<compile_context>
chip_gen: v6e
topology: v6e:2x2x1
jax: 0.10.0
libtpu: 0.0.40
codegen_flags: <defaults>
</compile_context>

<pallas_src>
import numpy as np
import jax
import jax.numpy as jnp
from jax import lax
from jax.experimental import pallas as pl
from jax.experimental.pallas import tpu as pltpu

EPS = 1e-5
HIGHEST = jax.lax.Precision.HIGHEST


# ---------------------------------------------------------------------------
# Haar (db1) wavelet filters (matches wavelet.create_wavelet_filter).
# ---------------------------------------------------------------------------
def haar_filters():
    s = np.float32(1.0) / np.sqrt(np.float32(2.0))
    dec_lo = np.array([s, s], np.float32)
    dec_hi = np.array([s, -s], np.float32)
    rec_lo = np.array([s, s], np.float32)
    rec_hi = np.array([s, -s], np.float32)
    dec = np.stack([np.outer(dec_lo, dec_lo), np.outer(dec_hi, dec_lo),
                    np.outer(dec_lo, dec_hi), np.outer(dec_hi, dec_hi)]).astype(np.float32)
    rec = np.stack([np.outer(rec_lo, rec_lo), np.outer(rec_hi, rec_lo),
                    np.outer(rec_lo, rec_hi), np.outer(rec_hi, rec_hi)]).astype(np.float32)
    return dec, rec


# ---------------------------------------------------------------------------
# Fused kernel: conv1(MXU,bf16)+bn1+relu -> Haar DWT -> wavelet depthwise conv
#               -> IDWT + base depthwise conv -> bn2 -> +residual -> relu.
# Everything works on zero-padded polyphase planes (plane r = 2p+q holds the
# full-res pixels (2i+p, 2j+q)) in channel-last layout: C on lanes, 3x3 tap
# shifts on the sublane / leading axes.
# ---------------------------------------------------------------------------
def _make_fused_kernel(Hh, Wh, C, dec, rec):
    Hp, Wp = Hh + 2, Wh + 2
    HW = Hh * Wh
    # For a full-res coordinate a = parity + tap_offset in {-1, 0, 1, 2}:
    #   combos[a + 1] = (source half-res parity, start index in the 1-padded plane)
    combos = ((1, 0), (0, 1), (1, 1), (0, 2))
    dec_f = [[float(dec[k, r // 2, r % 2]) for r in range(4)] for k in range(4)]
    rec_f = [[float(rec[k, r // 2, r % 2]) for r in range(4)] for k in range(4)]

    def kernel(xp_ref, w1_ref, t1_ref, bw_ref, bb_ref, bs_ref,
               ww_ref, ws_ref, s2_ref, t2_ref, o_ref, ypad_ref):
        # xp_ref  : (4, Hp, Wp, C)  zero-padded polyphase planes of x
        # w1_ref  : (9, C, C) bf16  conv1 taps (bn1 scale folded), t = ky*3 + kx
        # t1_ref  : (1, C)          folded bn1 shift
        # bw_ref  : (9, C)          base depthwise-conv taps
        # bb_ref, bs_ref : (1, C)   base conv bias / scale
        # ww_ref  : (4, 9, C)       wavelet-domain depthwise taps (per subband)
        # ws_ref  : (4, C)          wavelet-domain per-channel scales
        # s2_ref, t2_ref : (1, C)   folded bn2 scale / shift
        # o_ref   : (4, Hh, Wh, C)  output polyphase planes
        # ypad_ref: VMEM scratch (4, Hp, Wp, C): conv1 output with zero padding ring

        # Zero the scratch: its ring is the implicit zero padding of every 3x3 conv below.
        ypad_ref[...] = jnp.zeros_like(ypad_ref)

        # ---- hoist the 16 distinct shifted x windows (reused by conv1 + residual) ----
        xw3 = {}
        xw2 = {}
        for ra, (rp, rs) in enumerate(combos):
            for ca, (cp, cs) in enumerate(combos):
                w3 = xp_ref[2 * rp + cp, rs:rs + Hh, cs:cs + Wh, :]
                xw3[(ra, ca)] = w3                                      # f32, (Hh, Wh, C)
                xw2[(ra, ca)] = w3.reshape(HW, C).astype(jnp.bfloat16)  # MXU operand

        w1 = w1_ref[...]
        t1 = t1_ref[...]

        # ---- stage 1: conv1 on the MXU (bf16, f32 accumulate) per output parity ----
        for pb in range(2):
            for qb in range(2):
                acc = None
                for dy in range(3):
                    for dx in range(3):
                        part = jnp.dot(xw2[(pb + dy, qb + dx)], w1[dy * 3 + dx],
                                       preferred_element_type=jnp.float32)
                        acc = part if acc is None else acc + part
                y = jnp.maximum(acc + t1, 0.0).reshape(Hh, Wh, C)
                ypad_ref[2 * pb + qb, 1:1 + Hh, 1:1 + Wh, :] = y

        # ---- stage 2: Haar DWT (pure elementwise on the padded planes) ----
        yp = [ypad_ref[r] for r in range(4)]
        bw = bw_ref[...]
        bb = bb_ref[...]
        bs = bs_ref[...]
        ww = ww_ref[...]
        ws = ws_ref[...]
        s2 = s2_ref[...]
        t2 = t2_ref[...]

        subs = []
        for k in range(4):
            subs.append(dec_f[k][0] * yp[0] + dec_f[k][1] * yp[1]
                        + dec_f[k][2] * yp[2] + dec_f[k][3] * yp[3])

        # ---- depthwise 3x3 conv in the wavelet domain + per-channel scale ----
        tags = []
        for k in range(4):
            acc = None
            for dy in range(3):
                for dx in range(3):
                    term = ww[k, dy * 3 + dx] * subs[k][dy:dy + Hh, dx:dx + Wh, :]
                    acc = term if acc is None else acc + term
            tags.append(acc * ws[k])

        # ---- hoist the 16 distinct shifted y windows for the base depthwise conv ----
        yw = {}
        for ra, (rp, rs) in enumerate(combos):
            for ca, (cp, cs) in enumerate(combos):
                yw[(ra, ca)] = yp[2 * rp + cp][rs:rs + Hh, cs:cs + Wh, :]

        # ---- per output parity: base conv + IDWT + bn2 + residual + ReLU ----
        for pb in range(2):
            for qb in range(2):
                base = None
                for dy in range(3):
                    for dx in range(3):
                        term = bw[dy * 3 + dx] * yw[(pb + dy, qb + dx)]
                        base = term if base is None else base + term
                base = (base + bb) * bs
                r = 2 * pb + qb
                idwt = (rec_f[0][r] * tags[0] + rec_f[1][r] * tags[1]
                        + rec_f[2][r] * tags[2] + rec_f[3][r] * tags[3])
                z = (base + idwt) * s2 + t2 + xw3[(1 + pb, 1 + qb)]
                o_ref[r] = jnp.maximum(z, 0.0)

    return kernel


# ---------------------------------------------------------------------------
# Full BasicBlock forward: 1 fused Pallas kernel + one transpose in / out.
# ---------------------------------------------------------------------------
def basic_block_forward(x, p, dec, rec):
    B, C, H, W = x.shape
    assert H % 2 == 0 and W % 2 == 0, "WTConv2d path assumes even spatial dims"
    Hh, Wh = H // 2, W // 2
    Hp, Wp = Hh + 2, Wh + 2

    # Fold inference-mode BN into per-channel scale / shift.
    s1 = p["bn1_gamma"] / jnp.sqrt(p["bn1_var"] + EPS)
    t1 = p["bn1_beta"] - p["bn1_mean"] * s1
    s2 = p["bn2_gamma"] / jnp.sqrt(p["bn2_var"] + EPS)
    t2 = p["bn2_beta"] - p["bn2_mean"] * s2

    # conv1 weights: fold bn1 scale, tap-major (9, Cin, Cout), bf16 for the MXU.
    w1 = p["conv1_w"] * s1[:, None, None, None]                       # (Cout, Cin, 3, 3)
    w1 = jnp.transpose(w1, (2, 3, 1, 0)).reshape(9, C, C).astype(jnp.bfloat16)
    t1 = t1.reshape(1, C).astype(jnp.float32)

    # x -> zero-padded polyphase, channel-last: plane r = 2p+q holds x[:, :, 2i+p, 2j+q].
    xp = x.reshape(B, C, Hh, 2, Wh, 2)
    xp = jnp.transpose(xp, (0, 3, 5, 2, 4, 1))                         # (B, 2, 2, Hh, Wh, C)
    xp = jnp.pad(xp, ((0, 0), (0, 0), (0, 0), (1, 1), (1, 1), (0, 0)))
    xp = xp.reshape(B * 4, Hp, Wp, C)

    # Depthwise / per-channel parameters as natural (.., C) lane vectors (no Wh tiling).
    base_w = jnp.transpose(p["base_w"], (1, 2, 0)).reshape(9, C)
    base_b = p["base_b"].reshape(1, C)
    base_s = p["base_scale"].reshape(1, C)
    wav_w = jnp.transpose(p["wav_w"].reshape(C, 4, 3, 3), (1, 2, 3, 0)).reshape(4, 9, C)
    wav_s = jnp.transpose(p["wav_scale"].reshape(C, 4), (1, 0))
    s2 = s2.reshape(1, C)
    t2 = t2.reshape(1, C)

    kernel = _make_fused_kernel(Hh, Wh, C, dec, rec)

    out = pl.pallas_call(
        kernel,
        out_shape=jax.ShapeDtypeStruct((B * 4, Hh, Wh, C), jnp.float32),
        grid=(B,),
        in_specs=[
            pl.BlockSpec((4, Hp, Wp, C), lambda b: (b, 0, 0, 0)),
            pl.BlockSpec((9, C, C), lambda b: (0, 0, 0)),
            pl.BlockSpec((1, C), lambda b: (0, 0)),
            pl.BlockSpec((9, C), lambda b: (0, 0)),
            pl.BlockSpec((1, C), lambda b: (0, 0)),
            pl.BlockSpec((1, C), lambda b: (0, 0)),
            pl.BlockSpec((4, 9, C), lambda b: (0, 0, 0)),
            pl.BlockSpec((4, C), lambda b: (0, 0)),
            pl.BlockSpec((1, C), lambda b: (0, 0)),
            pl.BlockSpec((1, C), lambda b: (0, 0)),
        ],
        out_specs=pl.BlockSpec((4, Hh, Wh, C), lambda b: (b, 0, 0, 0)),
        scratch_shapes=[pltpu.VMEM((4, Hp, Wp, C), jnp.float32)],
        compiler_params=pltpu.CompilerParams(dimension_semantics=("parallel",)),
    )(xp, w1, t1, base_w, base_b, base_s, wav_w, wav_s, s2, t2)

    # Polyphase channel-last -> NCHW (single XLA transpose).
    out = out.reshape(B, 2, 2, Hh, Wh, C)
    return jnp.transpose(out, (0, 5, 3, 1, 4, 2)).reshape(B, C, H, W)


# ---------------------------------------------------------------------------
# Pure-JAX reference (correctness check only)
# ---------------------------------------------------------------------------
def _conv_nchw(x, w, stride=1, pad=0, groups=1):
    return lax.conv_general_dilated(
        x, w, window_strides=(stride, stride),
        padding=((pad, pad), (pad, pad)),
        dimension_numbers=("NCHW", "OIHW", "NCHW"),
        feature_group_count=groups, precision=HIGHEST)


def ref_forward(x, p, dec, rec):
    B, C, H, W = x.shape
    Hh, Wh = H // 2, W // 2

    def bn(z, g, b, m, v):
        return ((z - m[None, :, None, None]) / jnp.sqrt(v[None, :, None, None] + EPS)
                * g[None, :, None, None] + b[None, :, None, None])

    y = _conv_nchw(x, p["conv1_w"], pad=1)
    y = jnp.maximum(bn(y, p["bn1_gamma"], p["bn1_beta"], p["bn1_mean"], p["bn1_var"]), 0.0)

    wt_w = jnp.tile(jnp.asarray(dec), (C, 1, 1))[:, None]       # (4C,1,2,2)
    wt = _conv_nchw(y, wt_w, stride=2, pad=0, groups=C)         # (B,4C,Hh,Wh)
    tag = _conv_nchw(wt, p["wav_w"][:, None], pad=1, groups=4 * C)
    tag = (tag * p["wav_scale"][None, :, None, None]).reshape(B, C, 4, Hh, Wh)

    x_tag = jnp.zeros((B, C, H, W), jnp.float32)
    for pp in range(2):
        for q in range(2):
            comp = sum(rec[k, pp, q] * tag[:, :, k] for k in range(4))
            x_tag = x_tag.at[:, :, pp::2, q::2].set(comp)

    base = _conv_nchw(y, p["base_w"][:, None], pad=1, groups=C) + p["base_b"][None, :, None, None]
    base = base * p["base_scale"][None, :, None, None]

    z = bn(base + x_tag, p["bn2_gamma"], p["bn2_beta"], p["bn2_mean"], p["bn2_var"])
    return jnp.maximum(z + x, 0.0)


if __name__ == "__main__":
    B, C, H, W = 2, 4, 16, 16
    key = jax.random.PRNGKey(0)
    ks = jax.random.split(key, 16)

    p = {
        "conv1_w": 0.2 * jax.random.normal(ks[0], (C, C, 3, 3), jnp.float32),
        "bn1_gamma": 1.0 + 0.1 * jax.random.normal(ks[1], (C,), jnp.float32),
        "bn1_beta": 0.1 * jax.random.normal(ks[2], (C,), jnp.float32),
        "bn1_mean": 0.1 * jax.random.normal(ks[3], (C,), jnp.float32),
        "bn1_var": 1.0 + 0.1 * jnp.abs(jax.random.normal(ks[4], (C,), jnp.float32)),
        "base_w": 0.2 * jax.random.normal(ks[5], (C, 3, 3), jnp.float32),
        "base_b": 0.1 * jax.random.normal(ks[6], (C,), jnp.float32),
        "base_scale": jnp.ones((C,), jnp.float32),             # _ScaleModule init_scale=1.0
        "wav_w": 0.2 * jax.random.normal(ks[7], (4 * C, 3, 3), jnp.float32),
        "wav_scale": 0.1 * jnp.ones((4 * C,), jnp.float32),    # _ScaleModule init_scale=0.1
        "bn2_gamma": 1.0 + 0.1 * jax.random.normal(ks[8], (C,), jnp.float32),
        "bn2_beta": 0.1 * jax.random.normal(ks[9], (C,), jnp.float32),
        "bn2_mean": 0.1 * jax.random.normal(ks[10], (C,), jnp.float32),
        "bn2_var": 1.0 + 0.1 * jnp.abs(jax.random.normal(ks[11], (C,), jnp.float32)),
    }
    x = jax.random.normal(ks[12], (B, C, H, W), jnp.float32)

    dec, rec = haar_filters()

    fwd = jax.jit(lambda xx: basic_block_forward(xx, p, dec, rec))
    out = jax.block_until_ready(fwd(x))

    ref = jax.block_until_ready(ref_forward(x, p, dec, rec))
    # conv1 runs in single-pass bf16 on the MXU (reference is f32 HIGHEST) -> tolerance
    # sized for bf16 rounding of a 9*Cin-term contraction plus the depthwise tail.
    np.testing.assert_allclose(np.asarray(out), np.asarray(ref), rtol=3e-2, atol=3e-2)

    print("KERNEL_OK")
</pallas_src>

<mosaic_0001>
module attributes {stable_mosaic.version = 11 : i64} {
  func.func @kernel(%arg0: i32, %arg1: memref<4x10x10x4xf32, #tpu.memory_space<vmem>>, %arg2: memref<9x4x4xbf16, #tpu.memory_space<vmem>>, %arg3: memref<1x4xf32, #tpu.memory_space<vmem>>, %arg4: memref<9x4xf32, #tpu.memory_space<vmem>>, %arg5: memref<1x4xf32, #tpu.memory_space<vmem>>, %arg6: memref<1x4xf32, #tpu.memory_space<vmem>>, %arg7: memref<4x9x4xf32, #tpu.memory_space<vmem>>, %arg8: memref<4x4xf32, #tpu.memory_space<vmem>>, %arg9: memref<1x4xf32, #tpu.memory_space<vmem>>, %arg10: memref<1x4xf32, #tpu.memory_space<vmem>>, %arg11: memref<4x8x8x4xf32, #tpu.memory_space<vmem>>, %arg12: memref<4x10x10x4xf32, #tpu.memory_space<vmem>>) attributes {dimension_semantics = [#tpu.dimension_semantics<parallel>], iteration_bounds = array<i64: 2>, scalar_prefetch = 0 : i64, scratch_operands = 1 : i64, tpu.core_type = #tpu.core_type<tc>, window_params = [{transform_indices = @transform_0, window_bounds = array<i64: 4, 10, 10, 4>}, {pipeline_mode = #tpu.pipeline_mode<synchronous>, transform_indices = @transform_1, window_bounds = array<i64: 9, 4, 4>}, {pipeline_mode = #tpu.pipeline_mode<synchronous>, transform_indices = @transform_2, window_bounds = array<i64: 1, 4>}, {pipeline_mode = #tpu.pipeline_mode<synchronous>, transform_indices = @transform_3, window_bounds = array<i64: 9, 4>}, {pipeline_mode = #tpu.pipeline_mode<synchronous>, transform_indices = @transform_4, window_bounds = array<i64: 1, 4>}, {pipeline_mode = #tpu.pipeline_mode<synchronous>, transform_indices = @transform_5, window_bounds = array<i64: 1, 4>}, {pipeline_mode = #tpu.pipeline_mode<synchronous>, transform_indices = @transform_6, window_bounds = array<i64: 4, 9, 4>}, {pipeline_mode = #tpu.pipeline_mode<synchronous>, transform_indices = @transform_7, window_bounds = array<i64: 4, 4>}, {pipeline_mode = #tpu.pipeline_mode<synchronous>, transform_indices = @transform_8, window_bounds = array<i64: 1, 4>}, {pipeline_mode = #tpu.pipeline_mode<synchronous>, transform_indices = @transform_9, window_bounds = array<i64: 1, 4>}, {transform_indices = @transform_10, window_bounds = array<i64: 4, 8, 8, 4>}]} {
    %cst = arith.constant 0.000000e+00 : f32
    %0 = vector.broadcast %cst : f32 to vector<4x10x10x4xf32>
    %c0 = arith.constant 0 : index
    %c0_0 = arith.constant 0 : index
    %c0_1 = arith.constant 0 : index
    %c0_2 = arith.constant 0 : index
    %1 = vector.load %arg12[%c0, %c0_0, %c0_1, %c0_2] : memref<4x10x10x4xf32, #tpu.memory_space<vmem>>, vector<4x10x10x4xf32>
    tpu.vector_store %arg12[%c0, %c0_0, %c0_1, %c0_2], %0 {strides = array<i32>} : memref<4x10x10x4xf32, #tpu.memory_space<vmem>>, vector<4x10x10x4xf32>,
    %c3 = arith.constant 3 : index
    %c0_3 = arith.constant 0 : index
    %c0_4 = arith.constant 0 : index
    %c0_5 = arith.constant 0 : index
    %2 = vector.load %arg1[%c3, %c0_3, %c0_4, %c0_5] : memref<4x10x10x4xf32, #tpu.memory_space<vmem>>, vector<1x8x8x4xf32>
    %3 = vector.shape_cast %2 : vector<1x8x8x4xf32> to vector<8x8x4xf32>
    %4 = vector.shape_cast %3 : vector<8x8x4xf32> to vector<64x4xf32>
    %5 = arith.truncf %4 : vector<64x4xf32> to vector<64x4xbf16>
    %c2 = arith.constant 2 : index
    %c0_6 = arith.constant 0 : index
    %c1 = arith.constant 1 : index
    %c0_7 = arith.constant 0 : index
    %6 = vector.load %arg1[%c2, %c0_6, %c1, %c0_7] : memref<4x10x10x4xf32, #tpu.memory_space<vmem>>, vector<1x8x8x4xf32>
    %7 = vector.shape_cast %6 : vector<1x8x8x4xf32> to vector<8x8x4xf32>
    %8 = vector.shape_cast %7 : vector<8x8x4xf32> to vector<64x4xf32>
    %9 = arith.truncf %8 : vector<64x4xf32> to vector<64x4xbf16>
    %c3_8 = arith.constant 3 : index
    %c0_9 = arith.constant 0 : index
    %c1_10 = arith.constant 1 : index
    %c0_11 = arith.constant 0 : index
    %10 = vector.load %arg1[%c3_8, %c0_9, %c1_10, %c0_11] : memref<4x10x10x4xf32, #tpu.memory_space<vmem>>, vector<1x8x8x4xf32>
    %11 = vector.shape_cast %10 : vector<1x8x8x4xf32> to vector<8x8x4xf32>
    %12 = vector.shape_cast %11 : vector<8x8x4xf32> to vector<64x4xf32>
    %13 = arith.truncf %12 : vector<64x4xf32> to vector<64x4xbf16>
    %c2_12 = arith.constant 2 : index
    %c0_13 = arith.constant 0 : index
    %c2_14 = arith.constant 2 : index
    %c0_15 = arith.constant 0 : index
    %14 = vector.load %arg1[%c2_12, %c0_13, %c2_14, %c0_15] : memref<4x10x10x4xf32, #tpu.memory_space<vmem>>, vector<1x8x8x4xf32>
    %15 = vector.shape_cast %14 : vector<1x8x8x4xf32> to vector<8x8x4xf32>
    %16 = vector.shape_cast %15 : vector<8x8x4xf32> to vector<64x4xf32>
    %17 = arith.truncf %16 : vector<64x4xf32> to vector<64x4xbf16>
    %c1_16 = arith.constant 1 : index
    %c1_17 = arith.constant 1 : index
    %c0_18 = arith.constant 0 : index
    %c0_19 = arith.constant 0 : index
    %18 = vector.load %arg1[%c1_16, %c1_17, %c0_18, %c0_19] : memref<4x10x10x4xf32, #tpu.memory_space<vmem>>, vector<1x8x8x4xf32>
    %19 = vector.shape_cast %18 : vector<1x8x8x4xf32> to vector<8x8x4xf32>
    %20 = vector.shape_cast %19 : vector<8x8x4xf32> to vector<64x4xf32>
    %21 = arith.truncf %20 : vector<64x4xf32> to vector<64x4xbf16>
    %c0_20 = arith.constant 0 : index
    %c1_21 = arith.constant 1 : index
    %c1_22 = arith.constant 1 : index
    %c0_23 = arith.constant 0 : index
    %22 = vector.load %arg1[%c0_20, %c1_21, %c1_22, %c0_23] : memref<4x10x10x4xf32, #tpu.memory_space<vmem>>, vector<1x8x8x4xf32>
    %23 = vector.shape_cast %22 : vector<1x8x8x4xf32> to vector<8x8x4xf32>
    %24 = vector.shape_cast %23 : vector<8x8x4xf32> to vector<64x4xf32>
    %25 = arith.truncf %24 : vector<64x4xf32> to vector<64x4xbf16>
    %c1_24 = arith.constant 1 : index
    %c1_25 = arith.constant 1 : index
    %c1_26 = arith.constant 1 : index
    %c0_27 = arith.constant 0 : index
    %26 = vector.load %arg1[%c1_24, %c1_25, %c1_26, %c0_27] : memref<4x10x10x4xf32, #tpu.memory_space<vmem>>, vector<1x8x8x4xf32>
    %27 = vector.shape_cast %26 : vector<1x8x8x4xf32> to vector<8x8x4xf32>
    %28 = vector.shape_cast %27 : vector<8x8x4xf32> to vector<64x4xf32>
    %29 = arith.truncf %28 : vector<64x4xf32> to vector<64x4xbf16>
    %c0_28 = arith.constant 0 : index
    %c1_29 = arith.constant 1 : index
    %c2_30 = arith.constant 2 : index
    %c0_31 = arith.constant 0 : index
    %30 = vector.load %arg1[%c0_28, %c1_29, %c2_30, %c0_31] : memref<4x10x10x4xf32, #tpu.memory_space<vmem>>, vector<1x8x8x4xf32>
    %31 = vector.shape_cast %30 : vector<1x8x8x4xf32> to vector<8x8x4xf32>
    %32 = vector.shape_cast %31 : vector<8x8x4xf32> to vector<64x4xf32>
    %33 = arith.truncf %32 : vector<64x4xf32> to vector<64x4xbf16>
    %c3_32 = arith.constant 3 : index
    %c1_33 = arith.constant 1 : index
    %c0_34 = arith.constant 0 : index
    %c0_35 = arith.constant 0 : index
    %34 = vector.load %arg1[%c3_32, %c1_33, %c0_34, %c0_35] : memref<4x10x10x4xf32, #tpu.memory_space<vmem>>, vector<1x8x8x4xf32>
    %35 = vector.shape_cast %34 : vector<1x8x8x4xf32> to vector<8x8x4xf32>
    %36 = vector.shape_cast %35 : vector<8x8x4xf32> to vector<64x4xf32>
    %37 = arith.truncf %36 : vector<64x4xf32> to vector<64x4xbf16>
    %c2_36 = arith.constant 2 : index
    %c1_37 = arith.constant 1 : index
    %c1_38 = arith.constant 1 : index
    %c0_39 = arith.constant 0 : index
    %38 = vector.load %arg1[%c2_36, %c1_37, %c1_38, %c0_39] : memref<4x10x10x4xf32, #tpu.memory_space<vmem>>, vector<1x8x8x4xf32>
    %39 = vector.shape_cast %38 : vector<1x8x8x4xf32> to vector<8x8x4xf32>
    %40 = vector.shape_cast %39 : vector<8x8x4xf32> to vector<64x4xf32>
    %41 = arith.truncf %40 : vector<64x4xf32> to vector<64x4xbf16>
    %c3_40 = arith.constant 3 : index
    %c1_41 = arith.constant 1 : index
    %c1_42 = arith.constant 1 : index
    %c0_43 = arith.constant 0 : index
    %42 = vector.load %arg1[%c3_40, %c1_41, %c1_42, %c0_43] : memref<4x10x10x4xf32, #tpu.memory_space<vmem>>, vector<1x8x8x4xf32>
    %43 = vector.shape_cast %42 : vector<1x8x8x4xf32> to vector<8x8x4xf32>
    %44 = vector.shape_cast %43 : vector<8x8x4xf32> to vector<64x4xf32>
    %45 = arith.truncf %44 : vector<64x4xf32> to vector<64x4xbf16>
    %c2_44 = arith.constant 2 : index
    %c1_45 = arith.constant 1 : index
    %c2_46 = arith.constant 2 : index
    %c0_47 = arith.constant 0 : index
    %46 = vector.load %arg1[%c2_44, %c1_45, %c2_46, %c0_47] : memref<4x10x10x4xf32, #tpu.memory_space<vmem>>, vector<1x8x8x4xf32>
    %47 = vector.shape_cast %46 : vector<1x8x8x4xf32> to vector<8x8x4xf32>
    %48 = vector.shape_cast %47 : vector<8x8x4xf32> to vector<64x4xf32>
    %49 = arith.truncf %48 : vector<64x4xf32> to vector<64x4xbf16>
    %c1_48 = arith.constant 1 : index
    %c2_49 = arith.constant 2 : index
    %c0_50 = arith.constant 0 : index
    %c0_51 = arith.constant 0 : index
    %50 = vector.load %arg1[%c1_48, %c2_49, %c0_50, %c0_51] : memref<4x10x10x4xf32, #tpu.memory_space<vmem>>, vector<1x8x8x4xf32>
    %51 = vector.shape_cast %50 : vector<1x8x8x4xf32> to vector<8x8x4xf32>
    %52 = vector.shape_cast %51 : vector<8x8x4xf32> to vector<64x4xf32>
    %53 = arith.truncf %52 : vector<64x4xf32> to vector<64x4xbf16>
    %c0_52 = arith.constant 0 : index
    %c2_53 = arith.constant 2 : index
    %c1_54 = arith.constant 1 : index
    %c0_55 = arith.constant 0 : index
    %54 = vector.load %arg1[%c0_52, %c2_53, %c1_54, %c0_55] : memref<4x10x10x4xf32, #tpu.memory_space<vmem>>, vector<1x8x8x4xf32>
    %55 = vector.shape_cast %54 : vector<1x8x8x4xf32> to vector<8x8x4xf32>
    %56 = vector.shape_cast %55 : vector<8x8x4xf32> to vector<64x4xf32>
    %57 = arith.truncf %56 : vector<64x4xf32> to vector<64x4xbf16>
    %c1_56 = arith.constant 1 : index
    %c2_57 = arith.constant 2 : index
    %c1_58 = arith.constant 1 : index
    %c0_59 = arith.constant 0 : index
    %58 = vector.load %arg1[%c1_56, %c2_57, %c1_58, %c0_59] : memref<4x10x10x4xf32, #tpu.memory_space<vmem>>, vector<1x8x8x4xf32>
    %59 = vector.shape_cast %58 : vector<1x8x8x4xf32> to vector<8x8x4xf32>
    %60 = vector.shape_cast %59 : vector<8x8x4xf32> to vector<64x4xf32>
    %61 = arith.truncf %60 : vector<64x4xf32> to vector<64x4xbf16>
    %c0_60 = arith.constant 0 : index
    %c2_61 = arith.constant 2 : index
    %c2_62 = arith.constant 2 : index
    %c0_63 = arith.constant 0 : index
    %62 = vector.load %arg1[%c0_60, %c2_61, %c2_62, %c0_63] : memref<4x10x10x4xf32, #tpu.memory_space<vmem>>, vector<1x8x8x4xf32>
    %63 = vector.shape_cast %62 : vector<1x8x8x4xf32> to vector<8x8x4xf32>
    %64 = vector.shape_cast %63 : vector<8x8x4xf32> to vector<64x4xf32>
    %65 = arith.truncf %64 : vector<64x4xf32> to vector<64x4xbf16>
    %c0_64 = arith.constant 0 : index
    %c0_65 = arith.constant 0 : index
    %c0_66 = arith.constant 0 : index
    %66 = vector.load %arg2[%c0_64, %c0_65, %c0_66] : memref<9x4x4xbf16, #tpu.memory_space<vmem>>, vector<9x4x4xbf16>
    %c0_67 = arith.constant 0 : index
    %c0_68 = arith.constant 0 : index
    %67 = vector.load %arg3[%c0_67, %c0_68] : memref<1x4xf32, #tpu.memory_space<vmem>>, vector<1x4xf32>
    %68 = vector.extract_strided_slice %66 {offsets = [0, 0, 0], sizes = [1, 4, 4], strides = [1, 1, 1]} : vector<9x4x4xbf16> to vector<1x4x4xbf16>
    %69 = vector.shape_cast %68 : vector<1x4x4xbf16> to vector<4x4xbf16>
    %cst_69 = arith.constant dense<0.000000e+00> : vector<64x4xf32>
    %70 = tpu.matmul %5, %69, %cst_69 {dimension_numbers = #tpu.dot_dimension_numbers<[1], [0], [0], [1], [0, 0, 1, 1], [], []>} : vector<64x4xbf16>, vector<4x4xbf16>, vector<64x4xf32> -> vector<64x4xf32>
    %71 = vector.extract_strided_slice %66 {offsets = [1, 0, 0], sizes = [1, 4, 4], strides = [1, 1, 1]} : vector<9x4x4xbf16> to vector<1x4x4xbf16>
    %72 = vector.shape_cast %71 : vector<1x4x4xbf16> to vector<4x4xbf16>
    %cst_70 = arith.constant dense<0.000000e+00> : vector<64x4xf32>
    %73 = tpu.matmul %9, %72, %cst_70 {dimension_numbers = #tpu.dot_dimension_numbers<[1], [0], [0], [1], [0, 0, 1, 1], [], []>} : vector<64x4xbf16>, vector<4x4xbf16>, vector<64x4xf32> -> vector<64x4xf32>
    %74 = arith.addf %70, %73 : vector<64x4xf32>
    %75 = vector.extract_strided_slice %66 {offsets = [2, 0, 0], sizes = [1, 4, 4], strides = [1, 1, 1]} : vector<9x4x4xbf16> to vector<1x4x4xbf16>
    %76 = vector.shape_cast %75 : vector<1x4x4xbf16> to vector<4x4xbf16>
    %cst_71 = arith.constant dense<0.000000e+00> : vector<64x4xf32>
    %77 = tpu.matmul %13, %76, %cst_71 {dimension_numbers = #tpu.dot_dimension_numbers<[1], [0], [0], [1], [0, 0, 1, 1], [], []>} : vector<64x4xbf16>, vector<4x4xbf16>, vector<64x4xf32> -> vector<64x4xf32>
    %78 = arith.addf %74, %77 : vector<64x4xf32>
    %79 = vector.extract_strided_slice %66 {offsets = [3, 0, 0], sizes = [1, 4, 4], strides = [1, 1, 1]} : vector<9x4x4xbf16> to vector<1x4x4xbf16>
    %80 = vector.shape_cast %79 : vector<1x4x4xbf16> to vector<4x4xbf16>
    %cst_72 = arith.constant dense<0.000000e+00> : vector<64x4xf32>
    %81 = tpu.matmul %21, %80, %cst_72 {dimension_numbers = #tpu.dot_dimension_numbers<[1], [0], [0], [1], [0, 0, 1, 1], [], []>} : vector<64x4xbf16>, vector<4x4xbf16>, vector<64x4xf32> -> vector<64x4xf32>
    %82 = arith.addf %78, %81 : vector<64x4xf32>
    %83 = vector.extract_strided_slice %66 {offsets = [4, 0, 0], sizes = [1, 4, 4], strides = [1, 1, 1]} : vector<9x4x4xbf16> to vector<1x4x4xbf16>
    %84 = vector.shape_cast %83 : vector<1x4x4xbf16> to vector<4x4xbf16>
    %cst_73 = arith.constant dense<0.000000e+00> : vector<64x4xf32>
    %85 = tpu.matmul %25, %84, %cst_73 {dimension_numbers = #tpu.dot_dimension_numbers<[1], [0], [0], [1], [0, 0, 1, 1], [], []>} : vector<64x4xbf16>, vector<4x4xbf16>, vector<64x4xf32> -> vector<64x4xf32>
    %86 = arith.addf %82, %85 : vector<64x4xf32>
    %87 = vector.extract_strided_slice %66 {offsets = [5, 0, 0], sizes = [1, 4, 4], strides = [1, 1, 1]} : vector<9x4x4xbf16> to vector<1x4x4xbf16>
    %88 = vector.shape_cast %87 : vector<1x4x4xbf16> to vector<4x4xbf16>
    %cst_74 = arith.constant dense<0.000000e+00> : vector<64x4xf32>
    %89 = tpu.matmul %29, %88, %cst_74 {dimension_numbers = #tpu.dot_dimension_numbers<[1], [0], [0], [1], [0, 0, 1, 1], [], []>} : vector<64x4xbf16>, vector<4x4xbf16>, vector<64x4xf32> -> vector<64x4xf32>
    %90 = arith.addf %86, %89 : vector<64x4xf32>
    %91 = vector.extract_strided_slice %66 {offsets = [6, 0, 0], sizes = [1, 4, 4], strides = [1, 1, 1]} : vector<9x4x4xbf16> to vector<1x4x4xbf16>
    %92 = vector.shape_cast %91 : vector<1x4x4xbf16> to vector<4x4xbf16>
    %cst_75 = arith.constant dense<0.000000e+00> : vector<64x4xf32>
    %93 = tpu.matmul %37, %92, %cst_75 {dimension_numbers = #tpu.dot_dimension_numbers<[1], [0], [0], [1], [0, 0, 1, 1], [], []>} : vector<64x4xbf16>, vector<4x4xbf16>, vector<64x4xf32> -> vector<64x4xf32>
    %94 = arith.addf %90, %93 : vector<64x4xf32>
    %95 = vector.extract_strided_slice %66 {offsets = [7, 0, 0], sizes = [1, 4, 4], strides = [1, 1, 1]} : vector<9x4x4xbf16> to vector<1x4x4xbf16>
    %96 = vector.shape_cast %95 : vector<1x4x4xbf16> to vector<4x4xbf16>
    %cst_76 = arith.constant dense<0.000000e+00> : vector<64x4xf32>
    %97 = tpu.matmul %41, %96, %cst_76 {dimension_numbers = #tpu.dot_dimension_numbers<[1], [0], [0], [1], [0, 0, 1, 1], [], []>} : vector<64x4xbf16>, vector<4x4xbf16>, vector<64x4xf32> -> vector<64x4xf32>
    %98 = arith.addf %94, %97 : vector<64x4xf32>
    %99 = vector.extract_strided_slice %66 {offsets = [8, 0, 0], sizes = [1, 4, 4], strides = [1, 1, 1]} : vector<9x4x4xbf16> to vector<1x4x4xbf16>
    %100 = vector.shape_cast %99 : vector<1x4x4xbf16> to vector<4x4xbf16>
    %cst_77 = arith.constant dense<0.000000e+00> : vector<64x4xf32>
    %101 = tpu.matmul %45, %100, %cst_77 {dimension_numbers = #tpu.dot_dimension_numbers<[1], [0], [0], [1], [0, 0, 1, 1], [], []>} : vector<64x4xbf16>, vector<4x4xbf16>, vector<64x4xf32> -> vector<64x4xf32>
    %102 = arith.addf %98, %101 : vector<64x4xf32>
    %103 = vector.broadcast %67 : vector<1x4xf32> to vector<64x4xf32>
    %104 = arith.addf %102, %103 : vector<64x4xf32>
    %cst_78 = arith.constant 0.000000e+00 : f32
    %105 = vector.broadcast %cst_78 : f32 to vector<64x4xf32>
    %106 = arith.maximumf %104, %105 : vector<64x4xf32>
    %107 = vector.shape_cast %106 : vector<64x4xf32> to vector<8x8x4xf32>
    %c0_79 = arith.constant 0 : index
    %c1_80 = arith.constant 1 : index
    %c1_81 = arith.constant 1 : index
    %c0_82 = arith.constant 0 : index
    %108 = vector.load %arg12[%c0_79, %c1_80, %c1_81, %c0_82] : memref<4x10x10x4xf32, #tpu.memory_space<vmem>>, vector<1x8x8x4xf32>
    %109 = vector.shape_cast %108 : vector<1x8x8x4xf32> to vector<8x8x4xf32>
    %110 = vector.shape_cast %107 : vector<8x8x4xf32> to vector<1x8x8x4xf32>
    tpu.vector_store %arg12[%c0_79, %c1_80, %c1_81, %c0_82], %110 {strides = array<i32>} : memref<4x10x10x4xf32, #tpu.memory_space<vmem>>, vector<1x8x8x4xf32>,
    %111 = vector.extract_strided_slice %66 {offsets = [0, 0, 0], sizes = [1, 4, 4], strides = [1, 1, 1]} : vector<9x4x4xbf16> to vector<1x4x4xbf16>
    %112 = vector.shape_cast %111 : vector<1x4x4xbf16> to vector<4x4xbf16>
    %cst_83 = arith.constant dense<0.000000e+00> : vector<64x4xf32>
    %113 = tpu.matmul %9, %112, %cst_83 {dimension_numbers = #tpu.dot_dimension_numbers<[1], [0], [0], [1], [0, 0, 1, 1], [], []>} : vector<64x4xbf16>, vector<4x4xbf16>, vector<64x4xf32> -> vector<64x4xf32>
    %114 = vector.extract_strided_slice %66 {offsets = [1, 0, 0], sizes = [1, 4, 4], strides = [1, 1, 1]} : vector<9x4x4xbf16> to vector<1x4x4xbf16>
    %115 = vector.shape_cast %114 : vector<1x4x4xbf16> to vector<4x4xbf16>
    %cst_84 = arith.constant dense<0.000000e+00> : vector<64x4xf32>
    %116 = tpu.matmul %13, %115, %cst_84 {dimension_numbers = #tpu.dot_dimension_numbers<[1], [0], [0], [1], [0, 0, 1, 1], [], []>} : vector<64x4xbf16>, vector<4x4xbf16>, vector<64x4xf32> -> vector<64x4xf32>
    %117 = arith.addf %113, %116 : vector<64x4xf32>
    %118 = vector.extract_strided_slice %66 {offsets = [2, 0, 0], sizes = [1, 4, 4], strides = [1, 1, 1]} : vector<9x4x4xbf16> to vector<1x4x4xbf16>
    %119 = vector.shape_cast %118 : vector<1x4x4xbf16> to vector<4x4xbf16>
    %cst_85 = arith.constant dense<0.000000e+00> : vector<64x4xf32>
    %120 = tpu.matmul %17, %119, %cst_85 {dimension_numbers = #tpu.dot_dimension_numbers<[1], [0], [0], [1], [0, 0, 1, 1], [], []>} : vector<64x4xbf16>, vector<4x4xbf16>, vector<64x4xf32> -> vector<64x4xf32>
    %121 = arith.addf %117, %120 : vector<64x4xf32>
    %122 = vector.extract_strided_slice %66 {offsets = [3, 0, 0], sizes = [1, 4, 4], strides = [1, 1, 1]} : vector<9x4x4xbf16> to vector<1x4x4xbf16>
    %123 = vector.shape_cast %122 : vector<1x4x4xbf16> to vector<4x4xbf16>
    %cst_86 = arith.constant dense<0.000000e+00> : vector<64x4xf32>
    %124 = tpu.matmul %25, %123, %cst_86 {dimension_numbers = #tpu.dot_dimension_numbers<[1], [0], [0], [1], [0, 0, 1, 1], [], []>} : vector<64x4xbf16>, vector<4x4xbf16>, vector<64x4xf32> -> vector<64x4xf32>
    %125 = arith.addf %121, %124 : vector<64x4xf32>
    %126 = vector.extract_strided_slice %66 {offsets = [4, 0, 0], sizes = [1, 4, 4], strides = [1, 1, 1]} : vector<9x4x4xbf16> to vector<1x4x4xbf16>
    %127 = vector.shape_cast %126 : vector<1x4x4xbf16> to vector<4x4xbf16>
    %cst_87 = arith.constant dense<0.000000e+00> : vector<64x4xf32>
    %128 = tpu.matmul %29, %127, %cst_87 {dimension_numbers = #tpu.dot_dimension_numbers<[1], [0], [0], [1], [0, 0, 1, 1], [], []>} : vector<64x4xbf16>, vector<4x4xbf16>, vector<64x4xf32> -> vector<64x4xf32>
    %129 = arith.addf %125, %128 : vector<64x4xf32>
    %130 = vector.extract_strided_slice %66 {offsets = [5, 0, 0], sizes = [1, 4, 4], strides = [1, 1, 1]} : vector<9x4x4xbf16> to vector<1x4x4xbf16>
    %131 = vector.shape_cast %130 : vector<1x4x4xbf16> to vector<4x4xbf16>
    %cst_88 = arith.constant dense<0.000000e+00> : vector<64x4xf32>
    %132 = tpu.matmul %33, %131, %cst_88 {dimension_numbers = #tpu.dot_dimension_numbers<[1], [0], [0], [1], [0, 0, 1, 1], [], []>} : vector<64x4xbf16>, vector<4x4xbf16>, vector<64x4xf32> -> vector<64x4xf32>
    %133 = arith.addf %129, %132 : vector<64x4xf32>
    %134 = vector.extract_strided_slice %66 {offsets = [6, 0, 0], sizes = [1, 4, 4], strides = [1, 1, 1]} : vector<9x4x4xbf16> to vector<1x4x4xbf16>
    %135 = vector.shape_cast %134 : vector<1x4x4xbf16> to vector<4x4xbf16>
    %cst_89 = arith.constant dense<0.000000e+00> : vector<64x4xf32>
    %136 = tpu.matmul %41, %135, %cst_89 {dimension_numbers = #tpu.dot_dimension_numbers<[1], [0], [0], [1], [0, 0, 1, 1], [], []>} : vector<64x4xbf16>, vector<4x4xbf16>, vector<64x4xf32> -> vector<64x4xf32>
    %137 = arith.addf %133, %136 : vector<64x4xf32>
    %138 = vector.extract_strided_slice %66 {offsets = [7, 0, 0], sizes = [1, 4, 4], strides = [1, 1, 1]} : vector<9x4x4xbf16> to vector<1x4x4xbf16>
    %139 = vector.shape_cast %138 : vector<1x4x4xbf16> to vector<4x4xbf16>
    %cst_90 = arith.constant dense<0.000000e+00> : vector<64x4xf32>
    %140 = tpu.matmul %45, %139, %cst_90 {dimension_numbers = #tpu.dot_dimension_numbers<[1], [0], [0], [1], [0, 0, 1, 1], [], []>} : vector<64x4xbf16>, vector<4x4xbf16>, vector<64x4xf32> -> vector<64x4xf32>
    %141 = arith.addf %137, %140 : vector<64x4xf32>
    %142 = vector.extract_strided_slice %66 {offsets = [8, 0, 0], sizes = [1, 4, 4], strides = [1, 1, 1]} : vector<9x4x4xbf16> to vector<1x4x4xbf16>
    %143 = vector.shape_cast %142 : vector<1x4x4xbf16> to vector<4x4xbf16>
    %cst_91 = arith.constant dense<0.000000e+00> : vector<64x4xf32>
    %144 = tpu.matmul %49, %143, %cst_91 {dimension_numbers = #tpu.dot_dimension_numbers<[1], [0], [0], [1], [0, 0, 1, 1], [], []>} : vector<64x4xbf16>, vector<4x4xbf16>, vector<64x4xf32> -> vector<64x4xf32>
    %145 = arith.addf %141, %144 : vector<64x4xf32>
    %146 = vector.broadcast %67 : vector<1x4xf32> to vector<64x4xf32>
    %147 = arith.addf %145, %146 : vector<64x4xf32>
    %cst_92 = arith.constant 0.000000e+00 : f32
    %148 = vector.broadcast %cst_92 : f32 to vector<64x4xf32>
    %149 = arith.maximumf %147, %148 : vector<64x4xf32>
    %150 = vector.shape_cast %149 : vector<64x4xf32> to vector<8x8x4xf32>
    %c1_93 = arith.constant 1 : index
    %c1_94 = arith.constant 1 : index
    %c1_95 = arith.constant 1 : index
    %c0_96 = arith.constant 0 : index
    %151 = vector.load %arg12[%c1_93, %c1_94, %c1_95, %c0_96] : memref<4x10x10x4xf32, #tpu.memory_space<vmem>>, vector<1x8x8x4xf32>
    %152 = vector.shape_cast %151 : vector<1x8x8x4xf32> to vector<8x8x4xf32>
    %153 = vector.shape_cast %150 : vector<8x8x4xf32> to vector<1x8x8x4xf32>
    tpu.vector_store %arg12[%c1_93, %c1_94, %c1_95, %c0_96], %153 {strides = array<i32>} : memref<4x10x10x4xf32, #tpu.memory_space<vmem>>, vector<1x8x8x4xf32>,
    %154 = vector.extract_strided_slice %66 {offsets = [0, 0, 0], sizes = [1, 4, 4], strides = [1, 1, 1]} : vector<9x4x4xbf16> to vector<1x4x4xbf16>
    %155 = vector.shape_cast %154 : vector<1x4x4xbf16> to vector<4x4xbf16>
    %cst_97 = arith.constant dense<0.000000e+00> : vector<64x4xf32>
    %156 = tpu.matmul %21, %155, %cst_97 {dimension_numbers = #tpu.dot_dimension_numbers<[1], [0], [0], [1], [0, 0, 1, 1], [], []>} : vector<64x4xbf16>, vector<4x4xbf16>, vector<64x4xf32> -> vector<64x4xf32>
    %157 = vector.extract_strided_slice %66 {offsets = [1, 0, 0], sizes = [1, 4, 4], strides = [1, 1, 1]} : vector<9x4x4xbf16> to vector<1x4x4xbf16>
    %158 = vector.shape_cast %157 : vector<1x4x4xbf16> to vector<4x4xbf16>
    %cst_98 = arith.constant dense<0.000000e+00> : vector<64x4xf32>
    %159 = tpu.matmul %25, %158, %cst_98 {dimension_numbers = #tpu.dot_dimension_numbers<[1], [0], [0], [1], [0, 0, 1, 1], [], []>} : vector<64x4xbf16>, vector<4x4xbf16>, vector<64x4xf32> -> vector<64x4xf32>
    %160 = arith.addf %156, %159 : vector<64x4xf32>
    %161 = vector.extract_strided_slice %66 {offsets = [2, 0, 0], sizes = [1, 4, 4], strides = [1, 1, 1]} : vector<9x4x4xbf16> to vector<1x4x4xbf16>
    %162 = vector.shape_cast %161 : vector<1x4x4xbf16> to vector<4x4xbf16>
    %cst_99 = arith.constant dense<0.000000e+00> : vector<64x4xf32>
    %163 = tpu.matmul %29, %162, %cst_99 {dimension_numbers = #tpu.dot_dimension_numbers<[1], [0], [0], [1], [0, 0, 1, 1], [], []>} : vector<64x4xbf16>, vector<4x4xbf16>, vector<64x4xf32> -> vector<64x4xf32>
    %164 = arith.addf %160, %163 : vector<64x4xf32>
    %165 = vector.extract_strided_slice %66 {offsets = [3, 0, 0], sizes = [1, 4, 4], strides = [1, 1, 1]} : vector<9x4x4xbf16> to vector<1x4x4xbf16>
    %166 = vector.shape_cast %165 : vector<1x4x4xbf16> to vector<4x4xbf16>
    %cst_100 = arith.constant dense<0.000000e+00> : vector<64x4xf32>
    %167 = tpu.matmul %37, %166, %cst_100 {dimension_numbers = #tpu.dot_dimension_numbers<[1], [0], [0], [1], [0, 0, 1, 1], [], []>} : vector<64x4xbf16>, vector<4x4xbf16>, vector<64x4xf32> -> vector<64x4xf32>
    %168 = arith.addf %164, %167 : vector<64x4xf32>
    %169 = vector.extract_strided_slice %66 {offsets = [4, 0, 0], sizes = [1, 4, 4], strides = [1, 1, 1]} : vector<9x4x4xbf16> to vector<1x4x4xbf16>
    %170 = vector.shape_cast %169 : vector<1x4x4xbf16> to vector<4x4xbf16>
    %cst_101 = arith.constant dense<0.000000e+00> : vector<64x4xf32>
    %171 = tpu.matmul %41, %170, %cst_101 {dimension_numbers = #tpu.dot_dimension_numbers<[1], [0], [0], [1], [0, 0, 1, 1], [], []>} : vector<64x4xbf16>, vector<4x4xbf16>, vector<64x4xf32> -> vector<64x4xf32>
    %172 = arith.addf %168, %171 : vector<64x4xf32>
    %173 = vector.extract_strided_slice %66 {offsets = [5, 0, 0], sizes = [1, 4, 4], strides = [1, 1, 1]} : vector<9x4x4xbf16> to vector<1x4x4xbf16>
    %174 = vector.shape_cast %173 : vector<1x4x4xbf16> to vector<4x4xbf16>
    %cst_102 = arith.constant dense<0.000000e+00> : vector<64x4xf32>
    %175 = tpu.matmul %45, %174, %cst_102 {dimension_numbers = #tpu.dot_dimension_numbers<[1], [0], [0], [1], [0, 0, 1, 1], [], []>} : vector<64x4xbf16>, vector<4x4xbf16>, vector<64x4xf32> -> vector<64x4xf32>
    %176 = arith.addf %172, %175 : vector<64x4xf32>
    %177 = vector.extract_strided_slice %66 {offsets = [6, 0, 0], sizes = [1, 4, 4], strides = [1, 1, 1]} : vector<9x4x4xbf16> to vector<1x4x4xbf16>
    %178 = vector.shape_cast %177 : vector<1x4x4xbf16> to vector<4x4xbf16>
    %cst_103 = arith.constant dense<0.000000e+00> : vector<64x4xf32>
    %179 = tpu.matmul %53, %178, %cst_103 {dimension_numbers = #tpu.dot_dimension_numbers<[1], [0], [0], [1], [0, 0, 1, 1], [], []>} : vector<64x4xbf16>, vector<4x4xbf16>, vector<64x4xf32> -> vector<64x4xf32>
    %180 = arith.addf %176, %179 : vector<64x4xf32>
    %181 = vector.extract_strided_slice %66 {offsets = [7, 0, 0], sizes = [1, 4, 4], strides = [1, 1, 1]} : vector<9x4x4xbf16> to vector<1x4x4xbf16>
    %182 = vector.shape_cast %181 : vector<1x4x4xbf16> to vector<4x4xbf16>
    %cst_104 = arith.constant dense<0.000000e+00> : vector<64x4xf32>
    %183 = tpu.matmul %57, %182, %cst_104 {dimension_numbers = #tpu.dot_dimension_numbers<[1], [0], [0], [1], [0, 0, 1, 1], [], []>} : vector<64x4xbf16>, vector<4x4xbf16>, vector<64x4xf32> -> vector<64x4xf32>
    %184 = arith.addf %180, %183 : vector<64x4xf32>
    %185 = vector.extract_strided_slice %66 {offsets = [8, 0, 0], sizes = [1, 4, 4], strides = [1, 1, 1]} : vector<9x4x4xbf16> to vector<1x4x4xbf16>
    %186 = vector.shape_cast %185 : vector<1x4x4xbf16> to vector<4x4xbf16>
    %cst_105 = arith.constant dense<0.000000e+00> : vector<64x4xf32>
    %187 = tpu.matmul %61, %186, %cst_105 {dimension_numbers = #tpu.dot_dimension_numbers<[1], [0], [0], [1], [0, 0, 1, 1], [], []>} : vector<64x4xbf16>, vector<4x4xbf16>, vector<64x4xf32> -> vector<64x4xf32>
    %188 = arith.addf %184, %187 : vector<64x4xf32>
    %189 = vector.broadcast %67 : vector<1x4xf32> to vector<64x4xf32>
    %190 = arith.addf %188, %189 : vector<64x4xf32>
    %cst_106 = arith.constant 0.000000e+00 : f32
    %191 = vector.broadcast %cst_106 : f32 to vector<64x4xf32>
    %192 = arith.maximumf %190, %191 : vector<64x4xf32>
    %193 = vector.shape_cast %192 : vector<64x4xf32> to vector<8x8x4xf32>
    %c2_107 = arith.constant 2 : index
    %c1_108 = arith.constant 1 : index
    %c1_109 = arith.constant 1 : index
    %c0_110 = arith.constant 0 : index
    %194 = vector.load %arg12[%c2_107, %c1_108, %c1_109, %c0_110] : memref<4x10x10x4xf32, #tpu.memory_space<vmem>>, vector<1x8x8x4xf32>
    %195 = vector.shape_cast %194 : vector<1x8x8x4xf32> to vector<8x8x4xf32>
    %196 = vector.shape_cast %193 : vector<8x8x4xf32> to vector<1x8x8x4xf32>
    tpu.vector_store %arg12[%c2_107, %c1_108, %c1_109, %c0_110], %196 {strides = array<i32>} : memref<4x10x10x4xf32, #tpu.memory_space<vmem>>, vector<1x8x8x4xf32>,
    %197 = vector.extract_strided_slice %66 {offsets = [0, 0, 0], sizes = [1, 4, 4], strides = [1, 1, 1]} : vector<9x4x4xbf16> to vector<1x4x4xbf16>
    %198 = vector.shape_cast %197 : vector<1x4x4xbf16> to vector<4x4xbf16>
    %cst_111 = arith.constant dense<0.000000e+00> : vector<64x4xf32>
    %199 = tpu.matmul %25, %198, %cst_111 {dimension_numbers = #tpu.dot_dimension_numbers<[1], [0], [0], [1], [0, 0, 1, 1], [], []>} : vector<64x4xbf16>, vector<4x4xbf16>, vector<64x4xf32> -> vector<64x4xf32>
    %200 = vector.extract_strided_slice %66 {offsets = [1, 0, 0], sizes = [1, 4, 4], strides = [1, 1, 1]} : vector<9x4x4xbf16> to vector<1x4x4xbf16>
    %201 = vector.shape_cast %200 : vector<1x4x4xbf16> to vector<4x4xbf16>
    %cst_112 = arith.constant dense<0.000000e+00> : vector<64x4xf32>
    %202 = tpu.matmul %29, %201, %cst_112 {dimension_numbers = #tpu.dot_dimension_numbers<[1], [0], [0], [1], [0, 0, 1, 1], [], []>} : vector<64x4xbf16>, vector<4x4xbf16>, vector<64x4xf32> -> vector<64x4xf32>
    %203 = arith.addf %199, %202 : vector<64x4xf32>
    %204 = vector.extract_strided_slice %66 {offsets = [2, 0, 0], sizes = [1, 4, 4], strides = [1, 1, 1]} : vector<9x4x4xbf16> to vector<1x4x4xbf16>
    %205 = vector.shape_cast %204 : vector<1x4x4xbf16> to vector<4x4xbf16>
    %cst_113 = arith.constant dense<0.000000e+00> : vector<64x4xf32>
    %206 = tpu.matmul %33, %205, %cst_113 {dimension_numbers = #tpu.dot_dimension_numbers<[1], [0], [0], [1], [0, 0, 1, 1], [], []>} : vector<64x4xbf16>, vector<4x4xbf16>, vector<64x4xf32> -> vector<64x4xf32>
    %207 = arith.addf %203, %206 : vector<64x4xf32>
    %208 = vector.extract_strided_slice %66 {offsets = [3, 0, 0], sizes = [1, 4, 4], strides = [1, 1, 1]} : vector<9x4x4xbf16> to vector<1x4x4xbf16>
    %209 = vector.shape_cast %208 : vector<1x4x4xbf16> to vector<4x4xbf16>
    %cst_114 = arith.constant dense<0.000000e+00> : vector<64x4xf32>
    %210 = tpu.matmul %41, %209, %cst_114 {dimension_numbers = #tpu.dot_dimension_numbers<[1], [0], [0], [1], [0, 0, 1, 1], [], []>} : vector<64x4xbf16>, vector<4x4xbf16>, vector<64x4xf32> -> vector<64x4xf32>
    %211 = arith.addf %207, %210 : vector<64x4xf32>
    %212 = vector.extract_strided_slice %66 {offsets = [4, 0, 0], sizes = [1, 4, 4], strides = [1, 1, 1]} : vector<9x4x4xbf16> to vector<1x4x4xbf16>
    %213 = vector.shape_cast %212 : vector<1x4x4xbf16> to vector<4x4xbf16>
    %cst_115 = arith.constant dense<0.000000e+00> : vector<64x4xf32>
    %214 = tpu.matmul %45, %213, %cst_115 {dimension_numbers = #tpu.dot_dimension_numbers<[1], [0], [0], [1], [0, 0, 1, 1], [], []>} : vector<64x4xbf16>, vector<4x4xbf16>, vector<64x4xf32> -> vector<64x4xf32>
    %215 = arith.addf %211, %214 : vector<64x4xf32>
    %216 = vector.extract_strided_slice %66 {offsets = [5, 0, 0], sizes = [1, 4, 4], strides = [1, 1, 1]} : vector<9x4x4xbf16> to vector<1x4x4xbf16>
    %217 = vector.shape_cast %216 : vector<1x4x4xbf16> to vector<4x4xbf16>
    %cst_116 = arith.constant dense<0.000000e+00> : vector<64x4xf32>
    %218 = tpu.matmul %49, %217, %cst_116 {dimension_numbers = #tpu.dot_dimension_numbers<[1], [0], [0], [1], [0, 0, 1, 1], [], []>} : vector<64x4xbf16>, vector<4x4xbf16>, vector<64x4xf32> -> vector<64x4xf32>
    %219 = arith.addf %215, %218 : vector<64x4xf32>
    %220 = vector.extract_strided_slice %66 {offsets = [6, 0, 0], sizes = [1, 4, 4], strides = [1, 1, 1]} : vector<9x4x4xbf16> to vector<1x4x4xbf16>
    %221 = vector.shape_cast %220 : vector<1x4x4xbf16> to vector<4x4xbf16>
    %cst_117 = arith.constant dense<0.000000e+00> : vector<64x4xf32>
    %222 = tpu.matmul %57, %221, %cst_117 {dimension_numbers = #tpu.dot_dimension_numbers<[1], [0], [0], [1], [0, 0, 1, 1], [], []>} : vector<64x4xbf16>, vector<4x4xbf16>, vector<64x4xf32> -> vector<64x4xf32>
    %223 = arith.addf %219, %222 : vector<64x4xf32>
    %224 = vector.extract_strided_slice %66 {offsets = [7, 0, 0], sizes = [1, 4, 4], strides = [1, 1, 1]} : vector<9x4x4xbf16> to vector<1x4x4xbf16>
    %225 = vector.shape_cast %224 : vector<1x4x4xbf16> to vector<4x4xbf16>
    %cst_118 = arith.constant dense<0.000000e+00> : vector<64x4xf32>
    %226 = tpu.matmul %61, %225, %cst_118 {dimension_numbers = #tpu.dot_dimension_numbers<[1], [0], [0], [1], [0, 0, 1, 1], [], []>} : vector<64x4xbf16>, vector<4x4xbf16>, vector<64x4xf32> -> vector<64x4xf32>
    %227 = arith.addf %223, %226 : vector<64x4xf32>
    %228 = vector.extract_strided_slice %66 {offsets = [8, 0, 0], sizes = [1, 4, 4], strides = [1, 1, 1]} : vector<9x4x4xbf16> to vector<1x4x4xbf16>
    %229 = vector.shape_cast %228 : vector<1x4x4xbf16> to vector<4x4xbf16>
    %cst_119 = arith.constant dense<0.000000e+00> : vector<64x4xf32>
    %230 = tpu.matmul %65, %229, %cst_119 {dimension_numbers = #tpu.dot_dimension_numbers<[1], [0], [0], [1], [0, 0, 1, 1], [], []>} : vector<64x4xbf16>, vector<4x4xbf16>, vector<64x4xf32> -> vector<64x4xf32>
    %231 = arith.addf %227, %230 : vector<64x4xf32>
    %232 = vector.broadcast %67 : vector<1x4xf32> to vector<64x4xf32>
    %233 = arith.addf %231, %232 : vector<64x4xf32>
    %cst_120 = arith.constant 0.000000e+00 : f32
    %234 = vector.broadcast %cst_120 : f32 to vector<64x4xf32>
    %235 = arith.maximumf %233, %234 : vector<64x4xf32>
    %236 = vector.shape_cast %235 : vector<64x4xf32> to vector<8x8x4xf32>
    %c3_121 = arith.constant 3 : index
    %c1_122 = arith.constant 1 : index
    %c1_123 = arith.constant 1 : index
    %c0_124 = arith.constant 0 : index
    %237 = vector.load %arg12[%c3_121, %c1_122, %c1_123, %c0_124] : memref<4x10x10x4xf32, #tpu.memory_space<vmem>>, vector<1x8x8x4xf32>
    %238 = vector.shape_cast %237 : vector<1x8x8x4xf32> to vector<8x8x4xf32>
    %239 = vector.shape_cast %236 : vector<8x8x4xf32> to vector<1x8x8x4xf32>
    tpu.vector_store %arg12[%c3_121, %c1_122, %c1_123, %c0_124], %239 {strides = array<i32>} : memref<4x10x10x4xf32, #tpu.memory_space<vmem>>, vector<1x8x8x4xf32>,
    %c0_125 = arith.constant 0 : index
    %c0_126 = arith.constant 0 : index
    %c0_127 = arith.constant 0 : index
    %c0_128 = arith.constant 0 : index
    %240 = vector.load %arg12[%c0_125, %c0_126, %c0_127, %c0_128] : memref<4x10x10x4xf32, #tpu.memory_space<vmem>>, vector<1x10x10x4xf32>
    %241 = vector.shape_cast %240 : vector<1x10x10x4xf32> to vector<10x10x4xf32>
    %c1_129 = arith.constant 1 : index
    %c0_130 = arith.constant 0 : index
    %c0_131 = arith.constant 0 : index
    %c0_132 = arith.constant 0 : index
    %242 = vector.load %arg12[%c1_129, %c0_130, %c0_131, %c0_132] : memref<4x10x10x4xf32, #tpu.memory_space<vmem>>, vector<1x10x10x4xf32>
    %243 = vector.shape_cast %242 : vector<1x10x10x4xf32> to vector<10x10x4xf32>
    %c2_133 = arith.constant 2 : index
    %c0_134 = arith.constant 0 : index
    %c0_135 = arith.constant 0 : index
    %c0_136 = arith.constant 0 : index
    %244 = vector.load %arg12[%c2_133, %c0_134, %c0_135, %c0_136] : memref<4x10x10x4xf32, #tpu.memory_space<vmem>>, vector<1x10x10x4xf32>
    %245 = vector.shape_cast %244 : vector<1x10x10x4xf32> to vector<10x10x4xf32>
    %c3_137 = arith.constant 3 : index
    %c0_138 = arith.constant 0 : index
    %c0_139 = arith.constant 0 : index
    %c0_140 = arith.constant 0 : index
    %246 = vector.load %arg12[%c3_137, %c0_138, %c0_139, %c0_140] : memref<4x10x10x4xf32, #tpu.memory_space<vmem>>, vector<1x10x10x4xf32>
    %247 = vector.shape_cast %246 : vector<1x10x10x4xf32> to vector<10x10x4xf32>
    %c0_141 = arith.constant 0 : index
    %c0_142 = arith.constant 0 : index
    %248 = vector.load %arg4[%c0_141, %c0_142] : memref<9x4xf32, #tpu.memory_space<vmem>>, vector<9x4xf32>
    %c0_143 = arith.constant 0 : index
    %c0_144 = arith.constant 0 : index
    %249 = vector.load %arg5[%c0_143, %c0_144] : memref<1x4xf32, #tpu.memory_space<vmem>>, vector<1x4xf32>
    %c0_145 = arith.constant 0 : index
    %c0_146 = arith.constant 0 : index
    %250 = vector.load %arg6[%c0_145, %c0_146] : memref<1x4xf32, #tpu.memory_space<vmem>>, vector<1x4xf32>
    %c0_147 = arith.constant 0 : index
    %c0_148 = arith.constant 0 : index
    %c0_149 = arith.constant 0 : index
    %251 = vector.load %arg7[%c0_147, %c0_148, %c0_149] : memref<4x9x4xf32, #tpu.memory_space<vmem>>, vector<4x9x4xf32>
    %c0_150 = arith.constant 0 : index
    %c0_151 = arith.constant 0 : index
    %252 = vector.load %arg8[%c0_150, %c0_151] : memref<4x4xf32, #tpu.memory_space<vmem>>, vector<4x4xf32>
    %c0_152 = arith.constant 0 : index
    %c0_153 = arith.constant 0 : index
    %253 = vector.load %arg9[%c0_152, %c0_153] : memref<1x4xf32, #tpu.memory_space<vmem>>, vector<1x4xf32>
    %c0_154 = arith.constant 0 : index
    %c0_155 = arith.constant 0 : index
    %254 = vector.load %arg10[%c0_154, %c0_155] : memref<1x4xf32, #tpu.memory_space<vmem>>, vector<1x4xf32>
    %cst_156 = arith.constant 0.49999997 : f32
    %255 = vector.broadcast %cst_156 : f32 to vector<10x10x4xf32>
    %256 = arith.mulf %255, %241 : vector<10x10x4xf32>
    %cst_157 = arith.constant 0.49999997 : f32
    %257 = vector.broadcast %cst_157 : f32 to vector<10x10x4xf32>
    %258 = arith.mulf %257, %243 : vector<10x10x4xf32>
    %259 = arith.addf %256, %258 : vector<10x10x4xf32>
    %cst_158 = arith.constant 0.49999997 : f32
    %260 = vector.broadcast %cst_158 : f32 to vector<10x10x4xf32>
    %261 = arith.mulf %260, %245 : vector<10x10x4xf32>
    %262 = arith.addf %259, %261 : vector<10x10x4xf32>
    %cst_159 = arith.constant 0.49999997 : f32
    %263 = vector.broadcast %cst_159 : f32 to vector<10x10x4xf32>
    %264 = arith.mulf %263, %247 : vector<10x10x4xf32>
    %265 = arith.addf %262, %264 : vector<10x10x4xf32>
    %cst_160 = arith.constant 0.49999997 : f32
    %266 = vector.broadcast %cst_160 : f32 to vector<10x10x4xf32>
    %267 = arith.mulf %266, %241 : vector<10x10x4xf32>
    %cst_161 = arith.constant 0.49999997 : f32
    %268 = vector.broadcast %cst_161 : f32 to vector<10x10x4xf32>
    %269 = arith.mulf %268, %243 : vector<10x10x4xf32>
    %270 = arith.addf %267, %269 : vector<10x10x4xf32>
    %cst_162 = arith.constant -0.49999997 : f32
    %271 = vector.broadcast %cst_162 : f32 to vector<10x10x4xf32>
    %272 = arith.mulf %271, %245 : vector<10x10x4xf32>
    %273 = arith.addf %270, %272 : vector<10x10x4xf32>
    %cst_163 = arith.constant -0.49999997 : f32
    %274 = vector.broadcast %cst_163 : f32 to vector<10x10x4xf32>
    %275 = arith.mulf %274, %247 : vector<10x10x4xf32>
    %276 = arith.addf %273, %275 : vector<10x10x4xf32>
    %cst_164 = arith.constant 0.49999997 : f32
    %277 = vector.broadcast %cst_164 : f32 to vector<10x10x4xf32>
    %278 = arith.mulf %277, %241 : vector<10x10x4xf32>
    %cst_165 = arith.constant -0.49999997 : f32
    %279 = vector.broadcast %cst_165 : f32 to vector<10x10x4xf32>
    %280 = arith.mulf %279, %243 : vector<10x10x4xf32>
    %281 = arith.addf %278, %280 : vector<10x10x4xf32>
    %cst_166 = arith.constant 0.49999997 : f32
    %282 = vector.broadcast %cst_166 : f32 to vector<10x10x4xf32>
    %283 = arith.mulf %282, %245 : vector<10x10x4xf32>
    %284 = arith.addf %281, %283 : vector<10x10x4xf32>
    %cst_167 = arith.constant -0.49999997 : f32
    %285 = vector.broadcast %cst_167 : f32 to vector<10x10x4xf32>
    %286 = arith.mulf %285, %247 : vector<10x10x4xf32>
    %287 = arith.addf %284, %286 : vector<10x10x4xf32>
    %cst_168 = arith.constant 0.49999997 : f32
    %288 = vector.broadcast %cst_168 : f32 to vector<10x10x4xf32>
    %289 = arith.mulf %288, %241 : vector<10x10x4xf32>
    %cst_169 = arith.constant -0.49999997 : f32
    %290 = vector.broadcast %cst_169 : f32 to vector<10x10x4xf32>
    %291 = arith.mulf %290, %243 : vector<10x10x4xf32>
    %292 = arith.addf %289, %291 : vector<10x10x4xf32>
    %cst_170 = arith.constant -0.49999997 : f32
    %293 = vector.broadcast %cst_170 : f32 to vector<10x10x4xf32>
    %294 = arith.mulf %293, %245 : vector<10x10x4xf32>
    %295 = arith.addf %292, %294 : vector<10x10x4xf32>
    %cst_171 = arith.constant 0.49999997 : f32
    %296 = vector.broadcast %cst_171 : f32 to vector<10x10x4xf32>
    %297 = arith.mulf %296, %247 : vector<10x10x4xf32>
    %298 = arith.addf %295, %297 : vector<10x10x4xf32>
    %299 = vector.extract_strided_slice %251 {offsets = [0, 0, 0], sizes = [1, 1, 4], strides = [1, 1, 1]} : vector<4x9x4xf32> to vector<1x1x4xf32>
    %300 = vector.shape_cast %299 : vector<1x1x4xf32> to vector<4xf32>
    %301 = vector.extract_strided_slice %265 {offsets = [0, 0, 0], sizes = [8, 8, 4], strides = [1, 1, 1]} : vector<10x10x4xf32> to vector<8x8x4xf32>
    %302 = vector.shape_cast %300 : vector<4xf32> to vector<1x1x4xf32>
    %303 = vector.broadcast %302 : vector<1x1x4xf32> to vector<8x8x4xf32>
    %304 = arith.mulf %303, %301 : vector<8x8x4xf32>
    %305 = vector.extract_strided_slice %251 {offsets = [0, 1, 0], sizes = [1, 1, 4], strides = [1, 1, 1]} : vector<4x9x4xf32> to vector<1x1x4xf32>
    %306 = vector.shape_cast %305 : vector<1x1x4xf32> to vector<4xf32>
    %307 = vector.extract_strided_slice %265 {offsets = [0, 1, 0], sizes = [8, 8, 4], strides = [1, 1, 1]} : vector<10x10x4xf32> to vector<8x8x4xf32>
    %308 = vector.shape_cast %306 : vector<4xf32> to vector<1x1x4xf32>
    %309 = vector.broadcast %308 : vector<1x1x4xf32> to vector<8x8x4xf32>
    %310 = arith.mulf %309, %307 : vector<8x8x4xf32>
    %311 = arith.addf %304, %310 : vector<8x8x4xf32>
    %312 = vector.extract_strided_slice %251 {offsets = [0, 2, 0], sizes = [1, 1, 4], strides = [1, 1, 1]} : vector<4x9x4xf32> to vector<1x1x4xf32>
    %313 = vector.shape_cast %312 : vector<1x1x4xf32> to vector<4xf32>
    %314 = vector.extract_strided_slice %265 {offsets = [0, 2, 0], sizes = [8, 8, 4], strides = [1, 1, 1]} : vector<10x10x4xf32> to vector<8x8x4xf32>
    %315 = vector.shape_cast %313 : vector<4xf32> to vector<1x1x4xf32>
    %316 = vector.broadcast %315 : vector<1x1x4xf32> to vector<8x8x4xf32>
    %317 = arith.mulf %316, %314 : vector<8x8x4xf32>
    %318 = arith.addf %311, %317 : vector<8x8x4xf32>
    %319 = vector.extract_strided_slice %251 {offsets = [0, 3, 0], sizes = [1, 1, 4], strides = [1, 1, 1]} : vector<4x9x4xf32> to vector<1x1x4xf32>
    %320 = vector.shape_cast %319 : vector<1x1x4xf32> to vector<4xf32>
    %321 = vector.extract_strided_slice %265 {offsets = [1, 0, 0], sizes = [8, 8, 4], strides = [1, 1, 1]} : vector<10x10x4xf32> to vector<8x8x4xf32>
    %322 = vector.shape_cast %320 : vector<4xf32> to vector<1x1x4xf32>
    %323 = vector.broadcast %322 : vector<1x1x4xf32> to vector<8x8x4xf32>
    %324 = arith.mulf %323, %321 : vector<8x8x4xf32>
    %325 = arith.addf %318, %324 : vector<8x8x4xf32>
    %326 = vector.extract_strided_slice %251 {offsets = [0, 4, 0], sizes = [1, 1, 4], strides = [1, 1, 1]} : vector<4x9x4xf32> to vector<1x1x4xf32>
    %327 = vector.shape_cast %326 : vector<1x1x4xf32> to vector<4xf32>
    %328 = vector.extract_strided_slice %265 {offsets = [1, 1, 0], sizes = [8, 8, 4], strides = [1, 1, 1]} : vector<10x10x4xf32> to vector<8x8x4xf32>
    %329 = vector.shape_cast %327 : vector<4xf32> to vector<1x1x4xf32>
    %330 = vector.broadcast %329 : vector<1x1x4xf32> to vector<8x8x4xf32>
    %331 = arith.mulf %330, %328 : vector<8x8x4xf32>
    %332 = arith.addf %325, %331 : vector<8x8x4xf32>
    %333 = vector.extract_strided_slice %251 {offsets = [0, 5, 0], sizes = [1, 1, 4], strides = [1, 1, 1]} : vector<4x9x4xf32> to vector<1x1x4xf32>
    %334 = vector.shape_cast %333 : vector<1x1x4xf32> to vector<4xf32>
    %335 = vector.extract_strided_slice %265 {offsets = [1, 2, 0], sizes = [8, 8, 4], strides = [1, 1, 1]} : vector<10x10x4xf32> to vector<8x8x4xf32>
    %336 = vector.shape_cast %334 : vector<4xf32> to vector<1x1x4xf32>
    %337 = vector.broadcast %336 : vector<1x1x4xf32> to vector<8x8x4xf32>
    %338 = arith.mulf %337, %335 : vector<8x8x4xf32>
    %339 = arith.addf %332, %338 : vector<8x8x4xf32>
    %340 = vector.extract_strided_slice %251 {offsets = [0, 6, 0], sizes = [1, 1, 4], strides = [1, 1, 1]} : vector<4x9x4xf32> to vector<1x1x4xf32>
    %341 = vector.shape_cast %340 : vector<1x1x4xf32> to vector<4xf32>
    %342 = vector.extract_strided_slice %265 {offsets = [2, 0, 0], sizes = [8, 8, 4], strides = [1, 1, 1]} : vector<10x10x4xf32> to vector<8x8x4xf32>
    %343 = vector.shape_cast %341 : vector<4xf32> to vector<1x1x4xf32>
    %344 = vector.broadcast %343 : vector<1x1x4xf32> to vector<8x8x4xf32>
    %345 = arith.mulf %344, %342 : vector<8x8x4xf32>
    %346 = arith.addf %339, %345 : vector<8x8x4xf32>
    %347 = vector.extract_strided_slice %251 {offsets = [0, 7, 0], sizes = [1, 1, 4], strides = [1, 1, 1]} : vector<4x9x4xf32> to vector<1x1x4xf32>
    %348 = vector.shape_cast %347 : vector<1x1x4xf32> to vector<4xf32>
    %349 = vector.extract_strided_slice %265 {offsets = [2, 1, 0], sizes = [8, 8, 4], strides = [1, 1, 1]} : vector<10x10x4xf32> to vector<8x8x4xf32>
    %350 = vector.shape_cast %348 : vector<4xf32> to vector<1x1x4xf32>
    %351 = vector.broadcast %350 : vector<1x1x4xf32> to vector<8x8x4xf32>
    %352 = arith.mulf %351, %349 : vector<8x8x4xf32>
    %353 = arith.addf %346, %352 : vector<8x8x4xf32>
    %354 = vector.extract_strided_slice %251 {offsets = [0, 8, 0], sizes = [1, 1, 4], strides = [1, 1, 1]} : vector<4x9x4xf32> to vector<1x1x4xf32>
    %355 = vector.shape_cast %354 : vector<1x1x4xf32> to vector<4xf32>
    %356 = vector.extract_strided_slice %265 {offsets = [2, 2, 0], sizes = [8, 8, 4], strides = [1, 1, 1]} : vector<10x10x4xf32> to vector<8x8x4xf32>
    %357 = vector.shape_cast %355 : vector<4xf32> to vector<1x1x4xf32>
    %358 = vector.broadcast %357 : vector<1x1x4xf32> to vector<8x8x4xf32>
    %359 = arith.mulf %358, %356 : vector<8x8x4xf32>
    %360 = arith.addf %353, %359 : vector<8x8x4xf32>
    %361 = vector.extract_strided_slice %252 {offsets = [0, 0], sizes = [1, 4], strides = [1, 1]} : vector<4x4xf32> to vector<1x4xf32>
    %362 = vector.shape_cast %361 : vector<1x4xf32> to vector<4xf32>
    %363 = vector.shape_cast %362 : vector<4xf32> to vector<1x1x4xf32>
    %364 = vector.broadcast %363 : vector<1x1x4xf32> to vector<8x8x4xf32>
    %365 = arith.mulf %360, %364 : vector<8x8x4xf32>
    %366 = vector.extract_strided_slice %251 {offsets = [1, 0, 0], sizes = [1, 1, 4], strides = [1, 1, 1]} : vector<4x9x4xf32> to vector<1x1x4xf32>
    %367 = vector.shape_cast %366 : vector<1x1x4xf32> to vector<4xf32>
    %368 = vector.extract_strided_slice %276 {offsets = [0, 0, 0], sizes = [8, 8, 4], strides = [1, 1, 1]} : vector<10x10x4xf32> to vector<8x8x4xf32>
    %369 = vector.shape_cast %367 : vector<4xf32> to vector<1x1x4xf32>
    %370 = vector.broadcast %369 : vector<1x1x4xf32> to vector<8x8x4xf32>
    %371 = arith.mulf %370, %368 : vector<8x8x4xf32>
    %372 = vector.extract_strided_slice %251 {offsets = [1, 1, 0], sizes = [1, 1, 4], strides = [1, 1, 1]} : vector<4x9x4xf32> to vector<1x1x4xf32>
    %373 = vector.shape_cast %372 : vector<1x1x4xf32> to vector<4xf32>
    %374 = vector.extract_strided_slice %276 {offsets = [0, 1, 0], sizes = [8, 8, 4], strides = [1, 1, 1]} : vector<10x10x4xf32> to vector<8x8x4xf32>
    %375 = vector.shape_cast %373 : vector<4xf32> to vector<1x1x4xf32>
    %376 = vector.broadcast %375 : vector<1x1x4xf32> to vector<8x8x4xf32>
    %377 = arith.mulf %376, %374 : vector<8x8x4xf32>
    %378 = arith.addf %371, %377 : vector<8x8x4xf32>
    %379 = vector.extract_strided_slice %251 {offsets = [1, 2, 0], sizes = [1, 1, 4], strides = [1, 1, 1]} : vector<4x9x4xf32> to vector<1x1x4xf32>
    %380 = vector.shape_cast %379 : vector<1x1x4xf32> to vector<4xf32>
    %381 = vector.extract_strided_slice %276 {offsets = [0, 2, 0], sizes = [8, 8, 4], strides = [1, 1, 1]} : vector<10x10x4xf32> to vector<8x8x4xf32>
    %382 = vector.shape_cast %380 : vector<4xf32> to vector<1x1x4xf32>
    %383 = vector.broadcast %382 : vector<1x1x4xf32> to vector<8x8x4xf32>
    %384 = arith.mulf %383, %381 : vector<8x8x4xf32>
    %385 = arith.addf %378, %384 : vector<8x8x4xf32>
    %386 = vector.extract_strided_slice %251 {offsets = [1, 3, 0], sizes = [1, 1, 4], strides = [1, 1, 1]} : vector<4x9x4xf32> to vector<1x1x4xf32>
    %387 = vector.shape_cast %386 : vector<1x1x4xf32> to vector<4xf32>
    %388 = vector.extract_strided_slice %276 {offsets = [1, 0, 0], sizes = [8, 8, 4], strides = [1, 1, 1]} : vector<10x10x4xf32> to vector<8x8x4xf32>
    %389 = vector.shape_cast %387 : vector<4xf32> to vector<1x1x4xf32>
    %390 = vector.broadcast %389 : vector<1x1x4xf32> to vector<8x8x4xf32>
    %391 = arith.mulf %390, %388 : vector<8x8x4xf32>
    %392 = arith.addf %385, %391 : vector<8x8x4xf32>
    %393 = vector.extract_strided_slice %251 {offsets = [1, 4, 0], sizes = [1, 1, 4], strides = [1, 1, 1]} : vector<4x9x4xf32> to vector<1x1x4xf32>
    %394 = vector.shape_cast %393 : vector<1x1x4xf32> to vector<4xf32>
    %395 = vector.extract_strided_slice %276 {offsets = [1, 1, 0], sizes = [8, 8, 4], strides = [1, 1, 1]} : vector<10x10x4xf32> to vector<8x8x4xf32>
    %396 = vector.shape_cast %394 : vector<4xf32> to vector<1x1x4xf32>
    %397 = vector.broadcast %396 : vector<1x1x4xf32> to vector<8x8x4xf32>
    %398 = arith.mulf %397, %395 : vector<8x8x4xf32>
    %399 = arith.addf %392, %398 : vector<8x8x4xf32>
    %400 = vector.extract_strided_slice %251 {offsets = [1, 5, 0], sizes = [1, 1, 4], strides = [1, 1, 1]} : vector<4x9x4xf32> to vector<1x1x4xf32>
    %401 = vector.shape_cast %400 : vector<1x1x4xf32> to vector<4xf32>
    %402 = vector.extract_strided_slice %276 {offsets = [1, 2, 0], sizes = [8, 8, 4], strides = [1, 1, 1]} : vector<10x10x4xf32> to vector<8x8x4xf32>
    %403 = vector.shape_cast %401 : vector<4xf32> to vector<1x1x4xf32>
    %404 = vector.broadcast %403 : vector<1x1x4xf32> to vector<8x8x4xf32>
    %405 = arith.mulf %404, %402 : vector<8x8x4xf32>
    %406 = arith.addf %399, %405 : vector<8x8x4xf32>
    %407 = vector.extract_strided_slice %251 {offsets = [1, 6, 0], sizes = [1, 1, 4], strides = [1, 1, 1]} : vector<4x9x4xf32> to vector<1x1x4xf32>
    %408 = vector.shape_cast %407 : vector<1x1x4xf32> to vector<4xf32>
    %409 = vector.extract_strided_slice %276 {offsets = [2, 0, 0], sizes = [8, 8, 4], strides = [1, 1, 1]} : vector<10x10x4xf32> to vector<8x8x4xf32>
    %410 = vector.shape_cast %408 : vector<4xf32> to vector<1x1x4xf32>
    %411 = vector.broadcast %410 : vector<1x1x4xf32> to vector<8x8x4xf32>
    %412 = arith.mulf %411, %409 : vector<8x8x4xf32>
    %413 = arith.addf %406, %412 : vector<8x8x4xf32>
    %414 = vector.extract_strided_slice %251 {offsets = [1, 7, 0], sizes = [1, 1, 4], strides = [1, 1, 1]} : vector<4x9x4xf32> to vector<1x1x4xf32>
    %415 = vector.shape_cast %414 : vector<1x1x4xf32> to vector<4xf32>
    %416 = vector.extract_strided_slice %276 {offsets = [2, 1, 0], sizes = [8, 8, 4], strides = [1, 1, 1]} : vector<10x10x4xf32> to vector<8x8x4xf32>
    %417 = vector.shape_cast %415 : vector<4xf32> to vector<1x1x4xf32>
    %418 = vector.broadcast %417 : vector<1x1x4xf32> to vector<8x8x4xf32>
    %419 = arith.mulf %418, %416 : vector<8x8x4xf32>
    %420 = arith.addf %413, %419 : vector<8x8x4xf32>
    %421 = vector.extract_strided_slice %251 {offsets = [1, 8, 0], sizes = [1, 1, 4], strides = [1, 1, 1]} : vector<4x9x4xf32> to vector<1x1x4xf32>
    %422 = vector.shape_cast %421 : vector<1x1x4xf32> to vector<4xf32>
    %423 = vector.extract_strided_slice %276 {offsets = [2, 2, 0], sizes = [8, 8, 4], strides = [1, 1, 1]} : vector<10x10x4xf32> to vector<8x8x4xf32>
    %424 = vector.shape_cast %422 : vector<4xf32> to vector<1x1x4xf32>
    %425 = vector.broadcast %424 : vector<1x1x4xf32> to vector<8x8x4xf32>
    %426 = arith.mulf %425, %423 : vector<8x8x4xf32>
    %427 = arith.addf %420, %426 : vector<8x8x4xf32>
    %428 = vector.extract_strided_slice %252 {offsets = [1, 0], sizes = [1, 4], strides = [1, 1]} : vector<4x4xf32> to vector<1x4xf32>
    %429 = vector.shape_cast %428 : vector<1x4xf32> to vector<4xf32>
    %430 = vector.shape_cast %429 : vector<4xf32> to vector<1x1x4xf32>
    %431 = vector.broadcast %430 : vector<1x1x4xf32> to vector<8x8x4xf32>
    %432 = arith.mulf %427, %431 : vector<8x8x4xf32>
    %433 = vector.extract_strided_slice %251 {offsets = [2, 0, 0], sizes = [1, 1, 4], strides = [1, 1, 1]} : vector<4x9x4xf32> to vector<1x1x4xf32>
    %434 = vector.shape_cast %433 : vector<1x1x4xf32> to vector<4xf32>
    %435 = vector.extract_strided_slice %287 {offsets = [0, 0, 0], sizes = [8, 8, 4], strides = [1, 1, 1]} : vector<10x10x4xf32> to vector<8x8x4xf32>
    %436 = vector.shape_cast %434 : vector<4xf32> to vector<1x1x4xf32>
    %437 = vector.broadcast %436 : vector<1x1x4xf32> to vector<8x8x4xf32>
    %438 = arith.mulf %437, %435 : vector<8x8x4xf32>
    %439 = vector.extract_strided_slice %251 {offsets = [2, 1, 0], sizes = [1, 1, 4], strides = [1, 1, 1]} : vector<4x9x4xf32> to vector<1x1x4xf32>
    %440 = vector.shape_cast %439 : vector<1x1x4xf32> to vector<4xf32>
    %441 = vector.extract_strided_slice %287 {offsets = [0, 1, 0], sizes = [8, 8, 4], strides = [1, 1, 1]} : vector<10x10x4xf32> to vector<8x8x4xf32>
    %442 = vector.shape_cast %440 : vector<4xf32> to vector<1x1x4xf32>
    %443 = vector.broadcast %442 : vector<1x1x4xf32> to vector<8x8x4xf32>
    %444 = arith.mulf %443, %441 : vector<8x8x4xf32>
    %445 = arith.addf %438, %444 : vector<8x8x4xf32>
    %446 = vector.extract_strided_slice %251 {offsets = [2, 2, 0], sizes = [1, 1, 4], strides = [1, 1, 1]} : vector<4x9x4xf32> to vector<1x1x4xf32>
    %447 = vector.shape_cast %446 : vector<1x1x4xf32> to vector<4xf32>
    %448 = vector.extract_strided_slice %287 {offsets = [0, 2, 0], sizes = [8, 8, 4], strides = [1, 1, 1]} : vector<10x10x4xf32> to vector<8x8x4xf32>
    %449 = vector.shape_cast %447 : vector<4xf32> to vector<1x1x4xf32>
    %450 = vector.broadcast %449 : vector<1x1x4xf32> to vector<8x8x4xf32>
    %451 = arith.mulf %450, %448 : vector<8x8x4xf32>
    %452 = arith.addf %445, %451 : vector<8x8x4xf32>
    %453 = vector.extract_strided_slice %251 {offsets = [2, 3, 0], sizes = [1, 1, 4], strides = [1, 1, 1]} : vector<4x9x4xf32> to vector<1x1x4xf32>
    %454 = vector.shape_cast %453 : vector<1x1x4xf32> to vector<4xf32>
    %455 = vector.extract_strided_slice %287 {offsets = [1, 0, 0], sizes = [8, 8, 4], strides = [1, 1, 1]} : vector<10x10x4xf32> to vector<8x8x4xf32>
    %456 = vector.shape_cast %454 : vector<4xf32> to vector<1x1x4xf32>
    %457 = vector.broadcast %456 : vector<1x1x4xf32> to vector<8x8x4xf32>
    %458 = arith.mulf %457, %455 : vector<8x8x4xf32>
    %459 = arith.addf %452, %458 : vector<8x8x4xf32>
    %460 = vector.extract_strided_slice %251 {offsets = [2, 4, 0], sizes = [1, 1, 4], strides = [1, 1, 1]} : vector<4x9x4xf32> to vector<1x1x4xf32>
    %461 = vector.shape_cast %460 : vector<1x1x4xf32> to vector<4xf32>
    %462 = vector.extract_strided_slice %287 {offsets = [1, 1, 0], sizes = [8, 8, 4], strides = [1, 1, 1]} : vector<10x10x4xf32> to vector<8x8x4xf32>
    %463 = vector.shape_cast %461 : vector<4xf32> to vector<1x1x4xf32>
    %464 = vector.broadcast %463 : vector<1x1x4xf32> to vector<8x8x4xf32>
    %465 = arith.mulf %464, %462 : vector<8x8x4xf32>
    %466 = arith.addf %459, %465 : vector<8x8x4xf32>
    %467 = vector.extract_strided_slice %251 {offsets = [2, 5, 0], sizes = [1, 1, 4], strides = [1, 1, 1]} : vector<4x9x4xf32> to vector<1x1x4xf32>
    %468 = vector.shape_cast %467 : vector<1x1x4xf32> to vector<4xf32>
    %469 = vector.extract_strided_slice %287 {offsets = [1, 2, 0], sizes = [8, 8, 4], strides = [1, 1, 1]} : vector<10x10x4xf32> to vector<8x8x4xf32>
    %470 = vector.shape_cast %468 : vector<4xf32> to vector<1x1x4xf32>
    %471 = vector.broadcast %470 : vector<1x1x4xf32> to vector<8x8x4xf32>
    %472 = arith.mulf %471, %469 : vector<8x8x4xf32>
    %473 = arith.addf %466, %472 : vector<8x8x4xf32>
    %474 = vector.extract_strided_slice %251 {offsets = [2, 6, 0], sizes = [1, 1, 4], strides = [1, 1, 1]} : vector<4x9x4xf32> to vector<1x1x4xf32>
    %475 = vector.shape_cast %474 : vector<1x1x4xf32> to vector<4xf32>
    %476 = vector.extract_strided_slice %287 {offsets = [2, 0, 0], sizes = [8, 8, 4], strides = [1, 1, 1]} : vector<10x10x4xf32> to vector<8x8x4xf32>
    %477 = vector.shape_cast %475 : vector<4xf32> to vector<1x1x4xf32>
    %478 = vector.broadcast %477 : vector<1x1x4xf32> to vector<8x8x4xf32>
    %479 = arith.mulf %478, %476 : vector<8x8x4xf32>
    %480 = arith.addf %473, %479 : vector<8x8x4xf32>
    %481 = vector.extract_strided_slice %251 {offsets = [2, 7, 0], sizes = [1, 1, 4], strides = [1, 1, 1]} : vector<4x9x4xf32> to vector<1x1x4xf32>
    %482 = vector.shape_cast %481 : vector<1x1x4xf32> to vector<4xf32>
    %483 = vector.extract_strided_slice %287 {offsets = [2, 1, 0], sizes = [8, 8, 4], strides = [1, 1, 1]} : vector<10x10x4xf32> to vector<8x8x4xf32>
    %484 = vector.shape_cast %482 : vector<4xf32> to vector<1x1x4xf32>
    %485 = vector.broadcast %484 : vector<1x1x4xf32> to vector<8x8x4xf32>
    %486 = arith.mulf %485, %483 : vector<8x8x4xf32>
    %487 = arith.addf %480, %486 : vector<8x8x4xf32>
    %488 = vector.extract_strided_slice %251 {offsets = [2, 8, 0], sizes = [1, 1, 4], strides = [1, 1, 1]} : vector<4x9x4xf32> to vector<1x1x4xf32>
    %489 = vector.shape_cast %488 : vector<1x1x4xf32> to vector<4xf32>
    %490 = vector.extract_strided_slice %287 {offsets = [2, 2, 0], sizes = [8, 8, 4], strides = [1, 1, 1]} : vector<10x10x4xf32> to vector<8x8x4xf32>
    %491 = vector.shape_cast %489 : vector<4xf32> to vector<1x1x4xf32>
    %492 = vector.broadcast %491 : vector<1x1x4xf32> to vector<8x8x4xf32>
    %493 = arith.mulf %492, %490 : vector<8x8x4xf32>
    %494 = arith.addf %487, %493 : vector<8x8x4xf32>
    %495 = vector.extract_strided_slice %252 {offsets = [2, 0], sizes = [1, 4], strides = [1, 1]} : vector<4x4xf32> to vector<1x4xf32>
    %496 = vector.shape_cast %495 : vector<1x4xf32> to vector<4xf32>
    %497 = vector.shape_cast %496 : vector<4xf32> to vector<1x1x4xf32>
    %498 = vector.broadcast %497 : vector<1x1x4xf32> to vector<8x8x4xf32>
    %499 = arith.mulf %494, %498 : vector<8x8x4xf32>
    %500 = vector.extract_strided_slice %251 {offsets = [3, 0, 0], sizes = [1, 1, 4], strides = [1, 1, 1]} : vector<4x9x4xf32> to vector<1x1x4xf32>
    %501 = vector.shape_cast %500 : vector<1x1x4xf32> to vector<4xf32>
    %502 = vector.extract_strided_slice %298 {offsets = [0, 0, 0], sizes = [8, 8, 4], strides = [1, 1, 1]} : vector<10x10x4xf32> to vector<8x8x4xf32>
    %503 = vector.shape_cast %501 : vector<4xf32> to vector<1x1x4xf32>
    %504 = vector.broadcast %503 : vector<1x1x4xf32> to vector<8x8x4xf32>
    %505 = arith.mulf %504, %502 : vector<8x8x4xf32>
    %506 = vector.extract_strided_slice %251 {offsets = [3, 1, 0], sizes = [1, 1, 4], strides = [1, 1, 1]} : vector<4x9x4xf32> to vector<1x1x4xf32>
    %507 = vector.shape_cast %506 : vector<1x1x4xf32> to vector<4xf32>
    %508 = vector.extract_strided_slice %298 {offsets = [0, 1, 0], sizes = [8, 8, 4], strides = [1, 1, 1]} : vector<10x10x4xf32> to vector<8x8x4xf32>
    %509 = vector.shape_cast %507 : vector<4xf32> to vector<1x1x4xf32>
    %510 = vector.broadcast %509 : vector<1x1x4xf32> to vector<8x8x4xf32>
    %511 = arith.mulf %510, %508 : vector<8x8x4xf32>
    %512 = arith.addf %505, %511 : vector<8x8x4xf32>
    %513 = vector.extract_strided_slice %251 {offsets = [3, 2, 0], sizes = [1, 1, 4], strides = [1, 1, 1]} : vector<4x9x4xf32> to vector<1x1x4xf32>
    %514 = vector.shape_cast %513 : vector<1x1x4xf32> to vector<4xf32>
    %515 = vector.extract_strided_slice %298 {offsets = [0, 2, 0], sizes = [8, 8, 4], strides = [1, 1, 1]} : vector<10x10x4xf32> to vector<8x8x4xf32>
    %516 = vector.shape_cast %514 : vector<4xf32> to vector<1x1x4xf32>
    %517 = vector.broadcast %516 : vector<1x1x4xf32> to vector<8x8x4xf32>
    %518 = arith.mulf %517, %515 : vector<8x8x4xf32>
    %519 = arith.addf %512, %518 : vector<8x8x4xf32>
    %520 = vector.extract_strided_slice %251 {offsets = [3, 3, 0], sizes = [1, 1, 4], strides = [1, 1, 1]} : vector<4x9x4xf32> to vector<1x1x4xf32>
    %521 = vector.shape_cast %520 : vector<1x1x4xf32> to vector<4xf32>
    %522 = vector.extract_strided_slice %298 {offsets = [1, 0, 0], sizes = [8, 8, 4], strides = [1, 1, 1]} : vector<10x10x4xf32> to vector<8x8x4xf32>
    %523 = vector.shape_cast %521 : vector<4xf32> to vector<1x1x4xf32>
    %524 = vector.broadcast %523 : vector<1x1x4xf32> to vector<8x8x4xf32>
    %525 = arith.mulf %524, %522 : vector<8x8x4xf32>
    %526 = arith.addf %519, %525 : vector<8x8x4xf32>
    %527 = vector.extract_strided_slice %251 {offsets = [3, 4, 0], sizes = [1, 1, 4], strides = [1, 1, 1]} : vector<4x9x4xf32> to vector<1x1x4xf32>
    %528 = vector.shape_cast %527 : vector<1x1x4xf32> to vector<4xf32>
    %529 = vector.extract_strided_slice %298 {offsets = [1, 1, 0], sizes = [8, 8, 4], strides = [1, 1, 1]} : vector<10x10x4xf32> to vector<8x8x4xf32>
    %530 = vector.shape_cast %528 : vector<4xf32> to vector<1x1x4xf32>
    %531 = vector.broadcast %530 : vector<1x1x4xf32> to vector<8x8x4xf32>
    %532 = arith.mulf %531, %529 : vector<8x8x4xf32>
    %533 = arith.addf %526, %532 : vector<8x8x4xf32>
    %534 = vector.extract_strided_slice %251 {offsets = [3, 5, 0], sizes = [1, 1, 4], strides = [1, 1, 1]} : vector<4x9x4xf32> to vector<1x1x4xf32>
    %535 = vector.shape_cast %534 : vector<1x1x4xf32> to vector<4xf32>
    %536 = vector.extract_strided_slice %298 {offsets = [1, 2, 0], sizes = [8, 8, 4], strides = [1, 1, 1]} : vector<10x10x4xf32> to vector<8x8x4xf32>
    %537 = vector.shape_cast %535 : vector<4xf32> to vector<1x1x4xf32>
    %538 = vector.broadcast %537 : vector<1x1x4xf32> to vector<8x8x4xf32>
    %539 = arith.mulf %538, %536 : vector<8x8x4xf32>
    %540 = arith.addf %533, %539 : vector<8x8x4xf32>
    %541 = vector.extract_strided_slice %251 {offsets = [3, 6, 0], sizes = [1, 1, 4], strides = [1, 1, 1]} : vector<4x9x4xf32> to vector<1x1x4xf32>
    %542 = vector.shape_cast %541 : vector<1x1x4xf32> to vector<4xf32>
    %543 = vector.extract_strided_slice %298 {offsets = [2, 0, 0], sizes = [8, 8, 4], strides = [1, 1, 1]} : vector<10x10x4xf32> to vector<8x8x4xf32>
    %544 = vector.shape_cast %542 : vector<4xf32> to vector<1x1x4xf32>
    %545 = vector.broadcast %544 : vector<1x1x4xf32> to vector<8x8x4xf32>
    %546 = arith.mulf %545, %543 : vector<8x8x4xf32>
    %547 = arith.addf %540, %546 : vector<8x8x4xf32>
    %548 = vector.extract_strided_slice %251 {offsets = [3, 7, 0], sizes = [1, 1, 4], strides = [1, 1, 1]} : vector<4x9x4xf32> to vector<1x1x4xf32>
    %549 = vector.shape_cast %548 : vector<1x1x4xf32> to vector<4xf32>
    %550 = vector.extract_strided_slice %298 {offsets = [2, 1, 0], sizes = [8, 8, 4], strides = [1, 1, 1]} : vector<10x10x4xf32> to vector<8x8x4xf32>
    %551 = vector.shape_cast %549 : vector<4xf32> to vector<1x1x4xf32>
    %552 = vector.broadcast %551 : vector<1x1x4xf32> to vector<8x8x4xf32>
    %553 = arith.mulf %552, %550 : vector<8x8x4xf32>
    %554 = arith.addf %547, %553 : vector<8x8x4xf32>
    %555 = vector.extract_strided_slice %251 {offsets = [3, 8, 0], sizes = [1, 1, 4], strides = [1, 1, 1]} : vector<4x9x4xf32> to vector<1x1x4xf32>
    %556 = vector.shape_cast %555 : vector<1x1x4xf32> to vector<4xf32>
    %557 = vector.extract_strided_slice %298 {offsets = [2, 2, 0], sizes = [8, 8, 4], strides = [1, 1, 1]} : vector<10x10x4xf32> to vector<8x8x4xf32>
    %558 = vector.shape_cast %556 : vector<4xf32> to vector<1x1x4xf32>
    %559 = vector.broadcast %558 : vector<1x1x4xf32> to vector<8x8x4xf32>
    %560 = arith.mulf %559, %557 : vector<8x8x4xf32>
    %561 = arith.addf %554, %560 : vector<8x8x4xf32>
    %562 = vector.extract_strided_slice %252 {offsets = [3, 0], sizes = [1, 4], strides = [1, 1]} : vector<4x4xf32> to vector<1x4xf32>
    %563 = vector.shape_cast %562 : vector<1x4xf32> to vector<4xf32>
    %564 = vector.shape_cast %563 : vector<4xf32> to vector<1x1x4xf32>
    %565 = vector.broadcast %564 : vector<1x1x4xf32> to vector<8x8x4xf32>
    %566 = arith.mulf %561, %565 : vector<8x8x4xf32>
    %567 = vector.extract_strided_slice %247 {offsets = [0, 0, 0], sizes = [8, 8, 4], strides = [1, 1, 1]} : vector<10x10x4xf32> to vector<8x8x4xf32>
    %568 = vector.extract_strided_slice %245 {offsets = [0, 1, 0], sizes = [8, 8, 4], strides = [1, 1, 1]} : vector<10x10x4xf32> to vector<8x8x4xf32>
    %569 = vector.extract_strided_slice %247 {offsets = [0, 1, 0], sizes = [8, 8, 4], strides = [1, 1, 1]} : vector<10x10x4xf32> to vector<8x8x4xf32>
    %570 = vector.extract_strided_slice %245 {offsets = [0, 2, 0], sizes = [8, 8, 4], strides = [1, 1, 1]} : vector<10x10x4xf32> to vector<8x8x4xf32>
    %571 = vector.extract_strided_slice %243 {offsets = [1, 0, 0], sizes = [8, 8, 4], strides = [1, 1, 1]} : vector<10x10x4xf32> to vector<8x8x4xf32>
    %572 = vector.extract_strided_slice %241 {offsets = [1, 1, 0], sizes = [8, 8, 4], strides = [1, 1, 1]} : vector<10x10x4xf32> to vector<8x8x4xf32>
    %573 = vector.extract_strided_slice %243 {offsets = [1, 1, 0], sizes = [8, 8, 4], strides = [1, 1, 1]} : vector<10x10x4xf32> to vector<8x8x4xf32>
    %574 = vector.extract_strided_slice %241 {offsets = [1, 2, 0], sizes = [8, 8, 4], strides = [1, 1, 1]} : vector<10x10x4xf32> to vector<8x8x4xf32>
    %575 = vector.extract_strided_slice %247 {offsets = [1, 0, 0], sizes = [8, 8, 4], strides = [1, 1, 1]} : vector<10x10x4xf32> to vector<8x8x4xf32>
    %576 = vector.extract_strided_slice %245 {offsets = [1, 1, 0], sizes = [8, 8, 4], strides = [1, 1, 1]} : vector<10x10x4xf32> to vector<8x8x4xf32>
    %577 = vector.extract_strided_slice %247 {offsets = [1, 1, 0], sizes = [8, 8, 4], strides = [1, 1, 1]} : vector<10x10x4xf32> to vector<8x8x4xf32>
    %578 = vector.extract_strided_slice %245 {offsets = [1, 2, 0], sizes = [8, 8, 4], strides = [1, 1, 1]} : vector<10x10x4xf32> to vector<8x8x4xf32>
    %579 = vector.extract_strided_slice %243 {offsets = [2, 0, 0], sizes = [8, 8, 4], strides = [1, 1, 1]} : vector<10x10x4xf32> to vector<8x8x4xf32>
    %580 = vector.extract_strided_slice %241 {offsets = [2, 1, 0], sizes = [8, 8, 4], strides = [1, 1, 1]} : vector<10x10x4xf32> to vector<8x8x4xf32>
    %581 = vector.extract_strided_slice %243 {offsets = [2, 1, 0], sizes = [8, 8, 4], strides = [1, 1, 1]} : vector<10x10x4xf32> to vector<8x8x4xf32>
    %582 = vector.extract_strided_slice %241 {offsets = [2, 2, 0], sizes = [8, 8, 4], strides = [1, 1, 1]} : vector<10x10x4xf32> to vector<8x8x4xf32>
    %583 = vector.extract_strided_slice %248 {offsets = [0, 0], sizes = [1, 4], strides = [1, 1]} : vector<9x4xf32> to vector<1x4xf32>
    %584 = vector.shape_cast %583 : vector<1x4xf32> to vector<4xf32>
    %585 = vector.shape_cast %584 : vector<4xf32> to vector<1x1x4xf32>
    %586 = vector.broadcast %585 : vector<1x1x4xf32> to vector<8x8x4xf32>
    %587 = arith.mulf %586, %567 : vector<8x8x4xf32>
    %588 = vector.extract_strided_slice %248 {offsets = [1, 0], sizes = [1, 4], strides = [1, 1]} : vector<9x4xf32> to vector<1x4xf32>
    %589 = vector.shape_cast %588 : vector<1x4xf32> to vector<4xf32>
    %590 = vector.shape_cast %589 : vector<4xf32> to vector<1x1x4xf32>
    %591 = vector.broadcast %590 : vector<1x1x4xf32> to vector<8x8x4xf32>
    %592 = arith.mulf %591, %568 : vector<8x8x4xf32>
    %593 = arith.addf %587, %592 : vector<8x8x4xf32>
    %594 = vector.extract_strided_slice %248 {offsets = [2, 0], sizes = [1, 4], strides = [1, 1]} : vector<9x4xf32> to vector<1x4xf32>
    %595 = vector.shape_cast %594 : vector<1x4xf32> to vector<4xf32>
    %596 = vector.shape_cast %595 : vector<4xf32> to vector<1x1x4xf32>
    %597 = vector.broadcast %596 : vector<1x1x4xf32> to vector<8x8x4xf32>
    %598 = arith.mulf %597, %569 : vector<8x8x4xf32>
    %599 = arith.addf %593, %598 : vector<8x8x4xf32>
    %600 = vector.extract_strided_slice %248 {offsets = [3, 0], sizes = [1, 4], strides = [1, 1]} : vector<9x4xf32> to vector<1x4xf32>
    %601 = vector.shape_cast %600 : vector<1x4xf32> to vector<4xf32>
    %602 = vector.shape_cast %601 : vector<4xf32> to vector<1x1x4xf32>
    %603 = vector.broadcast %602 : vector<1x1x4xf32> to vector<8x8x4xf32>
    %604 = arith.mulf %603, %571 : vector<8x8x4xf32>
    %605 = arith.addf %599, %604 : vector<8x8x4xf32>
    %606 = vector.extract_strided_slice %248 {offsets = [4, 0], sizes = [1, 4], strides = [1, 1]} : vector<9x4xf32> to vector<1x4xf32>
    %607 = vector.shape_cast %606 : vector<1x4xf32> to vector<4xf32>
    %608 = vector.shape_cast %607 : vector<4xf32> to vector<1x1x4xf32>
    %609 = vector.broadcast %608 : vector<1x1x4xf32> to vector<8x8x4xf32>
    %610 = arith.mulf %609, %572 : vector<8x8x4xf32>
    %611 = arith.addf %605, %610 : vector<8x8x4xf32>
    %612 = vector.extract_strided_slice %248 {offsets = [5, 0], sizes = [1, 4], strides = [1, 1]} : vector<9x4xf32> to vector<1x4xf32>
    %613 = vector.shape_cast %612 : vector<1x4xf32> to vector<4xf32>
    %614 = vector.shape_cast %613 : vector<4xf32> to vector<1x1x4xf32>
    %615 = vector.broadcast %614 : vector<1x1x4xf32> to vector<8x8x4xf32>
    %616 = arith.mulf %615, %573 : vector<8x8x4xf32>
    %617 = arith.addf %611, %616 : vector<8x8x4xf32>
    %618 = vector.extract_strided_slice %248 {offsets = [6, 0], sizes = [1, 4], strides = [1, 1]} : vector<9x4xf32> to vector<1x4xf32>
    %619 = vector.shape_cast %618 : vector<1x4xf32> to vector<4xf32>
    %620 = vector.shape_cast %619 : vector<4xf32> to vector<1x1x4xf32>
    %621 = vector.broadcast %620 : vector<1x1x4xf32> to vector<8x8x4xf32>
    %622 = arith.mulf %621, %575 : vector<8x8x4xf32>
    %623 = arith.addf %617, %622 : vector<8x8x4xf32>
    %624 = vector.extract_strided_slice %248 {offsets = [7, 0], sizes = [1, 4], strides = [1, 1]} : vector<9x4xf32> to vector<1x4xf32>
    %625 = vector.shape_cast %624 : vector<1x4xf32> to vector<4xf32>
    %626 = vector.shape_cast %625 : vector<4xf32> to vector<1x1x4xf32>
    %627 = vector.broadcast %626 : vector<1x1x4xf32> to vector<8x8x4xf32>
    %628 = arith.mulf %627, %576 : vector<8x8x4xf32>
    %629 = arith.addf %623, %628 : vector<8x8x4xf32>
    %630 = vector.extract_strided_slice %248 {offsets = [8, 0], sizes = [1, 4], strides = [1, 1]} : vector<9x4xf32> to vector<1x4xf32>
    %631 = vector.shape_cast %630 : vector<1x4xf32> to vector<4xf32>
    %632 = vector.shape_cast %631 : vector<4xf32> to vector<1x1x4xf32>
    %633 = vector.broadcast %632 : vector<1x1x4xf32> to vector<8x8x4xf32>
    %634 = arith.mulf %633, %577 : vector<8x8x4xf32>
    %635 = arith.addf %629, %634 : vector<8x8x4xf32>
    %636 = vector.shape_cast %249 : vector<1x4xf32> to vector<1x1x4xf32>
    %637 = vector.broadcast %636 : vector<1x1x4xf32> to vector<8x8x4xf32>
    %638 = arith.addf %635, %637 : vector<8x8x4xf32>
    %639 = vector.shape_cast %250 : vector<1x4xf32> to vector<1x1x4xf32>
    %640 = vector.broadcast %639 : vector<1x1x4xf32> to vector<8x8x4xf32>
    %641 = arith.mulf %638, %640 : vector<8x8x4xf32>
    %cst_172 = arith.constant 0.49999997 : f32
    %642 = vector.broadcast %cst_172 : f32 to vector<8x8x4xf32>
    %643 = arith.mulf %642, %365 : vector<8x8x4xf32>
    %cst_173 = arith.constant 0.49999997 : f32
    %644 = vector.broadcast %cst_173 : f32 to vector<8x8x4xf32>
    %645 = arith.mulf %644, %432 : vector<8x8x4xf32>
    %646 = arith.addf %643, %645 : vector<8x8x4xf32>
    %cst_174 = arith.constant 0.49999997 : f32
    %647 = vector.broadcast %cst_174 : f32 to vector<8x8x4xf32>
    %648 = arith.mulf %647, %499 : vector<8x8x4xf32>
    %649 = arith.addf %646, %648 : vector<8x8x4xf32>
    %cst_175 = arith.constant 0.49999997 : f32
    %650 = vector.broadcast %cst_175 : f32 to vector<8x8x4xf32>
    %651 = arith.mulf %650, %566 : vector<8x8x4xf32>
    %652 = arith.addf %649, %651 : vector<8x8x4xf32>
    %653 = arith.addf %641, %652 : vector<8x8x4xf32>
    %654 = vector.shape_cast %253 : vector<1x4xf32> to vector<1x1x4xf32>
    %655 = vector.broadcast %654 : vector<1x1x4xf32> to vector<8x8x4xf32>
    %656 = arith.mulf %653, %655 : vector<8x8x4xf32>
    %657 = vector.shape_cast %254 : vector<1x4xf32> to vector<1x1x4xf32>
    %658 = vector.broadcast %657 : vector<1x1x4xf32> to vector<8x8x4xf32>
    %659 = arith.addf %656, %658 : vector<8x8x4xf32>
    %660 = arith.addf %659, %23 : vector<8x8x4xf32>
    %cst_176 = arith.constant 0.000000e+00 : f32
    %661 = vector.broadcast %cst_176 : f32 to vector<8x8x4xf32>
    %662 = arith.maximumf %660, %661 : vector<8x8x4xf32>
    %c0_177 = arith.constant 0 : index
    %c0_178 = arith.constant 0 : index
    %c0_179 = arith.constant 0 : index
    %c0_180 = arith.constant 0 : index
    %663 = vector.load %arg11[%c0_177, %c0_178, %c0_179, %c0_180] : memref<4x8x8x4xf32, #tpu.memory_space<vmem>>, vector<1x8x8x4xf32>
    %664 = vector.shape_cast %663 : vector<1x8x8x4xf32> to vector<8x8x4xf32>
    %665 = vector.shape_cast %662 : vector<8x8x4xf32> to vector<1x8x8x4xf32>
    tpu.vector_store %arg11[%c0_177, %c0_178, %c0_179, %c0_180], %665 {strides = array<i32>} : memref<4x8x8x4xf32, #tpu.memory_space<vmem>>, vector<1x8x8x4xf32>,
    %666 = vector.extract_strided_slice %248 {offsets = [0, 0], sizes = [1, 4], strides = [1, 1]} : vector<9x4xf32> to vector<1x4xf32>
    %667 = vector.shape_cast %666 : vector<1x4xf32> to vector<4xf32>
    %668 = vector.shape_cast %667 : vector<4xf32> to vector<1x1x4xf32>
    %669 = vector.broadcast %668 : vector<1x1x4xf32> to vector<8x8x4xf32>
    %670 = arith.mulf %669, %568 : vector<8x8x4xf32>
    %671 = vector.extract_strided_slice %248 {offsets = [1, 0], sizes = [1, 4], strides = [1, 1]} : vector<9x4xf32> to vector<1x4xf32>
    %672 = vector.shape_cast %671 : vector<1x4xf32> to vector<4xf32>
    %673 = vector.shape_cast %672 : vector<4xf32> to vector<1x1x4xf32>
    %674 = vector.broadcast %673 : vector<1x1x4xf32> to vector<8x8x4xf32>
    %675 = arith.mulf %674, %569 : vector<8x8x4xf32>
    %676 = arith.addf %670, %675 : vector<8x8x4xf32>
    %677 = vector.extract_strided_slice %248 {offsets = [2, 0], sizes = [1, 4], strides = [1, 1]} : vector<9x4xf32> to vector<1x4xf32>
    %678 = vector.shape_cast %677 : vector<1x4xf32> to vector<4xf32>
    %679 = vector.shape_cast %678 : vector<4xf32> to vector<1x1x4xf32>
    %680 = vector.broadcast %679 : vector<1x1x4xf32> to vector<8x8x4xf32>
    %681 = arith.mulf %680, %570 : vector<8x8x4xf32>
    %682 = arith.addf %676, %681 : vector<8x8x4xf32>
    %683 = vector.extract_strided_slice %248 {offsets = [3, 0], sizes = [1, 4], strides = [1, 1]} : vector<9x4xf32> to vector<1x4xf32>
    %684 = vector.shape_cast %683 : vector<1x4xf32> to vector<4xf32>
    %685 = vector.shape_cast %684 : vector<4xf32> to vector<1x1x4xf32>
    %686 = vector.broadcast %685 : vector<1x1x4xf32> to vector<8x8x4xf32>
    %687 = arith.mulf %686, %572 : vector<8x8x4xf32>
    %688 = arith.addf %682, %687 : vector<8x8x4xf32>
    %689 = vector.extract_strided_slice %248 {offsets = [4, 0], sizes = [1, 4], strides = [1, 1]} : vector<9x4xf32> to vector<1x4xf32>
    %690 = vector.shape_cast %689 : vector<1x4xf32> to vector<4xf32>
    %691 = vector.shape_cast %690 : vector<4xf32> to vector<1x1x4xf32>
    %692 = vector.broadcast %691 : vector<1x1x4xf32> to vector<8x8x4xf32>
    %693 = arith.mulf %692, %573 : vector<8x8x4xf32>
    %694 = arith.addf %688, %693 : vector<8x8x4xf32>
    %695 = vector.extract_strided_slice %248 {offsets = [5, 0], sizes = [1, 4], strides = [1, 1]} : vector<9x4xf32> to vector<1x4xf32>
    %696 = vector.shape_cast %695 : vector<1x4xf32> to vector<4xf32>
    %697 = vector.shape_cast %696 : vector<4xf32> to vector<1x1x4xf32>
    %698 = vector.broadcast %697 : vector<1x1x4xf32> to vector<8x8x4xf32>
    %699 = arith.mulf %698, %574 : vector<8x8x4xf32>
    %700 = arith.addf %694, %699 : vector<8x8x4xf32>
    %701 = vector.extract_strided_slice %248 {offsets = [6, 0], sizes = [1, 4], strides = [1, 1]} : vector<9x4xf32> to vector<1x4xf32>
    %702 = vector.shape_cast %701 : vector<1x4xf32> to vector<4xf32>
    %703 = vector.shape_cast %702 : vector<4xf32> to vector<1x1x4xf32>
    %704 = vector.broadcast %703 : vector<1x1x4xf32> to vector<8x8x4xf32>
    %705 = arith.mulf %704, %576 : vector<8x8x4xf32>
    %706 = arith.addf %700, %705 : vector<8x8x4xf32>
    %707 = vector.extract_strided_slice %248 {offsets = [7, 0], sizes = [1, 4], strides = [1, 1]} : vector<9x4xf32> to vector<1x4xf32>
    %708 = vector.shape_cast %707 : vector<1x4xf32> to vector<4xf32>
    %709 = vector.shape_cast %708 : vector<4xf32> to vector<1x1x4xf32>
    %710 = vector.broadcast %709 : vector<1x1x4xf32> to vector<8x8x4xf32>
    %711 = arith.mulf %710, %577 : vector<8x8x4xf32>
    %712 = arith.addf %706, %711 : vector<8x8x4xf32>
    %713 = vector.extract_strided_slice %248 {offsets = [8, 0], sizes = [1, 4], strides = [1, 1]} : vector<9x4xf32> to vector<1x4xf32>
    %714 = vector.shape_cast %713 : vector<1x4xf32> to vector<4xf32>
    %715 = vector.shape_cast %714 : vector<4xf32> to vector<1x1x4xf32>
    %716 = vector.broadcast %715 : vector<1x1x4xf32> to vector<8x8x4xf32>
    %717 = arith.mulf %716, %578 : vector<8x8x4xf32>
    %718 = arith.addf %712, %717 : vector<8x8x4xf32>
    %719 = vector.shape_cast %249 : vector<1x4xf32> to vector<1x1x4xf32>
    %720 = vector.broadcast %719 : vector<1x1x4xf32> to vector<8x8x4xf32>
    %721 = arith.addf %718, %720 : vector<8x8x4xf32>
    %722 = vector.shape_cast %250 : vector<1x4xf32> to vector<1x1x4xf32>
    %723 = vector.broadcast %722 : vector<1x1x4xf32> to vector<8x8x4xf32>
    %724 = arith.mulf %721, %723 : vector<8x8x4xf32>
    %cst_181 = arith.constant 0.49999997 : f32
    %725 = vector.broadcast %cst_181 : f32 to vector<8x8x4xf32>
    %726 = arith.mulf %725, %365 : vector<8x8x4xf32>
    %cst_182 = arith.constant 0.49999997 : f32
    %727 = vector.broadcast %cst_182 : f32 to vector<8x8x4xf32>
    %728 = arith.mulf %727, %432 : vector<8x8x4xf32>
    %729 = arith.addf %726, %728 : vector<8x8x4xf32>
    %cst_183 = arith.constant -0.49999997 : f32
    %730 = vector.broadcast %cst_183 : f32 to vector<8x8x4xf32>
    %731 = arith.mulf %730, %499 : vector<8x8x4xf32>
    %732 = arith.addf %729, %731 : vector<8x8x4xf32>
    %cst_184 = arith.constant -0.49999997 : f32
    %733 = vector.broadcast %cst_184 : f32 to vector<8x8x4xf32>
    %734 = arith.mulf %733, %566 : vector<8x8x4xf32>
    %735 = arith.addf %732, %734 : vector<8x8x4xf32>
    %736 = arith.addf %724, %735 : vector<8x8x4xf32>
    %737 = vector.shape_cast %253 : vector<1x4xf32> to vector<1x1x4xf32>
    %738 = vector.broadcast %737 : vector<1x1x4xf32> to vector<8x8x4xf32>
    %739 = arith.mulf %736, %738 : vector<8x8x4xf32>
    %740 = vector.shape_cast %254 : vector<1x4xf32> to vector<1x1x4xf32>
    %741 = vector.broadcast %740 : vector<1x1x4xf32> to vector<8x8x4xf32>
    %742 = arith.addf %739, %741 : vector<8x8x4xf32>
    %743 = arith.addf %742, %27 : vector<8x8x4xf32>
    %cst_185 = arith.constant 0.000000e+00 : f32
    %744 = vector.broadcast %cst_185 : f32 to vector<8x8x4xf32>
    %745 = arith.maximumf %743, %744 : vector<8x8x4xf32>
    %c1_186 = arith.constant 1 : index
    %c0_187 = arith.constant 0 : index
    %c0_188 = arith.constant 0 : index
    %c0_189 = arith.constant 0 : index
    %746 = vector.load %arg11[%c1_186, %c0_187, %c0_188, %c0_189] : memref<4x8x8x4xf32, #tpu.memory_space<vmem>>, vector<1x8x8x4xf32>
    %747 = vector.shape_cast %746 : vector<1x8x8x4xf32> to vector<8x8x4xf32>
    %748 = vector.shape_cast %745 : vector<8x8x4xf32> to vector<1x8x8x4xf32>
    tpu.vector_store %arg11[%c1_186, %c0_187, %c0_188, %c0_189], %748 {strides = array<i32>} : memref<4x8x8x4xf32, #tpu.memory_space<vmem>>, vector<1x8x8x4xf32>,
    %749 = vector.extract_strided_slice %248 {offsets = [0, 0], sizes = [1, 4], strides = [1, 1]} : vector<9x4xf32> to vector<1x4xf32>
    %750 = vector.shape_cast %749 : vector<1x4xf32> to vector<4xf32>
    %751 = vector.shape_cast %750 : vector<4xf32> to vector<1x1x4xf32>
    %752 = vector.broadcast %751 : vector<1x1x4xf32> to vector<8x8x4xf32>
    %753 = arith.mulf %752, %571 : vector<8x8x4xf32>
    %754 = vector.extract_strided_slice %248 {offsets = [1, 0], sizes = [1, 4], strides = [1, 1]} : vector<9x4xf32> to vector<1x4xf32>
    %755 = vector.shape_cast %754 : vector<1x4xf32> to vector<4xf32>
    %756 = vector.shape_cast %755 : vector<4xf32> to vector<1x1x4xf32>
    %757 = vector.broadcast %756 : vector<1x1x4xf32> to vector<8x8x4xf32>
    %758 = arith.mulf %757, %572 : vector<8x8x4xf32>
    %759 = arith.addf %753, %758 : vector<8x8x4xf32>
    %760 = vector.extract_strided_slice %248 {offsets = [2, 0], sizes = [1, 4], strides = [1, 1]} : vector<9x4xf32> to vector<1x4xf32>
    %761 = vector.shape_cast %760 : vector<1x4xf32> to vector<4xf32>
    %762 = vector.shape_cast %761 : vector<4xf32> to vector<1x1x4xf32>
    %763 = vector.broadcast %762 : vector<1x1x4xf32> to vector<8x8x4xf32>
    %764 = arith.mulf %763, %573 : vector<8x8x4xf32>
    %765 = arith.addf %759, %764 : vector<8x8x4xf32>
    %766 = vector.extract_strided_slice %248 {offsets = [3, 0], sizes = [1, 4], strides = [1, 1]} : vector<9x4xf32> to vector<1x4xf32>
    %767 = vector.shape_cast %766 : vector<1x4xf32> to vector<4xf32>
    %768 = vector.shape_cast %767 : vector<4xf32> to vector<1x1x4xf32>
    %769 = vector.broadcast %768 : vector<1x1x4xf32> to vector<8x8x4xf32>
    %770 = arith.mulf %769, %575 : vector<8x8x4xf32>
    %771 = arith.addf %765, %770 : vector<8x8x4xf32>
    %772 = vector.extract_strided_slice %248 {offsets = [4, 0], sizes = [1, 4], strides = [1, 1]} : vector<9x4xf32> to vector<1x4xf32>
    %773 = vector.shape_cast %772 : vector<1x4xf32> to vector<4xf32>
    %774 = vector.shape_cast %773 : vector<4xf32> to vector<1x1x4xf32>
    %775 = vector.broadcast %774 : vector<1x1x4xf32> to vector<8x8x4xf32>
    %776 = arith.mulf %775, %576 : vector<8x8x4xf32>
    %777 = arith.addf %771, %776 : vector<8x8x4xf32>
    %778 = vector.extract_strided_slice %248 {offsets = [5, 0], sizes = [1, 4], strides = [1, 1]} : vector<9x4xf32> to vector<1x4xf32>
    %779 = vector.shape_cast %778 : vector<1x4xf32> to vector<4xf32>
    %780 = vector.shape_cast %779 : vector<4xf32> to vector<1x1x4xf32>
    %781 = vector.broadcast %780 : vector<1x1x4xf32> to vector<8x8x4xf32>
    %782 = arith.mulf %781, %577 : vector<8x8x4xf32>
    %783 = arith.addf %777, %782 : vector<8x8x4xf32>
    %784 = vector.extract_strided_slice %248 {offsets = [6, 0], sizes = [1, 4], strides = [1, 1]} : vector<9x4xf32> to vector<1x4xf32>
    %785 = vector.shape_cast %784 : vector<1x4xf32> to vector<4xf32>
    %786 = vector.shape_cast %785 : vector<4xf32> to vector<1x1x4xf32>
    %787 = vector.broadcast %786 : vector<1x1x4xf32> to vector<8x8x4xf32>
    %788 = arith.mulf %787, %579 : vector<8x8x4xf32>
    %789 = arith.addf %783, %788 : vector<8x8x4xf32>
    %790 = vector.extract_strided_slice %248 {offsets = [7, 0], sizes = [1, 4], strides = [1, 1]} : vector<9x4xf32> to vector<1x4xf32>
    %791 = vector.shape_cast %790 : vector<1x4xf32> to vector<4xf32>
    %792 = vector.shape_cast %791 : vector<4xf32> to vector<1x1x4xf32>
    %793 = vector.broadcast %792 : vector<1x1x4xf32> to vector<8x8x4xf32>
    %794 = arith.mulf %793, %580 : vector<8x8x4xf32>
    %795 = arith.addf %789, %794 : vector<8x8x4xf32>
    %796 = vector.extract_strided_slice %248 {offsets = [8, 0], sizes = [1, 4], strides = [1, 1]} : vector<9x4xf32> to vector<1x4xf32>
    %797 = vector.shape_cast %796 : vector<1x4xf32> to vector<4xf32>
    %798 = vector.shape_cast %797 : vector<4xf32> to vector<1x1x4xf32>
    %799 = vector.broadcast %798 : vector<1x1x4xf32> to vector<8x8x4xf32>
    %800 = arith.mulf %799, %581 : vector<8x8x4xf32>
    %801 = arith.addf %795, %800 : vector<8x8x4xf32>
    %802 = vector.shape_cast %249 : vector<1x4xf32> to vector<1x1x4xf32>
    %803 = vector.broadcast %802 : vector<1x1x4xf32> to vector<8x8x4xf32>
    %804 = arith.addf %801, %803 : vector<8x8x4xf32>
    %805 = vector.shape_cast %250 : vector<1x4xf32> to vector<1x1x4xf32>
    %806 = vector.broadcast %805 : vector<1x1x4xf32> to vector<8x8x4xf32>
    %807 = arith.mulf %804, %806 : vector<8x8x4xf32>
    %cst_190 = arith.constant 0.49999997 : f32
    %808 = vector.broadcast %cst_190 : f32 to vector<8x8x4xf32>
    %809 = arith.mulf %808, %365 : vector<8x8x4xf32>
    %cst_191 = arith.constant -0.49999997 : f32
    %810 = vector.broadcast %cst_191 : f32 to vector<8x8x4xf32>
    %811 = arith.mulf %810, %432 : vector<8x8x4xf32>
    %812 = arith.addf %809, %811 : vector<8x8x4xf32>
    %cst_192 = arith.constant 0.49999997 : f32
    %813 = vector.broadcast %cst_192 : f32 to vector<8x8x4xf32>
    %814 = arith.mulf %813, %499 : vector<8x8x4xf32>
    %815 = arith.addf %812, %814 : vector<8x8x4xf32>
    %cst_193 = arith.constant -0.49999997 : f32
    %816 = vector.broadcast %cst_193 : f32 to vector<8x8x4xf32>
    %817 = arith.mulf %816, %566 : vector<8x8x4xf32>
    %818 = arith.addf %815, %817 : vector<8x8x4xf32>
    %819 = arith.addf %807, %818 : vector<8x8x4xf32>
    %820 = vector.shape_cast %253 : vector<1x4xf32> to vector<1x1x4xf32>
    %821 = vector.broadcast %820 : vector<1x1x4xf32> to vector<8x8x4xf32>
    %822 = arith.mulf %819, %821 : vector<8x8x4xf32>
    %823 = vector.shape_cast %254 : vector<1x4xf32> to vector<1x1x4xf32>
    %824 = vector.broadcast %823 : vector<1x1x4xf32> to vector<8x8x4xf32>
    %825 = arith.addf %822, %824 : vector<8x8x4xf32>
    %826 = arith.addf %825, %39 : vector<8x8x4xf32>
    %cst_194 = arith.constant 0.000000e+00 : f32
    %827 = vector.broadcast %cst_194 : f32 to vector<8x8x4xf32>
    %828 = arith.maximumf %826, %827 : vector<8x8x4xf32>
    %c2_195 = arith.constant 2 : index
    %c0_196 = arith.constant 0 : index
    %c0_197 = arith.constant 0 : index
    %c0_198 = arith.constant 0 : index
    %829 = vector.load %arg11[%c2_195, %c0_196, %c0_197, %c0_198] : memref<4x8x8x4xf32, #tpu.memory_space<vmem>>, vector<1x8x8x4xf32>
    %830 = vector.shape_cast %829 : vector<1x8x8x4xf32> to vector<8x8x4xf32>
    %831 = vector.shape_cast %828 : vector<8x8x4xf32> to vector<1x8x8x4xf32>
    tpu.vector_store %arg11[%c2_195, %c0_196, %c0_197, %c0_198], %831 {strides = array<i32>} : memref<4x8x8x4xf32, #tpu.memory_space<vmem>>, vector<1x8x8x4xf32>,
    %832 = vector.extract_strided_slice %248 {offsets = [0, 0], sizes = [1, 4], strides = [1, 1]} : vector<9x4xf32> to vector<1x4xf32>
    %833 = vector.shape_cast %832 : vector<1x4xf32> to vector<4xf32>
    %834 = vector.shape_cast %833 : vector<4xf32> to vector<1x1x4xf32>
    %835 = vector.broadcast %834 : vector<1x1x4xf32> to vector<8x8x4xf32>
    %836 = arith.mulf %835, %572 : vector<8x8x4xf32>
    %837 = vector.extract_strided_slice %248 {offsets = [1, 0], sizes = [1, 4], strides = [1, 1]} : vector<9x4xf32> to vector<1x4xf32>
    %838 = vector.shape_cast %837 : vector<1x4xf32> to vector<4xf32>
    %839 = vector.shape_cast %838 : vector<4xf32> to vector<1x1x4xf32>
    %840 = vector.broadcast %839 : vector<1x1x4xf32> to vector<8x8x4xf32>
    %841 = arith.mulf %840, %573 : vector<8x8x4xf32>
    %842 = arith.addf %836, %841 : vector<8x8x4xf32>
    %843 = vector.extract_strided_slice %248 {offsets = [2, 0], sizes = [1, 4], strides = [1, 1]} : vector<9x4xf32> to vector<1x4xf32>
    %844 = vector.shape_cast %843 : vector<1x4xf32> to vector<4xf32>
    %845 = vector.shape_cast %844 : vector<4xf32> to vector<1x1x4xf32>
    %846 = vector.broadcast %845 : vector<1x1x4xf32> to vector<8x8x4xf32>
    %847 = arith.mulf %846, %574 : vector<8x8x4xf32>
    %848 = arith.addf %842, %847 : vector<8x8x4xf32>
    %849 = vector.extract_strided_slice %248 {offsets = [3, 0], sizes = [1, 4], strides = [1, 1]} : vector<9x4xf32> to vector<1x4xf32>
    %850 = vector.shape_cast %849 : vector<1x4xf32> to vector<4xf32>
    %851 = vector.shape_cast %850 : vector<4xf32> to vector<1x1x4xf32>
    %852 = vector.broadcast %851 : vector<1x1x4xf32> to vector<8x8x4xf32>
    %853 = arith.mulf %852, %576 : vector<8x8x4xf32>
    %854 = arith.addf %848, %853 : vector<8x8x4xf32>
    %855 = vector.extract_strided_slice %248 {offsets = [4, 0], sizes = [1, 4], strides = [1, 1]} : vector<9x4xf32> to vector<1x4xf32>
    %856 = vector.shape_cast %855 : vector<1x4xf32> to vector<4xf32>
    %857 = vector.shape_cast %856 : vector<4xf32> to vector<1x1x4xf32>
    %858 = vector.broadcast %857 : vector<1x1x4xf32> to vector<8x8x4xf32>
    %859 = arith.mulf %858, %577 : vector<8x8x4xf32>
    %860 = arith.addf %854, %859 : vector<8x8x4xf32>
    %861 = vector.extract_strided_slice %248 {offsets = [5, 0], sizes = [1, 4], strides = [1, 1]} : vector<9x4xf32> to vector<1x4xf32>
    %862 = vector.shape_cast %861 : vector<1x4xf32> to vector<4xf32>
    %863 = vector.shape_cast %862 : vector<4xf32> to vector<1x1x4xf32>
    %864 = vector.broadcast %863 : vector<1x1x4xf32> to vector<8x8x4xf32>
    %865 = arith.mulf %864, %578 : vector<8x8x4xf32>
    %866 = arith.addf %860, %865 : vector<8x8x4xf32>
    %867 = vector.extract_strided_slice %248 {offsets = [6, 0], sizes = [1, 4], strides = [1, 1]} : vector<9x4xf32> to vector<1x4xf32>
    %868 = vector.shape_cast %867 : vector<1x4xf32> to vector<4xf32>
    %869 = vector.shape_cast %868 : vector<4xf32> to vector<1x1x4xf32>
    %870 = vector.broadcast %869 : vector<1x1x4xf32> to vector<8x8x4xf32>
    %871 = arith.mulf %870, %580 : vector<8x8x4xf32>
    %872 = arith.addf %866, %871 : vector<8x8x4xf32>
    %873 = vector.extract_strided_slice %248 {offsets = [7, 0], sizes = [1, 4], strides = [1, 1]} : vector<9x4xf32> to vector<1x4xf32>
    %874 = vector.shape_cast %873 : vector<1x4xf32> to vector<4xf32>
    %875 = vector.shape_cast %874 : vector<4xf32> to vector<1x1x4xf32>
    %876 = vector.broadcast %875 : vector<1x1x4xf32> to vector<8x8x4xf32>
    %877 = arith.mulf %876, %581 : vector<8x8x4xf32>
    %878 = arith.addf %872, %877 : vector<8x8x4xf32>
    %879 = vector.extract_strided_slice %248 {offsets = [8, 0], sizes = [1, 4], strides = [1, 1]} : vector<9x4xf32> to vector<1x4xf32>
    %880 = vector.shape_cast %879 : vector<1x4xf32> to vector<4xf32>
    %881 = vector.shape_cast %880 : vector<4xf32> to vector<1x1x4xf32>
    %882 = vector.broadcast %881 : vector<1x1x4xf32> to vector<8x8x4xf32>
    %883 = arith.mulf %882, %582 : vector<8x8x4xf32>
    %884 = arith.addf %878, %883 : vector<8x8x4xf32>
    %885 = vector.shape_cast %249 : vector<1x4xf32> to vector<1x1x4xf32>
    %886 = vector.broadcast %885 : vector<1x1x4xf32> to vector<8x8x4xf32>
    %887 = arith.addf %884, %886 : vector<8x8x4xf32>
    %888 = vector.shape_cast %250 : vector<1x4xf32> to vector<1x1x4xf32>
    %889 = vector.broadcast %888 : vector<1x1x4xf32> to vector<8x8x4xf32>
    %890 = arith.mulf %887, %889 : vector<8x8x4xf32>
    %cst_199 = arith.constant 0.49999997 : f32
    %891 = vector.broadcast %cst_199 : f32 to vector<8x8x4xf32>
    %892 = arith.mulf %891, %365 : vector<8x8x4xf32>
    %cst_200 = arith.constant -0.49999997 : f32
    %893 = vector.broadcast %cst_200 : f32 to vector<8x8x4xf32>
    %894 = arith.mulf %893, %432 : vector<8x8x4xf32>
    %895 = arith.addf %892, %894 : vector<8x8x4xf32>
    %cst_201 = arith.constant -0.49999997 : f32
    %896 = vector.broadcast %cst_201 : f32 to vector<8x8x4xf32>
    %897 = arith.mulf %896, %499 : vector<8x8x4xf32>
    %898 = arith.addf %895, %897 : vector<8x8x4xf32>
    %cst_202 = arith.constant 0.49999997 : f32
    %899 = vector.broadcast %cst_202 : f32 to vector<8x8x4xf32>
    %900 = arith.mulf %899, %566 : vector<8x8x4xf32>
    %901 = arith.addf %898, %900 : vector<8x8x4xf32>
    %902 = arith.addf %890, %901 : vector<8x8x4xf32>
    %903 = vector.shape_cast %253 : vector<1x4xf32> to vector<1x1x4xf32>
    %904 = vector.broadcast %903 : vector<1x1x4xf32> to vector<8x8x4xf32>
    %905 = arith.mulf %902, %904 : vector<8x8x4xf32>
    %906 = vector.shape_cast %254 : vector<1x4xf32> to vector<1x1x4xf32>
    %907 = vector.broadcast %906 : vector<1x1x4xf32> to vector<8x8x4xf32>
    %908 = arith.addf %905, %907 : vector<8x8x4xf32>
    %909 = arith.addf %908, %43 : vector<8x8x4xf32>
    %cst_203 = arith.constant 0.000000e+00 : f32
    %910 = vector.broadcast %cst_203 : f32 to vector<8x8x4xf32>
    %911 = arith.maximumf %909, %910 : vector<8x8x4xf32>
    %c3_204 = arith.constant 3 : index
    %c0_205 = arith.constant 0 : index
    %c0_206 = arith.constant 0 : index
    %c0_207 = arith.constant 0 : index
    %912 = vector.load %arg11[%c3_204, %c0_205, %c0_206, %c0_207] : memref<4x8x8x4xf32, #tpu.memory_space<vmem>>, vector<1x8x8x4xf32>
    %913 = vector.shape_cast %912 : vector<1x8x8x4xf32> to vector<8x8x4xf32>
    %914 = vector.shape_cast %911 : vector<8x8x4xf32> to vector<1x8x8x4xf32>
    tpu.vector_store %arg11[%c3_204, %c0_205, %c0_206, %c0_207], %914 {strides = array<i32>} : memref<4x8x8x4xf32, #tpu.memory_space<vmem>>, vector<1x8x8x4xf32>,
    return
  }
  func.func @transform_0(%arg0: i32) -> (i32, i32, i32, i32) {
    %c0_i32 = arith.constant 0 : i32
    %c0_i32_0 = arith.constant 0 : i32
    %c0_i32_1 = arith.constant 0 : i32
    %c0_i32_2 = arith.constant 0 : i32
    return %arg0, %c0_i32, %c0_i32_0, %c0_i32_1 : i32, i32, i32, i32
  }
  func.func @transform_1(%arg0: i32) -> (i32, i32, i32) {
    %c0_i32 = arith.constant 0 : i32
    %c0_i32_0 = arith.constant 0 : i32
    %c0_i32_1 = arith.constant 0 : i32
    %c0_i32_2 = arith.constant 0 : i32
    return %c0_i32, %c0_i32_0, %c0_i32_1 : i32, i32, i32
  }
  func.func @transform_2(%arg0: i32) -> (i32, i32) {
    %c0_i32 = arith.constant 0 : i32
    %c0_i32_0 = arith.constant 0 : i32
    %c0_i32_1 = arith.constant 0 : i32
    return %c0_i32, %c0_i32_0 : i32, i32
  }
  func.func @transform_3(%arg0: i32) -> (i32, i32) {
    %c0_i32 = arith.constant 0 : i32
    %c0_i32_0 = arith.constant 0 : i32
    %c0_i32_1 = arith.constant 0 : i32
    return %c0_i32, %c0_i32_0 : i32, i32
  }
  func.func @transform_4(%arg0: i32) -> (i32, i32) {
    %c0_i32 = arith.constant 0 : i32
    %c0_i32_0 = arith.constant 0 : i32
    %c0_i32_1 = arith.constant 0 : i32
    return %c0_i32, %c0_i32_0 : i32, i32
  }
  func.func @transform_5(%arg0: i32) -> (i32, i32) {
    %c0_i32 = arith.constant 0 : i32
    %c0_i32_0 = arith.constant 0 : i32
    %c0_i32_1 = arith.constant 0 : i32
    return %c0_i32, %c0_i32_0 : i32, i32
  }
  func.func @transform_6(%arg0: i32) -> (i32, i32, i32) {
    %c0_i32 = arith.constant 0 : i32
    %c0_i32_0 = arith.constant 0 : i32
    %c0_i32_1 = arith.constant 0 : i32
    %c0_i32_2 = arith.constant 0 : i32
    return %c0_i32, %c0_i32_0, %c0_i32_1 : i32, i32, i32
  }
  func.func @transform_7(%arg0: i32) -> (i32, i32) {
    %c0_i32 = arith.constant 0 : i32
    %c0_i32_0 = arith.constant 0 : i32
    %c0_i32_1 = arith.constant 0 : i32
    return %c0_i32, %c0_i32_0 : i32, i32
  }
  func.func @transform_8(%arg0: i32) -> (i32, i32) {
    %c0_i32 = arith.constant 0 : i32
    %c0_i32_0 = arith.constant 0 : i32
    %c0_i32_1 = arith.constant 0 : i32
    return %c0_i32, %c0_i32_0 : i32, i32
  }
  func.func @transform_9(%arg0: i32) -> (i32, i32) {
    %c0_i32 = arith.constant 0 : i32
    %c0_i32_0 = arith.constant 0 : i32
    %c0_i32_1 = arith.constant 0 : i32
    return %c0_i32, %c0_i32_0 : i32, i32
  }
  func.func @transform_10(%arg0: i32) -> (i32, i32, i32, i32) {
    %c0_i32 = arith.constant 0 : i32
    %c0_i32_0 = arith.constant 0 : i32
    %c0_i32_1 = arith.constant 0 : i32
    %c0_i32_2 = arith.constant 0 : i32
    return %arg0, %c0_i32, %c0_i32_0, %c0_i32_1 : i32, i32, i32, i32
  }
}

</mosaic_0001>

<llo_original>
// kernel: _lambda_.1
$region0: #{_lambda_.1}
  #allocation0 [shape = 'u32[]', space=smem, size = 0x4, offset = 0x4, fixed_abs, tag = 'smem constant byte address 0x4 - core index']
  #allocation1 [shape = 'u32[144,128]{1,0:T(1,128)}', space=vmem, size = 0x12000, scoped, tag = 'internal scratch']
  #allocation2 [shape = 'f32[4,10,10,4]{3,2,1,0:T(8,128)}', space=vmem, size = 0x50000, scoped, tag = 'scratch operand']
  %s0 = inlined_call_operand.vmem [shape: f32[8,10,10,4], index: 0, kind: input, shape index: {}]
  %s1 = inlined_call_operand.vmem [shape: bf16[9,4,4], index: 1, kind: input, shape index: {}]
  %s2 = inlined_call_operand.vmem [shape: f32[1,4], index: 2, kind: input, shape index: {}]
  %s3 = inlined_call_operand.vmem [shape: f32[9,4], index: 3, kind: input, shape index: {}]
  %s4 = inlined_call_operand.vmem [shape: f32[1,4], index: 4, kind: input, shape index: {}]
  %s5 = inlined_call_operand.vmem [shape: f32[1,4], index: 5, kind: input, shape index: {}]
  %s6 = inlined_call_operand.vmem [shape: f32[4,9,4], index: 6, kind: input, shape index: {}]
  %s7 = inlined_call_operand.vmem [shape: f32[4,4], index: 7, kind: input, shape index: {}]
  %s8 = inlined_call_operand.vmem [shape: f32[1,4], index: 8, kind: input, shape index: {}]
  %s9 = inlined_call_operand.vmem [shape: f32[1,4], index: 9, kind: input, shape index: {}]
  %s10 = inlined_call_operand.vmem [shape: f32[8,8,8,4], index: 10, kind: output, shape index: {}]
  %s11 = sld [smem:[#allocation0]]
  $region73: #{_lambda_.1} parent=0
    _
  %s13 = ssub.s32 1, %s11
  %s14 = scalar_select 0, %s13, %s11
  loop: start=0, step=1, limit=4
  $region2: #{_lambda_.1} parent=0 // loop_pre_header
    _
  $region3: #{_lambda_.1} parent=0 // loop_header
    %s16 = sphi 0, %s20
    %p17 = scmp.ge.s32.totalorder %s16, 4
    %s26 = sphi 0, %s28
    %s29 = sphi 0, %s26
    %s30 = sphi 0, %s29
    %s46 = sphi 0, %s30
    %s50 = sphi 0, %s50
    %s52 = sphi 0, %s50
    %s53 = sphi 0, %s52
    %s67 = sphi 0, %s53
    %s71 = sphi 0, %s71
    %s73 = sphi 0, %s71
    %s74 = sphi 0, %s73
    %s88 = sphi 0, %s74
    %s92 = sphi 0, %s92
    %s94 = sphi 0, %s92
    %s95 = sphi 0, %s94
    %s109 = sphi 0, %s95
    %s113 = sphi 0, %s113
    %s115 = sphi 0, %s113
    %s116 = sphi 0, %s115
    %s130 = sphi 0, %s116
    %s134 = sphi 0, %s134
    %s136 = sphi 0, %s134
    %s137 = sphi 0, %s136
    %s151 = sphi 0, %s137
    %s155 = sphi 0, %s155
    %s157 = sphi 0, %s155
    %s158 = sphi 0, %s157
    %s172 = sphi 0, %s158
    %s176 = sphi 0, %s176
    %s178 = sphi 0, %s176
    %s179 = sphi 0, %s178
    %s193 = sphi 0, %s179
    %s197 = sphi 0, %s197
    %s199 = sphi 0, %s197
    %s200 = sphi 0, %s199
    %s214 = sphi 0, %s200
    %s218 = sphi 0, %s218
    %s220 = sphi 0, %s218
    %s221 = sphi 0, %s220
    %s235 = sphi 0, %s221
    %s241 = sphi 0, %s243
    %s244 = sphi 0, %s241
    %s245 = sphi 0, %s244
    %s261 = sphi 0, %s245
  $region4: #{_lambda_.1} parent=0 // loop_header_branch
    %19 = sbr.rel (%p17) target = $region8
  $region5: #{_lambda_.1} parent=0 // loop_body
    %s21 = ssub.s32 %s16, 1
    %s22 = ssub.s32 %s16, 2
    %s23 = sadd.s32 %s16, 1
    %s24 = ssub.s32 %s16, %s23
    %p25 = scmp.eq.s32.totalorder %s24, 0
    %s27 = sadd.s32 %s26, 1
    %s28 = scalar_select %p25, %s26, %s27
    %p31 = pneg %p25
    %p32 = scmp.eq.s32.totalorder %s16, 1
    %p33 = por %p31, %p32
    %p34 = scmp.ne.s32.totalorder %s26, %s29
    %p35 = scmp.eq.s32.totalorder %s16, 0
    %p36 = por %p34, %p35
    %p37 = scmp.ne.s32.totalorder %s26, %s29
    %p38 = scmp.eq.s32.totalorder %s21, 1
    %p39 = por %p37, %p38
    %p40 = scmp.ne.s32.totalorder %s29, %s30
    %p41 = scmp.eq.s32.totalorder %s21, 0
    %p42 = por %p40, %p41
    %p43 = scmp.ne.s32.totalorder %s29, %s30
    %p44 = scmp.eq.s32.totalorder %s22, 1
    %p45 = por %p43, %p44
    %p47 = scmp.ne.s32.totalorder %s30, %s46
    %p48 = scmp.eq.s32.totalorder %s22, 0
    %p49 = por %p47, %p48
    %s51 = sadd.s32 %s50, 1
    %p54 = scmp.eq.s32.totalorder %s16, 1
    %p55 = scmp.ne.s32.totalorder %s50, %s52
    %p56 = scmp.eq.s32.totalorder %s16, 0
    %p57 = por %p55, %p56
    %p58 = scmp.ne.s32.totalorder %s50, %s52
    %p59 = scmp.eq.s32.totalorder %s21, 1
    %p60 = por %p58, %p59
    %p61 = scmp.ne.s32.totalorder %s52, %s53
    %p62 = scmp.eq.s32.totalorder %s21, 0
    %p63 = por %p61, %p62
    %p64 = scmp.ne.s32.totalorder %s52, %s53
    %p65 = scmp.eq.s32.totalorder %s22, 1
    %p66 = por %p64, %p65
    %p68 = scmp.ne.s32.totalorder %s53, %s67
    %p69 = scmp.eq.s32.totalorder %s22, 0
    %p70 = por %p68, %p69
    %s72 = sadd.s32 %s71, 1
    %p75 = scmp.eq.s32.totalorder %s16, 1
    %p76 = scmp.ne.s32.totalorder %s71, %s73
    %p77 = scmp.eq.s32.totalorder %s16, 0
    %p78 = por %p76, %p77
    %p79 = scmp.ne.s32.totalorder %s71, %s73
    %p80 = scmp.eq.s32.totalorder %s21, 1
    %p81 = por %p79, %p80
    %p82 = scmp.ne.s32.totalorder %s73, %s74
    %p83 = scmp.eq.s32.totalorder %s21, 0
    %p84 = por %p82, %p83
    %p85 = scmp.ne.s32.totalorder %s73, %s74
    %p86 = scmp.eq.s32.totalorder %s22, 1
    %p87 = por %p85, %p86
    %p89 = scmp.ne.s32.totalorder %s74, %s88
    %p90 = scmp.eq.s32.totalorder %s22, 0
    %p91 = por %p89, %p90
    %s93 = sadd.s32 %s92, 1
    %p96 = scmp.eq.s32.totalorder %s16, 1
    %p97 = scmp.ne.s32.totalorder %s92, %s94
    %p98 = scmp.eq.s32.totalorder %s16, 0
    %p99 = por %p97, %p98
    %p100 = scmp.ne.s32.totalorder %s92, %s94
    %p101 = scmp.eq.s32.totalorder %s21, 1
    %p102 = por %p100, %p101
    %p103 = scmp.ne.s32.totalorder %s94, %s95
    %p104 = scmp.eq.s32.totalorder %s21, 0
    %p105 = por %p103, %p104
    %p106 = scmp.ne.s32.totalorder %s94, %s95
    %p107 = scmp.eq.s32.totalorder %s22, 1
    %p108 = por %p106, %p107
    %p110 = scmp.ne.s32.totalorder %s95, %s109
    %p111 = scmp.eq.s32.totalorder %s22, 0
    %p112 = por %p110, %p111
    %s114 = sadd.s32 %s113, 1
    %p117 = scmp.eq.s32.totalorder %s16, 1
    %p118 = scmp.ne.s32.totalorder %s113, %s115
    %p119 = scmp.eq.s32.totalorder %s16, 0
    %p120 = por %p118, %p119
    %p121 = scmp.ne.s32.totalorder %s113, %s115
    %p122 = scmp.eq.s32.totalorder %s21, 1
    %p123 = por %p121, %p122
    %p124 = scmp.ne.s32.totalorder %s115, %s116
    %p125 = scmp.eq.s32.totalorder %s21, 0
    %p126 = por %p124, %p125
    %p127 = scmp.ne.s32.totalorder %s115, %s116
    %p128 = scmp.eq.s32.totalorder %s22, 1
    %p129 = por %p127, %p128
    %p131 = scmp.ne.s32.totalorder %s116, %s130
    %p132 = scmp.eq.s32.totalorder %s22, 0
    %p133 = por %p131, %p132
    %s135 = sadd.s32 %s134, 1
    %p138 = scmp.eq.s32.totalorder %s16, 1
    %p139 = scmp.ne.s32.totalorder %s134, %s136
    %p140 = scmp.eq.s32.totalorder %s16, 0
    %p141 = por %p139, %p140
    %p142 = scmp.ne.s32.totalorder %s134, %s136
    %p143 = scmp.eq.s32.totalorder %s21, 1
    %p144 = por %p142, %p143
    %p145 = scmp.ne.s32.totalorder %s136, %s137
    %p146 = scmp.eq.s32.totalorder %s21, 0
    %p147 = por %p145, %p146
    %p148 = scmp.ne.s32.totalorder %s136, %s137
    %p149 = scmp.eq.s32.totalorder %s22, 1
    %p150 = por %p148, %p149
    %p152 = scmp.ne.s32.totalorder %s137, %s151
    %p153 = scmp.eq.s32.totalorder %s22, 0
    %p154 = por %p152, %p153
    %s156 = sadd.s32 %s155, 1
    %p159 = scmp.eq.s32.totalorder %s16, 1
    %p160 = scmp.ne.s32.totalorder %s155, %s157
    %p161 = scmp.eq.s32.totalorder %s16, 0
    %p162 = por %p160, %p161
    %p163 = scmp.ne.s32.totalorder %s155, %s157
    %p164 = scmp.eq.s32.totalorder %s21, 1
    %p165 = por %p163, %p164
    %p166 = scmp.ne.s32.totalorder %s157, %s158
    %p167 = scmp.eq.s32.totalorder %s21, 0
    %p168 = por %p166, %p167
    %p169 = scmp.ne.s32.totalorder %s157, %s158
    %p170 = scmp.eq.s32.totalorder %s22, 1
    %p171 = por %p169, %p170
    %p173 = scmp.ne.s32.totalorder %s158, %s172
    %p174 = scmp.eq.s32.totalorder %s22, 0
    %p175 = por %p173, %p174
    %s177 = sadd.s32 %s176, 1
    %p180 = scmp.eq.s32.totalorder %s16, 1
    %p181 = scmp.ne.s32.totalorder %s176, %s178
    %p182 = scmp.eq.s32.totalorder %s16, 0
    %p183 = por %p181, %p182
    %p184 = scmp.ne.s32.totalorder %s176, %s178
    %p185 = scmp.eq.s32.totalorder %s21, 1
    %p186 = por %p184, %p185
    %p187 = scmp.ne.s32.totalorder %s178, %s179
    %p188 = scmp.eq.s32.totalorder %s21, 0
    %p189 = por %p187, %p188
    %p190 = scmp.ne.s32.totalorder %s178, %s179
    %p191 = scmp.eq.s32.totalorder %s22, 1
    %p192 = por %p190, %p191
    %p194 = scmp.ne.s32.totalorder %s179, %s193
    %p195 = scmp.eq.s32.totalorder %s22, 0
    %p196 = por %p194, %p195
    %s198 = sadd.s32 %s197, 1
    %p201 = scmp.eq.s32.totalorder %s16, 1
    %p202 = scmp.ne.s32.totalorder %s197, %s199
    %p203 = scmp.eq.s32.totalorder %s16, 0
    %p204 = por %p202, %p203
    %p205 = scmp.ne.s32.totalorder %s197, %s199
    %p206 = scmp.eq.s32.totalorder %s21, 1
    %p207 = por %p205, %p206
    %p208 = scmp.ne.s32.totalorder %s199, %s200
    %p209 = scmp.eq.s32.totalorder %s21, 0
    %p210 = por %p208, %p209
    %p211 = scmp.ne.s32.totalorder %s199, %s200
    %p212 = scmp.eq.s32.totalorder %s22, 1
    %p213 = por %p211, %p212
    %p215 = scmp.ne.s32.totalorder %s200, %s214
    %p216 = scmp.eq.s32.totalorder %s22, 0
    %p217 = por %p215, %p216
    %s219 = sadd.s32 %s218, 1
    %p222 = scmp.eq.s32.totalorder %s16, 1
    %p223 = scmp.ne.s32.totalorder %s218, %s220
    %p224 = scmp.eq.s32.totalorder %s16, 0
    %p225 = por %p223, %p224
    %p226 = scmp.ne.s32.totalorder %s218, %s220
    %p227 = scmp.eq.s32.totalorder %s21, 1
    %p228 = por %p226, %p227
    %p229 = scmp.ne.s32.totalorder %s220, %s221
    %p230 = scmp.eq.s32.totalorder %s21, 0
    %p231 = por %p229, %p230
    %p232 = scmp.ne.s32.totalorder %s220, %s221
    %p233 = scmp.eq.s32.totalorder %s22, 1
    %p234 = por %p232, %p233
    %p236 = scmp.ne.s32.totalorder %s221, %s235
    %p237 = scmp.eq.s32.totalorder %s22, 0
    %p238 = por %p236, %p237
    %s239 = ssub.s32 %s16, %s23
    %p240 = scmp.eq.s32.totalorder %s239, 0
    %s242 = sadd.s32 %s241, 1
    %s243 = scalar_select %p240, %s241, %s242
    %p246 = pneg %p240
    %p247 = scmp.eq.s32.totalorder %s16, 1
    %p248 = por %p246, %p247
    %p249 = scmp.ne.s32.totalorder %s241, %s244
    %p250 = scmp.eq.s32.totalorder %s16, 0
    %p251 = por %p249, %p250
    %p252 = scmp.ne.s32.totalorder %s241, %s244
    %p253 = scmp.eq.s32.totalorder %s21, 1
    %p254 = por %p252, %p253
    %p255 = scmp.ne.s32.totalorder %s244, %s245
    %p256 = scmp.eq.s32.totalorder %s21, 0
    %p257 = por %p255, %p256
    %p258 = scmp.ne.s32.totalorder %s244, %s245
    %p259 = scmp.eq.s32.totalorder %s22, 1
    %p260 = por %p258, %p259
    %p262 = scmp.ne.s32.totalorder %s245, %s261
    %p263 = scmp.eq.s32.totalorder %s22, 0
    %p264 = por %p262, %p263
    %p265 = scmp.le.s32.totalorder 1, %s16
    %p266 = scmp.lt.s32.totalorder %s16, 3
    %p267 = pnand %p265, %p266
    %p268 = pneg %p267
    // Predicated region
    $region9: #{_lambda_.1} parent=5 // pred_check
      _
    $region10: #{_lambda_.1} parent=5 // pred_check_branch
      %270 = sbr.rel (%p267) target = $region12
    $region11: #{_lambda_.1} parent=5 // pred_region
      %s271 = ssub.s32 %s16, 1
      // Predicated region
      $region13: #{_lambda_.1} parent=11 // pred_check
        %p272 = pneg %p63
      $region14: #{_lambda_.1} parent=11 // pred_check_branch
        %274 = sbr.rel (%p272) target = $region16
      $region15: #{_lambda_.1} parent=11 // pred_region
        _
      $region16: #{_lambda_.1} parent=11 // pred_fallthru
        _
      // Predicated region
      $region17: #{_lambda_.1} parent=11 // pred_check
        %p275 = pneg %p84
      $region18: #{_lambda_.1} parent=11 // pred_check_branch
        %277 = sbr.rel (%p275) target = $region20
      $region19: #{_lambda_.1} parent=11 // pred_region
        _
      $region20: #{_lambda_.1} parent=11 // pred_fallthru
        _
      // Predicated region
      $region21: #{_lambda_.1} parent=11 // pred_check
        %p278 = pneg %p105
      $region22: #{_lambda_.1} parent=11 // pred_check_branch
        %280 = sbr.rel (%p278) target = $region24
      $region23: #{_lambda_.1} parent=11 // pred_region
        _
      $region24: #{_lambda_.1} parent=11 // pred_fallthru
        _
      // Predicated region
      $region25: #{_lambda_.1} parent=11 // pred_check
        %p281 = pneg %p126
      $region26: #{_lambda_.1} parent=11 // pred_check_branch
        %283 = sbr.rel (%p281) target = $region28
      $region27: #{_lambda_.1} parent=11 // pred_region
        _
      $region28: #{_lambda_.1} parent=11 // pred_fallthru
        _
      // Predicated region
      $region29: #{_lambda_.1} parent=11 // pred_check
        %p284 = pneg %p147
      $region30: #{_lambda_.1} parent=11 // pred_check_branch
        %286 = sbr.rel (%p284) target = $region32
      $region31: #{_lambda_.1} parent=11 // pred_region
        _
      $region32: #{_lambda_.1} parent=11 // pred_fallthru
        _
      // Predicated region
      $region33: #{_lambda_.1} parent=11 // pred_check
        %p287 = pneg %p168
      $region34: #{_lambda_.1} parent=11 // pred_check_branch
        %289 = sbr.rel (%p287) target = $region36
      $region35: #{_lambda_.1} parent=11 // pred_region
        _
      $region36: #{_lambda_.1} parent=11 // pred_fallthru
        _
      // Predicated region
      $region37: #{_lambda_.1} parent=11 // pred_check
        %p290 = pneg %p189
      $region38: #{_lambda_.1} parent=11 // pred_check_branch
        %292 = sbr.rel (%p290) target = $region40
      $region39: #{_lambda_.1} parent=11 // pred_region
        _
      $region40: #{_lambda_.1} parent=11 // pred_fallthru
        _
      // Predicated region
      $region41: #{_lambda_.1} parent=11 // pred_check
        %p293 = pneg %p210
      $region42: #{_lambda_.1} parent=11 // pred_check_branch
        %295 = sbr.rel (%p293) target = $region44
      $region43: #{_lambda_.1} parent=11 // pred_region
        _
      $region44: #{_lambda_.1} parent=11 // pred_fallthru
        _
      // Predicated region
      $region45: #{_lambda_.1} parent=11 // pred_check
        %p296 = pneg %p231
      $region46: #{_lambda_.1} parent=11 // pred_check_branch
        %298 = sbr.rel (%p296) target = $region48
      $region47: #{_lambda_.1} parent=11 // pred_region
        _
      $region48: #{_lambda_.1} parent=11 // pred_fallthru
        _
    $region12: #{_lambda_.1} parent=5 // pred_fallthru
      _
    %p299 = scmp.lt.s32.totalorder %s16, 2
    // Predicated region
    $region49: #{_lambda_.1} parent=5 // pred_check
      %p300 = pneg %p299
    $region50: #{_lambda_.1} parent=5 // pred_check_branch
      %302 = sbr.rel (%p300) target = $region52
    $region51: #{_lambda_.1} parent=5 // pred_region
      // Predicated region
      $region53: #{_lambda_.1} parent=51 // pred_check
        %p303 = pneg %p36
      $region54: #{_lambda_.1} parent=51 // pred_check_branch
        %305 = sbr.rel (%p303) target = $region56
      $region55: #{_lambda_.1} parent=51 // pred_region
        %s306 = smul.u32 4, %s16
        %p307 = scmp.lt.s32.totalorder %s306, 7
        %s308 = scalar_select %p307, %s306, 7
        %s309 = smul.addr %s308, 20
        %s310 = smul.addr %s309, 8
        %s311 = scalar_lea.vmem %s0, %s310
        %s312 = smul.u32 4, %s16
      $region56: #{_lambda_.1} parent=51 // pred_fallthru
        _
    $region52: #{_lambda_.1} parent=5 // pred_fallthru
      _
    %p313 = scmp.le.s32.totalorder 1, %s16
    %p314 = scmp.lt.s32.totalorder %s16, 3
    %p315 = pnand %p313, %p314
    %p316 = pneg %p315
    // Predicated region
    $region57: #{_lambda_.1} parent=5 // pred_check
      _
    $region58: #{_lambda_.1} parent=5 // pred_check_branch
      %318 = sbr.rel (%p315) target = $region60
    $region59: #{_lambda_.1} parent=5 // pred_region
      %s319 = ssub.s32 %s16, 1
      %s320 = smul.u32 4, %s21
      %p321 = scmp.lt.s32.totalorder %s320, 7
      %s322 = scalar_select %p321, %s320, 7
      %s323 = smul.addr %s322, 20
      %s324 = smul.addr %s323, 8
      %s325 = scalar_lea.vmem %s0, %s324
      %p326 = pneg %p42
      %p327 = pneg %p39
      %p328 = pneg %p63
      %p329 = pneg %p60
      %p330 = pneg %p84
      %p331 = pneg %p81
      %p332 = pneg %p105
      %p333 = pneg %p102
      %p334 = pneg %p126
      %p335 = pneg %p123
      %p336 = pneg %p147
      %p337 = pneg %p144
      %p338 = pneg %p168
      %p339 = pneg %p165
      %p340 = pneg %p189
      %p341 = pneg %p186
      %p342 = pneg %p210
      %p343 = pneg %p207
      %p344 = pneg %p231
      %p345 = pneg %p228
      %p346 = pneg %p257
      %p347 = pneg %p254
      %s348 = smul.u32 4, %s21
      %p349 = scmp.lt.s32.totalorder %s348, 7
      %s350 = scalar_select %p349, %s348, 7
      %s351 = smul.addr %s350, 8
      %s352 = smul.addr %s351, 8
      %s353 = scalar_lea.vmem %s10, %s352
      %s354 = smul.u32 4, %s21
      %p355 = scmp.lt.s32.totalorder %s354, 7
      %s356 = scalar_select %p355, %s354, 7
      %s357 = smul.addr %s356, 20
      %s358 = smul.addr %s357, 8
      %s359 = scalar_lea.vmem %s0, %s358
      %s360 = smul.u32 4, %s21
      %s361 = smul.u32 4, %s21
      %p362 = scmp.lt.s32.totalorder %s361, 7
      %s363 = scalar_select %p362, %s361, 7
      %s364 = smul.addr %s363, 8
      %s365 = smul.addr %s364, 8
      %s366 = scalar_lea.vmem %s10, %s365
      %s367 = smul.u32 4, %s21
      %vm369 = vcmask 31744
      %370 = vst.msk [vmem:[#allocation2] sm:$0xff] %vm369, 0.0
      %vm371 = vcmask 25600
      %372 = vst.msk [vmem:[#allocation2 + $0x8] sm:$0x3] %vm371, 0.0
      %373 = vst.msk [vmem:[#allocation2 + $0x10] sm:$0xff] %vm369, 0.0
      %374 = vst.msk [vmem:[#allocation2 + $0x18] sm:$0x3] %vm371, 0.0
      %375 = vst.msk [vmem:[#allocation2 + $0x20] sm:$0xff] %vm369, 0.0
      %376 = vst.msk [vmem:[#allocation2 + $0x28] sm:$0x3] %vm371, 0.0
      %377 = vst.msk [vmem:[#allocation2 + $0x30] sm:$0xff] %vm369, 0.0
      %378 = vst.msk [vmem:[#allocation2 + $0x38] sm:$0x3] %vm371, 0.0
      %379 = vst.msk [vmem:[#allocation2 + $0x40] sm:$0xff] %vm369, 0.0
      %380 = vst.msk [vmem:[#allocation2 + $0x48] sm:$0x3] %vm371, 0.0
      %381 = vst.msk [vmem:[#allocation2 + $0x50] sm:$0xff] %vm369, 0.0
      %382 = vst.msk [vmem:[#allocation2 + $0x58] sm:$0x3] %vm371, 0.0
      %383 = vst.msk [vmem:[#allocation2 + $0x60] sm:$0xff] %vm369, 0.0
      %384 = vst.msk [vmem:[#allocation2 + $0x68] sm:$0x3] %vm371, 0.0
      %385 = vst.msk [vmem:[#allocation2 + $0x70] sm:$0xff] %vm369, 0.0
      %386 = vst.msk [vmem:[#allocation2 + $0x78] sm:$0x3] %vm371, 0.0
      %387 = vst.msk [vmem:[#allocation2 + $0x80] sm:$0xff] %vm369, 0.0
      %388 = vst.msk [vmem:[#allocation2 + $0x88] sm:$0x3] %vm371, 0.0
      %389 = vst.msk [vmem:[#allocation2 + $0x90] sm:$0xff] %vm369, 0.0
      %390 = vst.msk [vmem:[#allocation2 + $0x98] sm:$0x3] %vm371, 0.0
      %391 = vst.msk [vmem:[#allocation2 + $0xa0] sm:$0xff] %vm369, 0.0
      %392 = vst.msk [vmem:[#allocation2 + $0xa8] sm:$0x3] %vm371, 0.0
      %393 = vst.msk [vmem:[#allocation2 + $0xb0] sm:$0xff] %vm369, 0.0
      %394 = vst.msk [vmem:[#allocation2 + $0xb8] sm:$0x3] %vm371, 0.0
      %395 = vst.msk [vmem:[#allocation2 + $0xc0] sm:$0xff] %vm369, 0.0
      %396 = vst.msk [vmem:[#allocation2 + $0xc8] sm:$0x3] %vm371, 0.0
      %397 = vst.msk [vmem:[#allocation2 + $0xd0] sm:$0xff] %vm369, 0.0
      %398 = vst.msk [vmem:[#allocation2 + $0xd8] sm:$0x3] %vm371, 0.0
      %399 = vst.msk [vmem:[#allocation2 + $0xe0] sm:$0xff] %vm369, 0.0
      %400 = vst.msk [vmem:[#allocation2 + $0xe8] sm:$0x3] %vm371, 0.0
      %401 = vst.msk [vmem:[#allocation2 + $0xf0] sm:$0xff] %vm369, 0.0
      %402 = vst.msk [vmem:[#allocation2 + $0xf8] sm:$0x3] %vm371, 0.0
      %403 = vst.msk [vmem:[#allocation2 + $0x100] sm:$0xff] %vm369, 0.0
      %404 = vst.msk [vmem:[#allocation2 + $0x108] sm:$0x3] %vm371, 0.0
      %405 = vst.msk [vmem:[#allocation2 + $0x110] sm:$0xff] %vm369, 0.0
      %406 = vst.msk [vmem:[#allocation2 + $0x118] sm:$0x3] %vm371, 0.0
      %407 = vst.msk [vmem:[#allocation2 + $0x120] sm:$0xff] %vm369, 0.0
      %408 = vst.msk [vmem:[#allocation2 + $0x128] sm:$0x3] %vm371, 0.0
      %409 = vst.msk [vmem:[#allocation2 + $0x130] sm:$0xff] %vm369, 0.0
      %410 = vst.msk [vmem:[#allocation2 + $0x138] sm:$0x3] %vm371, 0.0
      %411 = vst.msk [vmem:[#allocation2 + $0x140] sm:$0xff] %vm369, 0.0
      %412 = vst.msk [vmem:[#allocation2 + $0x148] sm:$0x3] %vm371, 0.0
      %413 = vst.msk [vmem:[#allocation2 + $0x150] sm:$0xff] %vm369, 0.0
      %414 = vst.msk [vmem:[#allocation2 + $0x158] sm:$0x3] %vm371, 0.0
      %415 = vst.msk [vmem:[#allocation2 + $0x160] sm:$0xff] %vm369, 0.0
      %416 = vst.msk [vmem:[#allocation2 + $0x168] sm:$0x3] %vm371, 0.0
      %417 = vst.msk [vmem:[#allocation2 + $0x170] sm:$0xff] %vm369, 0.0
      %418 = vst.msk [vmem:[#allocation2 + $0x178] sm:$0x3] %vm371, 0.0
      %419 = vst.msk [vmem:[#allocation2 + $0x180] sm:$0xff] %vm369, 0.0
      %420 = vst.msk [vmem:[#allocation2 + $0x188] sm:$0x3] %vm371, 0.0
      %421 = vst.msk [vmem:[#allocation2 + $0x190] sm:$0xff] %vm369, 0.0
      %422 = vst.msk [vmem:[#allocation2 + $0x198] sm:$0x3] %vm371, 0.0
      %423 = vst.msk [vmem:[#allocation2 + $0x1a0] sm:$0xff] %vm369, 0.0
      %424 = vst.msk [vmem:[#allocation2 + $0x1a8] sm:$0x3] %vm371, 0.0
      %425 = vst.msk [vmem:[#allocation2 + $0x1b0] sm:$0xff] %vm369, 0.0
      %426 = vst.msk [vmem:[#allocation2 + $0x1b8] sm:$0x3] %vm371, 0.0
      %427 = vst.msk [vmem:[#allocation2 + $0x1c0] sm:$0xff] %vm369, 0.0
      %428 = vst.msk [vmem:[#allocation2 + $0x1c8] sm:$0x3] %vm371, 0.0
      %429 = vst.msk [vmem:[#allocation2 + $0x1d0] sm:$0xff] %vm369, 0.0
      %430 = vst.msk [vmem:[#allocation2 + $0x1d8] sm:$0x3] %vm371, 0.0
      %431 = vst.msk [vmem:[#allocation2 + $0x1e0] sm:$0xff] %vm369, 0.0
      %432 = vst.msk [vmem:[#allocation2 + $0x1e8] sm:$0x3] %vm371, 0.0
      %433 = vst.msk [vmem:[#allocation2 + $0x1f0] sm:$0xff] %vm369, 0.0
      %434 = vst.msk [vmem:[#allocation2 + $0x1f8] sm:$0x3] %vm371, 0.0
      %435 = vst.msk [vmem:[#allocation2 + $0x200] sm:$0xff] %vm369, 0.0
      %436 = vst.msk [vmem:[#allocation2 + $0x208] sm:$0x3] %vm371, 0.0
      %437 = vst.msk [vmem:[#allocation2 + $0x210] sm:$0xff] %vm369, 0.0
      %438 = vst.msk [vmem:[#allocation2 + $0x218] sm:$0x3] %vm371, 0.0
      %439 = vst.msk [vmem:[#allocation2 + $0x220] sm:$0xff] %vm369, 0.0
      %440 = vst.msk [vmem:[#allocation2 + $0x228] sm:$0x3] %vm371, 0.0
      %441 = vst.msk [vmem:[#allocation2 + $0x230] sm:$0xff] %vm369, 0.0
      %442 = vst.msk [vmem:[#allocation2 + $0x238] sm:$0x3] %vm371, 0.0
      %443 = vst.msk [vmem:[#allocation2 + $0x240] sm:$0xff] %vm369, 0.0
      %444 = vst.msk [vmem:[#allocation2 + $0x248] sm:$0x3] %vm371, 0.0
      %445 = vst.msk [vmem:[#allocation2 + $0x250] sm:$0xff] %vm369, 0.0
      %446 = vst.msk [vmem:[#allocation2 + $0x258] sm:$0x3] %vm371, 0.0
      %447 = vst.msk [vmem:[#allocation2 + $0x260] sm:$0xff] %vm369, 0.0
      %448 = vst.msk [vmem:[#allocation2 + $0x268] sm:$0x3] %vm371, 0.0
      %449 = vst.msk [vmem:[#allocation2 + $0x270] sm:$0xff] %vm369, 0.0
      %450 = vst.msk [vmem:[#allocation2 + $0x278] sm:$0x3] %vm371, 0.0
      %s451 = scalar_lea.vmem %s359, 480
      %v452 = vld [vmem:[%s451] sm:$0xff]
      %v453 = vld [vmem:[%s451 + $0x10] sm:$0xff]
      %v454 = vld [vmem:[%s451 + $0x20] sm:$0xff]
      %v455 = vld [vmem:[%s451 + $0x30] sm:$0xff]
      %v456 = vld [vmem:[%s451 + $0x40] sm:$0xff]
      %v457 = vld [vmem:[%s451 + $0x50] sm:$0xff]
      %v458 = vld [vmem:[%s451 + $0x60] sm:$0xff]
      %v459 = vld [vmem:[%s451 + $0x70] sm:$0xff]
      %v460 = vpack.c.bf16 %v453, %v452
      %v461 = vpack.c.bf16 %v455, %v454
      %v462 = vpack.c.bf16 %v457, %v456
      %v463 = vpack.c.bf16 %v459, %v458
      %s464 = scalar_lea.vmem %s359, 320
      %v465 = vld [vmem:[%s464 + $0x1] sm:$0xff]
      %v466 = vld [vmem:[%s464 + $0x11] sm:$0xff]
      %v467 = vld [vmem:[%s464 + $0x21] sm:$0xff]
      %v468 = vld [vmem:[%s464 + $0x31] sm:$0xff]
      %v469 = vld [vmem:[%s464 + $0x41] sm:$0xff]
      %v470 = vld [vmem:[%s464 + $0x51] sm:$0xff]
      %v471 = vld [vmem:[%s464 + $0x61] sm:$0xff]
      %v472 = vld [vmem:[%s464 + $0x71] sm:$0xff]
      %v473 = vpack.c.bf16 %v466, %v465
      %v474 = vpack.c.bf16 %v468, %v467
      %v475 = vpack.c.bf16 %v470, %v469
      %v476 = vpack.c.bf16 %v472, %v471
      %v477 = vld [vmem:[%s451 + $0x1] sm:$0xff]
      %v478 = vld [vmem:[%s451 + $0x11] sm:$0xff]
      %v479 = vld [vmem:[%s451 + $0x21] sm:$0xff]
      %v480 = vld [vmem:[%s451 + $0x31] sm:$0xff]
      %v481 = vld [vmem:[%s451 + $0x41] sm:$0xff]
      %v482 = vld [vmem:[%s451 + $0x51] sm:$0xff]
      %v483 = vld [vmem:[%s451 + $0x61] sm:$0xff]
      %v484 = vld [vmem:[%s451 + $0x71] sm:$0xff]
      %v485 = vpack.c.bf16 %v478, %v477
      %v486 = vpack.c.bf16 %v480, %v479
      %v487 = vpack.c.bf16 %v482, %v481
      %v488 = vpack.c.bf16 %v484, %v483
      %v489 = vld [vmem:[%s464 + $0x2] sm:$0xff]
      %v490 = vld [vmem:[%s464 + $0x12] sm:$0xff]
      %v491 = vld [vmem:[%s464 + $0x22] sm:$0xff]
      %v492 = vld [vmem:[%s464 + $0x32] sm:$0xff]
      %v493 = vld [vmem:[%s464 + $0x42] sm:$0xff]
      %v494 = vld [vmem:[%s464 + $0x52] sm:$0xff]
      %v495 = vld [vmem:[%s464 + $0x62] sm:$0xff]
      %v496 = vld [vmem:[%s464 + $0x72] sm:$0xff]
      %v497 = vpack.c.bf16 %v490, %v489
      %v498 = vpack.c.bf16 %v492, %v491
      %v499 = vpack.c.bf16 %v494, %v493
      %v500 = vpack.c.bf16 %v496, %v495
      %s501 = scalar_lea.vmem %s359, 176
      %v502 = vld [vmem:[%s501] sm:$0xff]
      %v503 = vld [vmem:[%s501 + $0x10] sm:$0xff]
      %v504 = vld [vmem:[%s501 + $0x20] sm:$0xff]
      %v505 = vld [vmem:[%s501 + $0x30] sm:$0xff]
      %v506 = vld [vmem:[%s501 + $0x40] sm:$0xff]
      %v507 = vld [vmem:[%s501 + $0x50] sm:$0xff]
      %v508 = vld [vmem:[%s501 + $0x60] sm:$0xff]
      %v509 = vld [vmem:[%s501 + $0x70] sm:$0xff]
      %v510 = vpack.c.bf16 %v503, %v502
      %v511 = vpack.c.bf16 %v505, %v504
      %v512 = vpack.c.bf16 %v507, %v506
      %v513 = vpack.c.bf16 %v509, %v508
      %s514 = scalar_lea.vmem %s359, 16
      %v515 = vld [vmem:[%s514 + $0x1] sm:$0xff]
      %v516 = vld [vmem:[%s514 + $0x11] sm:$0xff]
      %v517 = vld [vmem:[%s514 + $0x21] sm:$0xff]
      %v518 = vld [vmem:[%s514 + $0x31] sm:$0xff]
      %v519 = vld [vmem:[%s514 + $0x41] sm:$0xff]
      %v520 = vld [vmem:[%s514 + $0x51] sm:$0xff]
      %v521 = vld [vmem:[%s514 + $0x61] sm:$0xff]
      %v522 = vld [vmem:[%s514 + $0x71] sm:$0xff]
      %v523 = vpack.c.bf16 %v516, %v515
      %v524 = vpack.c.bf16 %v518, %v517
      %v525 = vpack.c.bf16 %v520, %v519
      %v526 = vpack.c.bf16 %v522, %v521
      %v527 = vld [vmem:[%s501 + $0x1] sm:$0xff]
      %v528 = vld [vmem:[%s501 + $0x11] sm:$0xff]
      %v529 = vld [vmem:[%s501 + $0x21] sm:$0xff]
      %v530 = vld [vmem:[%s501 + $0x31] sm:$0xff]
      %v531 = vld [vmem:[%s501 + $0x41] sm:$0xff]
      %v532 = vld [vmem:[%s501 + $0x51] sm:$0xff]
      %v533 = vld [vmem:[%s501 + $0x61] sm:$0xff]
      %v534 = vld [vmem:[%s501 + $0x71] sm:$0xff]
      %v535 = vpack.c.bf16 %v528, %v527
      %v536 = vpack.c.bf16 %v530, %v529
      %v537 = vpack.c.bf16 %v532, %v531
      %v538 = vpack.c.bf16 %v534, %v533
      %v539 = vld [vmem:[%s514 + $0x2] sm:$0xff]
      %v540 = vld [vmem:[%s514 + $0x12] sm:$0xff]
      %v541 = vld [vmem:[%s514 + $0x22] sm:$0xff]
      %v542 = vld [vmem:[%s514 + $0x32] sm:$0xff]
      %v543 = vld [vmem:[%s514 + $0x42] sm:$0xff]
      %v544 = vld [vmem:[%s514 + $0x52] sm:$0xff]
      %v545 = vld [vmem:[%s514 + $0x62] sm:$0xff]
      %v546 = vld [vmem:[%s514 + $0x72] sm:$0xff]
      %v547 = vpack.c.bf16 %v540, %v539
      %v548 = vpack.c.bf16 %v542, %v541
      %v549 = vpack.c.bf16 %v544, %v543
      %v550 = vpack.c.bf16 %v546, %v545
      %s551 = scalar_lea.vmem %s359, 496
      %v552 = vld [vmem:[%s551] sm:$0xff]
      %v553 = vld [vmem:[%s551 + $0x10] sm:$0xff]
      %v554 = vld [vmem:[%s551 + $0x20] sm:$0xff]
      %v555 = vld [vmem:[%s551 + $0x30] sm:$0xff]
      %v556 = vld [vmem:[%s551 + $0x40] sm:$0xff]
      %v557 = vld [vmem:[%s551 + $0x50] sm:$0xff]
      %v558 = vld [vmem:[%s551 + $0x60] sm:$0xff]
      %v559 = vld [vmem:[%s551 + $0x70] sm:$0xff]
      %v560 = vpack.c.bf16 %v553, %v552
      %v561 = vpack.c.bf16 %v555, %v554
      %v562 = vpack.c.bf16 %v557, %v556
      %v563 = vpack.c.bf16 %v559, %v558
      %s564 = scalar_lea.vmem %s359, 336
      %v565 = vld [vmem:[%s564 + $0x1] sm:$0xff]
      %v566 = vld [vmem:[%s564 + $0x11] sm:$0xff]
      %v567 = vld [vmem:[%s564 + $0x21] sm:$0xff]
      %v568 = vld [vmem:[%s564 + $0x31] sm:$0xff]
      %v569 = vld [vmem:[%s564 + $0x41] sm:$0xff]
      %v570 = vld [vmem:[%s564 + $0x51] sm:$0xff]
      %v571 = vld [vmem:[%s564 + $0x61] sm:$0xff]
      %v572 = vld [vmem:[%s564 + $0x71] sm:$0xff]
      %v573 = vpack.c.bf16 %v566, %v565
      %v574 = vpack.c.bf16 %v568, %v567
      %v575 = vpack.c.bf16 %v570, %v569
      %v576 = vpack.c.bf16 %v572, %v571
      %v577 = vld [vmem:[%s551 + $0x1] sm:$0xff]
      %v578 = vld [vmem:[%s551 + $0x11] sm:$0xff]
      %v579 = vld [vmem:[%s551 + $0x21] sm:$0xff]
      %v580 = vld [vmem:[%s551 + $0x31] sm:$0xff]
      %v581 = vld [vmem:[%s551 + $0x41] sm:$0xff]
      %v582 = vld [vmem:[%s551 + $0x51] sm:$0xff]
      %v583 = vld [vmem:[%s551 + $0x61] sm:$0xff]
      %v584 = vld [vmem:[%s551 + $0x71] sm:$0xff]
      %v585 = vpack.c.bf16 %v578, %v577
      %v586 = vpack.c.bf16 %v580, %v579
      %v587 = vpack.c.bf16 %v582, %v581
      %v588 = vpack.c.bf16 %v584, %v583
      %v589 = vld [vmem:[%s564 + $0x2] sm:$0xff]
      %v590 = vld [vmem:[%s564 + $0x12] sm:$0xff]
      %v591 = vld [vmem:[%s564 + $0x22] sm:$0xff]
      %v592 = vld [vmem:[%s564 + $0x32] sm:$0xff]
      %v593 = vld [vmem:[%s564 + $0x42] sm:$0xff]
      %v594 = vld [vmem:[%s564 + $0x52] sm:$0xff]
      %v595 = vld [vmem:[%s564 + $0x62] sm:$0xff]
      %v596 = vld [vmem:[%s564 + $0x72] sm:$0xff]
      %v597 = vpack.c.bf16 %v590, %v589
      %v598 = vpack.c.bf16 %v592, %v591
      %v599 = vpack.c.bf16 %v594, %v593
      %v600 = vpack.c.bf16 %v596, %v595
      %s601 = scalar_lea.vmem %s359, 192
      %v602 = vld [vmem:[%s601] sm:$0xff]
      %v603 = vld [vmem:[%s601 + $0x10] sm:$0xff]
      %v604 = vld [vmem:[%s601 + $0x20] sm:$0xff]
      %v605 = vld [vmem:[%s601 + $0x30] sm:$0xff]
      %v606 = vld [vmem:[%s601 + $0x40] sm:$0xff]
      %v607 = vld [vmem:[%s601 + $0x50] sm:$0xff]
      %v608 = vld [vmem:[%s601 + $0x60] sm:$0xff]
      %v609 = vld [vmem:[%s601 + $0x70] sm:$0xff]
      %v610 = vpack.c.bf16 %v603, %v602
      %v611 = vpack.c.bf16 %v605, %v604
      %v612 = vpack.c.bf16 %v607, %v606
      %v613 = vpack.c.bf16 %v609, %v608
      %s614 = scalar_lea.vmem %s359, 32
      %v615 = vld [vmem:[%s614 + $0x1] sm:$0xff]
      %v616 = vld [vmem:[%s614 + $0x11] sm:$0xff]
      %v617 = vld [vmem:[%s614 + $0x21] sm:$0xff]
      %v618 = vld [vmem:[%s614 + $0x31] sm:$0xff]
      %v619 = vld [vmem:[%s614 + $0x41] sm:$0xff]
      %v620 = vld [vmem:[%s614 + $0x51] sm:$0xff]
      %v621 = vld [vmem:[%s614 + $0x61] sm:$0xff]
      %v622 = vld [vmem:[%s614 + $0x71] sm:$0xff]
      %v623 = vpack.c.bf16 %v616, %v615
      %v624 = vpack.c.bf16 %v618, %v617
      %v625 = vpack.c.bf16 %v620, %v619
      %v626 = vpack.c.bf16 %v622, %v621
      %v627 = vld [vmem:[%s601 + $0x1] sm:$0xff]
      %v628 = vld [vmem:[%s601 + $0x11] sm:$0xff]
      %v629 = vld [vmem:[%s601 + $0x21] sm:$0xff]
      %v630 = vld [vmem:[%s601 + $0x31] sm:$0xff]
      %v631 = vld [vmem:[%s601 + $0x41] sm:$0xff]
      %v632 = vld [vmem:[%s601 + $0x51] sm:$0xff]
      %v633 = vld [vmem:[%s601 + $0x61] sm:$0xff]
      %v634 = vld [vmem:[%s601 + $0x71] sm:$0xff]
      %v635 = vpack.c.bf16 %v628, %v627
      %v636 = vpack.c.bf16 %v630, %v629
      %v637 = vpack.c.bf16 %v632, %v631
      %v638 = vpack.c.bf16 %v634, %v633
      %v639 = vld [vmem:[%s614 + $0x2] sm:$0xff]
      %v640 = vld [vmem:[%s614 + $0x12] sm:$0xff]
      %v641 = vld [vmem:[%s614 + $0x22] sm:$0xff]
      %v642 = vld [vmem:[%s614 + $0x32] sm:$0xff]
      %v643 = vld [vmem:[%s614 + $0x42] sm:$0xff]
      %v644 = vld [vmem:[%s614 + $0x52] sm:$0xff]
      %v645 = vld [vmem:[%s614 + $0x62] sm:$0xff]
      %v646 = vld [vmem:[%s614 + $0x72] sm:$0xff]
      %v647 = vpack.c.bf16 %v640, %v639
      %v648 = vpack.c.bf16 %v642, %v641
      %v649 = vpack.c.bf16 %v644, %v643
      %v650 = vpack.c.bf16 %v646, %v645
      %v651 = vld [vmem:[%s1] sm:$0x3]
      %v652 = vld [vmem:[%s1 + $0x2] sm:$0x3]
      %v653 = vld [vmem:[%s1 + $0x4] sm:$0x3]
      %v654 = vld [vmem:[%s1 + $0x6] sm:$0x3]
      %v655 = vld [vmem:[%s1 + $0x8] sm:$0x3]
      %v656 = vld [vmem:[%s1 + $0xa] sm:$0x3]
      %v657 = vld [vmem:[%s1 + $0xc] sm:$0x3]
      %v658 = vld [vmem:[%s1 + $0xe] sm:$0x3]
      %v659 = vld [vmem:[%s1 + $0x10] sm:$0x3]
      %v660 = vld [vmem:[%s2] sm:$0x1]
      %v662 = vsel %vm369, %v473, 0
      %v665 = vsel %vm369, %v474, 0
      %v668 = vsel %vm369, %v475, 0
      %v671 = vsel %vm369, %v476, 0
      %vm673 = vcmask 1041408
      %v675 = vsel %vm673, %v652, 0
      %677 = vmatprep.subr.bf16.mxu0 0
      %678 = vmatpush1.bf16.msra.mxu0 0
      %679 = vmatprep.subr.bf16.mxu0 0
      %680 = vmatpush1.bf16.msra.mxu0 0
      %681 = vmatprep.subr.bf16.mxu0 0
      %682 = vmatpush1.bf16.msra.mxu0 0
      %683 = vmatprep.subr.bf16.mxu0 0
      %684 = vmatpush1.bf16.msra.mxu0 0
      %685 = vmatprep.subr.bf16.mxu0 0
      %686 = vmatpush1.bf16.msra.mxu0 0
      %687 = vmatprep.subr.bf16.mxu0 0
      %688 = vmatpush1.bf16.msra.mxu0 0
      %689 = vmatprep.subr.bf16.mxu0 0
      %690 = vmatpush1.bf16.msra.mxu0 0
      %691 = vmatprep.subr.bf16.mxu0 0
      %692 = vmatpush1.bf16.msra.mxu0 %v675
      %693 = vmatprep.subr.bf16.mxu0 0
      %694 = vmatpush2.bf16.msra.mxu0 0
      %695 = vmatprep.subr.bf16.mxu0 0
      %696 = vmatpush2.bf16.msra.mxu0 0
      %697 = vmatprep.subr.bf16.mxu0 0
      %698 = vmatpush2.bf16.msra.mxu0 0
      %699 = vmatprep.subr.bf16.mxu0 0
      %700 = vmatpush2.bf16.msra.mxu0 0
      %701 = vmatprep.subr.bf16.mxu0 0
      %702 = vmatpush2.bf16.msra.mxu0 0
      %703 = vmatprep.subr.bf16.mxu0 0
      %704 = vmatpush2.bf16.msra.mxu0 0
      %705 = vmatprep.subr.bf16.mxu0 0
      %706 = vmatpush2.bf16.msra.mxu0 0
      %707 = vmatprep.subr.bf16.mxu0 0
      %708 = vmatpush2.bf16.msra.mxu0 0
      %709 = vmatprep.mubr.bf16.mxu0 0
      %710 = vmatmul.mubr.bf16.gmra.mxu0 %v662
      %v711 = vpop.f32.mrf.mxu0
      %v712 = vadd.f32 0.0, %v711
      %v713 = vpop.f32.mrf.mxu0
      %v714 = vpop.f32.mrf.mxu0
      %v715 = vadd.f32 0.0, %v714
      %v716 = vpop.f32.mrf.mxu0
      %717 = vmatprep.mubr.bf16.mxu0 0
      %718 = vmatmul.mubr.bf16.gmra.mxu0 %v665
      %v719 = vpop.f32.mrf.mxu0
      %v720 = vadd.f32 0.0, %v719
      %v721 = vpop.f32.mrf.mxu0
      %v722 = vpop.f32.mrf.mxu0
      %v723 = vadd.f32 0.0, %v722
      %v724 = vpop.f32.mrf.mxu0
      %725 = vmatprep.mubr.bf16.mxu0 0
      %726 = vmatmul.mubr.bf16.gmra.mxu0 %v668
      %v727 = vpop.f32.mrf.mxu0
      %v728 = vadd.f32 0.0, %v727
      %v729 = vpop.f32.mrf.mxu0
      %v730 = vpop.f32.mrf.mxu0
      %v731 = vadd.f32 0.0, %v730
      %v732 = vpop.f32.mrf.mxu0
      %733 = vmatprep.mubr.bf16.mxu0 0
      %734 = vmatmul.mubr.bf16.gmra.mxu0 %v671
      %v735 = vpop.f32.mrf.mxu0
      %v736 = vadd.f32 0.0, %v735
      %v737 = vpop.f32.mrf.mxu0
      %v738 = vpop.f32.mrf.mxu0
      %v739 = vadd.f32 0.0, %v738
      %v740 = vpop.f32.mrf.mxu0
      %741 = vdwg.mxu0
      %v743 = vsel %vm369, %v460, 0
      %v746 = vsel %vm369, %v461, 0
      %v749 = vsel %vm369, %v462, 0
      %v752 = vsel %vm369, %v463, 0
      %v755 = vsel %vm673, %v651, 0
      %757 = vmatprep.subr.bf16.mxu0 0
      %758 = vmatpush1.bf16.msra.mxu0 0
      %759 = vmatprep.subr.bf16.mxu0 0
      %760 = vmatpush1.bf16.msra.mxu0 0
      %761 = vmatprep.subr.bf16.mxu0 0
      %762 = vmatpush1.bf16.msra.mxu0 0
      %763 = vmatprep.subr.bf16.mxu0 0
      %764 = vmatpush1.bf16.msra.mxu0 0
      %765 = vmatprep.subr.bf16.mxu0 0
      %766 = vmatpush1.bf16.msra.mxu0 0
      %767 = vmatprep.subr.bf16.mxu0 0
      %768 = vmatpush1.bf16.msra.mxu0 0
      %769 = vmatprep.subr.bf16.mxu0 0
      %770 = vmatpush1.bf16.msra.mxu0 0
      %771 = vmatprep.subr.bf16.mxu0 0
      %772 = vmatpush1.bf16.msra.mxu0 %v755
      %773 = vmatprep.subr.bf16.mxu0 0
      %774 = vmatpush2.bf16.msra.mxu0 0
      %775 = vmatprep.subr.bf16.mxu0 0
      %776 = vmatpush2.bf16.msra.mxu0 0
      %777 = vmatprep.subr.bf16.mxu0 0
      %778 = vmatpush2.bf16.msra.mxu0 0
      %779 = vmatprep.subr.bf16.mxu0 0
      %780 = vmatpush2.bf16.msra.mxu0 0
      %781 = vmatprep.subr.bf16.mxu0 0
      %782 = vmatpush2.bf16.msra.mxu0 0
      %783 = vmatprep.subr.bf16.mxu0 0
      %784 = vmatpush2.bf16.msra.mxu0 0
      %785 = vmatprep.subr.bf16.mxu0 0
      %786 = vmatpush2.bf16.msra.mxu0 0
      %787 = vmatprep.subr.bf16.mxu0 0
      %788 = vmatpush2.bf16.msra.mxu0 0
      %789 = vmatprep.mubr.bf16.mxu0 0
      %790 = vmatmul.mubr.bf16.gmra.mxu0 %v743
      %v791 = vpop.f32.mrf.mxu0
      %v792 = vadd.f32 %v712, %v791
      %v793 = vpop.f32.mrf.mxu0
      %v794 = vpop.f32.mrf.mxu0
      %v795 = vadd.f32 %v715, %v794
      %v796 = vpop.f32.mrf.mxu0
      %797 = vmatprep.mubr.bf16.mxu0 0
      %798 = vmatmul.mubr.bf16.gmra.mxu0 %v746
      %v799 = vpop.f32.mrf.mxu0
      %v800 = vadd.f32 %v720, %v799
      %v801 = vpop.f32.mrf.mxu0
      %v802 = vpop.f32.mrf.mxu0
      %v803 = vadd.f32 %v723, %v802
      %v804 = vpop.f32.mrf.mxu0
      %805 = vmatprep.mubr.bf16.mxu0 0
      %806 = vmatmul.mubr.bf16.gmra.mxu0 %v749
      %v807 = vpop.f32.mrf.mxu0
      %v808 = vadd.f32 %v728, %v807
      %v809 = vpop.f32.mrf.mxu0
      %v810 = vpop.f32.mrf.mxu0
      %v811 = vadd.f32 %v731, %v810
      %v812 = vpop.f32.mrf.mxu0
      %813 = vmatprep.mubr.bf16.mxu0 0
      %814 = vmatmul.mubr.bf16.gmra.mxu0 %v752
      %v815 = vpop.f32.mrf.mxu0
      %v816 = vadd.f32 %v736, %v815
      %v817 = vpop.f32.mrf.mxu0
      %v818 = vpop.f32.mrf.mxu0
      %v819 = vadd.f32 %v739, %v818
      %v820 = vpop.f32.mrf.mxu0
      %821 = vdwg.mxu0
      %v823 = vsel %vm369, %v485, 0
      %v826 = vsel %vm369, %v486, 0
      %v829 = vsel %vm369, %v487, 0
      %v832 = vsel %vm369, %v488, 0
      %v835 = vsel %vm673, %v653, 0
      %837 = vmatprep.subr.bf16.mxu0 0
      %838 = vmatpush1.bf16.msra.mxu0 0
      %839 = vmatprep.subr.bf16.mxu0 0
      %840 = vmatpush1.bf16.msra.mxu0 0
      %841 = vmatprep.subr.bf16.mxu0 0
      %842 = vmatpush1.bf16.msra.mxu0 0
      %843 = vmatprep.subr.bf16.mxu0 0
      %844 = vmatpush1.bf16.msra.mxu0 0
      %845 = vmatprep.subr.bf16.mxu0 0
      %846 = vmatpush1.bf16.msra.mxu0 0
      %847 = vmatprep.subr.bf16.mxu0 0
      %848 = vmatpush1.bf16.msra.mxu0 0
      %849 = vmatprep.subr.bf16.mxu0 0
      %850 = vmatpush1.bf16.msra.mxu0 0
      %851 = vmatprep.subr.bf16.mxu0 0
      %852 = vmatpush1.bf16.msra.mxu0 %v835
      %853 = vmatprep.subr.bf16.mxu0 0
      %854 = vmatpush2.bf16.msra.mxu0 0
      %855 = vmatprep.subr.bf16.mxu0 0
      %856 = vmatpush2.bf16.msra.mxu0 0
      %857 = vmatprep.subr.bf16.mxu0 0
      %858 = vmatpush2.bf16.msra.mxu0 0
      %859 = vmatprep.subr.bf16.mxu0 0
      %860 = vmatpush2.bf16.msra.mxu0 0
      %861 = vmatprep.subr.bf16.mxu0 0
      %862 = vmatpush2.bf16.msra.mxu0 0
      %863 = vmatprep.subr.bf16.mxu0 0
      %864 = vmatpush2.bf16.msra.mxu0 0
      %865 = vmatprep.subr.bf16.mxu0 0
      %866 = vmatpush2.bf16.msra.mxu0 0
      %867 = vmatprep.subr.bf16.mxu0 0
      %868 = vmatpush2.bf16.msra.mxu0 0
      %869 = vmatprep.mubr.bf16.mxu0 0
      %870 = vmatmul.mubr.bf16.gmra.mxu0 %v823
      %v871 = vpop.f32.mrf.mxu0
      %v872 = vadd.f32 0.0, %v871
      %v873 = vpop.f32.mrf.mxu0
      %v874 = vpop.f32.mrf.mxu0
      %v875 = vadd.f32 0.0, %v874
      %v876 = vpop.f32.mrf.mxu0
      %877 = vmatprep.mubr.bf16.mxu0 0
      %878 = vmatmul.mubr.bf16.gmra.mxu0 %v826
      %v879 = vpop.f32.mrf.mxu0
      %v880 = vadd.f32 0.0, %v879
      %v881 = vpop.f32.mrf.mxu0
      %v882 = vpop.f32.mrf.mxu0
      %v883 = vadd.f32 0.0, %v882
      %v884 = vpop.f32.mrf.mxu0
      %885 = vmatprep.mubr.bf16.mxu0 0
      %886 = vmatmul.mubr.bf16.gmra.mxu0 %v829
      %v887 = vpop.f32.mrf.mxu0
      %v888 = vadd.f32 0.0, %v887
      %v889 = vpop.f32.mrf.mxu0
      %v890 = vpop.f32.mrf.mxu0
      %v891 = vadd.f32 0.0, %v890
      %v892 = vpop.f32.mrf.mxu0
      %893 = vmatprep.mubr.bf16.mxu0 0
      %894 = vmatmul.mubr.bf16.gmra.mxu0 %v832
      %v895 = vpop.f32.mrf.mxu0
      %v896 = vadd.f32 0.0, %v895
      %v897 = vpop.f32.mrf.mxu0
      %v898 = vpop.f32.mrf.mxu0
      %v899 = vadd.f32 0.0, %v898
      %v900 = vpop.f32.mrf.mxu0
      %901 = vdwg.mxu0
      %v902 = vadd.f32 %v792, %v872
      %v903 = vadd.f32 %v795, %v875
      %v904 = vadd.f32 %v800, %v880
      %v905 = vadd.f32 %v803, %v883
      %v906 = vadd.f32 %v808, %v888
      %v907 = vadd.f32 %v811, %v891
      %v908 = vadd.f32 %v816, %v896
      %v909 = vadd.f32 %v819, %v899
      %v911 = vsel %vm369, %v510, 0
      %v914 = vsel %vm369, %v511, 0
      %v917 = vsel %vm369, %v512, 0
      %v920 = vsel %vm369, %v513, 0
      %v923 = vsel %vm673, %v654, 0
      %925 = vmatprep.subr.bf16.mxu0 0
      %926 = vmatpush1.bf16.msra.mxu0 0
      %927 = vmatprep.subr.bf16.mxu0 0
      %928 = vmatpush1.bf16.msra.mxu0 0
      %929 = vmatprep.subr.bf16.mxu0 0
      %930 = vmatpush1.bf16.msra.mxu0 0
      %931 = vmatprep.subr.bf16.mxu0 0
      %932 = vmatpush1.bf16.msra.mxu0 0
      %933 = vmatprep.subr.bf16.mxu0 0
      %934 = vmatpush1.bf16.msra.mxu0 0
      %935 = vmatprep.subr.bf16.mxu0 0
      %936 = vmatpush1.bf16.msra.mxu0 0
      %937 = vmatprep.subr.bf16.mxu0 0
      %938 = vmatpush1.bf16.msra.mxu0 0
      %939 = vmatprep.subr.bf16.mxu0 0
      %940 = vmatpush1.bf16.msra.mxu0 %v923
      %941 = vmatprep.subr.bf16.mxu0 0
      %942 = vmatpush2.bf16.msra.mxu0 0
      %943 = vmatprep.subr.bf16.mxu0 0
      %944 = vmatpush2.bf16.msra.mxu0 0
      %945 = vmatprep.subr.bf16.mxu0 0
      %946 = vmatpush2.bf16.msra.mxu0 0
      %947 = vmatprep.subr.bf16.mxu0 0
      %948 = vmatpush2.bf16.msra.mxu0 0
      %949 = vmatprep.subr.bf16.mxu0 0
      %950 = vmatpush2.bf16.msra.mxu0 0
      %951 = vmatprep.subr.bf16.mxu0 0
      %952 = vmatpush2.bf16.msra.mxu0 0
      %953 = vmatprep.subr.bf16.mxu0 0
      %954 = vmatpush2.bf16.msra.mxu0 0
      %955 = vmatprep.subr.bf16.mxu0 0
      %956 = vmatpush2.bf16.msra.mxu0 0
      %957 = vmatprep.mubr.bf16.mxu0 0
      %958 = vmatmul.mubr.bf16.gmra.mxu0 %v911
      %v959 = vpop.f32.mrf.mxu0
      %v960 = vadd.f32 0.0, %v959
      %v961 = vpop.f32.mrf.mxu0
      %v962 = vpop.f32.mrf.mxu0
      %v963 = vadd.f32 0.0, %v962
      %v964 = vpop.f32.mrf.mxu0
      %965 = vmatprep.mubr.bf16.mxu0 0
      %966 = vmatmul.mubr.bf16.gmra.mxu0 %v914
      %v967 = vpop.f32.mrf.mxu0
      %v968 = vadd.f32 0.0, %v967
      %v969 = vpop.f32.mrf.mxu0
      %v970 = vpop.f32.mrf.mxu0
      %v971 = vadd.f32 0.0, %v970
      %v972 = vpop.f32.mrf.mxu0
      %973 = vmatprep.mubr.bf16.mxu0 0
      %974 = vmatmul.mubr.bf16.gmra.mxu0 %v917
      %v975 = vpop.f32.mrf.mxu0
      %v976 = vadd.f32 0.0, %v975
      %v977 = vpop.f32.mrf.mxu0
      %v978 = vpop.f32.mrf.mxu0
      %v979 = vadd.f32 0.0, %v978
      %v980 = vpop.f32.mrf.mxu0
      %981 = vmatprep.mubr.bf16.mxu0 0
      %982 = vmatmul.mubr.bf16.gmra.mxu0 %v920
      %v983 = vpop.f32.mrf.mxu0
      %v984 = vadd.f32 0.0, %v983
      %v985 = vpop.f32.mrf.mxu0
      %v986 = vpop.f32.mrf.mxu0
      %v987 = vadd.f32 0.0, %v986
      %v988 = vpop.f32.mrf.mxu0
      %989 = vdwg.mxu0
      %v990 = vadd.f32 %v902, %v960
      %v991 = vadd.f32 %v903, %v963
      %v992 = vadd.f32 %v904, %v968
      %v993 = vadd.f32 %v905, %v971
      %v994 = vadd.f32 %v906, %v976
      %v995 = vadd.f32 %v907, %v979
      %v996 = vadd.f32 %v908, %v984
      %v997 = vadd.f32 %v909, %v987
      %v999 = vsel %vm369, %v523, 0
      %v1002 = vsel %vm369, %v524, 0
      %v1005 = vsel %vm369, %v525, 0
      %v1008 = vsel %vm369, %v526, 0
      %v1011 = vsel %vm673, %v655, 0
      %1013 = vmatprep.subr.bf16.mxu0 0
      %1014 = vmatpush1.bf16.msra.mxu0 0
      %1015 = vmatprep.subr.bf16.mxu0 0
      %1016 = vmatpush1.bf16.msra.mxu0 0
      %1017 = vmatprep.subr.bf16.mxu0 0
      %1018 = vmatpush1.bf16.msra.mxu0 0
      %1019 = vmatprep.subr.bf16.mxu0 0
      %1020 = vmatpush1.bf16.msra.mxu0 0
      %1021 = vmatprep.subr.bf16.mxu0 0
      %1022 = vmatpush1.bf16.msra.mxu0 0
      %1023 = vmatprep.subr.bf16.mxu0 0
      %1024 = vmatpush1.bf16.msra.mxu0 0
      %1025 = vmatprep.subr.bf16.mxu0 0
      %1026 = vmatpush1.bf16.msra.mxu0 0
      %1027 = vmatprep.subr.bf16.mxu0 0
      %1028 = vmatpush1.bf16.msra.mxu0 %v1011
      %1029 = vmatprep.subr.bf16.mxu0 0
      %1030 = vmatpush2.bf16.msra.mxu0 0
      %1031 = vmatprep.subr.bf16.mxu0 0
      %1032 = vmatpush2.bf16.msra.mxu0 0
      %1033 = vmatprep.subr.bf16.mxu0 0
      %1034 = vmatpush2.bf16.msra.mxu0 0
      %1035 = vmatprep.subr.bf16.mxu0 0
      %1036 = vmatpush2.bf16.msra.mxu0 0
      %1037 = vmatprep.subr.bf16.mxu0 0
      %1038 = vmatpush2.bf16.msra.mxu0 0
      %1039 = vmatprep.subr.bf16.mxu0 0
      %1040 = vmatpush2.bf16.msra.mxu0 0
      %1041 = vmatprep.subr.bf16.mxu0 0
      %1042 = vmatpush2.bf16.msra.mxu0 0
      %1043 = vmatprep.subr.bf16.mxu0 0
      %1044 = vmatpush2.bf16.msra.mxu0 0
      %1045 = vmatprep.mubr.bf16.mxu0 0
      %1046 = vmatmul.mubr.bf16.gmra.mxu0 %v999
      %v1047 = vpop.f32.mrf.mxu0
      %v1048 = vadd.f32 0.0, %v1047
      %v1049 = vpop.f32.mrf.mxu0
      %v1050 = vpop.f32.mrf.mxu0
      %v1051 = vadd.f32 0.0, %v1050
      %v1052 = vpop.f32.mrf.mxu0
      %1053 = vmatprep.mubr.bf16.mxu0 0
      %1054 = vmatmul.mubr.bf16.gmra.mxu0 %v1002
      %v1055 = vpop.f32.mrf.mxu0
      %v1056 = vadd.f32 0.0, %v1055
      %v1057 = vpop.f32.mrf.mxu0
      %v1058 = vpop.f32.mrf.mxu0
      %v1059 = vadd.f32 0.0, %v1058
      %v1060 = vpop.f32.mrf.mxu0
      %1061 = vmatprep.mubr.bf16.mxu0 0
      %1062 = vmatmul.mubr.bf16.gmra.mxu0 %v1005
      %v1063 = vpop.f32.mrf.mxu0
      %v1064 = vadd.f32 0.0, %v1063
      %v1065 = vpop.f32.mrf.mxu0
      %v1066 = vpop.f32.mrf.mxu0
      %v1067 = vadd.f32 0.0, %v1066
      %v1068 = vpop.f32.mrf.mxu0
      %1069 = vmatprep.mubr.bf16.mxu0 0
      %1070 = vmatmul.mubr.bf16.gmra.mxu0 %v1008
      %v1071 = vpop.f32.mrf.mxu0
      %v1072 = vadd.f32 0.0, %v1071
      %v1073 = vpop.f32.mrf.mxu0
      %v1074 = vpop.f32.mrf.mxu0
      %v1075 = vadd.f32 0.0, %v1074
      %v1076 = vpop.f32.mrf.mxu0
      %1077 = vdwg.mxu0
      %v1078 = vadd.f32 %v990, %v1048
      %v1079 = vadd.f32 %v991, %v1051
      %v1080 = vadd.f32 %v992, %v1056
      %v1081 = vadd.f32 %v993, %v1059
      %v1082 = vadd.f32 %v994, %v1064
      %v1083 = vadd.f32 %v995, %v1067
      %v1084 = vadd.f32 %v996, %v1072
      %v1085 = vadd.f32 %v997, %v1075
      %v1087 = vsel %vm369, %v535, 0
      %v1090 = vsel %vm369, %v536, 0
      %v1093 = vsel %vm369, %v537, 0
      %v1096 = vsel %vm369, %v538, 0
      %v1099 = vsel %vm673, %v656, 0
      %1101 = vmatprep.subr.bf16.mxu0 0
      %1102 = vmatpush1.bf16.msra.mxu0 0
      %1103 = vmatprep.subr.bf16.mxu0 0
      %1104 = vmatpush1.bf16.msra.mxu0 0
      %1105 = vmatprep.subr.bf16.mxu0 0
      %1106 = vmatpush1.bf16.msra.mxu0 0
      %1107 = vmatprep.subr.bf16.mxu0 0
      %1108 = vmatpush1.bf16.msra.mxu0 0
      %1109 = vmatprep.subr.bf16.mxu0 0
      %1110 = vmatpush1.bf16.msra.mxu0 0
      %1111 = vmatprep.subr.bf16.mxu0 0
      %1112 = vmatpush1.bf16.msra.mxu0 0
      %1113 = vmatprep.subr.bf16.mxu0 0
      %1114 = vmatpush1.bf16.msra.mxu0 0
      %1115 = vmatprep.subr.bf16.mxu0 0
      %1116 = vmatpush1.bf16.msra.mxu0 %v1099
      %1117 = vmatprep.subr.bf16.mxu0 0
      %1118 = vmatpush2.bf16.msra.mxu0 0
      %1119 = vmatprep.subr.bf16.mxu0 0
      %1120 = vmatpush2.bf16.msra.mxu0 0
      %1121 = vmatprep.subr.bf16.mxu0 0
      %1122 = vmatpush2.bf16.msra.mxu0 0
      %1123 = vmatprep.subr.bf16.mxu0 0
      %1124 = vmatpush2.bf16.msra.mxu0 0
      %1125 = vmatprep.subr.bf16.mxu0 0
      %1126 = vmatpush2.bf16.msra.mxu0 0
      %1127 = vmatprep.subr.bf16.mxu0 0
      %1128 = vmatpush2.bf16.msra.mxu0 0
      %1129 = vmatprep.subr.bf16.mxu0 0
      %1130 = vmatpush2.bf16.msra.mxu0 0
      %1131 = vmatprep.subr.bf16.mxu0 0
      %1132 = vmatpush2.bf16.msra.mxu0 0
      %1133 = vmatprep.mubr.bf16.mxu0 0
      %1134 = vmatmul.mubr.bf16.gmra.mxu0 %v1087
      %v1135 = vpop.f32.mrf.mxu0
      %v1136 = vadd.f32 0.0, %v1135
      %v1137 = vpop.f32.mrf.mxu0
      %v1138 = vpop.f32.mrf.mxu0
      %v1139 = vadd.f32 0.0, %v1138
      %v1140 = vpop.f32.mrf.mxu0
      %1141 = vmatprep.mubr.bf16.mxu0 0
      %1142 = vmatmul.mubr.bf16.gmra.mxu0 %v1090
      %v1143 = vpop.f32.mrf.mxu0
      %v1144 = vadd.f32 0.0, %v1143
      %v1145 = vpop.f32.mrf.mxu0
      %v1146 = vpop.f32.mrf.mxu0
      %v1147 = vadd.f32 0.0, %v1146
      %v1148 = vpop.f32.mrf.mxu0
      %1149 = vmatprep.mubr.bf16.mxu0 0
      %1150 = vmatmul.mubr.bf16.gmra.mxu0 %v1093
      %v1151 = vpop.f32.mrf.mxu0
      %v1152 = vadd.f32 0.0, %v1151
      %v1153 = vpop.f32.mrf.mxu0
      %v1154 = vpop.f32.mrf.mxu0
      %v1155 = vadd.f32 0.0, %v1154
      %v1156 = vpop.f32.mrf.mxu0
      %1157 = vmatprep.mubr.bf16.mxu0 0
      %1158 = vmatmul.mubr.bf16.gmra.mxu0 %v1096
      %v1159 = vpop.f32.mrf.mxu0
      %v1160 = vadd.f32 0.0, %v1159
      %v1161 = vpop.f32.mrf.mxu0
      %v1162 = vpop.f32.mrf.mxu0
      %v1163 = vadd.f32 0.0, %v1162
      %v1164 = vpop.f32.mrf.mxu0
      %1165 = vdwg.mxu0
      %v1166 = vadd.f32 %v1078, %v1136
      %v1167 = vadd.f32 %v1079, %v1139
      %v1168 = vadd.f32 %v1080, %v1144
      %v1169 = vadd.f32 %v1081, %v1147
      %v1170 = vadd.f32 %v1082, %v1152
      %v1171 = vadd.f32 %v1083, %v1155
      %v1172 = vadd.f32 %v1084, %v1160
      %v1173 = vadd.f32 %v1085, %v1163
      %v1175 = vsel %vm369, %v560, 0
      %v1178 = vsel %vm369, %v561, 0
      %v1181 = vsel %vm369, %v562, 0
      %v1184 = vsel %vm369, %v563, 0
      %v1187 = vsel %vm673, %v657, 0
      %1189 = vmatprep.subr.bf16.mxu0 0
      %1190 = vmatpush1.bf16.msra.mxu0 0
      %1191 = vmatprep.subr.bf16.mxu0 0
      %1192 = vmatpush1.bf16.msra.mxu0 0
      %1193 = vmatprep.subr.bf16.mxu0 0
      %1194 = vmatpush1.bf16.msra.mxu0 0
      %1195 = vmatprep.subr.bf16.mxu0 0
      %1196 = vmatpush1.bf16.msra.mxu0 0
      %1197 = vmatprep.subr.bf16.mxu0 0
      %1198 = vmatpush1.bf16.msra.mxu0 0
      %1199 = vmatprep.subr.bf16.mxu0 0
      %1200 = vmatpush1.bf16.msra.mxu0 0
      %1201 = vmatprep.subr.bf16.mxu0 0
      %1202 = vmatpush1.bf16.msra.mxu0 0
      %1203 = vmatprep.subr.bf16.mxu0 0
      %1204 = vmatpush1.bf16.msra.mxu0 %v1187
      %1205 = vmatprep.subr.bf16.mxu0 0
      %1206 = vmatpush2.bf16.msra.mxu0 0
      %1207 = vmatprep.subr.bf16.mxu0 0
      %1208 = vmatpush2.bf16.msra.mxu0 0
      %1209 = vmatprep.subr.bf16.mxu0 0
      %1210 = vmatpush2.bf16.msra.mxu0 0
      %1211 = vmatprep.subr.bf16.mxu0 0
      %1212 = vmatpush2.bf16.msra.mxu0 0
      %1213 = vmatprep.subr.bf16.mxu0 0
      %1214 = vmatpush2.bf16.msra.mxu0 0
      %1215 = vmatprep.subr.bf16.mxu0 0
      %1216 = vmatpush2.bf16.msra.mxu0 0
      %1217 = vmatprep.subr.bf16.mxu0 0
      %1218 = vmatpush2.bf16.msra.mxu0 0
      %1219 = vmatprep.subr.bf16.mxu0 0
      %1220 = vmatpush2.bf16.msra.mxu0 0
      %1221 = vmatprep.mubr.bf16.mxu0 0
      %1222 = vmatmul.mubr.bf16.gmra.mxu0 %v1175
      %v1223 = vpop.f32.mrf.mxu0
      %v1224 = vadd.f32 0.0, %v1223
      %v1225 = vpop.f32.mrf.mxu0
      %v1226 = vpop.f32.mrf.mxu0
      %v1227 = vadd.f32 0.0, %v1226
      %v1228 = vpop.f32.mrf.mxu0
      %1229 = vmatprep.mubr.bf16.mxu0 0
      %1230 = vmatmul.mubr.bf16.gmra.mxu0 %v1178
      %v1231 = vpop.f32.mrf.mxu0
      %v1232 = vadd.f32 0.0, %v1231
      %v1233 = vpop.f32.mrf.mxu0
      %v1234 = vpop.f32.mrf.mxu0
      %v1235 = vadd.f32 0.0, %v1234
      %v1236 = vpop.f32.mrf.mxu0
      %1237 = vmatprep.mubr.bf16.mxu0 0
      %1238 = vmatmul.mubr.bf16.gmra.mxu0 %v1181
      %v1239 = vpop.f32.mrf.mxu0
      %v1240 = vadd.f32 0.0, %v1239
      %v1241 = vpop.f32.mrf.mxu0
      %v1242 = vpop.f32.mrf.mxu0
      %v1243 = vadd.f32 0.0, %v1242
      %v1244 = vpop.f32.mrf.mxu0
      %1245 = vmatprep.mubr.bf16.mxu0 0
      %1246 = vmatmul.mubr.bf16.gmra.mxu0 %v1184
      %v1247 = vpop.f32.mrf.mxu0
      %v1248 = vadd.f32 0.0, %v1247
      %v1249 = vpop.f32.mrf.mxu0
      %v1250 = vpop.f32.mrf.mxu0
      %v1251 = vadd.f32 0.0, %v1250
      %v1252 = vpop.f32.mrf.mxu0
      %1253 = vdwg.mxu0
      %v1254 = vadd.f32 %v1166, %v1224
      %v1255 = vadd.f32 %v1167, %v1227
      %v1256 = vadd.f32 %v1168, %v1232
      %v1257 = vadd.f32 %v1169, %v1235
      %v1258 = vadd.f32 %v1170, %v1240
      %v1259 = vadd.f32 %v1171, %v1243
      %v1260 = vadd.f32 %v1172, %v1248
      %v1261 = vadd.f32 %v1173, %v1251
      %v1263 = vsel %vm369, %v573, 0
      %v1266 = vsel %vm369, %v574, 0
      %v1269 = vsel %vm369, %v575, 0
      %v1272 = vsel %vm369, %v576, 0
      %v1275 = vsel %vm673, %v658, 0
      %1277 = vmatprep.subr.bf16.mxu0 0
      %1278 = vmatpush1.bf16.msra.mxu0 0
      %1279 = vmatprep.subr.bf16.mxu0 0
      %1280 = vmatpush1.bf16.msra.mxu0 0
      %1281 = vmatprep.subr.bf16.mxu0 0
      %1282 = vmatpush1.bf16.msra.mxu0 0
      %1283 = vmatprep.subr.bf16.mxu0 0
      %1284 = vmatpush1.bf16.msra.mxu0 0
      %1285 = vmatprep.subr.bf16.mxu0 0
      %1286 = vmatpush1.bf16.msra.mxu0 0
      %1287 = vmatprep.subr.bf16.mxu0 0
      %1288 = vmatpush1.bf16.msra.mxu0 0
      %1289 = vmatprep.subr.bf16.mxu0 0
      %1290 = vmatpush1.bf16.msra.mxu0 0
      %1291 = vmatprep.subr.bf16.mxu0 0
      %1292 = vmatpush1.bf16.msra.mxu0 %v1275
      %1293 = vmatprep.subr.bf16.mxu0 0
      %1294 = vmatpush2.bf16.msra.mxu0 0
      %1295 = vmatprep.subr.bf16.mxu0 0
      %1296 = vmatpush2.bf16.msra.mxu0 0
      %1297 = vmatprep.subr.bf16.mxu0 0
      %1298 = vmatpush2.bf16.msra.mxu0 0
      %1299 = vmatprep.subr.bf16.mxu0 0
      %1300 = vmatpush2.bf16.msra.mxu0 0
      %1301 = vmatprep.subr.bf16.mxu0 0
      %1302 = vmatpush2.bf16.msra.mxu0 0
      %1303 = vmatprep.subr.bf16.mxu0 0
      %1304 = vmatpush2.bf16.msra.mxu0 0
      %1305 = vmatprep.subr.bf16.mxu0 0
      %1306 = vmatpush2.bf16.msra.mxu0 0
      %1307 = vmatprep.subr.bf16.mxu0 0
      %1308 = vmatpush2.bf16.msra.mxu0 0
      %1309 = vmatprep.mubr.bf16.mxu0 0
      %1310 = vmatmul.mubr.bf16.gmra.mxu0 %v1263
      %v1311 = vpop.f32.mrf.mxu0
      %v1312 = vadd.f32 0.0, %v1311
      %v1313 = vpop.f32.mrf.mxu0
      %v1314 = vpop.f32.mrf.mxu0
      %v1315 = vadd.f32 0.0, %v1314
      %v1316 = vpop.f32.mrf.mxu0
      %1317 = vmatprep.mubr.bf16.mxu0 0
      %1318 = vmatmul.mubr.bf16.gmra.mxu0 %v1266
      %v1319 = vpop.f32.mrf.mxu0
      %v1320 = vadd.f32 0.0, %v1319
      %v1321 = vpop.f32.mrf.mxu0
      %v1322 = vpop.f32.mrf.mxu0
      %v1323 = vadd.f32 0.0, %v1322
      %v1324 = vpop.f32.mrf.mxu0
      %1325 = vmatprep.mubr.bf16.mxu0 0
      %1326 = vmatmul.mubr.bf16.gmra.mxu0 %v1269
      %v1327 = vpop.f32.mrf.mxu0
      %v1328 = vadd.f32 0.0, %v1327
      %v1329 = vpop.f32.mrf.mxu0
      %v1330 = vpop.f32.mrf.mxu0
      %v1331 = vadd.f32 0.0, %v1330
      %v1332 = vpop.f32.mrf.mxu0
      %1333 = vmatprep.mubr.bf16.mxu0 0
      %1334 = vmatmul.mubr.bf16.gmra.mxu0 %v1272
      %v1335 = vpop.f32.mrf.mxu0
      %v1336 = vadd.f32 0.0, %v1335
      %v1337 = vpop.f32.mrf.mxu0
      %v1338 = vpop.f32.mrf.mxu0
      %v1339 = vadd.f32 0.0, %v1338
      %v1340 = vpop.f32.mrf.mxu0
      %1341 = vdwg.mxu0
      %v1342 = vadd.f32 %v1254, %v1312
      %v1343 = vadd.f32 %v1255, %v1315
      %v1344 = vadd.f32 %v1256, %v1320
      %v1345 = vadd.f32 %v1257, %v1323
      %v1346 = vadd.f32 %v1258, %v1328
      %v1347 = vadd.f32 %v1259, %v1331
      %v1348 = vadd.f32 %v1260, %v1336
      %v1349 = vadd.f32 %v1261, %v1339
      %v1351 = vsel %vm369, %v585, 0
      %v1354 = vsel %vm369, %v586, 0
      %v1357 = vsel %vm369, %v587, 0
      %v1360 = vsel %vm369, %v588, 0
      %v1363 = vsel %vm673, %v659, 0
      %1365 = vmatprep.subr.bf16.mxu0 0
      %1366 = vmatpush1.bf16.msra.mxu0 0
      %1367 = vmatprep.subr.bf16.mxu0 0
      %1368 = vmatpush1.bf16.msra.mxu0 0
      %1369 = vmatprep.subr.bf16.mxu0 0
      %1370 = vmatpush1.bf16.msra.mxu0 0
      %1371 = vmatprep.subr.bf16.mxu0 0
      %1372 = vmatpush1.bf16.msra.mxu0 0
      %1373 = vmatprep.subr.bf16.mxu0 0
      %1374 = vmatpush1.bf16.msra.mxu0 0
      %1375 = vmatprep.subr.bf16.mxu0 0
      %1376 = vmatpush1.bf16.msra.mxu0 0
      %1377 = vmatprep.subr.bf16.mxu0 0
      %1378 = vmatpush1.bf16.msra.mxu0 0
      %1379 = vmatprep.subr.bf16.mxu0 0
      %1380 = vmatpush1.bf16.msra.mxu0 %v1363
      %1381 = vmatprep.subr.bf16.mxu0 0
      %1382 = vmatpush2.bf16.msra.mxu0 0
      %1383 = vmatprep.subr.bf16.mxu0 0
      %1384 = vmatpush2.bf16.msra.mxu0 0
      %1385 = vmatprep.subr.bf16.mxu0 0
      %1386 = vmatpush2.bf16.msra.mxu0 0
      %1387 = vmatprep.subr.bf16.mxu0 0
      %1388 = vmatpush2.bf16.msra.mxu0 0
      %1389 = vmatprep.subr.bf16.mxu0 0
      %1390 = vmatpush2.bf16.msra.mxu0 0
      %1391 = vmatprep.subr.bf16.mxu0 0
      %1392 = vmatpush2.bf16.msra.mxu0 0
      %1393 = vmatprep.subr.bf16.mxu0 0
      %1394 = vmatpush2.bf16.msra.mxu0 0
      %1395 = vmatprep.subr.bf16.mxu0 0
      %1396 = vmatpush2.bf16.msra.mxu0 0
      %1397 = vmatprep.mubr.bf16.mxu0 0
      %1398 = vmatmul.mubr.bf16.gmra.mxu0 %v1351
      %v1399 = vpop.f32.mrf.mxu0
      %v1400 = vadd.f32 0.0, %v1399
      %v1401 = vpop.f32.mrf.mxu0
      %v1402 = vpop.f32.mrf.mxu0
      %v1403 = vadd.f32 0.0, %v1402
      %v1404 = vpop.f32.mrf.mxu0
      %1405 = vmatprep.mubr.bf16.mxu0 0
      %1406 = vmatmul.mubr.bf16.gmra.mxu0 %v1354
      %v1407 = vpop.f32.mrf.mxu0
      %v1408 = vadd.f32 0.0, %v1407
      %v1409 = vpop.f32.mrf.mxu0
      %v1410 = vpop.f32.mrf.mxu0
      %v1411 = vadd.f32 0.0, %v1410
      %v1412 = vpop.f32.mrf.mxu0
      %1413 = vmatprep.mubr.bf16.mxu0 0
      %1414 = vmatmul.mubr.bf16.gmra.mxu0 %v1357
      %v1415 = vpop.f32.mrf.mxu0
      %v1416 = vadd.f32 0.0, %v1415
      %v1417 = vpop.f32.mrf.mxu0
      %v1418 = vpop.f32.mrf.mxu0
      %v1419 = vadd.f32 0.0, %v1418
      %v1420 = vpop.f32.mrf.mxu0
      %1421 = vmatprep.mubr.bf16.mxu0 0
      %1422 = vmatmul.mubr.bf16.gmra.mxu0 %v1360
      %v1423 = vpop.f32.mrf.mxu0
      %v1424 = vadd.f32 0.0, %v1423
      %v1425 = vpop.f32.mrf.mxu0
      %v1426 = vpop.f32.mrf.mxu0
      %v1427 = vadd.f32 0.0, %v1426
      %v1428 = vpop.f32.mrf.mxu0
      %1429 = vdwg.mxu0
      %v1430 = vadd.f32 %v1342, %v1400
      %v1431 = vadd.f32 %v1343, %v1403
      %v1432 = vadd.f32 %v1344, %v1408
      %v1433 = vadd.f32 %v1345, %v1411
      %v1434 = vadd.f32 %v1346, %v1416
      %v1435 = vadd.f32 %v1347, %v1419
      %v1436 = vadd.f32 %v1348, %v1424
      %v1437 = vadd.f32 %v1349, %v1427
      %v1439 = vlaneseq
      %v1440 = vshrl.u32 %v1439, 7
      %v1441 = vsub.s32 0, %v1440
      %v1442 = vrot.slane %v660, %v1441
      %v1444 = vadd.f32 %v1430, %v1442
      %v1445 = vadd.f32 %v1431, %v1442
      %v1446 = vadd.f32 %v1432, %v1442
      %v1447 = vadd.f32 %v1433, %v1442
      %v1448 = vadd.f32 %v1434, %v1442
      %v1449 = vadd.f32 %v1435, %v1442
      %v1450 = vadd.f32 %v1436, %v1442
      %v1451 = vadd.f32 %v1437, %v1442
      %v1452 = vmax.f32 %v1444, 0.0
      %v1453 = vmax.f32 %v1445, 0.0
      %v1454 = vmax.f32 %v1446, 0.0
      %v1455 = vmax.f32 %v1447, 0.0
      %v1456 = vmax.f32 %v1448, 0.0
      %v1457 = vmax.f32 %v1449, 0.0
      %v1458 = vmax.f32 %v1450, 0.0
      %v1459 = vmax.f32 %v1451, 0.0
      %s1460 = scalar_lea.vmem [#allocation2], 16
      %1461 = vst.msk [vmem:[%s1460 + $0x1] sm:$0xff] %vm369, %v1452
      %1462 = vst.msk [vmem:[%s1460 + $0x11] sm:$0xff] %vm369, %v1453
      %1463 = vst.msk [vmem:[%s1460 + $0x21] sm:$0xff] %vm369, %v1454
      %1464 = vst.msk [vmem:[%s1460 + $0x31] sm:$0xff] %vm369, %v1455
      %1465 = vst.msk [vmem:[%s1460 + $0x41] sm:$0xff] %vm369, %v1456
      %1466 = vst.msk [vmem:[%s1460 + $0x51] sm:$0xff] %vm369, %v1457
      %1467 = vst.msk [vmem:[%s1460 + $0x61] sm:$0xff] %vm369, %v1458
      %1468 = vst.msk [vmem:[%s1460 + $0x71] sm:$0xff] %vm369, %v1459
      %1469 = vmatprep.subr.bf16.mxu0 0
      %1470 = vmatpush1.bf16.msra.mxu0 0
      %1471 = vmatprep.subr.bf16.mxu0 0
      %1472 = vmatpush1.bf16.msra.mxu0 0
      %1473 = vmatprep.subr.bf16.mxu0 0
      %1474 = vmatpush1.bf16.msra.mxu0 0
      %1475 = vmatprep.subr.bf16.mxu0 0
      %1476 = vmatpush1.bf16.msra.mxu0 0
      %1477 = vmatprep.subr.bf16.mxu0 0
      %1478 = vmatpush1.bf16.msra.mxu0 0
      %1479 = vmatprep.subr.bf16.mxu0 0
      %1480 = vmatpush1.bf16.msra.mxu0 0
      %1481 = vmatprep.subr.bf16.mxu0 0
      %1482 = vmatpush1.bf16.msra.mxu0 0
      %1483 = vmatprep.subr.bf16.mxu0 0
      %1484 = vmatpush1.bf16.msra.mxu0 %v675
      %1485 = vmatprep.subr.bf16.mxu0 0
      %1486 = vmatpush2.bf16.msra.mxu0 0
      %1487 = vmatprep.subr.bf16.mxu0 0
      %1488 = vmatpush2.bf16.msra.mxu0 0
      %1489 = vmatprep.subr.bf16.mxu0 0
      %1490 = vmatpush2.bf16.msra.mxu0 0
      %1491 = vmatprep.subr.bf16.mxu0 0
      %1492 = vmatpush2.bf16.msra.mxu0 0
      %1493 = vmatprep.subr.bf16.mxu0 0
      %1494 = vmatpush2.bf16.msra.mxu0 0
      %1495 = vmatprep.subr.bf16.mxu0 0
      %1496 = vmatpush2.bf16.msra.mxu0 0
      %1497 = vmatprep.subr.bf16.mxu0 0
      %1498 = vmatpush2.bf16.msra.mxu0 0
      %1499 = vmatprep.subr.bf16.mxu0 0
      %1500 = vmatpush2.bf16.msra.mxu0 0
      %1501 = vmatprep.mubr.bf16.mxu0 0
      %1502 = vmatmul.mubr.bf16.gmra.mxu0 %v823
      %v1503 = vpop.f32.mrf.mxu0
      %v1504 = vadd.f32 0.0, %v1503
      %v1505 = vpop.f32.mrf.mxu0
      %v1506 = vpop.f32.mrf.mxu0
      %v1507 = vadd.f32 0.0, %v1506
      %v1508 = vpop.f32.mrf.mxu0
      %1509 = vmatprep.mubr.bf16.mxu0 0
      %1510 = vmatmul.mubr.bf16.gmra.mxu0 %v826
      %v1511 = vpop.f32.mrf.mxu0
      %v1512 = vadd.f32 0.0, %v1511
      %v1513 = vpop.f32.mrf.mxu0
      %v1514 = vpop.f32.mrf.mxu0
      %v1515 = vadd.f32 0.0, %v1514
      %v1516 = vpop.f32.mrf.mxu0
      %1517 = vmatprep.mubr.bf16.mxu0 0
      %1518 = vmatmul.mubr.bf16.gmra.mxu0 %v829
      %v1519 = vpop.f32.mrf.mxu0
      %v1520 = vadd.f32 0.0, %v1519
      %v1521 = vpop.f32.mrf.mxu0
      %v1522 = vpop.f32.mrf.mxu0
      %v1523 = vadd.f32 0.0, %v1522
      %v1524 = vpop.f32.mrf.mxu0
      %1525 = vmatprep.mubr.bf16.mxu0 0
      %1526 = vmatmul.mubr.bf16.gmra.mxu0 %v832
      %v1527 = vpop.f32.mrf.mxu0
      %v1528 = vadd.f32 0.0, %v1527
      %v1529 = vpop.f32.mrf.mxu0
      %v1530 = vpop.f32.mrf.mxu0
      %v1531 = vadd.f32 0.0, %v1530
      %v1532 = vpop.f32.mrf.mxu0
      %1533 = vdwg.mxu0
      %1534 = vmatprep.subr.bf16.mxu0 0
      %1535 = vmatpush1.bf16.msra.mxu0 0
      %1536 = vmatprep.subr.bf16.mxu0 0
      %1537 = vmatpush1.bf16.msra.mxu0 0
      %1538 = vmatprep.subr.bf16.mxu0 0
      %1539 = vmatpush1.bf16.msra.mxu0 0
      %1540 = vmatprep.subr.bf16.mxu0 0
      %1541 = vmatpush1.bf16.msra.mxu0 0
      %1542 = vmatprep.subr.bf16.mxu0 0
      %1543 = vmatpush1.bf16.msra.mxu0 0
      %1544 = vmatprep.subr.bf16.mxu0 0
      %1545 = vmatpush1.bf16.msra.mxu0 0
      %1546 = vmatprep.subr.bf16.mxu0 0
      %1547 = vmatpush1.bf16.msra.mxu0 0
      %1548 = vmatprep.subr.bf16.mxu0 0
      %1549 = vmatpush1.bf16.msra.mxu0 %v755
      %1550 = vmatprep.subr.bf16.mxu0 0
      %1551 = vmatpush2.bf16.msra.mxu0 0
      %1552 = vmatprep.subr.bf16.mxu0 0
      %1553 = vmatpush2.bf16.msra.mxu0 0
      %1554 = vmatprep.subr.bf16.mxu0 0
      %1555 = vmatpush2.bf16.msra.mxu0 0
      %1556 = vmatprep.subr.bf16.mxu0 0
      %1557 = vmatpush2.bf16.msra.mxu0 0
      %1558 = vmatprep.subr.bf16.mxu0 0
      %1559 = vmatpush2.bf16.msra.mxu0 0
      %1560 = vmatprep.subr.bf16.mxu0 0
      %1561 = vmatpush2.bf16.msra.mxu0 0
      %1562 = vmatprep.subr.bf16.mxu0 0
      %1563 = vmatpush2.bf16.msra.mxu0 0
      %1564 = vmatprep.subr.bf16.mxu0 0
      %1565 = vmatpush2.bf16.msra.mxu0 0
      %1566 = vmatprep.mubr.bf16.mxu0 0
      %1567 = vmatmul.mubr.bf16.gmra.mxu0 %v662
      %v1568 = vpop.f32.mrf.mxu0
      %v1569 = vadd.f32 %v1504, %v1568
      %v1570 = vpop.f32.mrf.mxu0
      %v1571 = vpop.f32.mrf.mxu0
      %v1572 = vadd.f32 %v1507, %v1571
      %v1573 = vpop.f32.mrf.mxu0
      %1574 = vmatprep.mubr.bf16.mxu0 0
      %1575 = vmatmul.mubr.bf16.gmra.mxu0 %v665
      %v1576 = vpop.f32.mrf.mxu0
      %v1577 = vadd.f32 %v1512, %v1576
      %v1578 = vpop.f32.mrf.mxu0
      %v1579 = vpop.f32.mrf.mxu0
      %v1580 = vadd.f32 %v1515, %v1579
      %v1581 = vpop.f32.mrf.mxu0
      %1582 = vmatprep.mubr.bf16.mxu0 0
      %1583 = vmatmul.mubr.bf16.gmra.mxu0 %v668
      %v1584 = vpop.f32.mrf.mxu0
      %v1585 = vadd.f32 %v1520, %v1584
      %v1586 = vpop.f32.mrf.mxu0
      %v1587 = vpop.f32.mrf.mxu0
      %v1588 = vadd.f32 %v1523, %v1587
      %v1589 = vpop.f32.mrf.mxu0
      %1590 = vmatprep.mubr.bf16.mxu0 0
      %1591 = vmatmul.mubr.bf16.gmra.mxu0 %v671
      %v1592 = vpop.f32.mrf.mxu0
      %v1593 = vadd.f32 %v1528, %v1592
      %v1594 = vpop.f32.mrf.mxu0
      %v1595 = vpop.f32.mrf.mxu0
      %v1596 = vadd.f32 %v1531, %v1595
      %v1597 = vpop.f32.mrf.mxu0
      %1598 = vdwg.mxu0
      %v1600 = vsel %vm369, %v497, 0
      %v1603 = vsel %vm369, %v498, 0
      %v1606 = vsel %vm369, %v499, 0
      %v1609 = vsel %vm369, %v500, 0
      %1611 = vmatprep.subr.bf16.mxu0 0
      %1612 = vmatpush1.bf16.msra.mxu0 0
      %1613 = vmatprep.subr.bf16.mxu0 0
      %1614 = vmatpush1.bf16.msra.mxu0 0
      %1615 = vmatprep.subr.bf16.mxu0 0
      %1616 = vmatpush1.bf16.msra.mxu0 0
      %1617 = vmatprep.subr.bf16.mxu0 0
      %1618 = vmatpush1.bf16.msra.mxu0 0
      %1619 = vmatprep.subr.bf16.mxu0 0
      %1620 = vmatpush1.bf16.msra.mxu0 0
      %1621 = vmatprep.subr.bf16.mxu0 0
      %1622 = vmatpush1.bf16.msra.mxu0 0
      %1623 = vmatprep.subr.bf16.mxu0 0
      %1624 = vmatpush1.bf16.msra.mxu0 0
      %1625 = vmatprep.subr.bf16.mxu0 0
      %1626 = vmatpush1.bf16.msra.mxu0 %v835
      %1627 = vmatprep.subr.bf16.mxu0 0
      %1628 = vmatpush2.bf16.msra.mxu0 0
      %1629 = vmatprep.subr.bf16.mxu0 0
      %1630 = vmatpush2.bf16.msra.mxu0 0
      %1631 = vmatprep.subr.bf16.mxu0 0
      %1632 = vmatpush2.bf16.msra.mxu0 0
      %1633 = vmatprep.subr.bf16.mxu0 0
      %1634 = vmatpush2.bf16.msra.mxu0 0
      %1635 = vmatprep.subr.bf16.mxu0 0
      %1636 = vmatpush2.bf16.msra.mxu0 0
      %1637 = vmatprep.subr.bf16.mxu0 0
      %1638 = vmatpush2.bf16.msra.mxu0 0
      %1639 = vmatprep.subr.bf16.mxu0 0
      %1640 = vmatpush2.bf16.msra.mxu0 0
      %1641 = vmatprep.subr.bf16.mxu0 0
      %1642 = vmatpush2.bf16.msra.mxu0 0
      %1643 = vmatprep.mubr.bf16.mxu0 0
      %1644 = vmatmul.mubr.bf16.gmra.mxu0 %v1600
      %v1645 = vpop.f32.mrf.mxu0
      %v1646 = vadd.f32 0.0, %v1645
      %v1647 = vpop.f32.mrf.mxu0
      %v1648 = vpop.f32.mrf.mxu0
      %v1649 = vadd.f32 0.0, %v1648
      %v1650 = vpop.f32.mrf.mxu0
      %1651 = vmatprep.mubr.bf16.mxu0 0
      %1652 = vmatmul.mubr.bf16.gmra.mxu0 %v1603
      %v1653 = vpop.f32.mrf.mxu0
      %v1654 = vadd.f32 0.0, %v1653
      %v1655 = vpop.f32.mrf.mxu0
      %v1656 = vpop.f32.mrf.mxu0
      %v1657 = vadd.f32 0.0, %v1656
      %v1658 = vpop.f32.mrf.mxu0
      %1659 = vmatprep.mubr.bf16.mxu0 0
      %1660 = vmatmul.mubr.bf16.gmra.mxu0 %v1606
      %v1661 = vpop.f32.mrf.mxu0
      %v1662 = vadd.f32 0.0, %v1661
      %v1663 = vpop.f32.mrf.mxu0
      %v1664 = vpop.f32.mrf.mxu0
      %v1665 = vadd.f32 0.0, %v1664
      %v1666 = vpop.f32.mrf.mxu0
      %1667 = vmatprep.mubr.bf16.mxu0 0
      %1668 = vmatmul.mubr.bf16.gmra.mxu0 %v1609
      %v1669 = vpop.f32.mrf.mxu0
      %v1670 = vadd.f32 0.0, %v1669
      %v1671 = vpop.f32.mrf.mxu0
      %v1672 = vpop.f32.mrf.mxu0
      %v1673 = vadd.f32 0.0, %v1672
      %v1674 = vpop.f32.mrf.mxu0
      %1675 = vdwg.mxu0
      %v1676 = vadd.f32 %v1569, %v1646
      %v1677 = vadd.f32 %v1572, %v1649
      %v1678 = vadd.f32 %v1577, %v1654
      %v1679 = vadd.f32 %v1580, %v1657
      %v1680 = vadd.f32 %v1585, %v1662
      %v1681 = vadd.f32 %v1588, %v1665
      %v1682 = vadd.f32 %v1593, %v1670
      %v1683 = vadd.f32 %v1596, %v1673
      %1684 = vmatprep.subr.bf16.mxu0 0
      %1685 = vmatpush1.bf16.msra.mxu0 0
      %1686 = vmatprep.subr.bf16.mxu0 0
      %1687 = vmatpush1.bf16.msra.mxu0 0
      %1688 = vmatprep.subr.bf16.mxu0 0
      %1689 = vmatpush1.bf16.msra.mxu0 0
      %1690 = vmatprep.subr.bf16.mxu0 0
      %1691 = vmatpush1.bf16.msra.mxu0 0
      %1692 = vmatprep.subr.bf16.mxu0 0
      %1693 = vmatpush1.bf16.msra.mxu0 0
      %1694 = vmatprep.subr.bf16.mxu0 0
      %1695 = vmatpush1.bf16.msra.mxu0 0
      %1696 = vmatprep.subr.bf16.mxu0 0
      %1697 = vmatpush1.bf16.msra.mxu0 0
      %1698 = vmatprep.subr.bf16.mxu0 0
      %1699 = vmatpush1.bf16.msra.mxu0 %v923
      %1700 = vmatprep.subr.bf16.mxu0 0
      %1701 = vmatpush2.bf16.msra.mxu0 0
      %1702 = vmatprep.subr.bf16.mxu0 0
      %1703 = vmatpush2.bf16.msra.mxu0 0
      %1704 = vmatprep.subr.bf16.mxu0 0
      %1705 = vmatpush2.bf16.msra.mxu0 0
      %1706 = vmatprep.subr.bf16.mxu0 0
      %1707 = vmatpush2.bf16.msra.mxu0 0
      %1708 = vmatprep.subr.bf16.mxu0 0
      %1709 = vmatpush2.bf16.msra.mxu0 0
      %1710 = vmatprep.subr.bf16.mxu0 0
      %1711 = vmatpush2.bf16.msra.mxu0 0
      %1712 = vmatprep.subr.bf16.mxu0 0
      %1713 = vmatpush2.bf16.msra.mxu0 0
      %1714 = vmatprep.subr.bf16.mxu0 0
      %1715 = vmatpush2.bf16.msra.mxu0 0
      %1716 = vmatprep.mubr.bf16.mxu0 0
      %1717 = vmatmul.mubr.bf16.gmra.mxu0 %v999
      %v1718 = vpop.f32.mrf.mxu0
      %v1719 = vadd.f32 0.0, %v1718
      %v1720 = vpop.f32.mrf.mxu0
      %v1721 = vpop.f32.mrf.mxu0
      %v1722 = vadd.f32 0.0, %v1721
      %v1723 = vpop.f32.mrf.mxu0
      %1724 = vmatprep.mubr.bf16.mxu0 0
      %1725 = vmatmul.mubr.bf16.gmra.mxu0 %v1002
      %v1726 = vpop.f32.mrf.mxu0
      %v1727 = vadd.f32 0.0, %v1726
      %v1728 = vpop.f32.mrf.mxu0
      %v1729 = vpop.f32.mrf.mxu0
      %v1730 = vadd.f32 0.0, %v1729
      %v1731 = vpop.f32.mrf.mxu0
      %1732 = vmatprep.mubr.bf16.mxu0 0
      %1733 = vmatmul.mubr.bf16.gmra.mxu0 %v1005
      %v1734 = vpop.f32.mrf.mxu0
      %v1735 = vadd.f32 0.0, %v1734
      %v1736 = vpop.f32.mrf.mxu0
      %v1737 = vpop.f32.mrf.mxu0
      %v1738 = vadd.f32 0.0, %v1737
      %v1739 = vpop.f32.mrf.mxu0
      %1740 = vmatprep.mubr.bf16.mxu0 0
      %1741 = vmatmul.mubr.bf16.gmra.mxu0 %v1008
      %v1742 = vpop.f32.mrf.mxu0
      %v1743 = vadd.f32 0.0, %v1742
      %v1744 = vpop.f32.mrf.mxu0
      %v1745 = vpop.f32.mrf.mxu0
      %v1746 = vadd.f32 0.0, %v1745
      %v1747 = vpop.f32.mrf.mxu0
      %1748 = vdwg.mxu0
      %v1749 = vadd.f32 %v1676, %v1719
      %v1750 = vadd.f32 %v1677, %v1722
      %v1751 = vadd.f32 %v1678, %v1727
      %v1752 = vadd.f32 %v1679, %v1730
      %v1753 = vadd.f32 %v1680, %v1735
      %v1754 = vadd.f32 %v1681, %v1738
      %v1755 = vadd.f32 %v1682, %v1743
      %v1756 = vadd.f32 %v1683, %v1746
      %1757 = vmatprep.subr.bf16.mxu0 0
      %1758 = vmatpush1.bf16.msra.mxu0 0
      %1759 = vmatprep.subr.bf16.mxu0 0
      %1760 = vmatpush1.bf16.msra.mxu0 0
      %1761 = vmatprep.subr.bf16.mxu0 0
      %1762 = vmatpush1.bf16.msra.mxu0 0
      %1763 = vmatprep.subr.bf16.mxu0 0
      %1764 = vmatpush1.bf16.msra.mxu0 0
      %1765 = vmatprep.subr.bf16.mxu0 0
      %1766 = vmatpush1.bf16.msra.mxu0 0
      %1767 = vmatprep.subr.bf16.mxu0 0
      %1768 = vmatpush1.bf16.msra.mxu0 0
      %1769 = vmatprep.subr.bf16.mxu0 0
      %1770 = vmatpush1.bf16.msra.mxu0 0
      %1771 = vmatprep.subr.bf16.mxu0 0
      %1772 = vmatpush1.bf16.msra.mxu0 %v1011
      %1773 = vmatprep.subr.bf16.mxu0 0
      %1774 = vmatpush2.bf16.msra.mxu0 0
      %1775 = vmatprep.subr.bf16.mxu0 0
      %1776 = vmatpush2.bf16.msra.mxu0 0
      %1777 = vmatprep.subr.bf16.mxu0 0
      %1778 = vmatpush2.bf16.msra.mxu0 0
      %1779 = vmatprep.subr.bf16.mxu0 0
      %1780 = vmatpush2.bf16.msra.mxu0 0
      %1781 = vmatprep.subr.bf16.mxu0 0
      %1782 = vmatpush2.bf16.msra.mxu0 0
      %1783 = vmatprep.subr.bf16.mxu0 0
      %1784 = vmatpush2.bf16.msra.mxu0 0
      %1785 = vmatprep.subr.bf16.mxu0 0
      %1786 = vmatpush2.bf16.msra.mxu0 0
      %1787 = vmatprep.subr.bf16.mxu0 0
      %1788 = vmatpush2.bf16.msra.mxu0 0
      %1789 = vmatprep.mubr.bf16.mxu0 0
      %1790 = vmatmul.mubr.bf16.gmra.mxu0 %v1087
      %v1791 = vpop.f32.mrf.mxu0
      %v1792 = vadd.f32 0.0, %v1791
      %v1793 = vpop.f32.mrf.mxu0
      %v1794 = vpop.f32.mrf.mxu0
      %v1795 = vadd.f32 0.0, %v1794
      %v1796 = vpop.f32.mrf.mxu0
      %1797 = vmatprep.mubr.bf16.mxu0 0
      %1798 = vmatmul.mubr.bf16.gmra.mxu0 %v1090
      %v1799 = vpop.f32.mrf.mxu0
      %v1800 = vadd.f32 0.0, %v1799
      %v1801 = vpop.f32.mrf.mxu0
      %v1802 = vpop.f32.mrf.mxu0
      %v1803 = vadd.f32 0.0, %v1802
      %v1804 = vpop.f32.mrf.mxu0
      %1805 = vmatprep.mubr.bf16.mxu0 0
      %1806 = vmatmul.mubr.bf16.gmra.mxu0 %v1093
      %v1807 = vpop.f32.mrf.mxu0
      %v1808 = vadd.f32 0.0, %v1807
      %v1809 = vpop.f32.mrf.mxu0
      %v1810 = vpop.f32.mrf.mxu0
      %v1811 = vadd.f32 0.0, %v1810
      %v1812 = vpop.f32.mrf.mxu0
      %1813 = vmatprep.mubr.bf16.mxu0 0
      %1814 = vmatmul.mubr.bf16.gmra.mxu0 %v1096
      %v1815 = vpop.f32.mrf.mxu0
      %v1816 = vadd.f32 0.0, %v1815
      %v1817 = vpop.f32.mrf.mxu0
      %v1818 = vpop.f32.mrf.mxu0
      %v1819 = vadd.f32 0.0, %v1818
      %v1820 = vpop.f32.mrf.mxu0
      %1821 = vdwg.mxu0
      %v1822 = vadd.f32 %v1749, %v1792
      %v1823 = vadd.f32 %v1750, %v1795
      %v1824 = vadd.f32 %v1751, %v1800
      %v1825 = vadd.f32 %v1752, %v1803
      %v1826 = vadd.f32 %v1753, %v1808
      %v1827 = vadd.f32 %v1754, %v1811
      %v1828 = vadd.f32 %v1755, %v1816
      %v1829 = vadd.f32 %v1756, %v1819
      %v1831 = vsel %vm369, %v547, 0
      %v1834 = vsel %vm369, %v548, 0
      %v1837 = vsel %vm369, %v549, 0
      %v1840 = vsel %vm369, %v550, 0
      %1842 = vmatprep.subr.bf16.mxu0 0
      %1843 = vmatpush1.bf16.msra.mxu0 0
      %1844 = vmatprep.subr.bf16.mxu0 0
      %1845 = vmatpush1.bf16.msra.mxu0 0
      %1846 = vmatprep.subr.bf16.mxu0 0
      %1847 = vmatpush1.bf16.msra.mxu0 0
      %1848 = vmatprep.subr.bf16.mxu0 0
      %1849 = vmatpush1.bf16.msra.mxu0 0
      %1850 = vmatprep.subr.bf16.mxu0 0
      %1851 = vmatpush1.bf16.msra.mxu0 0
      %1852 = vmatprep.subr.bf16.mxu0 0
      %1853 = vmatpush1.bf16.msra.mxu0 0
      %1854 = vmatprep.subr.bf16.mxu0 0
      %1855 = vmatpush1.bf16.msra.mxu0 0
      %1856 = vmatprep.subr.bf16.mxu0 0
      %1857 = vmatpush1.bf16.msra.mxu0 %v1099
      %1858 = vmatprep.subr.bf16.mxu0 0
      %1859 = vmatpush2.bf16.msra.mxu0 0
      %1860 = vmatprep.subr.bf16.mxu0 0
      %1861 = vmatpush2.bf16.msra.mxu0 0
      %1862 = vmatprep.subr.bf16.mxu0 0
      %1863 = vmatpush2.bf16.msra.mxu0 0
      %1864 = vmatprep.subr.bf16.mxu0 0
      %1865 = vmatpush2.bf16.msra.mxu0 0
      %1866 = vmatprep.subr.bf16.mxu0 0
      %1867 = vmatpush2.bf16.msra.mxu0 0
      %1868 = vmatprep.subr.bf16.mxu0 0
      %1869 = vmatpush2.bf16.msra.mxu0 0
      %1870 = vmatprep.subr.bf16.mxu0 0
      %1871 = vmatpush2.bf16.msra.mxu0 0
      %1872 = vmatprep.subr.bf16.mxu0 0
      %1873 = vmatpush2.bf16.msra.mxu0 0
      %1874 = vmatprep.mubr.bf16.mxu0 0
      %1875 = vmatmul.mubr.bf16.gmra.mxu0 %v1831
      %v1876 = vpop.f32.mrf.mxu0
      %v1877 = vadd.f32 0.0, %v1876
      %v1878 = vpop.f32.mrf.mxu0
      %v1879 = vpop.f32.mrf.mxu0
      %v1880 = vadd.f32 0.0, %v1879
      %v1881 = vpop.f32.mrf.mxu0
      %1882 = vmatprep.mubr.bf16.mxu0 0
      %1883 = vmatmul.mubr.bf16.gmra.mxu0 %v1834
      %v1884 = vpop.f32.mrf.mxu0
      %v1885 = vadd.f32 0.0, %v1884
      %v1886 = vpop.f32.mrf.mxu0
      %v1887 = vpop.f32.mrf.mxu0
      %v1888 = vadd.f32 0.0, %v1887
      %v1889 = vpop.f32.mrf.mxu0
      %1890 = vmatprep.mubr.bf16.mxu0 0
      %1891 = vmatmul.mubr.bf16.gmra.mxu0 %v1837
      %v1892 = vpop.f32.mrf.mxu0
      %v1893 = vadd.f32 0.0, %v1892
      %v1894 = vpop.f32.mrf.mxu0
      %v1895 = vpop.f32.mrf.mxu0
      %v1896 = vadd.f32 0.0, %v1895
      %v1897 = vpop.f32.mrf.mxu0
      %1898 = vmatprep.mubr.bf16.mxu0 0
      %1899 = vmatmul.mubr.bf16.gmra.mxu0 %v1840
      %v1900 = vpop.f32.mrf.mxu0
      %v1901 = vadd.f32 0.0, %v1900
      %v1902 = vpop.f32.mrf.mxu0
      %v1903 = vpop.f32.mrf.mxu0
      %v1904 = vadd.f32 0.0, %v1903
      %v1905 = vpop.f32.mrf.mxu0
      %1906 = vdwg.mxu0
      %v1907 = vadd.f32 %v1822, %v1877
      %v1908 = vadd.f32 %v1823, %v1880
      %v1909 = vadd.f32 %v1824, %v1885
      %v1910 = vadd.f32 %v1825, %v1888
      %v1911 = vadd.f32 %v1826, %v1893
      %v1912 = vadd.f32 %v1827, %v1896
      %v1913 = vadd.f32 %v1828, %v1901
      %v1914 = vadd.f32 %v1829, %v1904
      %1915 = vmatprep.subr.bf16.mxu0 0
      %1916 = vmatpush1.bf16.msra.mxu0 0
      %1917 = vmatprep.subr.bf16.mxu0 0
      %1918 = vmatpush1.bf16.msra.mxu0 0
      %1919 = vmatprep.subr.bf16.mxu0 0
      %1920 = vmatpush1.bf16.msra.mxu0 0
      %1921 = vmatprep.subr.bf16.mxu0 0
      %1922 = vmatpush1.bf16.msra.mxu0 0
      %1923 = vmatprep.subr.bf16.mxu0 0
      %1924 = vmatpush1.bf16.msra.mxu0 0
      %1925 = vmatprep.subr.bf16.mxu0 0
      %1926 = vmatpush1.bf16.msra.mxu0 0
      %1927 = vmatprep.subr.bf16.mxu0 0
      %1928 = vmatpush1.bf16.msra.mxu0 0
      %1929 = vmatprep.subr.bf16.mxu0 0
      %1930 = vmatpush1.bf16.msra.mxu0 %v1187
      %1931 = vmatprep.subr.bf16.mxu0 0
      %1932 = vmatpush2.bf16.msra.mxu0 0
      %1933 = vmatprep.subr.bf16.mxu0 0
      %1934 = vmatpush2.bf16.msra.mxu0 0
      %1935 = vmatprep.subr.bf16.mxu0 0
      %1936 = vmatpush2.bf16.msra.mxu0 0
      %1937 = vmatprep.subr.bf16.mxu0 0
      %1938 = vmatpush2.bf16.msra.mxu0 0
      %1939 = vmatprep.subr.bf16.mxu0 0
      %1940 = vmatpush2.bf16.msra.mxu0 0
      %1941 = vmatprep.subr.bf16.mxu0 0
      %1942 = vmatpush2.bf16.msra.mxu0 0
      %1943 = vmatprep.subr.bf16.mxu0 0
      %1944 = vmatpush2.bf16.msra.mxu0 0
      %1945 = vmatprep.subr.bf16.mxu0 0
      %1946 = vmatpush2.bf16.msra.mxu0 0
      %1947 = vmatprep.mubr.bf16.mxu0 0
      %1948 = vmatmul.mubr.bf16.gmra.mxu0 %v1263
      %v1949 = vpop.f32.mrf.mxu0
      %v1950 = vadd.f32 0.0, %v1949
      %v1951 = vpop.f32.mrf.mxu0
      %v1952 = vpop.f32.mrf.mxu0
      %v1953 = vadd.f32 0.0, %v1952
      %v1954 = vpop.f32.mrf.mxu0
      %1955 = vmatprep.mubr.bf16.mxu0 0
      %1956 = vmatmul.mubr.bf16.gmra.mxu0 %v1266
      %v1957 = vpop.f32.mrf.mxu0
      %v1958 = vadd.f32 0.0, %v1957
      %v1959 = vpop.f32.mrf.mxu0
      %v1960 = vpop.f32.mrf.mxu0
      %v1961 = vadd.f32 0.0, %v1960
      %v1962 = vpop.f32.mrf.mxu0
      %1963 = vmatprep.mubr.bf16.mxu0 0
      %1964 = vmatmul.mubr.bf16.gmra.mxu0 %v1269
      %v1965 = vpop.f32.mrf.mxu0
      %v1966 = vadd.f32 0.0, %v1965
      %v1967 = vpop.f32.mrf.mxu0
      %v1968 = vpop.f32.mrf.mxu0
      %v1969 = vadd.f32 0.0, %v1968
      %v1970 = vpop.f32.mrf.mxu0
      %1971 = vmatprep.mubr.bf16.mxu0 0
      %1972 = vmatmul.mubr.bf16.gmra.mxu0 %v1272
      %v1973 = vpop.f32.mrf.mxu0
      %v1974 = vadd.f32 0.0, %v1973
      %v1975 = vpop.f32.mrf.mxu0
      %v1976 = vpop.f32.mrf.mxu0
      %v1977 = vadd.f32 0.0, %v1976
      %v1978 = vpop.f32.mrf.mxu0
      %1979 = vdwg.mxu0
      %v1980 = vadd.f32 %v1907, %v1950
      %v1981 = vadd.f32 %v1908, %v1953
      %v1982 = vadd.f32 %v1909, %v1958
      %v1983 = vadd.f32 %v1910, %v1961
      %v1984 = vadd.f32 %v1911, %v1966
      %v1985 = vadd.f32 %v1912, %v1969
      %v1986 = vadd.f32 %v1913, %v1974
      %v1987 = vadd.f32 %v1914, %v1977
      %1988 = vmatprep.subr.bf16.mxu0 0
      %1989 = vmatpush1.bf16.msra.mxu0 0
      %1990 = vmatprep.subr.bf16.mxu0 0
      %1991 = vmatpush1.bf16.msra.mxu0 0
      %1992 = vmatprep.subr.bf16.mxu0 0
      %1993 = vmatpush1.bf16.msra.mxu0 0
      %1994 = vmatprep.subr.bf16.mxu0 0
      %1995 = vmatpush1.bf16.msra.mxu0 0
      %1996 = vmatprep.subr.bf16.mxu0 0
      %1997 = vmatpush1.bf16.msra.mxu0 0
      %1998 = vmatprep.subr.bf16.mxu0 0
      %1999 = vmatpush1.bf16.msra.mxu0 0
      %2000 = vmatprep.subr.bf16.mxu0 0
      %2001 = vmatpush1.bf16.msra.mxu0 0
      %2002 = vmatprep.subr.bf16.mxu0 0
      %2003 = vmatpush1.bf16.msra.mxu0 %v1275
      %2004 = vmatprep.subr.bf16.mxu0 0
      %2005 = vmatpush2.bf16.msra.mxu0 0
      %2006 = vmatprep.subr.bf16.mxu0 0
      %2007 = vmatpush2.bf16.msra.mxu0 0
      %2008 = vmatprep.subr.bf16.mxu0 0
      %2009 = vmatpush2.bf16.msra.mxu0 0
      %2010 = vmatprep.subr.bf16.mxu0 0
      %2011 = vmatpush2.bf16.msra.mxu0 0
      %2012 = vmatprep.subr.bf16.mxu0 0
      %2013 = vmatpush2.bf16.msra.mxu0 0
      %2014 = vmatprep.subr.bf16.mxu0 0
      %2015 = vmatpush2.bf16.msra.mxu0 0
      %2016 = vmatprep.subr.bf16.mxu0 0
      %2017 = vmatpush2.bf16.msra.mxu0 0
      %2018 = vmatprep.subr.bf16.mxu0 0
      %2019 = vmatpush2.bf16.msra.mxu0 0
      %2020 = vmatprep.mubr.bf16.mxu0 0
      %2021 = vmatmul.mubr.bf16.gmra.mxu0 %v1351
      %v2022 = vpop.f32.mrf.mxu0
      %v2023 = vadd.f32 0.0, %v2022
      %v2024 = vpop.f32.mrf.mxu0
      %v2025 = vpop.f32.mrf.mxu0
      %v2026 = vadd.f32 0.0, %v2025
      %v2027 = vpop.f32.mrf.mxu0
      %2028 = vmatprep.mubr.bf16.mxu0 0
      %2029 = vmatmul.mubr.bf16.gmra.mxu0 %v1354
      %v2030 = vpop.f32.mrf.mxu0
      %v2031 = vadd.f32 0.0, %v2030
      %v2032 = vpop.f32.mrf.mxu0
      %v2033 = vpop.f32.mrf.mxu0
      %v2034 = vadd.f32 0.0, %v2033
      %v2035 = vpop.f32.mrf.mxu0
      %2036 = vmatprep.mubr.bf16.mxu0 0
      %2037 = vmatmul.mubr.bf16.gmra.mxu0 %v1357
      %v2038 = vpop.f32.mrf.mxu0
      %v2039 = vadd.f32 0.0, %v2038
      %v2040 = vpop.f32.mrf.mxu0
      %v2041 = vpop.f32.mrf.mxu0
      %v2042 = vadd.f32 0.0, %v2041
      %v2043 = vpop.f32.mrf.mxu0
      %2044 = vmatprep.mubr.bf16.mxu0 0
      %2045 = vmatmul.mubr.bf16.gmra.mxu0 %v1360
      %v2046 = vpop.f32.mrf.mxu0
      %v2047 = vadd.f32 0.0, %v2046
      %v2048 = vpop.f32.mrf.mxu0
      %v2049 = vpop.f32.mrf.mxu0
      %v2050 = vadd.f32 0.0, %v2049
      %v2051 = vpop.f32.mrf.mxu0
      %2052 = vdwg.mxu0
      %v2053 = vadd.f32 %v1980, %v2023
      %v2054 = vadd.f32 %v1981, %v2026
      %v2055 = vadd.f32 %v1982, %v2031
      %v2056 = vadd.f32 %v1983, %v2034
      %v2057 = vadd.f32 %v1984, %v2039
      %v2058 = vadd.f32 %v1985, %v2042
      %v2059 = vadd.f32 %v1986, %v2047
      %v2060 = vadd.f32 %v1987, %v2050
      %v2062 = vsel %vm369, %v597, 0
      %v2065 = vsel %vm369, %v598, 0
      %v2068 = vsel %vm369, %v599, 0
      %v2071 = vsel %vm369, %v600, 0
      %2073 = vmatprep.subr.bf16.mxu0 0
      %2074 = vmatpush1.bf16.msra.mxu0 0
      %2075 = vmatprep.subr.bf16.mxu0 0
      %2076 = vmatpush1.bf16.msra.mxu0 0
      %2077 = vmatprep.subr.bf16.mxu0 0
      %2078 = vmatpush1.bf16.msra.mxu0 0
      %2079 = vmatprep.subr.bf16.mxu0 0
      %2080 = vmatpush1.bf16.msra.mxu0 0
      %2081 = vmatprep.subr.bf16.mxu0 0
      %2082 = vmatpush1.bf16.msra.mxu0 0
      %2083 = vmatprep.subr.bf16.mxu0 0
      %2084 = vmatpush1.bf16.msra.mxu0 0
      %2085 = vmatprep.subr.bf16.mxu0 0
      %2086 = vmatpush1.bf16.msra.mxu0 0
      %2087 = vmatprep.subr.bf16.mxu0 0
      %2088 = vmatpush1.bf16.msra.mxu0 %v1363
      %2089 = vmatprep.subr.bf16.mxu0 0
      %2090 = vmatpush2.bf16.msra.mxu0 0
      %2091 = vmatprep.subr.bf16.mxu0 0
      %2092 = vmatpush2.bf16.msra.mxu0 0
      %2093 = vmatprep.subr.bf16.mxu0 0
      %2094 = vmatpush2.bf16.msra.mxu0 0
      %2095 = vmatprep.subr.bf16.mxu0 0
      %2096 = vmatpush2.bf16.msra.mxu0 0
      %2097 = vmatprep.subr.bf16.mxu0 0
      %2098 = vmatpush2.bf16.msra.mxu0 0
      %2099 = vmatprep.subr.bf16.mxu0 0
      %2100 = vmatpush2.bf16.msra.mxu0 0
      %2101 = vmatprep.subr.bf16.mxu0 0
      %2102 = vmatpush2.bf16.msra.mxu0 0
      %2103 = vmatprep.subr.bf16.mxu0 0
      %2104 = vmatpush2.bf16.msra.mxu0 0
      %2105 = vmatprep.mubr.bf16.mxu0 0
      %2106 = vmatmul.mubr.bf16.gmra.mxu0 %v2062
      %v2107 = vpop.f32.mrf.mxu0
      %v2108 = vadd.f32 0.0, %v2107
      %v2109 = vpop.f32.mrf.mxu0
      %v2110 = vpop.f32.mrf.mxu0
      %v2111 = vadd.f32 0.0, %v2110
      %v2112 = vpop.f32.mrf.mxu0
      %2113 = vmatprep.mubr.bf16.mxu0 0
      %2114 = vmatmul.mubr.bf16.gmra.mxu0 %v2065
      %v2115 = vpop.f32.mrf.mxu0
      %v2116 = vadd.f32 0.0, %v2115
      %v2117 = vpop.f32.mrf.mxu0
      %v2118 = vpop.f32.mrf.mxu0
      %v2119 = vadd.f32 0.0, %v2118
      %v2120 = vpop.f32.mrf.mxu0
      %2121 = vmatprep.mubr.bf16.mxu0 0
      %2122 = vmatmul.mubr.bf16.gmra.mxu0 %v2068
      %v2123 = vpop.f32.mrf.mxu0
      %v2124 = vadd.f32 0.0, %v2123
      %v2125 = vpop.f32.mrf.mxu0
      %v2126 = vpop.f32.mrf.mxu0
      %v2127 = vadd.f32 0.0, %v2126
      %v2128 = vpop.f32.mrf.mxu0
      %2129 = vmatprep.mubr.bf16.mxu0 0
      %2130 = vmatmul.mubr.bf16.gmra.mxu0 %v2071
      %v2131 = vpop.f32.mrf.mxu0
      %v2132 = vadd.f32 0.0, %v2131
      %v2133 = vpop.f32.mrf.mxu0
      %v2134 = vpop.f32.mrf.mxu0
      %v2135 = vadd.f32 0.0, %v2134
      %v2136 = vpop.f32.mrf.mxu0
      %2137 = vdwg.mxu0
      %v2138 = vadd.f32 %v2053, %v2108
      %v2139 = vadd.f32 %v2054, %v2111
      %v2140 = vadd.f32 %v2055, %v2116
      %v2141 = vadd.f32 %v2056, %v2119
      %v2142 = vadd.f32 %v2057, %v2124
      %v2143 = vadd.f32 %v2058, %v2127
      %v2144 = vadd.f32 %v2059, %v2132
      %v2145 = vadd.f32 %v2060, %v2135
      %v2146 = vadd.f32 %v2138, %v1442
      %v2147 = vadd.f32 %v2139, %v1442
      %v2148 = vadd.f32 %v2140, %v1442
      %v2149 = vadd.f32 %v2141, %v1442
      %v2150 = vadd.f32 %v2142, %v1442
      %v2151 = vadd.f32 %v2143, %v1442
      %v2152 = vadd.f32 %v2144, %v1442
      %v2153 = vadd.f32 %v2145, %v1442
      %v2154 = vmax.f32 %v2146, 0.0
      %v2155 = vmax.f32 %v2147, 0.0
      %v2156 = vmax.f32 %v2148, 0.0
      %v2157 = vmax.f32 %v2149, 0.0
      %v2158 = vmax.f32 %v2150, 0.0
      %v2159 = vmax.f32 %v2151, 0.0
      %v2160 = vmax.f32 %v2152, 0.0
      %v2161 = vmax.f32 %v2153, 0.0
      %s2162 = scalar_lea.vmem [#allocation2], 176
      %2163 = vst.msk [vmem:[%s2162 + $0x1] sm:$0xff] %vm369, %v2154
      %2164 = vst.msk [vmem:[%s2162 + $0x11] sm:$0xff] %vm369, %v2155
      %2165 = vst.msk [vmem:[%s2162 + $0x21] sm:$0xff] %vm369, %v2156
      %2166 = vst.msk [vmem:[%s2162 + $0x31] sm:$0xff] %vm369, %v2157
      %2167 = vst.msk [vmem:[%s2162 + $0x41] sm:$0xff] %vm369, %v2158
      %2168 = vst.msk [vmem:[%s2162 + $0x51] sm:$0xff] %vm369, %v2159
      %2169 = vst.msk [vmem:[%s2162 + $0x61] sm:$0xff] %vm369, %v2160
      %2170 = vst.msk [vmem:[%s2162 + $0x71] sm:$0xff] %vm369, %v2161
      %2171 = vmatprep.subr.bf16.mxu0 0
      %2172 = vmatpush1.bf16.msra.mxu0 0
      %2173 = vmatprep.subr.bf16.mxu0 0
      %2174 = vmatpush1.bf16.msra.mxu0 0
      %2175 = vmatprep.subr.bf16.mxu0 0
      %2176 = vmatpush1.bf16.msra.mxu0 0
      %2177 = vmatprep.subr.bf16.mxu0 0
      %2178 = vmatpush1.bf16.msra.mxu0 0
      %2179 = vmatprep.subr.bf16.mxu0 0
      %2180 = vmatpush1.bf16.msra.mxu0 0
      %2181 = vmatprep.subr.bf16.mxu0 0
      %2182 = vmatpush1.bf16.msra.mxu0 0
      %2183 = vmatprep.subr.bf16.mxu0 0
      %2184 = vmatpush1.bf16.msra.mxu0 0
      %2185 = vmatprep.subr.bf16.mxu0 0
      %2186 = vmatpush1.bf16.msra.mxu0 %v675
      %2187 = vmatprep.subr.bf16.mxu0 0
      %2188 = vmatpush2.bf16.msra.mxu0 0
      %2189 = vmatprep.subr.bf16.mxu0 0
      %2190 = vmatpush2.bf16.msra.mxu0 0
      %2191 = vmatprep.subr.bf16.mxu0 0
      %2192 = vmatpush2.bf16.msra.mxu0 0
      %2193 = vmatprep.subr.bf16.mxu0 0
      %2194 = vmatpush2.bf16.msra.mxu0 0
      %2195 = vmatprep.subr.bf16.mxu0 0
      %2196 = vmatpush2.bf16.msra.mxu0 0
      %2197 = vmatprep.subr.bf16.mxu0 0
      %2198 = vmatpush2.bf16.msra.mxu0 0
      %2199 = vmatprep.subr.bf16.mxu0 0
      %2200 = vmatpush2.bf16.msra.mxu0 0
      %2201 = vmatprep.subr.bf16.mxu0 0
      %2202 = vmatpush2.bf16.msra.mxu0 0
      %2203 = vmatprep.mubr.bf16.mxu0 0
      %2204 = vmatmul.mubr.bf16.gmra.mxu0 %v999
      %v2205 = vpop.f32.mrf.mxu0
      %v2206 = vadd.f32 0.0, %v2205
      %v2207 = vpop.f32.mrf.mxu0
      %v2208 = vpop.f32.mrf.mxu0
      %v2209 = vadd.f32 0.0, %v2208
      %v2210 = vpop.f32.mrf.mxu0
      %2211 = vmatprep.mubr.bf16.mxu0 0
      %2212 = vmatmul.mubr.bf16.gmra.mxu0 %v1002
      %v2213 = vpop.f32.mrf.mxu0
      %v2214 = vadd.f32 0.0, %v2213
      %v2215 = vpop.f32.mrf.mxu0
      %v2216 = vpop.f32.mrf.mxu0
      %v2217 = vadd.f32 0.0, %v2216
      %v2218 = vpop.f32.mrf.mxu0
      %2219 = vmatprep.mubr.bf16.mxu0 0
      %2220 = vmatmul.mubr.bf16.gmra.mxu0 %v1005
      %v2221 = vpop.f32.mrf.mxu0
      %v2222 = vadd.f32 0.0, %v2221
      %v2223 = vpop.f32.mrf.mxu0
      %v2224 = vpop.f32.mrf.mxu0
      %v2225 = vadd.f32 0.0, %v2224
      %v2226 = vpop.f32.mrf.mxu0
      %2227 = vmatprep.mubr.bf16.mxu0 0
      %2228 = vmatmul.mubr.bf16.gmra.mxu0 %v1008
      %v2229 = vpop.f32.mrf.mxu0
      %v2230 = vadd.f32 0.0, %v2229
      %v2231 = vpop.f32.mrf.mxu0
      %v2232 = vpop.f32.mrf.mxu0
      %v2233 = vadd.f32 0.0, %v2232
      %v2234 = vpop.f32.mrf.mxu0
      %2235 = vdwg.mxu0
      %2236 = vmatprep.subr.bf16.mxu0 0
      %2237 = vmatpush1.bf16.msra.mxu0 0
      %2238 = vmatprep.subr.bf16.mxu0 0
      %2239 = vmatpush1.bf16.msra.mxu0 0
      %2240 = vmatprep.subr.bf16.mxu0 0
      %2241 = vmatpush1.bf16.msra.mxu0 0
      %2242 = vmatprep.subr.bf16.mxu0 0
      %2243 = vmatpush1.bf16.msra.mxu0 0
      %2244 = vmatprep.subr.bf16.mxu0 0
      %2245 = vmatpush1.bf16.msra.mxu0 0
      %2246 = vmatprep.subr.bf16.mxu0 0
      %2247 = vmatpush1.bf16.msra.mxu0 0
      %2248 = vmatprep.subr.bf16.mxu0 0
      %2249 = vmatpush1.bf16.msra.mxu0 0
      %2250 = vmatprep.subr.bf16.mxu0 0
      %2251 = vmatpush1.bf16.msra.mxu0 %v755
      %2252 = vmatprep.subr.bf16.mxu0 0
      %2253 = vmatpush2.bf16.msra.mxu0 0
      %2254 = vmatprep.subr.bf16.mxu0 0
      %2255 = vmatpush2.bf16.msra.mxu0 0
      %2256 = vmatprep.subr.bf16.mxu0 0
      %2257 = vmatpush2.bf16.msra.mxu0 0
      %2258 = vmatprep.subr.bf16.mxu0 0
      %2259 = vmatpush2.bf16.msra.mxu0 0
      %2260 = vmatprep.subr.bf16.mxu0 0
      %2261 = vmatpush2.bf16.msra.mxu0 0
      %2262 = vmatprep.subr.bf16.mxu0 0
      %2263 = vmatpush2.bf16.msra.mxu0 0
      %2264 = vmatprep.subr.bf16.mxu0 0
      %2265 = vmatpush2.bf16.msra.mxu0 0
      %2266 = vmatprep.subr.bf16.mxu0 0
      %2267 = vmatpush2.bf16.msra.mxu0 0
      %2268 = vmatprep.mubr.bf16.mxu0 0
      %2269 = vmatmul.mubr.bf16.gmra.mxu0 %v911
      %v2270 = vpop.f32.mrf.mxu0
      %v2271 = vadd.f32 %v2206, %v2270
      %v2272 = vpop.f32.mrf.mxu0
      %v2273 = vpop.f32.mrf.mxu0
      %v2274 = vadd.f32 %v2209, %v2273
      %v2275 = vpop.f32.mrf.mxu0
      %2276 = vmatprep.mubr.bf16.mxu0 0
      %2277 = vmatmul.mubr.bf16.gmra.mxu0 %v914
      %v2278 = vpop.f32.mrf.mxu0
      %v2279 = vadd.f32 %v2214, %v2278
      %v2280 = vpop.f32.mrf.mxu0
      %v2281 = vpop.f32.mrf.mxu0
      %v2282 = vadd.f32 %v2217, %v2281
      %v2283 = vpop.f32.mrf.mxu0
      %2284 = vmatprep.mubr.bf16.mxu0 0
      %2285 = vmatmul.mubr.bf16.gmra.mxu0 %v917
      %v2286 = vpop.f32.mrf.mxu0
      %v2287 = vadd.f32 %v2222, %v2286
      %v2288 = vpop.f32.mrf.mxu0
      %v2289 = vpop.f32.mrf.mxu0
      %v2290 = vadd.f32 %v2225, %v2289
      %v2291 = vpop.f32.mrf.mxu0
      %2292 = vmatprep.mubr.bf16.mxu0 0
      %2293 = vmatmul.mubr.bf16.gmra.mxu0 %v920
      %v2294 = vpop.f32.mrf.mxu0
      %v2295 = vadd.f32 %v2230, %v2294
      %v2296 = vpop.f32.mrf.mxu0
      %v2297 = vpop.f32.mrf.mxu0
      %v2298 = vadd.f32 %v2233, %v2297
      %v2299 = vpop.f32.mrf.mxu0
      %2300 = vdwg.mxu0
      %2301 = vmatprep.subr.bf16.mxu0 0
      %2302 = vmatpush1.bf16.msra.mxu0 0
      %2303 = vmatprep.subr.bf16.mxu0 0
      %2304 = vmatpush1.bf16.msra.mxu0 0
      %2305 = vmatprep.subr.bf16.mxu0 0
      %2306 = vmatpush1.bf16.msra.mxu0 0
      %2307 = vmatprep.subr.bf16.mxu0 0
      %2308 = vmatpush1.bf16.msra.mxu0 0
      %2309 = vmatprep.subr.bf16.mxu0 0
      %2310 = vmatpush1.bf16.msra.mxu0 0
      %2311 = vmatprep.subr.bf16.mxu0 0
      %2312 = vmatpush1.bf16.msra.mxu0 0
      %2313 = vmatprep.subr.bf16.mxu0 0
      %2314 = vmatpush1.bf16.msra.mxu0 0
      %2315 = vmatprep.subr.bf16.mxu0 0
      %2316 = vmatpush1.bf16.msra.mxu0 %v835
      %2317 = vmatprep.subr.bf16.mxu0 0
      %2318 = vmatpush2.bf16.msra.mxu0 0
      %2319 = vmatprep.subr.bf16.mxu0 0
      %2320 = vmatpush2.bf16.msra.mxu0 0
      %2321 = vmatprep.subr.bf16.mxu0 0
      %2322 = vmatpush2.bf16.msra.mxu0 0
      %2323 = vmatprep.subr.bf16.mxu0 0
      %2324 = vmatpush2.bf16.msra.mxu0 0
      %2325 = vmatprep.subr.bf16.mxu0 0
      %2326 = vmatpush2.bf16.msra.mxu0 0
      %2327 = vmatprep.subr.bf16.mxu0 0
      %2328 = vmatpush2.bf16.msra.mxu0 0
      %2329 = vmatprep.subr.bf16.mxu0 0
      %2330 = vmatpush2.bf16.msra.mxu0 0
      %2331 = vmatprep.subr.bf16.mxu0 0
      %2332 = vmatpush2.bf16.msra.mxu0 0
      %2333 = vmatprep.mubr.bf16.mxu0 0
      %2334 = vmatmul.mubr.bf16.gmra.mxu0 %v1087
      %v2335 = vpop.f32.mrf.mxu0
      %v2336 = vadd.f32 0.0, %v2335
      %v2337 = vpop.f32.mrf.mxu0
      %v2338 = vpop.f32.mrf.mxu0
      %v2339 = vadd.f32 0.0, %v2338
      %v2340 = vpop.f32.mrf.mxu0
      %2341 = vmatprep.mubr.bf16.mxu0 0
      %2342 = vmatmul.mubr.bf16.gmra.mxu0 %v1090
      %v2343 = vpop.f32.mrf.mxu0
      %v2344 = vadd.f32 0.0, %v2343
      %v2345 = vpop.f32.mrf.mxu0
      %v2346 = vpop.f32.mrf.mxu0
      %v2347 = vadd.f32 0.0, %v2346
      %v2348 = vpop.f32.mrf.mxu0
      %2349 = vmatprep.mubr.bf16.mxu0 0
      %2350 = vmatmul.mubr.bf16.gmra.mxu0 %v1093
      %v2351 = vpop.f32.mrf.mxu0
      %v2352 = vadd.f32 0.0, %v2351
      %v2353 = vpop.f32.mrf.mxu0
      %v2354 = vpop.f32.mrf.mxu0
      %v2355 = vadd.f32 0.0, %v2354
      %v2356 = vpop.f32.mrf.mxu0
      %2357 = vmatprep.mubr.bf16.mxu0 0
      %2358 = vmatmul.mubr.bf16.gmra.mxu0 %v1096
      %v2359 = vpop.f32.mrf.mxu0
      %v2360 = vadd.f32 0.0, %v2359
      %v2361 = vpop.f32.mrf.mxu0
      %v2362 = vpop.f32.mrf.mxu0
      %v2363 = vadd.f32 0.0, %v2362
      %v2364 = vpop.f32.mrf.mxu0
      %2365 = vdwg.mxu0
      %v2366 = vadd.f32 %v2271, %v2336
      %v2367 = vadd.f32 %v2274, %v2339
      %v2368 = vadd.f32 %v2279, %v2344
      %v2369 = vadd.f32 %v2282, %v2347
      %v2370 = vadd.f32 %v2287, %v2352
      %v2371 = vadd.f32 %v2290, %v2355
      %v2372 = vadd.f32 %v2295, %v2360
      %v2373 = vadd.f32 %v2298, %v2363
      %2374 = vmatprep.subr.bf16.mxu0 0
      %2375 = vmatpush1.bf16.msra.mxu0 0
      %2376 = vmatprep.subr.bf16.mxu0 0
      %2377 = vmatpush1.bf16.msra.mxu0 0
      %2378 = vmatprep.subr.bf16.mxu0 0
      %2379 = vmatpush1.bf16.msra.mxu0 0
      %2380 = vmatprep.subr.bf16.mxu0 0
      %2381 = vmatpush1.bf16.msra.mxu0 0
      %2382 = vmatprep.subr.bf16.mxu0 0
      %2383 = vmatpush1.bf16.msra.mxu0 0
      %2384 = vmatprep.subr.bf16.mxu0 0
      %2385 = vmatpush1.bf16.msra.mxu0 0
      %2386 = vmatprep.subr.bf16.mxu0 0
      %2387 = vmatpush1.bf16.msra.mxu0 0
      %2388 = vmatprep.subr.bf16.mxu0 0
      %2389 = vmatpush1.bf16.msra.mxu0 %v923
      %2390 = vmatprep.subr.bf16.mxu0 0
      %2391 = vmatpush2.bf16.msra.mxu0 0
      %2392 = vmatprep.subr.bf16.mxu0 0
      %2393 = vmatpush2.bf16.msra.mxu0 0
      %2394 = vmatprep.subr.bf16.mxu0 0
      %2395 = vmatpush2.bf16.msra.mxu0 0
      %2396 = vmatprep.subr.bf16.mxu0 0
      %2397 = vmatpush2.bf16.msra.mxu0 0
      %2398 = vmatprep.subr.bf16.mxu0 0
      %2399 = vmatpush2.bf16.msra.mxu0 0
      %2400 = vmatprep.subr.bf16.mxu0 0
      %2401 = vmatpush2.bf16.msra.mxu0 0
      %2402 = vmatprep.subr.bf16.mxu0 0
      %2403 = vmatpush2.bf16.msra.mxu0 0
      %2404 = vmatprep.subr.bf16.mxu0 0
      %2405 = vmatpush2.bf16.msra.mxu0 0
      %2406 = vmatprep.mubr.bf16.mxu0 0
      %2407 = vmatmul.mubr.bf16.gmra.mxu0 %v1175
      %v2408 = vpop.f32.mrf.mxu0
      %v2409 = vadd.f32 0.0, %v2408
      %v2410 = vpop.f32.mrf.mxu0
      %v2411 = vpop.f32.mrf.mxu0
      %v2412 = vadd.f32 0.0, %v2411
      %v2413 = vpop.f32.mrf.mxu0
      %2414 = vmatprep.mubr.bf16.mxu0 0
      %2415 = vmatmul.mubr.bf16.gmra.mxu0 %v1178
      %v2416 = vpop.f32.mrf.mxu0
      %v2417 = vadd.f32 0.0, %v2416
      %v2418 = vpop.f32.mrf.mxu0
      %v2419 = vpop.f32.mrf.mxu0
      %v2420 = vadd.f32 0.0, %v2419
      %v2421 = vpop.f32.mrf.mxu0
      %2422 = vmatprep.mubr.bf16.mxu0 0
      %2423 = vmatmul.mubr.bf16.gmra.mxu0 %v1181
      %v2424 = vpop.f32.mrf.mxu0
      %v2425 = vadd.f32 0.0, %v2424
      %v2426 = vpop.f32.mrf.mxu0
      %v2427 = vpop.f32.mrf.mxu0
      %v2428 = vadd.f32 0.0, %v2427
      %v2429 = vpop.f32.mrf.mxu0
      %2430 = vmatprep.mubr.bf16.mxu0 0
      %2431 = vmatmul.mubr.bf16.gmra.mxu0 %v1184
      %v2432 = vpop.f32.mrf.mxu0
      %v2433 = vadd.f32 0.0, %v2432
      %v2434 = vpop.f32.mrf.mxu0
      %v2435 = vpop.f32.mrf.mxu0
      %v2436 = vadd.f32 0.0, %v2435
      %v2437 = vpop.f32.mrf.mxu0
      %2438 = vdwg.mxu0
      %v2439 = vadd.f32 %v2366, %v2409
      %v2440 = vadd.f32 %v2367, %v2412
      %v2441 = vadd.f32 %v2368, %v2417
      %v2442 = vadd.f32 %v2369, %v2420
      %v2443 = vadd.f32 %v2370, %v2425
      %v2444 = vadd.f32 %v2371, %v2428
      %v2445 = vadd.f32 %v2372, %v2433
      %v2446 = vadd.f32 %v2373, %v2436
      %2447 = vmatprep.subr.bf16.mxu0 0
      %2448 = vmatpush1.bf16.msra.mxu0 0
      %2449 = vmatprep.subr.bf16.mxu0 0
      %2450 = vmatpush1.bf16.msra.mxu0 0
      %2451 = vmatprep.subr.bf16.mxu0 0
      %2452 = vmatpush1.bf16.msra.mxu0 0
      %2453 = vmatprep.subr.bf16.mxu0 0
      %2454 = vmatpush1.bf16.msra.mxu0 0
      %2455 = vmatprep.subr.bf16.mxu0 0
      %2456 = vmatpush1.bf16.msra.mxu0 0
      %2457 = vmatprep.subr.bf16.mxu0 0
      %2458 = vmatpush1.bf16.msra.mxu0 0
      %2459 = vmatprep.subr.bf16.mxu0 0
      %2460 = vmatpush1.bf16.msra.mxu0 0
      %2461 = vmatprep.subr.bf16.mxu0 0
      %2462 = vmatpush1.bf16.msra.mxu0 %v1011
      %2463 = vmatprep.subr.bf16.mxu0 0
      %2464 = vmatpush2.bf16.msra.mxu0 0
      %2465 = vmatprep.subr.bf16.mxu0 0
      %2466 = vmatpush2.bf16.msra.mxu0 0
      %2467 = vmatprep.subr.bf16.mxu0 0
      %2468 = vmatpush2.bf16.msra.mxu0 0
      %2469 = vmatprep.subr.bf16.mxu0 0
      %2470 = vmatpush2.bf16.msra.mxu0 0
      %2471 = vmatprep.subr.bf16.mxu0 0
      %2472 = vmatpush2.bf16.msra.mxu0 0
      %2473 = vmatprep.subr.bf16.mxu0 0
      %2474 = vmatpush2.bf16.msra.mxu0 0
      %2475 = vmatprep.subr.bf16.mxu0 0
      %2476 = vmatpush2.bf16.msra.mxu0 0
      %2477 = vmatprep.subr.bf16.mxu0 0
      %2478 = vmatpush2.bf16.msra.mxu0 0
      %2479 = vmatprep.mubr.bf16.mxu0 0
      %2480 = vmatmul.mubr.bf16.gmra.mxu0 %v1263
      %v2481 = vpop.f32.mrf.mxu0
      %v2482 = vadd.f32 0.0, %v2481
      %v2483 = vpop.f32.mrf.mxu0
      %v2484 = vpop.f32.mrf.mxu0
      %v2485 = vadd.f32 0.0, %v2484
      %v2486 = vpop.f32.mrf.mxu0
      %2487 = vmatprep.mubr.bf16.mxu0 0
      %2488 = vmatmul.mubr.bf16.gmra.mxu0 %v1266
      %v2489 = vpop.f32.mrf.mxu0
      %v2490 = vadd.f32 0.0, %v2489
      %v2491 = vpop.f32.mrf.mxu0
      %v2492 = vpop.f32.mrf.mxu0
      %v2493 = vadd.f32 0.0, %v2492
      %v2494 = vpop.f32.mrf.mxu0
      %2495 = vmatprep.mubr.bf16.mxu0 0
      %2496 = vmatmul.mubr.bf16.gmra.mxu0 %v1269
      %v2497 = vpop.f32.mrf.mxu0
      %v2498 = vadd.f32 0.0, %v2497
      %v2499 = vpop.f32.mrf.mxu0
      %v2500 = vpop.f32.mrf.mxu0
      %v2501 = vadd.f32 0.0, %v2500
      %v2502 = vpop.f32.mrf.mxu0
      %2503 = vmatprep.mubr.bf16.mxu0 0
      %2504 = vmatmul.mubr.bf16.gmra.mxu0 %v1272
      %v2505 = vpop.f32.mrf.mxu0
      %v2506 = vadd.f32 0.0, %v2505
      %v2507 = vpop.f32.mrf.mxu0
      %v2508 = vpop.f32.mrf.mxu0
      %v2509 = vadd.f32 0.0, %v2508
      %v2510 = vpop.f32.mrf.mxu0
      %2511 = vdwg.mxu0
      %v2512 = vadd.f32 %v2439, %v2482
      %v2513 = vadd.f32 %v2440, %v2485
      %v2514 = vadd.f32 %v2441, %v2490
      %v2515 = vadd.f32 %v2442, %v2493
      %v2516 = vadd.f32 %v2443, %v2498
      %v2517 = vadd.f32 %v2444, %v2501
      %v2518 = vadd.f32 %v2445, %v2506
      %v2519 = vadd.f32 %v2446, %v2509
      %2520 = vmatprep.subr.bf16.mxu0 0
      %2521 = vmatpush1.bf16.msra.mxu0 0
      %2522 = vmatprep.subr.bf16.mxu0 0
      %2523 = vmatpush1.bf16.msra.mxu0 0
      %2524 = vmatprep.subr.bf16.mxu0 0
      %2525 = vmatpush1.bf16.msra.mxu0 0
      %2526 = vmatprep.subr.bf16.mxu0 0
      %2527 = vmatpush1.bf16.msra.mxu0 0
      %2528 = vmatprep.subr.bf16.mxu0 0
      %2529 = vmatpush1.bf16.msra.mxu0 0
      %2530 = vmatprep.subr.bf16.mxu0 0
      %2531 = vmatpush1.bf16.msra.mxu0 0
      %2532 = vmatprep.subr.bf16.mxu0 0
      %2533 = vmatpush1.bf16.msra.mxu0 0
      %2534 = vmatprep.subr.bf16.mxu0 0
      %2535 = vmatpush1.bf16.msra.mxu0 %v1099
      %2536 = vmatprep.subr.bf16.mxu0 0
      %2537 = vmatpush2.bf16.msra.mxu0 0
      %2538 = vmatprep.subr.bf16.mxu0 0
      %2539 = vmatpush2.bf16.msra.mxu0 0
      %2540 = vmatprep.subr.bf16.mxu0 0
      %2541 = vmatpush2.bf16.msra.mxu0 0
      %2542 = vmatprep.subr.bf16.mxu0 0
      %2543 = vmatpush2.bf16.msra.mxu0 0
      %2544 = vmatprep.subr.bf16.mxu0 0
      %2545 = vmatpush2.bf16.msra.mxu0 0
      %2546 = vmatprep.subr.bf16.mxu0 0
      %2547 = vmatpush2.bf16.msra.mxu0 0
      %2548 = vmatprep.subr.bf16.mxu0 0
      %2549 = vmatpush2.bf16.msra.mxu0 0
      %2550 = vmatprep.subr.bf16.mxu0 0
      %2551 = vmatpush2.bf16.msra.mxu0 0
      %2552 = vmatprep.mubr.bf16.mxu0 0
      %2553 = vmatmul.mubr.bf16.gmra.mxu0 %v1351
      %v2554 = vpop.f32.mrf.mxu0
      %v2555 = vadd.f32 0.0, %v2554
      %v2556 = vpop.f32.mrf.mxu0
      %v2557 = vpop.f32.mrf.mxu0
      %v2558 = vadd.f32 0.0, %v2557
      %v2559 = vpop.f32.mrf.mxu0
      %2560 = vmatprep.mubr.bf16.mxu0 0
      %2561 = vmatmul.mubr.bf16.gmra.mxu0 %v1354
      %v2562 = vpop.f32.mrf.mxu0
      %v2563 = vadd.f32 0.0, %v2562
      %v2564 = vpop.f32.mrf.mxu0
      %v2565 = vpop.f32.mrf.mxu0
      %v2566 = vadd.f32 0.0, %v2565
      %v2567 = vpop.f32.mrf.mxu0
      %2568 = vmatprep.mubr.bf16.mxu0 0
      %2569 = vmatmul.mubr.bf16.gmra.mxu0 %v1357
      %v2570 = vpop.f32.mrf.mxu0
      %v2571 = vadd.f32 0.0, %v2570
      %v2572 = vpop.f32.mrf.mxu0
      %v2573 = vpop.f32.mrf.mxu0
      %v2574 = vadd.f32 0.0, %v2573
      %v2575 = vpop.f32.mrf.mxu0
      %2576 = vmatprep.mubr.bf16.mxu0 0
      %2577 = vmatmul.mubr.bf16.gmra.mxu0 %v1360
      %v2578 = vpop.f32.mrf.mxu0
      %v2579 = vadd.f32 0.0, %v2578
      %v2580 = vpop.f32.mrf.mxu0
      %v2581 = vpop.f32.mrf.mxu0
      %v2582 = vadd.f32 0.0, %v2581
      %v2583 = vpop.f32.mrf.mxu0
      %2584 = vdwg.mxu0
      %v2585 = vadd.f32 %v2512, %v2555
      %v2586 = vadd.f32 %v2513, %v2558
      %v2587 = vadd.f32 %v2514, %v2563
      %v2588 = vadd.f32 %v2515, %v2566
      %v2589 = vadd.f32 %v2516, %v2571
      %v2590 = vadd.f32 %v2517, %v2574
      %v2591 = vadd.f32 %v2518, %v2579
      %v2592 = vadd.f32 %v2519, %v2582
      %v2594 = vsel %vm369, %v610, 0
      %v2597 = vsel %vm369, %v611, 0
      %v2600 = vsel %vm369, %v612, 0
      %v2603 = vsel %vm369, %v613, 0
      %2605 = vmatprep.subr.bf16.mxu0 0
      %2606 = vmatpush1.bf16.msra.mxu0 0
      %2607 = vmatprep.subr.bf16.mxu0 0
      %2608 = vmatpush1.bf16.msra.mxu0 0
      %2609 = vmatprep.subr.bf16.mxu0 0
      %2610 = vmatpush1.bf16.msra.mxu0 0
      %2611 = vmatprep.subr.bf16.mxu0 0
      %2612 = vmatpush1.bf16.msra.mxu0 0
      %2613 = vmatprep.subr.bf16.mxu0 0
      %2614 = vmatpush1.bf16.msra.mxu0 0
      %2615 = vmatprep.subr.bf16.mxu0 0
      %2616 = vmatpush1.bf16.msra.mxu0 0
      %2617 = vmatprep.subr.bf16.mxu0 0
      %2618 = vmatpush1.bf16.msra.mxu0 0
      %2619 = vmatprep.subr.bf16.mxu0 0
      %2620 = vmatpush1.bf16.msra.mxu0 %v1187
      %2621 = vmatprep.subr.bf16.mxu0 0
      %2622 = vmatpush2.bf16.msra.mxu0 0
      %2623 = vmatprep.subr.bf16.mxu0 0
      %2624 = vmatpush2.bf16.msra.mxu0 0
      %2625 = vmatprep.subr.bf16.mxu0 0
      %2626 = vmatpush2.bf16.msra.mxu0 0
      %2627 = vmatprep.subr.bf16.mxu0 0
      %2628 = vmatpush2.bf16.msra.mxu0 0
      %2629 = vmatprep.subr.bf16.mxu0 0
      %2630 = vmatpush2.bf16.msra.mxu0 0
      %2631 = vmatprep.subr.bf16.mxu0 0
      %2632 = vmatpush2.bf16.msra.mxu0 0
      %2633 = vmatprep.subr.bf16.mxu0 0
      %2634 = vmatpush2.bf16.msra.mxu0 0
      %2635 = vmatprep.subr.bf16.mxu0 0
      %2636 = vmatpush2.bf16.msra.mxu0 0
      %2637 = vmatprep.mubr.bf16.mxu0 0
      %2638 = vmatmul.mubr.bf16.gmra.mxu0 %v2594
      %v2639 = vpop.f32.mrf.mxu0
      %v2640 = vadd.f32 0.0, %v2639
      %v2641 = vpop.f32.mrf.mxu0
      %v2642 = vpop.f32.mrf.mxu0
      %v2643 = vadd.f32 0.0, %v2642
      %v2644 = vpop.f32.mrf.mxu0
      %2645 = vmatprep.mubr.bf16.mxu0 0
      %2646 = vmatmul.mubr.bf16.gmra.mxu0 %v2597
      %v2647 = vpop.f32.mrf.mxu0
      %v2648 = vadd.f32 0.0, %v2647
      %v2649 = vpop.f32.mrf.mxu0
      %v2650 = vpop.f32.mrf.mxu0
      %v2651 = vadd.f32 0.0, %v2650
      %v2652 = vpop.f32.mrf.mxu0
      %2653 = vmatprep.mubr.bf16.mxu0 0
      %2654 = vmatmul.mubr.bf16.gmra.mxu0 %v2600
      %v2655 = vpop.f32.mrf.mxu0
      %v2656 = vadd.f32 0.0, %v2655
      %v2657 = vpop.f32.mrf.mxu0
      %v2658 = vpop.f32.mrf.mxu0
      %v2659 = vadd.f32 0.0, %v2658
      %v2660 = vpop.f32.mrf.mxu0
      %2661 = vmatprep.mubr.bf16.mxu0 0
      %2662 = vmatmul.mubr.bf16.gmra.mxu0 %v2603
      %v2663 = vpop.f32.mrf.mxu0
      %v2664 = vadd.f32 0.0, %v2663
      %v2665 = vpop.f32.mrf.mxu0
      %v2666 = vpop.f32.mrf.mxu0
      %v2667 = vadd.f32 0.0, %v2666
      %v2668 = vpop.f32.mrf.mxu0
      %2669 = vdwg.mxu0
      %v2670 = vadd.f32 %v2585, %v2640
      %v2671 = vadd.f32 %v2586, %v2643
      %v2672 = vadd.f32 %v2587, %v2648
      %v2673 = vadd.f32 %v2588, %v2651
      %v2674 = vadd.f32 %v2589, %v2656
      %v2675 = vadd.f32 %v2590, %v2659
      %v2676 = vadd.f32 %v2591, %v2664
      %v2677 = vadd.f32 %v2592, %v2667
      %v2679 = vsel %vm369, %v623, 0
      %v2682 = vsel %vm369, %v624, 0
      %v2685 = vsel %vm369, %v625, 0
      %v2688 = vsel %vm369, %v626, 0
      %2690 = vmatprep.subr.bf16.mxu0 0
      %2691 = vmatpush1.bf16.msra.mxu0 0
      %2692 = vmatprep.subr.bf16.mxu0 0
      %2693 = vmatpush1.bf16.msra.mxu0 0
      %2694 = vmatprep.subr.bf16.mxu0 0
      %2695 = vmatpush1.bf16.msra.mxu0 0
      %2696 = vmatprep.subr.bf16.mxu0 0
      %2697 = vmatpush1.bf16.msra.mxu0 0
      %2698 = vmatprep.subr.bf16.mxu0 0
      %2699 = vmatpush1.bf16.msra.mxu0 0
      %2700 = vmatprep.subr.bf16.mxu0 0
      %2701 = vmatpush1.bf16.msra.mxu0 0
      %2702 = vmatprep.subr.bf16.mxu0 0
      %2703 = vmatpush1.bf16.msra.mxu0 0
      %2704 = vmatprep.subr.bf16.mxu0 0
      %2705 = vmatpush1.bf16.msra.mxu0 %v1275
      %2706 = vmatprep.subr.bf16.mxu0 0
      %2707 = vmatpush2.bf16.msra.mxu0 0
      %2708 = vmatprep.subr.bf16.mxu0 0
      %2709 = vmatpush2.bf16.msra.mxu0 0
      %2710 = vmatprep.subr.bf16.mxu0 0
      %2711 = vmatpush2.bf16.msra.mxu0 0
      %2712 = vmatprep.subr.bf16.mxu0 0
      %2713 = vmatpush2.bf16.msra.mxu0 0
      %2714 = vmatprep.subr.bf16.mxu0 0
      %2715 = vmatpush2.bf16.msra.mxu0 0
      %2716 = vmatprep.subr.bf16.mxu0 0
      %2717 = vmatpush2.bf16.msra.mxu0 0
      %2718 = vmatprep.subr.bf16.mxu0 0
      %2719 = vmatpush2.bf16.msra.mxu0 0
      %2720 = vmatprep.subr.bf16.mxu0 0
      %2721 = vmatpush2.bf16.msra.mxu0 0
      %2722 = vmatprep.mubr.bf16.mxu0 0
      %2723 = vmatmul.mubr.bf16.gmra.mxu0 %v2679
      %v2724 = vpop.f32.mrf.mxu0
      %v2725 = vadd.f32 0.0, %v2724
      %v2726 = vpop.f32.mrf.mxu0
      %v2727 = vpop.f32.mrf.mxu0
      %v2728 = vadd.f32 0.0, %v2727
      %v2729 = vpop.f32.mrf.mxu0
      %2730 = vmatprep.mubr.bf16.mxu0 0
      %2731 = vmatmul.mubr.bf16.gmra.mxu0 %v2682
      %v2732 = vpop.f32.mrf.mxu0
      %v2733 = vadd.f32 0.0, %v2732
      %v2734 = vpop.f32.mrf.mxu0
      %v2735 = vpop.f32.mrf.mxu0
      %v2736 = vadd.f32 0.0, %v2735
      %v2737 = vpop.f32.mrf.mxu0
      %2738 = vmatprep.mubr.bf16.mxu0 0
      %2739 = vmatmul.mubr.bf16.gmra.mxu0 %v2685
      %v2740 = vpop.f32.mrf.mxu0
      %v2741 = vadd.f32 0.0, %v2740
      %v2742 = vpop.f32.mrf.mxu0
      %v2743 = vpop.f32.mrf.mxu0
      %v2744 = vadd.f32 0.0, %v2743
      %v2745 = vpop.f32.mrf.mxu0
      %2746 = vmatprep.mubr.bf16.mxu0 0
      %2747 = vmatmul.mubr.bf16.gmra.mxu0 %v2688
      %v2748 = vpop.f32.mrf.mxu0
      %v2749 = vadd.f32 0.0, %v2748
      %v2750 = vpop.f32.mrf.mxu0
      %v2751 = vpop.f32.mrf.mxu0
      %v2752 = vadd.f32 0.0, %v2751
      %v2753 = vpop.f32.mrf.mxu0
      %2754 = vdwg.mxu0
      %v2755 = vadd.f32 %v2670, %v2725
      %v2756 = vadd.f32 %v2671, %v2728
      %v2757 = vadd.f32 %v2672, %v2733
      %v2758 = vadd.f32 %v2673, %v2736
      %v2759 = vadd.f32 %v2674, %v2741
      %v2760 = vadd.f32 %v2675, %v2744
      %v2761 = vadd.f32 %v2676, %v2749
      %v2762 = vadd.f32 %v2677, %v2752
      %v2764 = vsel %vm369, %v635, 0
      %v2767 = vsel %vm369, %v636, 0
      %v2770 = vsel %vm369, %v637, 0
      %v2773 = vsel %vm369, %v638, 0
      %2775 = vmatprep.subr.bf16.mxu0 0
      %2776 = vmatpush1.bf16.msra.mxu0 0
      %2777 = vmatprep.subr.bf16.mxu0 0
      %2778 = vmatpush1.bf16.msra.mxu0 0
      %2779 = vmatprep.subr.bf16.mxu0 0
      %2780 = vmatpush1.bf16.msra.mxu0 0
      %2781 = vmatprep.subr.bf16.mxu0 0
      %2782 = vmatpush1.bf16.msra.mxu0 0
      %2783 = vmatprep.subr.bf16.mxu0 0
      %2784 = vmatpush1.bf16.msra.mxu0 0
      %2785 = vmatprep.subr.bf16.mxu0 0
      %2786 = vmatpush1.bf16.msra.mxu0 0
      %2787 = vmatprep.subr.bf16.mxu0 0
      %2788 = vmatpush1.bf16.msra.mxu0 0
      %2789 = vmatprep.subr.bf16.mxu0 0
      %2790 = vmatpush1.bf16.msra.mxu0 %v1363
      %2791 = vmatprep.subr.bf16.mxu0 0
      %2792 = vmatpush2.bf16.msra.mxu0 0
      %2793 = vmatprep.subr.bf16.mxu0 0
      %2794 = vmatpush2.bf16.msra.mxu0 0
      %2795 = vmatprep.subr.bf16.mxu0 0
      %2796 = vmatpush2.bf16.msra.mxu0 0
      %2797 = vmatprep.subr.bf16.mxu0 0
      %2798 = vmatpush2.bf16.msra.mxu0 0
      %2799 = vmatprep.subr.bf16.mxu0 0
      %2800 = vmatpush2.bf16.msra.mxu0 0
      %2801 = vmatprep.subr.bf16.mxu0 0
      %2802 = vmatpush2.bf16.msra.mxu0 0
      %2803 = vmatprep.subr.bf16.mxu0 0
      %2804 = vmatpush2.bf16.msra.mxu0 0
      %2805 = vmatprep.subr.bf16.mxu0 0
      %2806 = vmatpush2.bf16.msra.mxu0 0
      %2807 = vmatprep.mubr.bf16.mxu0 0
      %2808 = vmatmul.mubr.bf16.gmra.mxu0 %v2764
      %v2809 = vpop.f32.mrf.mxu0
      %v2810 = vadd.f32 0.0, %v2809
      %v2811 = vpop.f32.mrf.mxu0
      %v2812 = vpop.f32.mrf.mxu0
      %v2813 = vadd.f32 0.0, %v2812
      %v2814 = vpop.f32.mrf.mxu0
      %2815 = vmatprep.mubr.bf16.mxu0 0
      %2816 = vmatmul.mubr.bf16.gmra.mxu0 %v2767
      %v2817 = vpop.f32.mrf.mxu0
      %v2818 = vadd.f32 0.0, %v2817
      %v2819 = vpop.f32.mrf.mxu0
      %v2820 = vpop.f32.mrf.mxu0
      %v2821 = vadd.f32 0.0, %v2820
      %v2822 = vpop.f32.mrf.mxu0
      %2823 = vmatprep.mubr.bf16.mxu0 0
      %2824 = vmatmul.mubr.bf16.gmra.mxu0 %v2770
      %v2825 = vpop.f32.mrf.mxu0
      %v2826 = vadd.f32 0.0, %v2825
      %v2827 = vpop.f32.mrf.mxu0
      %v2828 = vpop.f32.mrf.mxu0
      %v2829 = vadd.f32 0.0, %v2828
      %v2830 = vpop.f32.mrf.mxu0
      %2831 = vmatprep.mubr.bf16.mxu0 0
      %2832 = vmatmul.mubr.bf16.gmra.mxu0 %v2773
      %v2833 = vpop.f32.mrf.mxu0
      %v2834 = vadd.f32 0.0, %v2833
      %v2835 = vpop.f32.mrf.mxu0
      %v2836 = vpop.f32.mrf.mxu0
      %v2837 = vadd.f32 0.0, %v2836
      %v2838 = vpop.f32.mrf.mxu0
      %2839 = vdwg.mxu0
      %v2840 = vadd.f32 %v2755, %v2810
      %v2841 = vadd.f32 %v2756, %v2813
      %v2842 = vadd.f32 %v2757, %v2818
      %v2843 = vadd.f32 %v2758, %v2821
      %v2844 = vadd.f32 %v2759, %v2826
      %v2845 = vadd.f32 %v2760, %v2829
      %v2846 = vadd.f32 %v2761, %v2834
      %v2847 = vadd.f32 %v2762, %v2837
      %v2848 = vadd.f32 %v2840, %v1442
      %v2849 = vadd.f32 %v2841, %v1442
      %v2850 = vadd.f32 %v2842, %v1442
      %v2851 = vadd.f32 %v2843, %v1442
      %v2852 = vadd.f32 %v2844, %v1442
      %v2853 = vadd.f32 %v2845, %v1442
      %v2854 = vadd.f32 %v2846, %v1442
      %v2855 = vadd.f32 %v2847, %v1442
      %v2856 = vmax.f32 %v2848, 0.0
      %v2857 = vmax.f32 %v2849, 0.0
      %v2858 = vmax.f32 %v2850, 0.0
      %v2859 = vmax.f32 %v2851, 0.0
      %v2860 = vmax.f32 %v2852, 0.0
      %v2861 = vmax.f32 %v2853, 0.0
      %v2862 = vmax.f32 %v2854, 0.0
      %v2863 = vmax.f32 %v2855, 0.0
      %s2864 = scalar_lea.vmem [#allocation2], 336
      %2865 = vst.msk [vmem:[%s2864 + $0x1] sm:$0xff] %vm369, %v2856
      %2866 = vst.msk [vmem:[%s2864 + $0x11] sm:$0xff] %vm369, %v2857
      %2867 = vst.msk [vmem:[%s2864 + $0x21] sm:$0xff] %vm369, %v2858
      %2868 = vst.msk [vmem:[%s2864 + $0x31] sm:$0xff] %vm369, %v2859
      %2869 = vst.msk [vmem:[%s2864 + $0x41] sm:$0xff] %vm369, %v2860
      %2870 = vst.msk [vmem:[%s2864 + $0x51] sm:$0xff] %vm369, %v2861
      %2871 = vst.msk [vmem:[%s2864 + $0x61] sm:$0xff] %vm369, %v2862
      %2872 = vst.msk [vmem:[%s2864 + $0x71] sm:$0xff] %vm369, %v2863
      %2873 = vmatprep.subr.bf16.mxu0 0
      %2874 = vmatpush1.bf16.msra.mxu0 0
      %2875 = vmatprep.subr.bf16.mxu0 0
      %2876 = vmatpush1.bf16.msra.mxu0 0
      %2877 = vmatprep.subr.bf16.mxu0 0
      %2878 = vmatpush1.bf16.msra.mxu0 0
      %2879 = vmatprep.subr.bf16.mxu0 0
      %2880 = vmatpush1.bf16.msra.mxu0 0
      %2881 = vmatprep.subr.bf16.mxu0 0
      %2882 = vmatpush1.bf16.msra.mxu0 0
      %2883 = vmatprep.subr.bf16.mxu0 0
      %2884 = vmatpush1.bf16.msra.mxu0 0
      %2885 = vmatprep.subr.bf16.mxu0 0
      %2886 = vmatpush1.bf16.msra.mxu0 0
      %2887 = vmatprep.subr.bf16.mxu0 0
      %2888 = vmatpush1.bf16.msra.mxu0 %v675
      %2889 = vmatprep.subr.bf16.mxu0 0
      %2890 = vmatpush2.bf16.msra.mxu0 0
      %2891 = vmatprep.subr.bf16.mxu0 0
      %2892 = vmatpush2.bf16.msra.mxu0 0
      %2893 = vmatprep.subr.bf16.mxu0 0
      %2894 = vmatpush2.bf16.msra.mxu0 0
      %2895 = vmatprep.subr.bf16.mxu0 0
      %2896 = vmatpush2.bf16.msra.mxu0 0
      %2897 = vmatprep.subr.bf16.mxu0 0
      %2898 = vmatpush2.bf16.msra.mxu0 0
      %2899 = vmatprep.subr.bf16.mxu0 0
      %2900 = vmatpush2.bf16.msra.mxu0 0
      %2901 = vmatprep.subr.bf16.mxu0 0
      %2902 = vmatpush2.bf16.msra.mxu0 0
      %2903 = vmatprep.subr.bf16.mxu0 0
      %2904 = vmatpush2.bf16.msra.mxu0 0
      %2905 = vmatprep.mubr.bf16.mxu0 0
      %2906 = vmatmul.mubr.bf16.gmra.mxu0 %v1087
      %v2907 = vpop.f32.mrf.mxu0
      %v2908 = vadd.f32 0.0, %v2907
      %v2909 = vpop.f32.mrf.mxu0
      %v2910 = vpop.f32.mrf.mxu0
      %v2911 = vadd.f32 0.0, %v2910
      %v2912 = vpop.f32.mrf.mxu0
      %2913 = vmatprep.mubr.bf16.mxu0 0
      %2914 = vmatmul.mubr.bf16.gmra.mxu0 %v1090
      %v2915 = vpop.f32.mrf.mxu0
      %v2916 = vadd.f32 0.0, %v2915
      %v2917 = vpop.f32.mrf.mxu0
      %v2918 = vpop.f32.mrf.mxu0
      %v2919 = vadd.f32 0.0, %v2918
      %v2920 = vpop.f32.mrf.mxu0
      %2921 = vmatprep.mubr.bf16.mxu0 0
      %2922 = vmatmul.mubr.bf16.gmra.mxu0 %v1093
      %v2923 = vpop.f32.mrf.mxu0
      %v2924 = vadd.f32 0.0, %v2923
      %v2925 = vpop.f32.mrf.mxu0
      %v2926 = vpop.f32.mrf.mxu0
      %v2927 = vadd.f32 0.0, %v2926
      %v2928 = vpop.f32.mrf.mxu0
      %2929 = vmatprep.mubr.bf16.mxu0 0
      %2930 = vmatmul.mubr.bf16.gmra.mxu0 %v1096
      %v2931 = vpop.f32.mrf.mxu0
      %v2932 = vadd.f32 0.0, %v2931
      %v2933 = vpop.f32.mrf.mxu0
      %v2934 = vpop.f32.mrf.mxu0
      %v2935 = vadd.f32 0.0, %v2934
      %v2936 = vpop.f32.mrf.mxu0
      %2937 = vdwg.mxu0
      %2938 = vmatprep.subr.bf16.mxu0 0
      %2939 = vmatpush1.bf16.msra.mxu0 0
      %2940 = vmatprep.subr.bf16.mxu0 0
      %2941 = vmatpush1.bf16.msra.mxu0 0
      %2942 = vmatprep.subr.bf16.mxu0 0
      %2943 = vmatpush1.bf16.msra.mxu0 0
      %2944 = vmatprep.subr.bf16.mxu0 0
      %2945 = vmatpush1.bf16.msra.mxu0 0
      %2946 = vmatprep.subr.bf16.mxu0 0
      %2947 = vmatpush1.bf16.msra.mxu0 0
      %2948 = vmatprep.subr.bf16.mxu0 0
      %2949 = vmatpush1.bf16.msra.mxu0 0
      %2950 = vmatprep.subr.bf16.mxu0 0
      %2951 = vmatpush1.bf16.msra.mxu0 0
      %2952 = vmatprep.subr.bf16.mxu0 0
      %2953 = vmatpush1.bf16.msra.mxu0 %v755
      %2954 = vmatprep.subr.bf16.mxu0 0
      %2955 = vmatpush2.bf16.msra.mxu0 0
      %2956 = vmatprep.subr.bf16.mxu0 0
      %2957 = vmatpush2.bf16.msra.mxu0 0
      %2958 = vmatprep.subr.bf16.mxu0 0
      %2959 = vmatpush2.bf16.msra.mxu0 0
      %2960 = vmatprep.subr.bf16.mxu0 0
      %2961 = vmatpush2.bf16.msra.mxu0 0
      %2962 = vmatprep.subr.bf16.mxu0 0
      %2963 = vmatpush2.bf16.msra.mxu0 0
      %2964 = vmatprep.subr.bf16.mxu0 0
      %2965 = vmatpush2.bf16.msra.mxu0 0
      %2966 = vmatprep.subr.bf16.mxu0 0
      %2967 = vmatpush2.bf16.msra.mxu0 0
      %2968 = vmatprep.subr.bf16.mxu0 0
      %2969 = vmatpush2.bf16.msra.mxu0 0
      %2970 = vmatprep.mubr.bf16.mxu0 0
      %2971 = vmatmul.mubr.bf16.gmra.mxu0 %v999
      %v2972 = vpop.f32.mrf.mxu0
      %v2973 = vadd.f32 %v2908, %v2972
      %v2974 = vpop.f32.mrf.mxu0
      %v2975 = vpop.f32.mrf.mxu0
      %v2976 = vadd.f32 %v2911, %v2975
      %v2977 = vpop.f32.mrf.mxu0
      %2978 = vmatprep.mubr.bf16.mxu0 0
      %2979 = vmatmul.mubr.bf16.gmra.mxu0 %v1002
      %v2980 = vpop.f32.mrf.mxu0
      %v2981 = vadd.f32 %v2916, %v2980
      %v2982 = vpop.f32.mrf.mxu0
      %v2983 = vpop.f32.mrf.mxu0
      %v2984 = vadd.f32 %v2919, %v2983
      %v2985 = vpop.f32.mrf.mxu0
      %2986 = vmatprep.mubr.bf16.mxu0 0
      %2987 = vmatmul.mubr.bf16.gmra.mxu0 %v1005
      %v2988 = vpop.f32.mrf.mxu0
      %v2989 = vadd.f32 %v2924, %v2988
      %v2990 = vpop.f32.mrf.mxu0
      %v2991 = vpop.f32.mrf.mxu0
      %v2992 = vadd.f32 %v2927, %v2991
      %v2993 = vpop.f32.mrf.mxu0
      %2994 = vmatprep.mubr.bf16.mxu0 0
      %2995 = vmatmul.mubr.bf16.gmra.mxu0 %v1008
      %v2996 = vpop.f32.mrf.mxu0
      %v2997 = vadd.f32 %v2932, %v2996
      %v2998 = vpop.f32.mrf.mxu0
      %v2999 = vpop.f32.mrf.mxu0
      %v3000 = vadd.f32 %v2935, %v2999
      %v3001 = vpop.f32.mrf.mxu0
      %3002 = vdwg.mxu0
      %3003 = vmatprep.subr.bf16.mxu0 0
      %3004 = vmatpush1.bf16.msra.mxu0 0
      %3005 = vmatprep.subr.bf16.mxu0 0
      %3006 = vmatpush1.bf16.msra.mxu0 0
      %3007 = vmatprep.subr.bf16.mxu0 0
      %3008 = vmatpush1.bf16.msra.mxu0 0
      %3009 = vmatprep.subr.bf16.mxu0 0
      %3010 = vmatpush1.bf16.msra.mxu0 0
      %3011 = vmatprep.subr.bf16.mxu0 0
      %3012 = vmatpush1.bf16.msra.mxu0 0
      %3013 = vmatprep.subr.bf16.mxu0 0
      %3014 = vmatpush1.bf16.msra.mxu0 0
      %3015 = vmatprep.subr.bf16.mxu0 0
      %3016 = vmatpush1.bf16.msra.mxu0 0
      %3017 = vmatprep.subr.bf16.mxu0 0
      %3018 = vmatpush1.bf16.msra.mxu0 %v835
      %3019 = vmatprep.subr.bf16.mxu0 0
      %3020 = vmatpush2.bf16.msra.mxu0 0
      %3021 = vmatprep.subr.bf16.mxu0 0
      %3022 = vmatpush2.bf16.msra.mxu0 0
      %3023 = vmatprep.subr.bf16.mxu0 0
      %3024 = vmatpush2.bf16.msra.mxu0 0
      %3025 = vmatprep.subr.bf16.mxu0 0
      %3026 = vmatpush2.bf16.msra.mxu0 0
      %3027 = vmatprep.subr.bf16.mxu0 0
      %3028 = vmatpush2.bf16.msra.mxu0 0
      %3029 = vmatprep.subr.bf16.mxu0 0
      %3030 = vmatpush2.bf16.msra.mxu0 0
      %3031 = vmatprep.subr.bf16.mxu0 0
      %3032 = vmatpush2.bf16.msra.mxu0 0
      %3033 = vmatprep.subr.bf16.mxu0 0
      %3034 = vmatpush2.bf16.msra.mxu0 0
      %3035 = vmatprep.mubr.bf16.mxu0 0
      %3036 = vmatmul.mubr.bf16.gmra.mxu0 %v1831
      %v3037 = vpop.f32.mrf.mxu0
      %v3038 = vadd.f32 0.0, %v3037
      %v3039 = vpop.f32.mrf.mxu0
      %v3040 = vpop.f32.mrf.mxu0
      %v3041 = vadd.f32 0.0, %v3040
      %v3042 = vpop.f32.mrf.mxu0
      %3043 = vmatprep.mubr.bf16.mxu0 0
      %3044 = vmatmul.mubr.bf16.gmra.mxu0 %v1834
      %v3045 = vpop.f32.mrf.mxu0
      %v3046 = vadd.f32 0.0, %v3045
      %v3047 = vpop.f32.mrf.mxu0
      %v3048 = vpop.f32.mrf.mxu0
      %v3049 = vadd.f32 0.0, %v3048
      %v3050 = vpop.f32.mrf.mxu0
      %3051 = vmatprep.mubr.bf16.mxu0 0
      %3052 = vmatmul.mubr.bf16.gmra.mxu0 %v1837
      %v3053 = vpop.f32.mrf.mxu0
      %v3054 = vadd.f32 0.0, %v3053
      %v3055 = vpop.f32.mrf.mxu0
      %v3056 = vpop.f32.mrf.mxu0
      %v3057 = vadd.f32 0.0, %v3056
      %v3058 = vpop.f32.mrf.mxu0
      %3059 = vmatprep.mubr.bf16.mxu0 0
      %3060 = vmatmul.mubr.bf16.gmra.mxu0 %v1840
      %v3061 = vpop.f32.mrf.mxu0
      %v3062 = vadd.f32 0.0, %v3061
      %v3063 = vpop.f32.mrf.mxu0
      %v3064 = vpop.f32.mrf.mxu0
      %v3065 = vadd.f32 0.0, %v3064
      %v3066 = vpop.f32.mrf.mxu0
      %3067 = vdwg.mxu0
      %v3068 = vadd.f32 %v2973, %v3038
      %v3069 = vadd.f32 %v2976, %v3041
      %v3070 = vadd.f32 %v2981, %v3046
      %v3071 = vadd.f32 %v2984, %v3049
      %v3072 = vadd.f32 %v2989, %v3054
      %v3073 = vadd.f32 %v2992, %v3057
      %v3074 = vadd.f32 %v2997, %v3062
      %v3075 = vadd.f32 %v3000, %v3065
      %3076 = vmatprep.subr.bf16.mxu0 0
      %3077 = vmatpush1.bf16.msra.mxu0 0
      %3078 = vmatprep.subr.bf16.mxu0 0
      %3079 = vmatpush1.bf16.msra.mxu0 0
      %3080 = vmatprep.subr.bf16.mxu0 0
      %3081 = vmatpush1.bf16.msra.mxu0 0
      %3082 = vmatprep.subr.bf16.mxu0 0
      %3083 = vmatpush1.bf16.msra.mxu0 0
      %3084 = vmatprep.subr.bf16.mxu0 0
      %3085 = vmatpush1.bf16.msra.mxu0 0
      %3086 = vmatprep.subr.bf16.mxu0 0
      %3087 = vmatpush1.bf16.msra.mxu0 0
      %3088 = vmatprep.subr.bf16.mxu0 0
      %3089 = vmatpush1.bf16.msra.mxu0 0
      %3090 = vmatprep.subr.bf16.mxu0 0
      %3091 = vmatpush1.bf16.msra.mxu0 %v923
      %3092 = vmatprep.subr.bf16.mxu0 0
      %3093 = vmatpush2.bf16.msra.mxu0 0
      %3094 = vmatprep.subr.bf16.mxu0 0
      %3095 = vmatpush2.bf16.msra.mxu0 0
      %3096 = vmatprep.subr.bf16.mxu0 0
      %3097 = vmatpush2.bf16.msra.mxu0 0
      %3098 = vmatprep.subr.bf16.mxu0 0
      %3099 = vmatpush2.bf16.msra.mxu0 0
      %3100 = vmatprep.subr.bf16.mxu0 0
      %3101 = vmatpush2.bf16.msra.mxu0 0
      %3102 = vmatprep.subr.bf16.mxu0 0
      %3103 = vmatpush2.bf16.msra.mxu0 0
      %3104 = vmatprep.subr.bf16.mxu0 0
      %3105 = vmatpush2.bf16.msra.mxu0 0
      %3106 = vmatprep.subr.bf16.mxu0 0
      %3107 = vmatpush2.bf16.msra.mxu0 0
      %3108 = vmatprep.mubr.bf16.mxu0 0
      %3109 = vmatmul.mubr.bf16.gmra.mxu0 %v1263
      %v3110 = vpop.f32.mrf.mxu0
      %v3111 = vadd.f32 0.0, %v3110
      %v3112 = vpop.f32.mrf.mxu0
      %v3113 = vpop.f32.mrf.mxu0
      %v3114 = vadd.f32 0.0, %v3113
      %v3115 = vpop.f32.mrf.mxu0
      %3116 = vmatprep.mubr.bf16.mxu0 0
      %3117 = vmatmul.mubr.bf16.gmra.mxu0 %v1266
      %v3118 = vpop.f32.mrf.mxu0
      %v3119 = vadd.f32 0.0, %v3118
      %v3120 = vpop.f32.mrf.mxu0
      %v3121 = vpop.f32.mrf.mxu0
      %v3122 = vadd.f32 0.0, %v3121
      %v3123 = vpop.f32.mrf.mxu0
      %3124 = vmatprep.mubr.bf16.mxu0 0
      %3125 = vmatmul.mubr.bf16.gmra.mxu0 %v1269
      %v3126 = vpop.f32.mrf.mxu0
      %v3127 = vadd.f32 0.0, %v3126
      %v3128 = vpop.f32.mrf.mxu0
      %v3129 = vpop.f32.mrf.mxu0
      %v3130 = vadd.f32 0.0, %v3129
      %v3131 = vpop.f32.mrf.mxu0
      %3132 = vmatprep.mubr.bf16.mxu0 0
      %3133 = vmatmul.mubr.bf16.gmra.mxu0 %v1272
      %v3134 = vpop.f32.mrf.mxu0
      %v3135 = vadd.f32 0.0, %v3134
      %v3136 = vpop.f32.mrf.mxu0
      %v3137 = vpop.f32.mrf.mxu0
      %v3138 = vadd.f32 0.0, %v3137
      %v3139 = vpop.f32.mrf.mxu0
      %3140 = vdwg.mxu0
      %v3141 = vadd.f32 %v3068, %v3111
      %v3142 = vadd.f32 %v3069, %v3114
      %v3143 = vadd.f32 %v3070, %v3119
      %v3144 = vadd.f32 %v3071, %v3122
      %v3145 = vadd.f32 %v3072, %v3127
      %v3146 = vadd.f32 %v3073, %v3130
      %v3147 = vadd.f32 %v3074, %v3135
      %v3148 = vadd.f32 %v3075, %v3138
      %3149 = vmatprep.subr.bf16.mxu0 0
      %3150 = vmatpush1.bf16.msra.mxu0 0
      %3151 = vmatprep.subr.bf16.mxu0 0
      %3152 = vmatpush1.bf16.msra.mxu0 0
      %3153 = vmatprep.subr.bf16.mxu0 0
      %3154 = vmatpush1.bf16.msra.mxu0 0
      %3155 = vmatprep.subr.bf16.mxu0 0
      %3156 = vmatpush1.bf16.msra.mxu0 0
      %3157 = vmatprep.subr.bf16.mxu0 0
      %3158 = vmatpush1.bf16.msra.mxu0 0
      %3159 = vmatprep.subr.bf16.mxu0 0
      %3160 = vmatpush1.bf16.msra.mxu0 0
      %3161 = vmatprep.subr.bf16.mxu0 0
      %3162 = vmatpush1.bf16.msra.mxu0 0
      %3163 = vmatprep.subr.bf16.mxu0 0
      %3164 = vmatpush1.bf16.msra.mxu0 %v1011
      %3165 = vmatprep.subr.bf16.mxu0 0
      %3166 = vmatpush2.bf16.msra.mxu0 0
      %3167 = vmatprep.subr.bf16.mxu0 0
      %3168 = vmatpush2.bf16.msra.mxu0 0
      %3169 = vmatprep.subr.bf16.mxu0 0
      %3170 = vmatpush2.bf16.msra.mxu0 0
      %3171 = vmatprep.subr.bf16.mxu0 0
      %3172 = vmatpush2.bf16.msra.mxu0 0
      %3173 = vmatprep.subr.bf16.mxu0 0
      %3174 = vmatpush2.bf16.msra.mxu0 0
      %3175 = vmatprep.subr.bf16.mxu0 0
      %3176 = vmatpush2.bf16.msra.mxu0 0
      %3177 = vmatprep.subr.bf16.mxu0 0
      %3178 = vmatpush2.bf16.msra.mxu0 0
      %3179 = vmatprep.subr.bf16.mxu0 0
      %3180 = vmatpush2.bf16.msra.mxu0 0
      %3181 = vmatprep.mubr.bf16.mxu0 0
      %3182 = vmatmul.mubr.bf16.gmra.mxu0 %v1351
      %v3183 = vpop.f32.mrf.mxu0
      %v3184 = vadd.f32 0.0, %v3183
      %v3185 = vpop.f32.mrf.mxu0
      %v3186 = vpop.f32.mrf.mxu0
      %v3187 = vadd.f32 0.0, %v3186
      %v3188 = vpop.f32.mrf.mxu0
      %3189 = vmatprep.mubr.bf16.mxu0 0
      %3190 = vmatmul.mubr.bf16.gmra.mxu0 %v1354
      %v3191 = vpop.f32.mrf.mxu0
      %v3192 = vadd.f32 0.0, %v3191
      %v3193 = vpop.f32.mrf.mxu0
      %v3194 = vpop.f32.mrf.mxu0
      %v3195 = vadd.f32 0.0, %v3194
      %v3196 = vpop.f32.mrf.mxu0
      %3197 = vmatprep.mubr.bf16.mxu0 0
      %3198 = vmatmul.mubr.bf16.gmra.mxu0 %v1357
      %v3199 = vpop.f32.mrf.mxu0
      %v3200 = vadd.f32 0.0, %v3199
      %v3201 = vpop.f32.mrf.mxu0
      %v3202 = vpop.f32.mrf.mxu0
      %v3203 = vadd.f32 0.0, %v3202
      %v3204 = vpop.f32.mrf.mxu0
      %3205 = vmatprep.mubr.bf16.mxu0 0
      %3206 = vmatmul.mubr.bf16.gmra.mxu0 %v1360
      %v3207 = vpop.f32.mrf.mxu0
      %v3208 = vadd.f32 0.0, %v3207
      %v3209 = vpop.f32.mrf.mxu0
      %v3210 = vpop.f32.mrf.mxu0
      %v3211 = vadd.f32 0.0, %v3210
      %v3212 = vpop.f32.mrf.mxu0
      %3213 = vdwg.mxu0
      %v3214 = vadd.f32 %v3141, %v3184
      %v3215 = vadd.f32 %v3142, %v3187
      %v3216 = vadd.f32 %v3143, %v3192
      %v3217 = vadd.f32 %v3144, %v3195
      %v3218 = vadd.f32 %v3145, %v3200
      %v3219 = vadd.f32 %v3146, %v3203
      %v3220 = vadd.f32 %v3147, %v3208
      %v3221 = vadd.f32 %v3148, %v3211
      %3222 = vmatprep.subr.bf16.mxu0 0
      %3223 = vmatpush1.bf16.msra.mxu0 0
      %3224 = vmatprep.subr.bf16.mxu0 0
      %3225 = vmatpush1.bf16.msra.mxu0 0
      %3226 = vmatprep.subr.bf16.mxu0 0
      %3227 = vmatpush1.bf16.msra.mxu0 0
      %3228 = vmatprep.subr.bf16.mxu0 0
      %3229 = vmatpush1.bf16.msra.mxu0 0
      %3230 = vmatprep.subr.bf16.mxu0 0
      %3231 = vmatpush1.bf16.msra.mxu0 0
      %3232 = vmatprep.subr.bf16.mxu0 0
      %3233 = vmatpush1.bf16.msra.mxu0 0
      %3234 = vmatprep.subr.bf16.mxu0 0
      %3235 = vmatpush1.bf16.msra.mxu0 0
      %3236 = vmatprep.subr.bf16.mxu0 0
      %3237 = vmatpush1.bf16.msra.mxu0 %v1099
      %3238 = vmatprep.subr.bf16.mxu0 0
      %3239 = vmatpush2.bf16.msra.mxu0 0
      %3240 = vmatprep.subr.bf16.mxu0 0
      %3241 = vmatpush2.bf16.msra.mxu0 0
      %3242 = vmatprep.subr.bf16.mxu0 0
      %3243 = vmatpush2.bf16.msra.mxu0 0
      %3244 = vmatprep.subr.bf16.mxu0 0
      %3245 = vmatpush2.bf16.msra.mxu0 0
      %3246 = vmatprep.subr.bf16.mxu0 0
      %3247 = vmatpush2.bf16.msra.mxu0 0
      %3248 = vmatprep.subr.bf16.mxu0 0
      %3249 = vmatpush2.bf16.msra.mxu0 0
      %3250 = vmatprep.subr.bf16.mxu0 0
      %3251 = vmatpush2.bf16.msra.mxu0 0
      %3252 = vmatprep.subr.bf16.mxu0 0
      %3253 = vmatpush2.bf16.msra.mxu0 0
      %3254 = vmatprep.mubr.bf16.mxu0 0
      %3255 = vmatmul.mubr.bf16.gmra.mxu0 %v2062
      %v3256 = vpop.f32.mrf.mxu0
      %v3257 = vadd.f32 0.0, %v3256
      %v3258 = vpop.f32.mrf.mxu0
      %v3259 = vpop.f32.mrf.mxu0
      %v3260 = vadd.f32 0.0, %v3259
      %v3261 = vpop.f32.mrf.mxu0
      %3262 = vmatprep.mubr.bf16.mxu0 0
      %3263 = vmatmul.mubr.bf16.gmra.mxu0 %v2065
      %v3264 = vpop.f32.mrf.mxu0
      %v3265 = vadd.f32 0.0, %v3264
      %v3266 = vpop.f32.mrf.mxu0
      %v3267 = vpop.f32.mrf.mxu0
      %v3268 = vadd.f32 0.0, %v3267
      %v3269 = vpop.f32.mrf.mxu0
      %3270 = vmatprep.mubr.bf16.mxu0 0
      %3271 = vmatmul.mubr.bf16.gmra.mxu0 %v2068
      %v3272 = vpop.f32.mrf.mxu0
      %v3273 = vadd.f32 0.0, %v3272
      %v3274 = vpop.f32.mrf.mxu0
      %v3275 = vpop.f32.mrf.mxu0
      %v3276 = vadd.f32 0.0, %v3275
      %v3277 = vpop.f32.mrf.mxu0
      %3278 = vmatprep.mubr.bf16.mxu0 0
      %3279 = vmatmul.mubr.bf16.gmra.mxu0 %v2071
      %v3280 = vpop.f32.mrf.mxu0
      %v3281 = vadd.f32 0.0, %v3280
      %v3282 = vpop.f32.mrf.mxu0
      %v3283 = vpop.f32.mrf.mxu0
      %v3284 = vadd.f32 0.0, %v3283
      %v3285 = vpop.f32.mrf.mxu0
      %3286 = vdwg.mxu0
      %v3287 = vadd.f32 %v3214, %v3257
      %v3288 = vadd.f32 %v3215, %v3260
      %v3289 = vadd.f32 %v3216, %v3265
      %v3290 = vadd.f32 %v3217, %v3268
      %v3291 = vadd.f32 %v3218, %v3273
      %v3292 = vadd.f32 %v3219, %v3276
      %v3293 = vadd.f32 %v3220, %v3281
      %v3294 = vadd.f32 %v3221, %v3284
      %3295 = vmatprep.subr.bf16.mxu0 0
      %3296 = vmatpush1.bf16.msra.mxu0 0
      %3297 = vmatprep.subr.bf16.mxu0 0
      %3298 = vmatpush1.bf16.msra.mxu0 0
      %3299 = vmatprep.subr.bf16.mxu0 0
      %3300 = vmatpush1.bf16.msra.mxu0 0
      %3301 = vmatprep.subr.bf16.mxu0 0
      %3302 = vmatpush1.bf16.msra.mxu0 0
      %3303 = vmatprep.subr.bf16.mxu0 0
      %3304 = vmatpush1.bf16.msra.mxu0 0
      %3305 = vmatprep.subr.bf16.mxu0 0
      %3306 = vmatpush1.bf16.msra.mxu0 0
      %3307 = vmatprep.subr.bf16.mxu0 0
      %3308 = vmatpush1.bf16.msra.mxu0 0
      %3309 = vmatprep.subr.bf16.mxu0 0
      %3310 = vmatpush1.bf16.msra.mxu0 %v1187
      %3311 = vmatprep.subr.bf16.mxu0 0
      %3312 = vmatpush2.bf16.msra.mxu0 0
      %3313 = vmatprep.subr.bf16.mxu0 0
      %3314 = vmatpush2.bf16.msra.mxu0 0
      %3315 = vmatprep.subr.bf16.mxu0 0
      %3316 = vmatpush2.bf16.msra.mxu0 0
      %3317 = vmatprep.subr.bf16.mxu0 0
      %3318 = vmatpush2.bf16.msra.mxu0 0
      %3319 = vmatprep.subr.bf16.mxu0 0
      %3320 = vmatpush2.bf16.msra.mxu0 0
      %3321 = vmatprep.subr.bf16.mxu0 0
      %3322 = vmatpush2.bf16.msra.mxu0 0
      %3323 = vmatprep.subr.bf16.mxu0 0
      %3324 = vmatpush2.bf16.msra.mxu0 0
      %3325 = vmatprep.subr.bf16.mxu0 0
      %3326 = vmatpush2.bf16.msra.mxu0 0
      %3327 = vmatprep.mubr.bf16.mxu0 0
      %3328 = vmatmul.mubr.bf16.gmra.mxu0 %v2679
      %v3329 = vpop.f32.mrf.mxu0
      %v3330 = vadd.f32 0.0, %v3329
      %v3331 = vpop.f32.mrf.mxu0
      %v3332 = vpop.f32.mrf.mxu0
      %v3333 = vadd.f32 0.0, %v3332
      %v3334 = vpop.f32.mrf.mxu0
      %3335 = vmatprep.mubr.bf16.mxu0 0
      %3336 = vmatmul.mubr.bf16.gmra.mxu0 %v2682
      %v3337 = vpop.f32.mrf.mxu0
      %v3338 = vadd.f32 0.0, %v3337
      %v3339 = vpop.f32.mrf.mxu0
      %v3340 = vpop.f32.mrf.mxu0
      %v3341 = vadd.f32 0.0, %v3340
      %v3342 = vpop.f32.mrf.mxu0
      %3343 = vmatprep.mubr.bf16.mxu0 0
      %3344 = vmatmul.mubr.bf16.gmra.mxu0 %v2685
      %v3345 = vpop.f32.mrf.mxu0
      %v3346 = vadd.f32 0.0, %v3345
      %v3347 = vpop.f32.mrf.mxu0
      %v3348 = vpop.f32.mrf.mxu0
      %v3349 = vadd.f32 0.0, %v3348
      %v3350 = vpop.f32.mrf.mxu0
      %3351 = vmatprep.mubr.bf16.mxu0 0
      %3352 = vmatmul.mubr.bf16.gmra.mxu0 %v2688
      %v3353 = vpop.f32.mrf.mxu0
      %v3354 = vadd.f32 0.0, %v3353
      %v3355 = vpop.f32.mrf.mxu0
      %v3356 = vpop.f32.mrf.mxu0
      %v3357 = vadd.f32 0.0, %v3356
      %v3358 = vpop.f32.mrf.mxu0
      %3359 = vdwg.mxu0
      %v3360 = vadd.f32 %v3287, %v3330
      %v3361 = vadd.f32 %v3288, %v3333
      %v3362 = vadd.f32 %v3289, %v3338
      %v3363 = vadd.f32 %v3290, %v3341
      %v3364 = vadd.f32 %v3291, %v3346
      %v3365 = vadd.f32 %v3292, %v3349
      %v3366 = vadd.f32 %v3293, %v3354
      %v3367 = vadd.f32 %v3294, %v3357
      %3368 = vmatprep.subr.bf16.mxu0 0
      %3369 = vmatpush1.bf16.msra.mxu0 0
      %3370 = vmatprep.subr.bf16.mxu0 0
      %3371 = vmatpush1.bf16.msra.mxu0 0
      %3372 = vmatprep.subr.bf16.mxu0 0
      %3373 = vmatpush1.bf16.msra.mxu0 0
      %3374 = vmatprep.subr.bf16.mxu0 0
      %3375 = vmatpush1.bf16.msra.mxu0 0
      %3376 = vmatprep.subr.bf16.mxu0 0
      %3377 = vmatpush1.bf16.msra.mxu0 0
      %3378 = vmatprep.subr.bf16.mxu0 0
      %3379 = vmatpush1.bf16.msra.mxu0 0
      %3380 = vmatprep.subr.bf16.mxu0 0
      %3381 = vmatpush1.bf16.msra.mxu0 0
      %3382 = vmatprep.subr.bf16.mxu0 0
      %3383 = vmatpush1.bf16.msra.mxu0 %v1275
      %3384 = vmatprep.subr.bf16.mxu0 0
      %3385 = vmatpush2.bf16.msra.mxu0 0
      %3386 = vmatprep.subr.bf16.mxu0 0
      %3387 = vmatpush2.bf16.msra.mxu0 0
      %3388 = vmatprep.subr.bf16.mxu0 0
      %3389 = vmatpush2.bf16.msra.mxu0 0
      %3390 = vmatprep.subr.bf16.mxu0 0
      %3391 = vmatpush2.bf16.msra.mxu0 0
      %3392 = vmatprep.subr.bf16.mxu0 0
      %3393 = vmatpush2.bf16.msra.mxu0 0
      %3394 = vmatprep.subr.bf16.mxu0 0
      %3395 = vmatpush2.bf16.msra.mxu0 0
      %3396 = vmatprep.subr.bf16.mxu0 0
      %3397 = vmatpush2.bf16.msra.mxu0 0
      %3398 = vmatprep.subr.bf16.mxu0 0
      %3399 = vmatpush2.bf16.msra.mxu0 0
      %3400 = vmatprep.mubr.bf16.mxu0 0
      %3401 = vmatmul.mubr.bf16.gmra.mxu0 %v2764
      %v3402 = vpop.f32.mrf.mxu0
      %v3403 = vadd.f32 0.0, %v3402
      %v3404 = vpop.f32.mrf.mxu0
      %v3405 = vpop.f32.mrf.mxu0
      %v3406 = vadd.f32 0.0, %v3405
      %v3407 = vpop.f32.mrf.mxu0
      %3408 = vmatprep.mubr.bf16.mxu0 0
      %3409 = vmatmul.mubr.bf16.gmra.mxu0 %v2767
      %v3410 = vpop.f32.mrf.mxu0
      %v3411 = vadd.f32 0.0, %v3410
      %v3412 = vpop.f32.mrf.mxu0
      %v3413 = vpop.f32.mrf.mxu0
      %v3414 = vadd.f32 0.0, %v3413
      %v3415 = vpop.f32.mrf.mxu0
      %3416 = vmatprep.mubr.bf16.mxu0 0
      %3417 = vmatmul.mubr.bf16.gmra.mxu0 %v2770
      %v3418 = vpop.f32.mrf.mxu0
      %v3419 = vadd.f32 0.0, %v3418
      %v3420 = vpop.f32.mrf.mxu0
      %v3421 = vpop.f32.mrf.mxu0
      %v3422 = vadd.f32 0.0, %v3421
      %v3423 = vpop.f32.mrf.mxu0
      %3424 = vmatprep.mubr.bf16.mxu0 0
      %3425 = vmatmul.mubr.bf16.gmra.mxu0 %v2773
      %v3426 = vpop.f32.mrf.mxu0
      %v3427 = vadd.f32 0.0, %v3426
      %v3428 = vpop.f32.mrf.mxu0
      %v3429 = vpop.f32.mrf.mxu0
      %v3430 = vadd.f32 0.0, %v3429
      %v3431 = vpop.f32.mrf.mxu0
      %3432 = vdwg.mxu0
      %v3433 = vadd.f32 %v3360, %v3403
      %v3434 = vadd.f32 %v3361, %v3406
      %v3435 = vadd.f32 %v3362, %v3411
      %v3436 = vadd.f32 %v3363, %v3414
      %v3437 = vadd.f32 %v3364, %v3419
      %v3438 = vadd.f32 %v3365, %v3422
      %v3439 = vadd.f32 %v3366, %v3427
      %v3440 = vadd.f32 %v3367, %v3430
      %v3442 = vsel %vm369, %v647, 0
      %v3445 = vsel %vm369, %v648, 0
      %v3448 = vsel %vm369, %v649, 0
      %v3451 = vsel %vm369, %v650, 0
      %3453 = vmatprep.subr.bf16.mxu0 0
      %3454 = vmatpush1.bf16.msra.mxu0 0
      %3455 = vmatprep.subr.bf16.mxu0 0
      %3456 = vmatpush1.bf16.msra.mxu0 0
      %3457 = vmatprep.subr.bf16.mxu0 0
      %3458 = vmatpush1.bf16.msra.mxu0 0
      %3459 = vmatprep.subr.bf16.mxu0 0
      %3460 = vmatpush1.bf16.msra.mxu0 0
      %3461 = vmatprep.subr.bf16.mxu0 0
      %3462 = vmatpush1.bf16.msra.mxu0 0
      %3463 = vmatprep.subr.bf16.mxu0 0
      %3464 = vmatpush1.bf16.msra.mxu0 0
      %3465 = vmatprep.subr.bf16.mxu0 0
      %3466 = vmatpush1.bf16.msra.mxu0 0
      %3467 = vmatprep.subr.bf16.mxu0 0
      %3468 = vmatpush1.bf16.msra.mxu0 %v1363
      %3469 = vmatprep.subr.bf16.mxu0 0
      %3470 = vmatpush2.bf16.msra.mxu0 0
      %3471 = vmatprep.subr.bf16.mxu0 0
      %3472 = vmatpush2.bf16.msra.mxu0 0
      %3473 = vmatprep.subr.bf16.mxu0 0
      %3474 = vmatpush2.bf16.msra.mxu0 0
      %3475 = vmatprep.subr.bf16.mxu0 0
      %3476 = vmatpush2.bf16.msra.mxu0 0
      %3477 = vmatprep.subr.bf16.mxu0 0
      %3478 = vmatpush2.bf16.msra.mxu0 0
      %3479 = vmatprep.subr.bf16.mxu0 0
      %3480 = vmatpush2.bf16.msra.mxu0 0
      %3481 = vmatprep.subr.bf16.mxu0 0
      %3482 = vmatpush2.bf16.msra.mxu0 0
      %3483 = vmatprep.subr.bf16.mxu0 0
      %3484 = vmatpush2.bf16.msra.mxu0 0
      %3485 = vmatprep.mubr.bf16.mxu0 0
      %3486 = vmatmul.mubr.bf16.gmra.mxu0 %v3442
      %v3487 = vpop.f32.mrf.mxu0
      %v3488 = vadd.f32 0.0, %v3487
      %v3489 = vpop.f32.mrf.mxu0
      %v3490 = vpop.f32.mrf.mxu0
      %v3491 = vadd.f32 0.0, %v3490
      %v3492 = vpop.f32.mrf.mxu0
      %3493 = vmatprep.mubr.bf16.mxu0 0
      %3494 = vmatmul.mubr.bf16.gmra.mxu0 %v3445
      %v3495 = vpop.f32.mrf.mxu0
      %v3496 = vadd.f32 0.0, %v3495
      %v3497 = vpop.f32.mrf.mxu0
      %v3498 = vpop.f32.mrf.mxu0
      %v3499 = vadd.f32 0.0, %v3498
      %v3500 = vpop.f32.mrf.mxu0
      %3501 = vmatprep.mubr.bf16.mxu0 0
      %3502 = vmatmul.mubr.bf16.gmra.mxu0 %v3448
      %v3503 = vpop.f32.mrf.mxu0
      %v3504 = vadd.f32 0.0, %v3503
      %v3505 = vpop.f32.mrf.mxu0
      %v3506 = vpop.f32.mrf.mxu0
      %v3507 = vadd.f32 0.0, %v3506
      %v3508 = vpop.f32.mrf.mxu0
      %3509 = vmatprep.mubr.bf16.mxu0 0
      %3510 = vmatmul.mubr.bf16.gmra.mxu0 %v3451
      %v3511 = vpop.f32.mrf.mxu0
      %v3512 = vadd.f32 0.0, %v3511
      %v3513 = vpop.f32.mrf.mxu0
      %v3514 = vpop.f32.mrf.mxu0
      %v3515 = vadd.f32 0.0, %v3514
      %v3516 = vpop.f32.mrf.mxu0
      %3517 = vdwg.mxu0
      %v3518 = vadd.f32 %v3433, %v3488
      %v3519 = vadd.f32 %v3434, %v3491
      %v3520 = vadd.f32 %v3435, %v3496
      %v3521 = vadd.f32 %v3436, %v3499
      %v3522 = vadd.f32 %v3437, %v3504
      %v3523 = vadd.f32 %v3438, %v3507
      %v3524 = vadd.f32 %v3439, %v3512
      %v3525 = vadd.f32 %v3440, %v3515
      %v3526 = vadd.f32 %v3518, %v1442
      %v3527 = vadd.f32 %v3519, %v1442
      %v3528 = vadd.f32 %v3520, %v1442
      %v3529 = vadd.f32 %v3521, %v1442
      %v3530 = vadd.f32 %v3522, %v1442
      %v3531 = vadd.f32 %v3523, %v1442
      %v3532 = vadd.f32 %v3524, %v1442
      %v3533 = vadd.f32 %v3525, %v1442
      %v3534 = vmax.f32 %v3526, 0.0
      %v3535 = vmax.f32 %v3527, 0.0
      %v3536 = vmax.f32 %v3528, 0.0
      %v3537 = vmax.f32 %v3529, 0.0
      %v3538 = vmax.f32 %v3530, 0.0
      %v3539 = vmax.f32 %v3531, 0.0
      %v3540 = vmax.f32 %v3532, 0.0
      %v3541 = vmax.f32 %v3533, 0.0
      %s3542 = scalar_lea.vmem [#allocation2], 496
      %3543 = vst.msk [vmem:[%s3542 + $0x1] sm:$0xff] %vm369, %v3534
      %3544 = vst.msk [vmem:[%s3542 + $0x11] sm:$0xff] %vm369, %v3535
      %3545 = vst.msk [vmem:[%s3542 + $0x21] sm:$0xff] %vm369, %v3536
      %3546 = vst.msk [vmem:[%s3542 + $0x31] sm:$0xff] %vm369, %v3537
      %3547 = vst.msk [vmem:[%s3542 + $0x41] sm:$0xff] %vm369, %v3538
      %3548 = vst.msk [vmem:[%s3542 + $0x51] sm:$0xff] %vm369, %v3539
      %3549 = vst.msk [vmem:[%s3542 + $0x61] sm:$0xff] %vm369, %v3540
      %3550 = vst.msk [vmem:[%s3542 + $0x71] sm:$0xff] %vm369, %v3541
      %v3551 = vld [vmem:[#allocation2] sm:$0xff]
      %v3552 = vld [vmem:[#allocation2 + $0x8] sm:$0x3]
      %v3553 = vld [vmem:[#allocation2 + $0x10] sm:$0xff]
      %v3554 = vld [vmem:[#allocation2 + $0x18] sm:$0x3]
      %v3555 = vld [vmem:[#allocation2 + $0x20] sm:$0xff]
      %v3556 = vld [vmem:[#allocation2 + $0x28] sm:$0x3]
      %v3557 = vld [vmem:[#allocation2 + $0x30] sm:$0xff]
      %v3558 = vld [vmem:[#allocation2 + $0x38] sm:$0x3]
      %v3559 = vld [vmem:[#allocation2 + $0x40] sm:$0xff]
      %v3560 = vld [vmem:[#allocation2 + $0x48] sm:$0x3]
      %v3561 = vld [vmem:[#allocation2 + $0x50] sm:$0xff]
      %v3562 = vld [vmem:[#allocation2 + $0x58] sm:$0x3]
      %v3563 = vld [vmem:[#allocation2 + $0x60] sm:$0xff]
      %v3564 = vld [vmem:[#allocation2 + $0x68] sm:$0x3]
      %v3565 = vld [vmem:[#allocation2 + $0x70] sm:$0xff]
      %v3566 = vld [vmem:[#allocation2 + $0x78] sm:$0x3]
      %v3567 = vld [vmem:[#allocation2 + $0x80] sm:$0xff]
      %v3568 = vld [vmem:[#allocation2 + $0x88] sm:$0x3]
      %v3569 = vld [vmem:[#allocation2 + $0x90] sm:$0xff]
      %v3570 = vld [vmem:[#allocation2 + $0x98] sm:$0x3]
      %s3571 = scalar_lea.vmem [#allocation2], 160
      %v3572 = vld [vmem:[%s3571] sm:$0xff]
      %v3573 = vld [vmem:[%s3571 + $0x8] sm:$0x3]
      %v3574 = vld [vmem:[%s3571 + $0x10] sm:$0xff]
      %v3575 = vld [vmem:[%s3571 + $0x18] sm:$0x3]
      %v3576 = vld [vmem:[%s3571 + $0x20] sm:$0xff]
      %v3577 = vld [vmem:[%s3571 + $0x28] sm:$0x3]
      %v3578 = vld [vmem:[%s3571 + $0x30] sm:$0xff]
      %v3579 = vld [vmem:[%s3571 + $0x38] sm:$0x3]
      %v3580 = vld [vmem:[%s3571 + $0x40] sm:$0xff]
      %v3581 = vld [vmem:[%s3571 + $0x48] sm:$0x3]
      %v3582 = vld [vmem:[%s3571 + $0x50] sm:$0xff]
      %v3583 = vld [vmem:[%s3571 + $0x58] sm:$0x3]
      %v3584 = vld [vmem:[%s3571 + $0x60] sm:$0xff]
      %v3585 = vld [vmem:[%s3571 + $0x68] sm:$0x3]
      %v3586 = vld [vmem:[%s3571 + $0x70] sm:$0xff]
      %v3587 = vld [vmem:[%s3571 + $0x78] sm:$0x3]
      %v3588 = vld [vmem:[%s3571 + $0x80] sm:$0xff]
      %v3589 = vld [vmem:[%s3571 + $0x88] sm:$0x3]
      %v3590 = vld [vmem:[%s3571 + $0x90] sm:$0xff]
      %v3591 = vld [vmem:[%s3571 + $0x98] sm:$0x3]
      %s3592 = scalar_lea.vmem [#allocation2], 320
      %v3593 = vld [vmem:[%s3592] sm:$0xff]
      %v3594 = vld [vmem:[%s3592 + $0x8] sm:$0x3]
      %v3595 = vld [vmem:[%s3592 + $0x10] sm:$0xff]
      %v3596 = vld [vmem:[%s3592 + $0x18] sm:$0x3]
      %v3597 = vld [vmem:[%s3592 + $0x20] sm:$0xff]
      %v3598 = vld [vmem:[%s3592 + $0x28] sm:$0x3]
      %v3599 = vld [vmem:[%s3592 + $0x30] sm:$0xff]
      %v3600 = vld [vmem:[%s3592 + $0x38] sm:$0x3]
      %v3601 = vld [vmem:[%s3592 + $0x40] sm:$0xff]
      %v3602 = vld [vmem:[%s3592 + $0x48] sm:$0x3]
      %v3603 = vld [vmem:[%s3592 + $0x50] sm:$0xff]
      %v3604 = vld [vmem:[%s3592 + $0x58] sm:$0x3]
      %v3605 = vld [vmem:[%s3592 + $0x60] sm:$0xff]
      %v3606 = vld [vmem:[%s3592 + $0x68] sm:$0x3]
      %v3607 = vld [vmem:[%s3592 + $0x70] sm:$0xff]
      %v3608 = vld [vmem:[%s3592 + $0x78] sm:$0x3]
      %v3609 = vld [vmem:[%s3592 + $0x80] sm:$0xff]
      %v3610 = vld [vmem:[%s3592 + $0x88] sm:$0x3]
      %v3611 = vld [vmem:[%s3592 + $0x90] sm:$0xff]
      %v3612 = vld [vmem:[%s3592 + $0x98] sm:$0x3]
      %s3613 = scalar_lea.vmem [#allocation2], 480
      %v3614 = vld [vmem:[%s3613] sm:$0xff]
      %v3615 = vld [vmem:[%s3613 + $0x8] sm:$0x3]
      %v3616 = vld [vmem:[%s3613 + $0x10] sm:$0xff]
      %v3617 = vld [vmem:[%s3613 + $0x18] sm:$0x3]
      %v3618 = vld [vmem:[%s3613 + $0x20] sm:$0xff]
      %v3619 = vld [vmem:[%s3613 + $0x28] sm:$0x3]
      %v3620 = vld [vmem:[%s3613 + $0x30] sm:$0xff]
      %v3621 = vld [vmem:[%s3613 + $0x38] sm:$0x3]
      %v3622 = vld [vmem:[%s3613 + $0x40] sm:$0xff]
      %v3623 = vld [vmem:[%s3613 + $0x48] sm:$0x3]
      %v3624 = vld [vmem:[%s3613 + $0x50] sm:$0xff]
      %v3625 = vld [vmem:[%s3613 + $0x58] sm:$0x3]
      %v3626 = vld [vmem:[%s3613 + $0x60] sm:$0xff]
      %v3627 = vld [vmem:[%s3613 + $0x68] sm:$0x3]
      %v3628 = vld [vmem:[%s3613 + $0x70] sm:$0xff]
      %v3629 = vld [vmem:[%s3613 + $0x78] sm:$0x3]
      %v3630 = vld [vmem:[%s3613 + $0x80] sm:$0xff]
      %v3631 = vld [vmem:[%s3613 + $0x88] sm:$0x3]
      %v3632 = vld [vmem:[%s3613 + $0x90] sm:$0xff]
      %v3633 = vld [vmem:[%s3613 + $0x98] sm:$0x3]
      %v3634 = vld [vmem:[%s3] sm:$0xff]
      %v3635 = vld [vmem:[%s3 + $0x8] sm:$0x1]
      %v3636 = vld [vmem:[%s4] sm:$0x1]
      %v3637 = vld [vmem:[%s5] sm:$0x1]
      %v3638 = vld [vmem:[%s6] sm:$0xff]
      %v3639 = vld [vmem:[%s6 + $0x8] sm:$0x1]
      %v3640 = vld [vmem:[%s6 + $0x10] sm:$0xff]
      %v3641 = vld [vmem:[%s6 + $0x18] sm:$0x1]
      %v3642 = vld [vmem:[%s6 + $0x20] sm:$0xff]
      %v3643 = vld [vmem:[%s6 + $0x28] sm:$0x1]
      %v3644 = vld [vmem:[%s6 + $0x30] sm:$0xff]
      %v3645 = vld [vmem:[%s6 + $0x38] sm:$0x1]
      %v3646 = vld [vmem:[%s7] sm:$0xf]
      %v3647 = vld [vmem:[%s8] sm:$0x1]
      %v3648 = vld [vmem:[%s9] sm:$0x1]
      %v3649 = vmul.f32 %v3551, 0.49999997
      %v3650 = vmul.f32 %v3552, 0.49999997
      %v3651 = vmul.f32 %v3553, 0.49999997
      %v3652 = vmul.f32 %v3554, 0.49999997
      %v3653 = vmul.f32 %v3555, 0.49999997
      %v3654 = vmul.f32 %v3556, 0.49999997
      %v3655 = vmul.f32 %v3557, 0.49999997
      %v3656 = vmul.f32 %v3558, 0.49999997
      %v3657 = vmul.f32 %v3559, 0.49999997
      %v3658 = vmul.f32 %v3560, 0.49999997
      %v3659 = vmul.f32 %v3561, 0.49999997
      %v3660 = vmul.f32 %v3562, 0.49999997
      %v3661 = vmul.f32 %v3563, 0.49999997
      %v3662 = vmul.f32 %v3564, 0.49999997
      %v3663 = vmul.f32 %v3565, 0.49999997
      %v3664 = vmul.f32 %v3566, 0.49999997
      %v3665 = vmul.f32 %v3567, 0.49999997
      %v3666 = vmul.f32 %v3568, 0.49999997
      %v3667 = vmul.f32 %v3569, 0.49999997
      %v3668 = vmul.f32 %v3570, 0.49999997
      %v3669 = vmul.f32 %v3572, 0.49999997
      %v3670 = vmul.f32 %v3573, 0.49999997
      %v3671 = vmul.f32 %v3574, 0.49999997
      %v3672 = vmul.f32 %v3575, 0.49999997
      %v3673 = vmul.f32 %v3576, 0.49999997
      %v3674 = vmul.f32 %v3577, 0.49999997
      %v3675 = vmul.f32 %v3578, 0.49999997
      %v3676 = vmul.f32 %v3579, 0.49999997
      %v3677 = vmul.f32 %v3580, 0.49999997
      %v3678 = vmul.f32 %v3581, 0.49999997
      %v3679 = vmul.f32 %v3582, 0.49999997
      %v3680 = vmul.f32 %v3583, 0.49999997
      %v3681 = vmul.f32 %v3584, 0.49999997
      %v3682 = vmul.f32 %v3585, 0.49999997
      %v3683 = vmul.f32 %v3586, 0.49999997
      %v3684 = vmul.f32 %v3587, 0.49999997
      %v3685 = vmul.f32 %v3588, 0.49999997
      %v3686 = vmul.f32 %v3589, 0.49999997
      %v3687 = vmul.f32 %v3590, 0.49999997
      %v3688 = vmul.f32 %v3591, 0.49999997
      %v3689 = vadd.f32 %v3649, %v3669
      %v3690 = vadd.f32 %v3650, %v3670
      %v3691 = vadd.f32 %v3651, %v3671
      %v3692 = vadd.f32 %v3652, %v3672
      %v3693 = vadd.f32 %v3653, %v3673
      %v3694 = vadd.f32 %v3654, %v3674
      %v3695 = vadd.f32 %v3655, %v3675
      %v3696 = vadd.f32 %v3656, %v3676
      %v3697 = vadd.f32 %v3657, %v3677
      %v3698 = vadd.f32 %v3658, %v3678
      %v3699 = vadd.f32 %v3659, %v3679
      %v3700 = vadd.f32 %v3660, %v3680
      %v3701 = vadd.f32 %v3661, %v3681
      %v3702 = vadd.f32 %v3662, %v3682
      %v3703 = vadd.f32 %v3663, %v3683
      %v3704 = vadd.f32 %v3664, %v3684
      %v3705 = vadd.f32 %v3665, %v3685
      %v3706 = vadd.f32 %v3666, %v3686
      %v3707 = vadd.f32 %v3667, %v3687
      %v3708 = vadd.f32 %v3668, %v3688
      %v3709 = vmul.f32 %v3593, 0.49999997
      %v3710 = vmul.f32 %v3594, 0.49999997
      %v3711 = vmul.f32 %v3595, 0.49999997
      %v3712 = vmul.f32 %v3596, 0.49999997
      %v3713 = vmul.f32 %v3597, 0.49999997
      %v3714 = vmul.f32 %v3598, 0.49999997
      %v3715 = vmul.f32 %v3599, 0.49999997
      %v3716 = vmul.f32 %v3600, 0.49999997
      %v3717 = vmul.f32 %v3601, 0.49999997
      %v3718 = vmul.f32 %v3602, 0.49999997
      %v3719 = vmul.f32 %v3603, 0.49999997
      %v3720 = vmul.f32 %v3604, 0.49999997
      %v3721 = vmul.f32 %v3605, 0.49999997
      %v3722 = vmul.f32 %v3606, 0.49999997
      %v3723 = vmul.f32 %v3607, 0.49999997
      %v3724 = vmul.f32 %v3608, 0.49999997
      %v3725 = vmul.f32 %v3609, 0.49999997
      %v3726 = vmul.f32 %v3610, 0.49999997
      %v3727 = vmul.f32 %v3611, 0.49999997
      %v3728 = vmul.f32 %v3612, 0.49999997
      %v3729 = vadd.f32 %v3689, %v3709
      %v3730 = vadd.f32 %v3690, %v3710
      %v3731 = vadd.f32 %v3691, %v3711
      %v3732 = vadd.f32 %v3692, %v3712
      %v3733 = vadd.f32 %v3693, %v3713
      %v3734 = vadd.f32 %v3694, %v3714
      %v3735 = vadd.f32 %v3695, %v3715
      %v3736 = vadd.f32 %v3696, %v3716
      %v3737 = vadd.f32 %v3697, %v3717
      %v3738 = vadd.f32 %v3698, %v3718
      %v3739 = vadd.f32 %v3699, %v3719
      %v3740 = vadd.f32 %v3700, %v3720
      %v3741 = vadd.f32 %v3701, %v3721
      %v3742 = vadd.f32 %v3702, %v3722
      %v3743 = vadd.f32 %v3703, %v3723
      %v3744 = vadd.f32 %v3704, %v3724
      %v3745 = vadd.f32 %v3705, %v3725
      %v3746 = vadd.f32 %v3706, %v3726
      %v3747 = vadd.f32 %v3707, %v3727
      %v3748 = vadd.f32 %v3708, %v3728
      %v3749 = vmul.f32 %v3614, 0.49999997
      %v3750 = vmul.f32 %v3615, 0.49999997
      %v3751 = vmul.f32 %v3616, 0.49999997
      %v3752 = vmul.f32 %v3617, 0.49999997
      %v3753 = vmul.f32 %v3618, 0.49999997
      %v3754 = vmul.f32 %v3619, 0.49999997
      %v3755 = vmul.f32 %v3620, 0.49999997
      %v3756 = vmul.f32 %v3621, 0.49999997
      %v3757 = vmul.f32 %v3622, 0.49999997
      %v3758 = vmul.f32 %v3623, 0.49999997
      %v3759 = vmul.f32 %v3624, 0.49999997
      %v3760 = vmul.f32 %v3625, 0.49999997
      %v3761 = vmul.f32 %v3626, 0.49999997
      %v3762 = vmul.f32 %v3627, 0.49999997
      %v3763 = vmul.f32 %v3628, 0.49999997
      %v3764 = vmul.f32 %v3629, 0.49999997
      %v3765 = vmul.f32 %v3630, 0.49999997
      %v3766 = vmul.f32 %v3631, 0.49999997
      %v3767 = vmul.f32 %v3632, 0.49999997
      %v3768 = vmul.f32 %v3633, 0.49999997
      %v3769 = vadd.f32 %v3729, %v3749
      %v3770 = vadd.f32 %v3730, %v3750
      %v3771 = vadd.f32 %v3731, %v3751
      %v3772 = vadd.f32 %v3732, %v3752
      %v3773 = vadd.f32 %v3733, %v3753
      %v3774 = vadd.f32 %v3734, %v3754
      %v3775 = vadd.f32 %v3735, %v3755
      %v3776 = vadd.f32 %v3736, %v3756
      %v3777 = vadd.f32 %v3737, %v3757
      %v3778 = vadd.f32 %v3738, %v3758
      %v3779 = vadd.f32 %v3739, %v3759
      %v3780 = vadd.f32 %v3740, %v3760
      %v3781 = vadd.f32 %v3741, %v3761
      %v3782 = vadd.f32 %v3742, %v3762
      %v3783 = vadd.f32 %v3743, %v3763
      %v3784 = vadd.f32 %v3744, %v3764
      %v3785 = vadd.f32 %v3745, %v3765
      %v3786 = vadd.f32 %v3746, %v3766
      %v3787 = vadd.f32 %v3747, %v3767
      %v3788 = vadd.f32 %v3748, %v3768
      %v3789 = vmul.f32 %v3593, -0.49999997
      %v3790 = vmul.f32 %v3594, -0.49999997
      %v3791 = vmul.f32 %v3595, -0.49999997
      %v3792 = vmul.f32 %v3596, -0.49999997
      %v3793 = vmul.f32 %v3597, -0.49999997
      %v3794 = vmul.f32 %v3598, -0.49999997
      %v3795 = vmul.f32 %v3599, -0.49999997
      %v3796 = vmul.f32 %v3600, -0.49999997
      %v3797 = vmul.f32 %v3601, -0.49999997
      %v3798 = vmul.f32 %v3602, -0.49999997
      %v3799 = vmul.f32 %v3603, -0.49999997
      %v3800 = vmul.f32 %v3604, -0.49999997
      %v3801 = vmul.f32 %v3605, -0.49999997
      %v3802 = vmul.f32 %v3606, -0.49999997
      %v3803 = vmul.f32 %v3607, -0.49999997
      %v3804 = vmul.f32 %v3608, -0.49999997
      %v3805 = vmul.f32 %v3609, -0.49999997
      %v3806 = vmul.f32 %v3610, -0.49999997
      %v3807 = vmul.f32 %v3611, -0.49999997
      %v3808 = vmul.f32 %v3612, -0.49999997
      %v3809 = vadd.f32 %v3689, %v3789
      %v3810 = vadd.f32 %v3690, %v3790
      %v3811 = vadd.f32 %v3691, %v3791
      %v3812 = vadd.f32 %v3692, %v3792
      %v3813 = vadd.f32 %v3693, %v3793
      %v3814 = vadd.f32 %v3694, %v3794
      %v3815 = vadd.f32 %v3695, %v3795
      %v3816 = vadd.f32 %v3696, %v3796
      %v3817 = vadd.f32 %v3697, %v3797
      %v3818 = vadd.f32 %v3698, %v3798
      %v3819 = vadd.f32 %v3699, %v3799
      %v3820 = vadd.f32 %v3700, %v3800
      %v3821 = vadd.f32 %v3701, %v3801
      %v3822 = vadd.f32 %v3702, %v3802
      %v3823 = vadd.f32 %v3703, %v3803
      %v3824 = vadd.f32 %v3704, %v3804
      %v3825 = vadd.f32 %v3705, %v3805
      %v3826 = vadd.f32 %v3706, %v3806
      %v3827 = vadd.f32 %v3707, %v3807
      %v3828 = vadd.f32 %v3708, %v3808
      %v3829 = vmul.f32 %v3614, -0.49999997
      %v3830 = vmul.f32 %v3615, -0.49999997
      %v3831 = vmul.f32 %v3616, -0.49999997
      %v3832 = vmul.f32 %v3617, -0.49999997
      %v3833 = vmul.f32 %v3618, -0.49999997
      %v3834 = vmul.f32 %v3619, -0.49999997
      %v3835 = vmul.f32 %v3620, -0.49999997
      %v3836 = vmul.f32 %v3621, -0.49999997
      %v3837 = vmul.f32 %v3622, -0.49999997
      %v3838 = vmul.f32 %v3623, -0.49999997
      %v3839 = vmul.f32 %v3624, -0.49999997
      %v3840 = vmul.f32 %v3625, -0.49999997
      %v3841 = vmul.f32 %v3626, -0.49999997
      %v3842 = vmul.f32 %v3627, -0.49999997
      %v3843 = vmul.f32 %v3628, -0.49999997
      %v3844 = vmul.f32 %v3629, -0.49999997
      %v3845 = vmul.f32 %v3630, -0.49999997
      %v3846 = vmul.f32 %v3631, -0.49999997
      %v3847 = vmul.f32 %v3632, -0.49999997
      %v3848 = vmul.f32 %v3633, -0.49999997
      %v3849 = vadd.f32 %v3809, %v3829
      %v3850 = vadd.f32 %v3810, %v3830
      %v3851 = vadd.f32 %v3811, %v3831
      %v3852 = vadd.f32 %v3812, %v3832
      %v3853 = vadd.f32 %v3813, %v3833
      %v3854 = vadd.f32 %v3814, %v3834
      %v3855 = vadd.f32 %v3815, %v3835
      %v3856 = vadd.f32 %v3816, %v3836
      %v3857 = vadd.f32 %v3817, %v3837
      %v3858 = vadd.f32 %v3818, %v3838
      %v3859 = vadd.f32 %v3819, %v3839
      %v3860 = vadd.f32 %v3820, %v3840
      %v3861 = vadd.f32 %v3821, %v3841
      %v3862 = vadd.f32 %v3822, %v3842
      %v3863 = vadd.f32 %v3823, %v3843
      %v3864 = vadd.f32 %v3824, %v3844
      %v3865 = vadd.f32 %v3825, %v3845
      %v3866 = vadd.f32 %v3826, %v3846
      %v3867 = vadd.f32 %v3827, %v3847
      %v3868 = vadd.f32 %v3828, %v3848
      %v3869 = vmul.f32 %v3572, -0.49999997
      %v3870 = vmul.f32 %v3573, -0.49999997
      %v3871 = vmul.f32 %v3574, -0.49999997
      %v3872 = vmul.f32 %v3575, -0.49999997
      %v3873 = vmul.f32 %v3576, -0.49999997
      %v3874 = vmul.f32 %v3577, -0.49999997
      %v3875 = vmul.f32 %v3578, -0.49999997
      %v3876 = vmul.f32 %v3579, -0.49999997
      %v3877 = vmul.f32 %v3580, -0.49999997
      %v3878 = vmul.f32 %v3581, -0.49999997
      %v3879 = vmul.f32 %v3582, -0.49999997
      %v3880 = vmul.f32 %v3583, -0.49999997
      %v3881 = vmul.f32 %v3584, -0.49999997
      %v3882 = vmul.f32 %v3585, -0.49999997
      %v3883 = vmul.f32 %v3586, -0.49999997
      %v3884 = vmul.f32 %v3587, -0.49999997
      %v3885 = vmul.f32 %v3588, -0.49999997
      %v3886 = vmul.f32 %v3589, -0.49999997
      %v3887 = vmul.f32 %v3590, -0.49999997
      %v3888 = vmul.f32 %v3591, -0.49999997
      %v3889 = vadd.f32 %v3649, %v3869
      %v3890 = vadd.f32 %v3650, %v3870
      %v3891 = vadd.f32 %v3651, %v3871
      %v3892 = vadd.f32 %v3652, %v3872
      %v3893 = vadd.f32 %v3653, %v3873
      %v3894 = vadd.f32 %v3654, %v3874
      %v3895 = vadd.f32 %v3655, %v3875
      %v3896 = vadd.f32 %v3656, %v3876
      %v3897 = vadd.f32 %v3657, %v3877
      %v3898 = vadd.f32 %v3658, %v3878
      %v3899 = vadd.f32 %v3659, %v3879
      %v3900 = vadd.f32 %v3660, %v3880
      %v3901 = vadd.f32 %v3661, %v3881
      %v3902 = vadd.f32 %v3662, %v3882
      %v3903 = vadd.f32 %v3663, %v3883
      %v3904 = vadd.f32 %v3664, %v3884
      %v3905 = vadd.f32 %v3665, %v3885
      %v3906 = vadd.f32 %v3666, %v3886
      %v3907 = vadd.f32 %v3667, %v3887
      %v3908 = vadd.f32 %v3668, %v3888
      %v3909 = vadd.f32 %v3889, %v3709
      %v3910 = vadd.f32 %v3890, %v3710
      %v3911 = vadd.f32 %v3891, %v3711
      %v3912 = vadd.f32 %v3892, %v3712
      %v3913 = vadd.f32 %v3893, %v3713
      %v3914 = vadd.f32 %v3894, %v3714
      %v3915 = vadd.f32 %v3895, %v3715
      %v3916 = vadd.f32 %v3896, %v3716
      %v3917 = vadd.f32 %v3897, %v3717
      %v3918 = vadd.f32 %v3898, %v3718
      %v3919 = vadd.f32 %v3899, %v3719
      %v3920 = vadd.f32 %v3900, %v3720
      %v3921 = vadd.f32 %v3901, %v3721
      %v3922 = vadd.f32 %v3902, %v3722
      %v3923 = vadd.f32 %v3903, %v3723
      %v3924 = vadd.f32 %v3904, %v3724
      %v3925 = vadd.f32 %v3905, %v3725
      %v3926 = vadd.f32 %v3906, %v3726
      %v3927 = vadd.f32 %v3907, %v3727
      %v3928 = vadd.f32 %v3908, %v3728
      %v3929 = vadd.f32 %v3909, %v3829
      %v3930 = vadd.f32 %v3910, %v3830
      %v3931 = vadd.f32 %v3911, %v3831
      %v3932 = vadd.f32 %v3912, %v3832
      %v3933 = vadd.f32 %v3913, %v3833
      %v3934 = vadd.f32 %v3914, %v3834
      %v3935 = vadd.f32 %v3915, %v3835
      %v3936 = vadd.f32 %v3916, %v3836
      %v3937 = vadd.f32 %v3917, %v3837
      %v3938 = vadd.f32 %v3918, %v3838
      %v3939 = vadd.f32 %v3919, %v3839
      %v3940 = vadd.f32 %v3920, %v3840
      %v3941 = vadd.f32 %v3921, %v3841
      %v3942 = vadd.f32 %v3922, %v3842
      %v3943 = vadd.f32 %v3923, %v3843
      %v3944 = vadd.f32 %v3924, %v3844
      %v3945 = vadd.f32 %v3925, %v3845
      %v3946 = vadd.f32 %v3926, %v3846
      %v3947 = vadd.f32 %v3927, %v3847
      %v3948 = vadd.f32 %v3928, %v3848
      %v3949 = vadd.f32 %v3889, %v3789
      %v3950 = vadd.f32 %v3890, %v3790
      %v3951 = vadd.f32 %v3891, %v3791
      %v3952 = vadd.f32 %v3892, %v3792
      %v3953 = vadd.f32 %v3893, %v3793
      %v3954 = vadd.f32 %v3894, %v3794
      %v3955 = vadd.f32 %v3895, %v3795
      %v3956 = vadd.f32 %v3896, %v3796
      %v3957 = vadd.f32 %v3897, %v3797
      %v3958 = vadd.f32 %v3898, %v3798
      %v3959 = vadd.f32 %v3899, %v3799
      %v3960 = vadd.f32 %v3900, %v3800
      %v3961 = vadd.f32 %v3901, %v3801
      %v3962 = vadd.f32 %v3902, %v3802
      %v3963 = vadd.f32 %v3903, %v3803
      %v3964 = vadd.f32 %v3904, %v3804
      %v3965 = vadd.f32 %v3905, %v3805
      %v3966 = vadd.f32 %v3906, %v3806
      %v3967 = vadd.f32 %v3907, %v3807
      %v3968 = vadd.f32 %v3908, %v3808
      %v3969 = vadd.f32 %v3949, %v3749
      %v3970 = vadd.f32 %v3950, %v3750
      %v3971 = vadd.f32 %v3951, %v3751
      %v3972 = vadd.f32 %v3952, %v3752
      %v3973 = vadd.f32 %v3953, %v3753
      %v3974 = vadd.f32 %v3954, %v3754
      %v3975 = vadd.f32 %v3955, %v3755
      %v3976 = vadd.f32 %v3956, %v3756
      %v3977 = vadd.f32 %v3957, %v3757
      %v3978 = vadd.f32 %v3958, %v3758
      %v3979 = vadd.f32 %v3959, %v3759
      %v3980 = vadd.f32 %v3960, %v3760
      %v3981 = vadd.f32 %v3961, %v3761
      %v3982 = vadd.f32 %v3962, %v3762
      %v3983 = vadd.f32 %v3963, %v3763
      %v3984 = vadd.f32 %v3964, %v3764
      %v3985 = vadd.f32 %v3965, %v3765
      %v3986 = vadd.f32 %v3966, %v3766
      %v3987 = vadd.f32 %v3967, %v3767
      %v3988 = vadd.f32 %v3968, %v3768
      %v3989 = vlaneseq
      %v3990 = vshrl.u32 %v3989, 7
      %v3991 = vsub.s32 0, %v3990
      %v3992 = vrot.slane %v3638, %v3991
      %v3993 = vmul.f32 %v3992, %v3769
      %v3994 = vmul.f32 %v3992, %v3771
      %v3995 = vmul.f32 %v3992, %v3773
      %v3996 = vmul.f32 %v3992, %v3775
      %v3997 = vmul.f32 %v3992, %v3777
      %v3998 = vmul.f32 %v3992, %v3779
      %v3999 = vmul.f32 %v3992, %v3781
      %v4000 = vmul.f32 %v3992, %v3783
      %v4001 = vlaneseq
      %v4002 = vshrl.u32 %v4001, 7
      %v4003 = vsub.s32 1, %v4002
      %v4004 = vrot.slane %v3638, %v4003
      %v4005 = vmul.f32 %v4004, %v3769
      %v4006 = vmul.f32 %v4004, %v3770
      %v4007 = vmul.f32 %v4004, %v3771
      %v4008 = vmul.f32 %v4004, %v3772
      %v4009 = vmul.f32 %v4004, %v3773
      %v4010 = vmul.f32 %v4004, %v3774
      %v4011 = vmul.f32 %v4004, %v3775
      %v4012 = vmul.f32 %v4004, %v3776
      %v4013 = vmul.f32 %v4004, %v3777
      %v4014 = vmul.f32 %v4004, %v3778
      %v4015 = vmul.f32 %v4004, %v3779
      %v4016 = vmul.f32 %v4004, %v3780
      %v4017 = vmul.f32 %v4004, %v3781
      %v4018 = vmul.f32 %v4004, %v3782
      %v4019 = vmul.f32 %v4004, %v3783
      %v4020 = vmul.f32 %v4004, %v3784
      %vm4037 = vcmask 1046528
      %v4038 = vrot.slane %v4005, 1
      %v4039 = vrot.slane %v4006, 1
      %v4040 = vsel %vm4037, %v4038, %v4039
      %v4041 = vrot.slane %v4007, 1
      %v4042 = vrot.slane %v4008, 1
      %v4043 = vsel %vm4037, %v4041, %v4042
      %v4044 = vrot.slane %v4009, 1
      %v4045 = vrot.slane %v4010, 1
      %v4046 = vsel %vm4037, %v4044, %v4045
      %v4047 = vrot.slane %v4011, 1
      %v4048 = vrot.slane %v4012, 1
      %v4049 = vsel %vm4037, %v4047, %v4048
      %v4050 = vrot.slane %v4013, 1
      %v4051 = vrot.slane %v4014, 1
      %v4052 = vsel %vm4037, %v4050, %v4051
      %v4053 = vrot.slane %v4015, 1
      %v4054 = vrot.slane %v4016, 1
      %v4055 = vsel %vm4037, %v4053, %v4054
      %v4056 = vrot.slane %v4017, 1
      %v4057 = vrot.slane %v4018, 1
      %v4058 = vsel %vm4037, %v4056, %v4057
      %v4059 = vrot.slane %v4019, 1
      %v4060 = vrot.slane %v4020, 1
      %v4061 = vsel %vm4037, %v4059, %v4060
      %v4070 = vadd.f32 %v3993, %v4040
      %v4071 = vadd.f32 %v3994, %v4043
      %v4072 = vadd.f32 %v3995, %v4046
      %v4073 = vadd.f32 %v3996, %v4049
      %v4074 = vadd.f32 %v3997, %v4052
      %v4075 = vadd.f32 %v3998, %v4055
      %v4076 = vadd.f32 %v3999, %v4058
      %v4077 = vadd.f32 %v4000, %v4061
      %v4078 = vlaneseq
      %v4079 = vshrl.u32 %v4078, 7
      %v4080 = vsub.s32 2, %v4079
      %v4081 = vrot.slane %v3638, %v4080
      %v4082 = vmul.f32 %v4081, %v3769
      %v4083 = vmul.f32 %v4081, %v3770
      %v4084 = vmul.f32 %v4081, %v3771
      %v4085 = vmul.f32 %v4081, %v3772
      %v4086 = vmul.f32 %v4081, %v3773
      %v4087 = vmul.f32 %v4081, %v3774
      %v4088 = vmul.f32 %v4081, %v3775
      %v4089 = vmul.f32 %v4081, %v3776
      %v4090 = vmul.f32 %v4081, %v3777
      %v4091 = vmul.f32 %v4081, %v3778
      %v4092 = vmul.f32 %v4081, %v3779
      %v4093 = vmul.f32 %v4081, %v3780
      %v4094 = vmul.f32 %v4081, %v3781
      %v4095 = vmul.f32 %v4081, %v3782
      %v4096 = vmul.f32 %v4081, %v3783
      %v4097 = vmul.f32 %v4081, %v3784
      %vm4114 = vcmask 1045504
      %v4115 = vrot.slane %v4082, 2
      %v4116 = vrot.slane %v4083, 2
      %v4117 = vsel %vm4114, %v4115, %v4116
      %v4118 = vrot.slane %v4084, 2
      %v4119 = vrot.slane %v4085, 2
      %v4120 = vsel %vm4114, %v4118, %v4119
      %v4121 = vrot.slane %v4086, 2
      %v4122 = vrot.slane %v4087, 2
      %v4123 = vsel %vm4114, %v4121, %v4122
      %v4124 = vrot.slane %v4088, 2
      %v4125 = vrot.slane %v4089, 2
      %v4126 = vsel %vm4114, %v4124, %v4125
      %v4127 = vrot.slane %v4090, 2
      %v4128 = vrot.slane %v4091, 2
      %v4129 = vsel %vm4114, %v4127, %v4128
      %v4130 = vrot.slane %v4092, 2
      %v4131 = vrot.slane %v4093, 2
      %v4132 = vsel %vm4114, %v4130, %v4131
      %v4133 = vrot.slane %v4094, 2
      %v4134 = vrot.slane %v4095, 2
      %v4135 = vsel %vm4114, %v4133, %v4134
      %v4136 = vrot.slane %v4096, 2
      %v4137 = vrot.slane %v4097, 2
      %v4138 = vsel %vm4114, %v4136, %v4137
      %v4147 = vadd.f32 %v4070, %v4117
      %v4148 = vadd.f32 %v4071, %v4120
      %v4149 = vadd.f32 %v4072, %v4123
      %v4150 = vadd.f32 %v4073, %v4126
      %v4151 = vadd.f32 %v4074, %v4129
      %v4152 = vadd.f32 %v4075, %v4132
      %v4153 = vadd.f32 %v4076, %v4135
      %v4154 = vadd.f32 %v4077, %v4138
      %v4155 = vlaneseq
      %v4156 = vshrl.u32 %v4155, 7
      %v4157 = vsub.s32 3, %v4156
      %v4158 = vrot.slane %v3638, %v4157
      %v4159 = vmul.f32 %v4158, %v3771
      %v4160 = vmul.f32 %v4158, %v3773
      %v4161 = vmul.f32 %v4158, %v3775
      %v4162 = vmul.f32 %v4158, %v3777
      %v4163 = vmul.f32 %v4158, %v3779
      %v4164 = vmul.f32 %v4158, %v3781
      %v4165 = vmul.f32 %v4158, %v3783
      %v4166 = vmul.f32 %v4158, %v3785
      %v4167 = vadd.f32 %v4147, %v4159
      %v4168 = vadd.f32 %v4148, %v4160
      %v4169 = vadd.f32 %v4149, %v4161
      %v4170 = vadd.f32 %v4150, %v4162
      %v4171 = vadd.f32 %v4151, %v4163
      %v4172 = vadd.f32 %v4152, %v4164
      %v4173 = vadd.f32 %v4153, %v4165
      %v4174 = vadd.f32 %v4154, %v4166
      %v4175 = vlaneseq
      %v4176 = vshrl.u32 %v4175, 7
      %v4177 = vsub.s32 4, %v4176
      %v4178 = vrot.slane %v3638, %v4177
      %v4179 = vmul.f32 %v4178, %v3771
      %v4180 = vmul.f32 %v4178, %v3772
      %v4181 = vmul.f32 %v4178, %v3773
      %v4182 = vmul.f32 %v4178, %v3774
      %v4183 = vmul.f32 %v4178, %v3775
      %v4184 = vmul.f32 %v4178, %v3776
      %v4185 = vmul.f32 %v4178, %v3777
      %v4186 = vmul.f32 %v4178, %v3778
      %v4187 = vmul.f32 %v4178, %v3779
      %v4188 = vmul.f32 %v4178, %v3780
      %v4189 = vmul.f32 %v4178, %v3781
      %v4190 = vmul.f32 %v4178, %v3782
      %v4191 = vmul.f32 %v4178, %v3783
      %v4192 = vmul.f32 %v4178, %v3784
      %v4193 = vmul.f32 %v4178, %v3785
      %v4194 = vmul.f32 %v4178, %v3786
      %v4211 = vrot.slane %v4179, 1
      %v4212 = vrot.slane %v4180, 1
      %v4213 = vsel %vm4037, %v4211, %v4212
      %v4214 = vrot.slane %v4181, 1
      %v4215 = vrot.slane %v4182, 1
      %v4216 = vsel %vm4037, %v4214, %v4215
      %v4217 = vrot.slane %v4183, 1
      %v4218 = vrot.slane %v4184, 1
      %v4219 = vsel %vm4037, %v4217, %v4218
      %v4220 = vrot.slane %v4185, 1
      %v4221 = vrot.slane %v4186, 1
      %v4222 = vsel %vm4037, %v4220, %v4221
      %v4223 = vrot.slane %v4187, 1
      %v4224 = vrot.slane %v4188, 1
      %v4225 = vsel %vm4037, %v4223, %v4224
      %v4226 = vrot.slane %v4189, 1
      %v4227 = vrot.slane %v4190, 1
      %v4228 = vsel %vm4037, %v4226, %v4227
      %v4229 = vrot.slane %v4191, 1
      %v4230 = vrot.slane %v4192, 1
      %v4231 = vsel %vm4037, %v4229, %v4230
      %v4232 = vrot.slane %v4193, 1
      %v4233 = vrot.slane %v4194, 1
      %v4234 = vsel %vm4037, %v4232, %v4233
      %v4243 = vadd.f32 %v4167, %v4213
      %v4244 = vadd.f32 %v4168, %v4216
      %v4245 = vadd.f32 %v4169, %v4219
      %v4246 = vadd.f32 %v4170, %v4222
      %v4247 = vadd.f32 %v4171, %v4225
      %v4248 = vadd.f32 %v4172, %v4228
      %v4249 = vadd.f32 %v4173, %v4231
      %v4250 = vadd.f32 %v4174, %v4234
      %v4251 = vlaneseq
      %v4252 = vshrl.u32 %v4251, 7
      %v4253 = vsub.s32 5, %v4252
      %v4254 = vrot.slane %v3638, %v4253
      %v4255 = vmul.f32 %v4254, %v3771
      %v4256 = vmul.f32 %v4254, %v3772
      %v4257 = vmul.f32 %v4254, %v3773
      %v4258 = vmul.f32 %v4254, %v3774
      %v4259 = vmul.f32 %v4254, %v3775
      %v4260 = vmul.f32 %v4254, %v3776
      %v4261 = vmul.f32 %v4254, %v3777
      %v4262 = vmul.f32 %v4254, %v3778
      %v4263 = vmul.f32 %v4254, %v3779
      %v4264 = vmul.f32 %v4254, %v3780
      %v4265 = vmul.f32 %v4254, %v3781
      %v4266 = vmul.f32 %v4254, %v3782
      %v4267 = vmul.f32 %v4254, %v3783
      %v4268 = vmul.f32 %v4254, %v3784
      %v4269 = vmul.f32 %v4254, %v3785
      %v4270 = vmul.f32 %v4254, %v3786
      %v4287 = vrot.slane %v4255, 2
      %v4288 = vrot.slane %v4256, 2
      %v4289 = vsel %vm4114, %v4287, %v4288
      %v4290 = vrot.slane %v4257, 2
      %v4291 = vrot.slane %v4258, 2
      %v4292 = vsel %vm4114, %v4290, %v4291
      %v4293 = vrot.slane %v4259, 2
      %v4294 = vrot.slane %v4260, 2
      %v4295 = vsel %vm4114, %v4293, %v4294
      %v4296 = vrot.slane %v4261, 2
      %v4297 = vrot.slane %v4262, 2
      %v4298 = vsel %vm4114, %v4296, %v4297
      %v4299 = vrot.slane %v4263, 2
      %v4300 = vrot.slane %v4264, 2
      %v4301 = vsel %vm4114, %v4299, %v4300
      %v4302 = vrot.slane %v4265, 2
      %v4303 = vrot.slane %v4266, 2
      %v4304 = vsel %vm4114, %v4302, %v4303
      %v4305 = vrot.slane %v4267, 2
      %v4306 = vrot.slane %v4268, 2
      %v4307 = vsel %vm4114, %v4305, %v4306
      %v4308 = vrot.slane %v4269, 2
      %v4309 = vrot.slane %v4270, 2
      %v4310 = vsel %vm4114, %v4308, %v4309
      %v4319 = vadd.f32 %v4243, %v4289
      %v4320 = vadd.f32 %v4244, %v4292
      %v4321 = vadd.f32 %v4245, %v4295
      %v4322 = vadd.f32 %v4246, %v4298
      %v4323 = vadd.f32 %v4247, %v4301
      %v4324 = vadd.f32 %v4248, %v4304
      %v4325 = vadd.f32 %v4249, %v4307
      %v4326 = vadd.f32 %v4250, %v4310
      %v4327 = vlaneseq
      %v4328 = vshrl.u32 %v4327, 7
      %v4329 = vsub.s32 6, %v4328
      %v4330 = vrot.slane %v3638, %v4329
      %v4331 = vmul.f32 %v4330, %v3773
      %v4332 = vmul.f32 %v4330, %v3775
      %v4333 = vmul.f32 %v4330, %v3777
      %v4334 = vmul.f32 %v4330, %v3779
      %v4335 = vmul.f32 %v4330, %v3781
      %v4336 = vmul.f32 %v4330, %v3783
      %v4337 = vmul.f32 %v4330, %v3785
      %v4338 = vmul.f32 %v4330, %v3787
      %v4339 = vadd.f32 %v4319, %v4331
      %v4340 = vadd.f32 %v4320, %v4332
      %v4341 = vadd.f32 %v4321, %v4333
      %v4342 = vadd.f32 %v4322, %v4334
      %v4343 = vadd.f32 %v4323, %v4335
      %v4344 = vadd.f32 %v4324, %v4336
      %v4345 = vadd.f32 %v4325, %v4337
      %v4346 = vadd.f32 %v4326, %v4338
      %v4347 = vlaneseq
      %v4348 = vshrl.u32 %v4347, 7
      %v4349 = vsub.s32 7, %v4348
      %v4350 = vrot.slane %v3638, %v4349
      %v4351 = vmul.f32 %v4350, %v3773
      %v4352 = vmul.f32 %v4350, %v3774
      %v4353 = vmul.f32 %v4350, %v3775
      %v4354 = vmul.f32 %v4350, %v3776
      %v4355 = vmul.f32 %v4350, %v3777
      %v4356 = vmul.f32 %v4350, %v3778
      %v4357 = vmul.f32 %v4350, %v3779
      %v4358 = vmul.f32 %v4350, %v3780
      %v4359 = vmul.f32 %v4350, %v3781
      %v4360 = vmul.f32 %v4350, %v3782
      %v4361 = vmul.f32 %v4350, %v3783
      %v4362 = vmul.f32 %v4350, %v3784
      %v4363 = vmul.f32 %v4350, %v3785
      %v4364 = vmul.f32 %v4350, %v3786
      %v4365 = vmul.f32 %v4350, %v3787
      %v4366 = vmul.f32 %v4350, %v3788
      %v4383 = vrot.slane %v4351, 1
      %v4384 = vrot.slane %v4352, 1
      %v4385 = vsel %vm4037, %v4383, %v4384
      %v4386 = vrot.slane %v4353, 1
      %v4387 = vrot.slane %v4354, 1
      %v4388 = vsel %vm4037, %v4386, %v4387
      %v4389 = vrot.slane %v4355, 1
      %v4390 = vrot.slane %v4356, 1
      %v4391 = vsel %vm4037, %v4389, %v4390
      %v4392 = vrot.slane %v4357, 1
      %v4393 = vrot.slane %v4358, 1
      %v4394 = vsel %vm4037, %v4392, %v4393
      %v4395 = vrot.slane %v4359, 1
      %v4396 = vrot.slane %v4360, 1
      %v4397 = vsel %vm4037, %v4395, %v4396
      %v4398 = vrot.slane %v4361, 1
      %v4399 = vrot.slane %v4362, 1
      %v4400 = vsel %vm4037, %v4398, %v4399
      %v4401 = vrot.slane %v4363, 1
      %v4402 = vrot.slane %v4364, 1
      %v4403 = vsel %vm4037, %v4401, %v4402
      %v4404 = vrot.slane %v4365, 1
      %v4405 = vrot.slane %v4366, 1
      %v4406 = vsel %vm4037, %v4404, %v4405
      %v4415 = vadd.f32 %v4339, %v4385
      %v4416 = vadd.f32 %v4340, %v4388
      %v4417 = vadd.f32 %v4341, %v4391
      %v4418 = vadd.f32 %v4342, %v4394
      %v4419 = vadd.f32 %v4343, %v4397
      %v4420 = vadd.f32 %v4344, %v4400
      %v4421 = vadd.f32 %v4345, %v4403
      %v4422 = vadd.f32 %v4346, %v4406
      %v4423 = vlaneseq
      %v4424 = vshrl.u32 %v4423, 7
      %v4425 = vsub.s32 0, %v4424
      %v4426 = vrot.slane %v3639, %v4425
      %v4427 = vmul.f32 %v4426, %v3773
      %v4428 = vmul.f32 %v4426, %v3774
      %v4429 = vmul.f32 %v4426, %v3775
      %v4430 = vmul.f32 %v4426, %v3776
      %v4431 = vmul.f32 %v4426, %v3777
      %v4432 = vmul.f32 %v4426, %v3778
      %v4433 = vmul.f32 %v4426, %v3779
      %v4434 = vmul.f32 %v4426, %v3780
      %v4435 = vmul.f32 %v4426, %v3781
      %v4436 = vmul.f32 %v4426, %v3782
      %v4437 = vmul.f32 %v4426, %v3783
      %v4438 = vmul.f32 %v4426, %v3784
      %v4439 = vmul.f32 %v4426, %v3785
      %v4440 = vmul.f32 %v4426, %v3786
      %v4441 = vmul.f32 %v4426, %v3787
      %v4442 = vmul.f32 %v4426, %v3788
      %v4459 = vrot.slane %v4427, 2
      %v4460 = vrot.slane %v4428, 2
      %v4461 = vsel %vm4114, %v4459, %v4460
      %v4462 = vrot.slane %v4429, 2
      %v4463 = vrot.slane %v4430, 2
      %v4464 = vsel %vm4114, %v4462, %v4463
      %v4465 = vrot.slane %v4431, 2
      %v4466 = vrot.slane %v4432, 2
      %v4467 = vsel %vm4114, %v4465, %v4466
      %v4468 = vrot.slane %v4433, 2
      %v4469 = vrot.slane %v4434, 2
      %v4470 = vsel %vm4114, %v4468, %v4469
      %v4471 = vrot.slane %v4435, 2
      %v4472 = vrot.slane %v4436, 2
      %v4473 = vsel %vm4114, %v4471, %v4472
      %v4474 = vrot.slane %v4437, 2
      %v4475 = vrot.slane %v4438, 2
      %v4476 = vsel %vm4114, %v4474, %v4475
      %v4477 = vrot.slane %v4439, 2
      %v4478 = vrot.slane %v4440, 2
      %v4479 = vsel %vm4114, %v4477, %v4478
      %v4480 = vrot.slane %v4441, 2
      %v4481 = vrot.slane %v4442, 2
      %v4482 = vsel %vm4114, %v4480, %v4481
      %v4491 = vadd.f32 %v4415, %v4461
      %v4492 = vadd.f32 %v4416, %v4464
      %v4493 = vadd.f32 %v4417, %v4467
      %v4494 = vadd.f32 %v4418, %v4470
      %v4495 = vadd.f32 %v4419, %v4473
      %v4496 = vadd.f32 %v4420, %v4476
      %v4497 = vadd.f32 %v4421, %v4479
      %v4498 = vadd.f32 %v4422, %v4482
      %v4499 = vlaneseq
      %v4500 = vshrl.u32 %v4499, 7
      %v4501 = vsub.s32 0, %v4500
      %v4502 = vrot.slane %v3646, %v4501
      %v4503 = vmul.f32 %v4491, %v4502
      %v4504 = vmul.f32 %v4492, %v4502
      %v4505 = vmul.f32 %v4493, %v4502
      %v4506 = vmul.f32 %v4494, %v4502
      %v4507 = vmul.f32 %v4495, %v4502
      %v4508 = vmul.f32 %v4496, %v4502
      %v4509 = vmul.f32 %v4497, %v4502
      %v4510 = vmul.f32 %v4498, %v4502
      %v4511 = vlaneseq
      %v4512 = vshrl.u32 %v4511, 7
      %v4513 = vsub.s32 0, %v4512
      %v4514 = vrot.slane %v3640, %v4513
      %v4515 = vmul.f32 %v4514, %v3849
      %v4516 = vmul.f32 %v4514, %v3851
      %v4517 = vmul.f32 %v4514, %v3853
      %v4518 = vmul.f32 %v4514, %v3855
      %v4519 = vmul.f32 %v4514, %v3857
      %v4520 = vmul.f32 %v4514, %v3859
      %v4521 = vmul.f32 %v4514, %v3861
      %v4522 = vmul.f32 %v4514, %v3863
      %v4523 = vlaneseq
      %v4524 = vshrl.u32 %v4523, 7
      %v4525 = vsub.s32 1, %v4524
      %v4526 = vrot.slane %v3640, %v4525
      %v4527 = vmul.f32 %v4526, %v3849
      %v4528 = vmul.f32 %v4526, %v3850
      %v4529 = vmul.f32 %v4526, %v3851
      %v4530 = vmul.f32 %v4526, %v3852
      %v4531 = vmul.f32 %v4526, %v3853
      %v4532 = vmul.f32 %v4526, %v3854
      %v4533 = vmul.f32 %v4526, %v3855
      %v4534 = vmul.f32 %v4526, %v3856
      %v4535 = vmul.f32 %v4526, %v3857
      %v4536 = vmul.f32 %v4526, %v3858
      %v4537 = vmul.f32 %v4526, %v3859
      %v4538 = vmul.f32 %v4526, %v3860
      %v4539 = vmul.f32 %v4526, %v3861
      %v4540 = vmul.f32 %v4526, %v3862
      %v4541 = vmul.f32 %v4526, %v3863
      %v4542 = vmul.f32 %v4526, %v3864
      %v4559 = vrot.slane %v4527, 1
      %v4560 = vrot.slane %v4528, 1
      %v4561 = vsel %vm4037, %v4559, %v4560
      %v4562 = vrot.slane %v4529, 1
      %v4563 = vrot.slane %v4530, 1
      %v4564 = vsel %vm4037, %v4562, %v4563
      %v4565 = vrot.slane %v4531, 1
      %v4566 = vrot.slane %v4532, 1
      %v4567 = vsel %vm4037, %v4565, %v4566
      %v4568 = vrot.slane %v4533, 1
      %v4569 = vrot.slane %v4534, 1
      %v4570 = vsel %vm4037, %v4568, %v4569
      %v4571 = vrot.slane %v4535, 1
      %v4572 = vrot.slane %v4536, 1
      %v4573 = vsel %vm4037, %v4571, %v4572
      %v4574 = vrot.slane %v4537, 1
      %v4575 = vrot.slane %v4538, 1
      %v4576 = vsel %vm4037, %v4574, %v4575
      %v4577 = vrot.slane %v4539, 1
      %v4578 = vrot.slane %v4540, 1
      %v4579 = vsel %vm4037, %v4577, %v4578
      %v4580 = vrot.slane %v4541, 1
      %v4581 = vrot.slane %v4542, 1
      %v4582 = vsel %vm4037, %v4580, %v4581
      %v4591 = vadd.f32 %v4515, %v4561
      %v4592 = vadd.f32 %v4516, %v4564
      %v4593 = vadd.f32 %v4517, %v4567
      %v4594 = vadd.f32 %v4518, %v4570
      %v4595 = vadd.f32 %v4519, %v4573
      %v4596 = vadd.f32 %v4520, %v4576
      %v4597 = vadd.f32 %v4521, %v4579
      %v4598 = vadd.f32 %v4522, %v4582
      %v4599 = vlaneseq
      %v4600 = vshrl.u32 %v4599, 7
      %v4601 = vsub.s32 2, %v4600
      %v4602 = vrot.slane %v3640, %v4601
      %v4603 = vmul.f32 %v4602, %v3849
      %v4604 = vmul.f32 %v4602, %v3850
      %v4605 = vmul.f32 %v4602, %v3851
      %v4606 = vmul.f32 %v4602, %v3852
      %v4607 = vmul.f32 %v4602, %v3853
      %v4608 = vmul.f32 %v4602, %v3854
      %v4609 = vmul.f32 %v4602, %v3855
      %v4610 = vmul.f32 %v4602, %v3856
      %v4611 = vmul.f32 %v4602, %v3857
      %v4612 = vmul.f32 %v4602, %v3858
      %v4613 = vmul.f32 %v4602, %v3859
      %v4614 = vmul.f32 %v4602, %v3860
      %v4615 = vmul.f32 %v4602, %v3861
      %v4616 = vmul.f32 %v4602, %v3862
      %v4617 = vmul.f32 %v4602, %v3863
      %v4618 = vmul.f32 %v4602, %v3864
      %v4635 = vrot.slane %v4603, 2
      %v4636 = vrot.slane %v4604, 2
      %v4637 = vsel %vm4114, %v4635, %v4636
      %v4638 = vrot.slane %v4605, 2
      %v4639 = vrot.slane %v4606, 2
      %v4640 = vsel %vm4114, %v4638, %v4639
      %v4641 = vrot.slane %v4607, 2
      %v4642 = vrot.slane %v4608, 2
      %v4643 = vsel %vm4114, %v4641, %v4642
      %v4644 = vrot.slane %v4609, 2
      %v4645 = vrot.slane %v4610, 2
      %v4646 = vsel %vm4114, %v4644, %v4645
      %v4647 = vrot.slane %v4611, 2
      %v4648 = vrot.slane %v4612, 2
      %v4649 = vsel %vm4114, %v4647, %v4648
      %v4650 = vrot.slane %v4613, 2
      %v4651 = vrot.slane %v4614, 2
      %v4652 = vsel %vm4114, %v4650, %v4651
      %v4653 = vrot.slane %v4615, 2
      %v4654 = vrot.slane %v4616, 2
      %v4655 = vsel %vm4114, %v4653, %v4654
      %v4656 = vrot.slane %v4617, 2
      %v4657 = vrot.slane %v4618, 2
      %v4658 = vsel %vm4114, %v4656, %v4657
      %v4667 = vadd.f32 %v4591, %v4637
      %v4668 = vadd.f32 %v4592, %v4640
      %v4669 = vadd.f32 %v4593, %v4643
      %v4670 = vadd.f32 %v4594, %v4646
      %v4671 = vadd.f32 %v4595, %v4649
      %v4672 = vadd.f32 %v4596, %v4652
      %v4673 = vadd.f32 %v4597, %v4655
      %v4674 = vadd.f32 %v4598, %v4658
      %v4675 = vlaneseq
      %v4676 = vshrl.u32 %v4675, 7
      %v4677 = vsub.s32 3, %v4676
      %v4678 = vrot.slane %v3640, %v4677
      %v4679 = vmul.f32 %v4678, %v3851
      %v4680 = vmul.f32 %v4678, %v3853
      %v4681 = vmul.f32 %v4678, %v3855
      %v4682 = vmul.f32 %v4678, %v3857
      %v4683 = vmul.f32 %v4678, %v3859
      %v4684 = vmul.f32 %v4678, %v3861
      %v4685 = vmul.f32 %v4678, %v3863
      %v4686 = vmul.f32 %v4678, %v3865
      %v4687 = vadd.f32 %v4667, %v4679
      %v4688 = vadd.f32 %v4668, %v4680
      %v4689 = vadd.f32 %v4669, %v4681
      %v4690 = vadd.f32 %v4670, %v4682
      %v4691 = vadd.f32 %v4671, %v4683
      %v4692 = vadd.f32 %v4672, %v4684
      %v4693 = vadd.f32 %v4673, %v4685
      %v4694 = vadd.f32 %v4674, %v4686
      %v4695 = vlaneseq
      %v4696 = vshrl.u32 %v4695, 7
      %v4697 = vsub.s32 4, %v4696
      %v4698 = vrot.slane %v3640, %v4697
      %v4699 = vmul.f32 %v4698, %v3851
      %v4700 = vmul.f32 %v4698, %v3852
      %v4701 = vmul.f32 %v4698, %v3853
      %v4702 = vmul.f32 %v4698, %v3854
      %v4703 = vmul.f32 %v4698, %v3855
      %v4704 = vmul.f32 %v4698, %v3856
      %v4705 = vmul.f32 %v4698, %v3857
      %v4706 = vmul.f32 %v4698, %v3858
      %v4707 = vmul.f32 %v4698, %v3859
      %v4708 = vmul.f32 %v4698, %v3860
      %v4709 = vmul.f32 %v4698, %v3861
      %v4710 = vmul.f32 %v4698, %v3862
      %v4711 = vmul.f32 %v4698, %v3863
      %v4712 = vmul.f32 %v4698, %v3864
      %v4713 = vmul.f32 %v4698, %v3865
      %v4714 = vmul.f32 %v4698, %v3866
      %v4731 = vrot.slane %v4699, 1
      %v4732 = vrot.slane %v4700, 1
      %v4733 = vsel %vm4037, %v4731, %v4732
      %v4734 = vrot.slane %v4701, 1
      %v4735 = vrot.slane %v4702, 1
      %v4736 = vsel %vm4037, %v4734, %v4735
      %v4737 = vrot.slane %v4703, 1
      %v4738 = vrot.slane %v4704, 1
      %v4739 = vsel %vm4037, %v4737, %v4738
      %v4740 = vrot.slane %v4705, 1
      %v4741 = vrot.slane %v4706, 1
      %v4742 = vsel %vm4037, %v4740, %v4741
      %v4743 = vrot.slane %v4707, 1
      %v4744 = vrot.slane %v4708, 1
      %v4745 = vsel %vm4037, %v4743, %v4744
      %v4746 = vrot.slane %v4709, 1
      %v4747 = vrot.slane %v4710, 1
      %v4748 = vsel %vm4037, %v4746, %v4747
      %v4749 = vrot.slane %v4711, 1
      %v4750 = vrot.slane %v4712, 1
      %v4751 = vsel %vm4037, %v4749, %v4750
      %v4752 = vrot.slane %v4713, 1
      %v4753 = vrot.slane %v4714, 1
      %v4754 = vsel %vm4037, %v4752, %v4753
      %v4763 = vadd.f32 %v4687, %v4733
      %v4764 = vadd.f32 %v4688, %v4736
      %v4765 = vadd.f32 %v4689, %v4739
      %v4766 = vadd.f32 %v4690, %v4742
      %v4767 = vadd.f32 %v4691, %v4745
      %v4768 = vadd.f32 %v4692, %v4748
      %v4769 = vadd.f32 %v4693, %v4751
      %v4770 = vadd.f32 %v4694, %v4754
      %v4771 = vlaneseq
      %v4772 = vshrl.u32 %v4771, 7
      %v4773 = vsub.s32 5, %v4772
      %v4774 = vrot.slane %v3640, %v4773
      %v4775 = vmul.f32 %v4774, %v3851
      %v4776 = vmul.f32 %v4774, %v3852
      %v4777 = vmul.f32 %v4774, %v3853
      %v4778 = vmul.f32 %v4774, %v3854
      %v4779 = vmul.f32 %v4774, %v3855
      %v4780 = vmul.f32 %v4774, %v3856
      %v4781 = vmul.f32 %v4774, %v3857
      %v4782 = vmul.f32 %v4774, %v3858
      %v4783 = vmul.f32 %v4774, %v3859
      %v4784 = vmul.f32 %v4774, %v3860
      %v4785 = vmul.f32 %v4774, %v3861
      %v4786 = vmul.f32 %v4774, %v3862
      %v4787 = vmul.f32 %v4774, %v3863
      %v4788 = vmul.f32 %v4774, %v3864
      %v4789 = vmul.f32 %v4774, %v3865
      %v4790 = vmul.f32 %v4774, %v3866
      %v4807 = vrot.slane %v4775, 2
      %v4808 = vrot.slane %v4776, 2
      %v4809 = vsel %vm4114, %v4807, %v4808
      %v4810 = vrot.slane %v4777, 2
      %v4811 = vrot.slane %v4778, 2
      %v4812 = vsel %vm4114, %v4810, %v4811
      %v4813 = vrot.slane %v4779, 2
      %v4814 = vrot.slane %v4780, 2
      %v4815 = vsel %vm4114, %v4813, %v4814
      %v4816 = vrot.slane %v4781, 2
      %v4817 = vrot.slane %v4782, 2
      %v4818 = vsel %vm4114, %v4816, %v4817
      %v4819 = vrot.slane %v4783, 2
      %v4820 = vrot.slane %v4784, 2
      %v4821 = vsel %vm4114, %v4819, %v4820
      %v4822 = vrot.slane %v4785, 2
      %v4823 = vrot.slane %v4786, 2
      %v4824 = vsel %vm4114, %v4822, %v4823
      %v4825 = vrot.slane %v4787, 2
      %v4826 = vrot.slane %v4788, 2
      %v4827 = vsel %vm4114, %v4825, %v4826
      %v4828 = vrot.slane %v4789, 2
      %v4829 = vrot.slane %v4790, 2
      %v4830 = vsel %vm4114, %v4828, %v4829
      %v4839 = vadd.f32 %v4763, %v4809
      %v4840 = vadd.f32 %v4764, %v4812
      %v4841 = vadd.f32 %v4765, %v4815
      %v4842 = vadd.f32 %v4766, %v4818
      %v4843 = vadd.f32 %v4767, %v4821
      %v4844 = vadd.f32 %v4768, %v4824
      %v4845 = vadd.f32 %v4769, %v4827
      %v4846 = vadd.f32 %v4770, %v4830
      %v4847 = vlaneseq
      %v4848 = vshrl.u32 %v4847, 7
      %v4849 = vsub.s32 6, %v4848
      %v4850 = vrot.slane %v3640, %v4849
      %v4851 = vmul.f32 %v4850, %v3853
      %v4852 = vmul.f32 %v4850, %v3855
      %v4853 = vmul.f32 %v4850, %v3857
      %v4854 = vmul.f32 %v4850, %v3859
      %v4855 = vmul.f32 %v4850, %v3861
      %v4856 = vmul.f32 %v4850, %v3863
      %v4857 = vmul.f32 %v4850, %v3865
      %v4858 = vmul.f32 %v4850, %v3867
      %v4859 = vadd.f32 %v4839, %v4851
      %v4860 = vadd.f32 %v4840, %v4852
      %v4861 = vadd.f32 %v4841, %v4853
      %v4862 = vadd.f32 %v4842, %v4854
      %v4863 = vadd.f32 %v4843, %v4855
      %v4864 = vadd.f32 %v4844, %v4856
      %v4865 = vadd.f32 %v4845, %v4857
      %v4866 = vadd.f32 %v4846, %v4858
      %v4867 = vlaneseq
      %v4868 = vshrl.u32 %v4867, 7
      %v4869 = vsub.s32 7, %v4868
      %v4870 = vrot.slane %v3640, %v4869
      %v4871 = vmul.f32 %v4870, %v3853
      %v4872 = vmul.f32 %v4870, %v3854
      %v4873 = vmul.f32 %v4870, %v3855
      %v4874 = vmul.f32 %v4870, %v3856
      %v4875 = vmul.f32 %v4870, %v3857
      %v4876 = vmul.f32 %v4870, %v3858
      %v4877 = vmul.f32 %v4870, %v3859
      %v4878 = vmul.f32 %v4870, %v3860
      %v4879 = vmul.f32 %v4870, %v3861
      %v4880 = vmul.f32 %v4870, %v3862
      %v4881 = vmul.f32 %v4870, %v3863
      %v4882 = vmul.f32 %v4870, %v3864
      %v4883 = vmul.f32 %v4870, %v3865
      %v4884 = vmul.f32 %v4870, %v3866
      %v4885 = vmul.f32 %v4870, %v3867
      %v4886 = vmul.f32 %v4870, %v3868
      %v4903 = vrot.slane %v4871, 1
      %v4904 = vrot.slane %v4872, 1
      %v4905 = vsel %vm4037, %v4903, %v4904
      %v4906 = vrot.slane %v4873, 1
      %v4907 = vrot.slane %v4874, 1
      %v4908 = vsel %vm4037, %v4906, %v4907
      %v4909 = vrot.slane %v4875, 1
      %v4910 = vrot.slane %v4876, 1
      %v4911 = vsel %vm4037, %v4909, %v4910
      %v4912 = vrot.slane %v4877, 1
      %v4913 = vrot.slane %v4878, 1
      %v4914 = vsel %vm4037, %v4912, %v4913
      %v4915 = vrot.slane %v4879, 1
      %v4916 = vrot.slane %v4880, 1
      %v4917 = vsel %vm4037, %v4915, %v4916
      %v4918 = vrot.slane %v4881, 1
      %v4919 = vrot.slane %v4882, 1
      %v4920 = vsel %vm4037, %v4918, %v4919
      %v4921 = vrot.slane %v4883, 1
      %v4922 = vrot.slane %v4884, 1
      %v4923 = vsel %vm4037, %v4921, %v4922
      %v4924 = vrot.slane %v4885, 1
      %v4925 = vrot.slane %v4886, 1
      %v4926 = vsel %vm4037, %v4924, %v4925
      %v4935 = vadd.f32 %v4859, %v4905
      %v4936 = vadd.f32 %v4860, %v4908
      %v4937 = vadd.f32 %v4861, %v4911
      %v4938 = vadd.f32 %v4862, %v4914
      %v4939 = vadd.f32 %v4863, %v4917
      %v4940 = vadd.f32 %v4864, %v4920
      %v4941 = vadd.f32 %v4865, %v4923
      %v4942 = vadd.f32 %v4866, %v4926
      %v4943 = vlaneseq
      %v4944 = vshrl.u32 %v4943, 7
      %v4945 = vsub.s32 0, %v4944
      %v4946 = vrot.slane %v3641, %v4945
      %v4947 = vmul.f32 %v4946, %v3853
      %v4948 = vmul.f32 %v4946, %v3854
      %v4949 = vmul.f32 %v4946, %v3855
      %v4950 = vmul.f32 %v4946, %v3856
      %v4951 = vmul.f32 %v4946, %v3857
      %v4952 = vmul.f32 %v4946, %v3858
      %v4953 = vmul.f32 %v4946, %v3859
      %v4954 = vmul.f32 %v4946, %v3860
      %v4955 = vmul.f32 %v4946, %v3861
      %v4956 = vmul.f32 %v4946, %v3862
      %v4957 = vmul.f32 %v4946, %v3863
      %v4958 = vmul.f32 %v4946, %v3864
      %v4959 = vmul.f32 %v4946, %v3865
      %v4960 = vmul.f32 %v4946, %v3866
      %v4961 = vmul.f32 %v4946, %v3867
      %v4962 = vmul.f32 %v4946, %v3868
      %v4979 = vrot.slane %v4947, 2
      %v4980 = vrot.slane %v4948, 2
      %v4981 = vsel %vm4114, %v4979, %v4980
      %v4982 = vrot.slane %v4949, 2
      %v4983 = vrot.slane %v4950, 2
      %v4984 = vsel %vm4114, %v4982, %v4983
      %v4985 = vrot.slane %v4951, 2
      %v4986 = vrot.slane %v4952, 2
      %v4987 = vsel %vm4114, %v4985, %v4986
      %v4988 = vrot.slane %v4953, 2
      %v4989 = vrot.slane %v4954, 2
      %v4990 = vsel %vm4114, %v4988, %v4989
      %v4991 = vrot.slane %v4955, 2
      %v4992 = vrot.slane %v4956, 2
      %v4993 = vsel %vm4114, %v4991, %v4992
      %v4994 = vrot.slane %v4957, 2
      %v4995 = vrot.slane %v4958, 2
      %v4996 = vsel %vm4114, %v4994, %v4995
      %v4997 = vrot.slane %v4959, 2
      %v4998 = vrot.slane %v4960, 2
      %v4999 = vsel %vm4114, %v4997, %v4998
      %v5000 = vrot.slane %v4961, 2
      %v5001 = vrot.slane %v4962, 2
      %v5002 = vsel %vm4114, %v5000, %v5001
      %v5011 = vadd.f32 %v4935, %v4981
      %v5012 = vadd.f32 %v4936, %v4984
      %v5013 = vadd.f32 %v4937, %v4987
      %v5014 = vadd.f32 %v4938, %v4990
      %v5015 = vadd.f32 %v4939, %v4993
      %v5016 = vadd.f32 %v4940, %v4996
      %v5017 = vadd.f32 %v4941, %v4999
      %v5018 = vadd.f32 %v4942, %v5002
      %v5019 = vlaneseq
      %v5020 = vshrl.u32 %v5019, 7
      %v5021 = vsub.s32 1, %v5020
      %v5022 = vrot.slane %v3646, %v5021
      %v5023 = vmul.f32 %v5011, %v5022
      %v5024 = vmul.f32 %v5012, %v5022
      %v5025 = vmul.f32 %v5013, %v5022
      %v5026 = vmul.f32 %v5014, %v5022
      %v5027 = vmul.f32 %v5015, %v5022
      %v5028 = vmul.f32 %v5016, %v5022
      %v5029 = vmul.f32 %v5017, %v5022
      %v5030 = vmul.f32 %v5018, %v5022
      %v5031 = vlaneseq
      %v5032 = vshrl.u32 %v5031, 7
      %v5033 = vsub.s32 0, %v5032
      %v5034 = vrot.slane %v3642, %v5033
      %v5035 = vmul.f32 %v5034, %v3929
      %v5036 = vmul.f32 %v5034, %v3931
      %v5037 = vmul.f32 %v5034, %v3933
      %v5038 = vmul.f32 %v5034, %v3935
      %v5039 = vmul.f32 %v5034, %v3937
      %v5040 = vmul.f32 %v5034, %v3939
      %v5041 = vmul.f32 %v5034, %v3941
      %v5042 = vmul.f32 %v5034, %v3943
      %v5043 = vlaneseq
      %v5044 = vshrl.u32 %v5043, 7
      %v5045 = vsub.s32 1, %v5044
      %v5046 = vrot.slane %v3642, %v5045
      %v5047 = vmul.f32 %v5046, %v3929
      %v5048 = vmul.f32 %v5046, %v3930
      %v5049 = vmul.f32 %v5046, %v3931
      %v5050 = vmul.f32 %v5046, %v3932
      %v5051 = vmul.f32 %v5046, %v3933
      %v5052 = vmul.f32 %v5046, %v3934
      %v5053 = vmul.f32 %v5046, %v3935
      %v5054 = vmul.f32 %v5046, %v3936
      %v5055 = vmul.f32 %v5046, %v3937
      %v5056 = vmul.f32 %v5046, %v3938
      %v5057 = vmul.f32 %v5046, %v3939
      %v5058 = vmul.f32 %v5046, %v3940
      %v5059 = vmul.f32 %v5046, %v3941
      %v5060 = vmul.f32 %v5046, %v3942
      %v5061 = vmul.f32 %v5046, %v3943
      %v5062 = vmul.f32 %v5046, %v3944
      %v5079 = vrot.slane %v5047, 1
      %v5080 = vrot.slane %v5048, 1
      %v5081 = vsel %vm4037, %v5079, %v5080
      %v5082 = vrot.slane %v5049, 1
      %v5083 = vrot.slane %v5050, 1
      %v5084 = vsel %vm4037, %v5082, %v5083
      %v5085 = vrot.slane %v5051, 1
      %v5086 = vrot.slane %v5052, 1
      %v5087 = vsel %vm4037, %v5085, %v5086
      %v5088 = vrot.slane %v5053, 1
      %v5089 = vrot.slane %v5054, 1
      %v5090 = vsel %vm4037, %v5088, %v5089
      %v5091 = vrot.slane %v5055, 1
      %v5092 = vrot.slane %v5056, 1
      %v5093 = vsel %vm4037, %v5091, %v5092
      %v5094 = vrot.slane %v5057, 1
      %v5095 = vrot.slane %v5058, 1
      %v5096 = vsel %vm4037, %v5094, %v5095
      %v5097 = vrot.slane %v5059, 1
      %v5098 = vrot.slane %v5060, 1
      %v5099 = vsel %vm4037, %v5097, %v5098
      %v5100 = vrot.slane %v5061, 1
      %v5101 = vrot.slane %v5062, 1
      %v5102 = vsel %vm4037, %v5100, %v5101
      %v5111 = vadd.f32 %v5035, %v5081
      %v5112 = vadd.f32 %v5036, %v5084
      %v5113 = vadd.f32 %v5037, %v5087
      %v5114 = vadd.f32 %v5038, %v5090
      %v5115 = vadd.f32 %v5039, %v5093
      %v5116 = vadd.f32 %v5040, %v5096
      %v5117 = vadd.f32 %v5041, %v5099
      %v5118 = vadd.f32 %v5042, %v5102
      %v5119 = vlaneseq
      %v5120 = vshrl.u32 %v5119, 7
      %v5121 = vsub.s32 2, %v5120
      %v5122 = vrot.slane %v3642, %v5121
      %v5123 = vmul.f32 %v5122, %v3929
      %v5124 = vmul.f32 %v5122, %v3930
      %v5125 = vmul.f32 %v5122, %v3931
      %v5126 = vmul.f32 %v5122, %v3932
      %v5127 = vmul.f32 %v5122, %v3933
      %v5128 = vmul.f32 %v5122, %v3934
      %v5129 = vmul.f32 %v5122, %v3935
      %v5130 = vmul.f32 %v5122, %v3936
      %v5131 = vmul.f32 %v5122, %v3937
      %v5132 = vmul.f32 %v5122, %v3938
      %v5133 = vmul.f32 %v5122, %v3939
      %v5134 = vmul.f32 %v5122, %v3940
      %v5135 = vmul.f32 %v5122, %v3941
      %v5136 = vmul.f32 %v5122, %v3942
      %v5137 = vmul.f32 %v5122, %v3943
      %v5138 = vmul.f32 %v5122, %v3944
      %v5155 = vrot.slane %v5123, 2
      %v5156 = vrot.slane %v5124, 2
      %v5157 = vsel %vm4114, %v5155, %v5156
      %v5158 = vrot.slane %v5125, 2
      %v5159 = vrot.slane %v5126, 2
      %v5160 = vsel %vm4114, %v5158, %v5159
      %v5161 = vrot.slane %v5127, 2
      %v5162 = vrot.slane %v5128, 2
      %v5163 = vsel %vm4114, %v5161, %v5162
      %v5164 = vrot.slane %v5129, 2
      %v5165 = vrot.slane %v5130, 2
      %v5166 = vsel %vm4114, %v5164, %v5165
      %v5167 = vrot.slane %v5131, 2
      %v5168 = vrot.slane %v5132, 2
      %v5169 = vsel %vm4114, %v5167, %v5168
      %v5170 = vrot.slane %v5133, 2
      %v5171 = vrot.slane %v5134, 2
      %v5172 = vsel %vm4114, %v5170, %v5171
      %v5173 = vrot.slane %v5135, 2
      %v5174 = vrot.slane %v5136, 2
      %v5175 = vsel %vm4114, %v5173, %v5174
      %v5176 = vrot.slane %v5137, 2
      %v5177 = vrot.slane %v5138, 2
      %v5178 = vsel %vm4114, %v5176, %v5177
      %v5187 = vadd.f32 %v5111, %v5157
      %v5188 = vadd.f32 %v5112, %v5160
      %v5189 = vadd.f32 %v5113, %v5163
      %v5190 = vadd.f32 %v5114, %v5166
      %v5191 = vadd.f32 %v5115, %v5169
      %v5192 = vadd.f32 %v5116, %v5172
      %v5193 = vadd.f32 %v5117, %v5175
      %v5194 = vadd.f32 %v5118, %v5178
      %v5195 = vlaneseq
      %v5196 = vshrl.u32 %v5195, 7
      %v5197 = vsub.s32 3, %v5196
      %v5198 = vrot.slane %v3642, %v5197
      %v5199 = vmul.f32 %v5198, %v3931
      %v5200 = vmul.f32 %v5198, %v3933
      %v5201 = vmul.f32 %v5198, %v3935
      %v5202 = vmul.f32 %v5198, %v3937
      %v5203 = vmul.f32 %v5198, %v3939
      %v5204 = vmul.f32 %v5198, %v3941
      %v5205 = vmul.f32 %v5198, %v3943
      %v5206 = vmul.f32 %v5198, %v3945
      %v5207 = vadd.f32 %v5187, %v5199
      %v5208 = vadd.f32 %v5188, %v5200
      %v5209 = vadd.f32 %v5189, %v5201
      %v5210 = vadd.f32 %v5190, %v5202
      %v5211 = vadd.f32 %v5191, %v5203
      %v5212 = vadd.f32 %v5192, %v5204
      %v5213 = vadd.f32 %v5193, %v5205
      %v5214 = vadd.f32 %v5194, %v5206
      %v5215 = vlaneseq
      %v5216 = vshrl.u32 %v5215, 7
      %v5217 = vsub.s32 4, %v5216
      %v5218 = vrot.slane %v3642, %v5217
      %v5219 = vmul.f32 %v5218, %v3931
      %v5220 = vmul.f32 %v5218, %v3932
      %v5221 = vmul.f32 %v5218, %v3933
      %v5222 = vmul.f32 %v5218, %v3934
      %v5223 = vmul.f32 %v5218, %v3935
      %v5224 = vmul.f32 %v5218, %v3936
      %v5225 = vmul.f32 %v5218, %v3937
      %v5226 = vmul.f32 %v5218, %v3938
      %v5227 = vmul.f32 %v5218, %v3939
      %v5228 = vmul.f32 %v5218, %v3940
      %v5229 = vmul.f32 %v5218, %v3941
      %v5230 = vmul.f32 %v5218, %v3942
      %v5231 = vmul.f32 %v5218, %v3943
      %v5232 = vmul.f32 %v5218, %v3944
      %v5233 = vmul.f32 %v5218, %v3945
      %v5234 = vmul.f32 %v5218, %v3946
      %v5251 = vrot.slane %v5219, 1
      %v5252 = vrot.slane %v5220, 1
      %v5253 = vsel %vm4037, %v5251, %v5252
      %v5254 = vrot.slane %v5221, 1
      %v5255 = vrot.slane %v5222, 1
      %v5256 = vsel %vm4037, %v5254, %v5255
      %v5257 = vrot.slane %v5223, 1
      %v5258 = vrot.slane %v5224, 1
      %v5259 = vsel %vm4037, %v5257, %v5258
      %v5260 = vrot.slane %v5225, 1
      %v5261 = vrot.slane %v5226, 1
      %v5262 = vsel %vm4037, %v5260, %v5261
      %v5263 = vrot.slane %v5227, 1
      %v5264 = vrot.slane %v5228, 1
      %v5265 = vsel %vm4037, %v5263, %v5264
      %v5266 = vrot.slane %v5229, 1
      %v5267 = vrot.slane %v5230, 1
      %v5268 = vsel %vm4037, %v5266, %v5267
      %v5269 = vrot.slane %v5231, 1
      %v5270 = vrot.slane %v5232, 1
      %v5271 = vsel %vm4037, %v5269, %v5270
      %v5272 = vrot.slane %v5233, 1
      %v5273 = vrot.slane %v5234, 1
      %v5274 = vsel %vm4037, %v5272, %v5273
      %v5283 = vadd.f32 %v5207, %v5253
      %v5284 = vadd.f32 %v5208, %v5256
      %v5285 = vadd.f32 %v5209, %v5259
      %v5286 = vadd.f32 %v5210, %v5262
      %v5287 = vadd.f32 %v5211, %v5265
      %v5288 = vadd.f32 %v5212, %v5268
      %v5289 = vadd.f32 %v5213, %v5271
      %v5290 = vadd.f32 %v5214, %v5274
      %v5291 = vlaneseq
      %v5292 = vshrl.u32 %v5291, 7
      %v5293 = vsub.s32 5, %v5292
      %v5294 = vrot.slane %v3642, %v5293
      %v5295 = vmul.f32 %v5294, %v3931
      %v5296 = vmul.f32 %v5294, %v3932
      %v5297 = vmul.f32 %v5294, %v3933
      %v5298 = vmul.f32 %v5294, %v3934
      %v5299 = vmul.f32 %v5294, %v3935
      %v5300 = vmul.f32 %v5294, %v3936
      %v5301 = vmul.f32 %v5294, %v3937
      %v5302 = vmul.f32 %v5294, %v3938
      %v5303 = vmul.f32 %v5294, %v3939
      %v5304 = vmul.f32 %v5294, %v3940
      %v5305 = vmul.f32 %v5294, %v3941
      %v5306 = vmul.f32 %v5294, %v3942
      %v5307 = vmul.f32 %v5294, %v3943
      %v5308 = vmul.f32 %v5294, %v3944
      %v5309 = vmul.f32 %v5294, %v3945
      %v5310 = vmul.f32 %v5294, %v3946
      %v5327 = vrot.slane %v5295, 2
      %v5328 = vrot.slane %v5296, 2
      %v5329 = vsel %vm4114, %v5327, %v5328
      %v5330 = vrot.slane %v5297, 2
      %v5331 = vrot.slane %v5298, 2
      %v5332 = vsel %vm4114, %v5330, %v5331
      %v5333 = vrot.slane %v5299, 2
      %v5334 = vrot.slane %v5300, 2
      %v5335 = vsel %vm4114, %v5333, %v5334
      %v5336 = vrot.slane %v5301, 2
      %v5337 = vrot.slane %v5302, 2
      %v5338 = vsel %vm4114, %v5336, %v5337
      %v5339 = vrot.slane %v5303, 2
      %v5340 = vrot.slane %v5304, 2
      %v5341 = vsel %vm4114, %v5339, %v5340
      %v5342 = vrot.slane %v5305, 2
      %v5343 = vrot.slane %v5306, 2
      %v5344 = vsel %vm4114, %v5342, %v5343
      %v5345 = vrot.slane %v5307, 2
      %v5346 = vrot.slane %v5308, 2
      %v5347 = vsel %vm4114, %v5345, %v5346
      %v5348 = vrot.slane %v5309, 2
      %v5349 = vrot.slane %v5310, 2
      %v5350 = vsel %vm4114, %v5348, %v5349
      %v5359 = vadd.f32 %v5283, %v5329
      %v5360 = vadd.f32 %v5284, %v5332
      %v5361 = vadd.f32 %v5285, %v5335
      %v5362 = vadd.f32 %v5286, %v5338
      %v5363 = vadd.f32 %v5287, %v5341
      %v5364 = vadd.f32 %v5288, %v5344
      %v5365 = vadd.f32 %v5289, %v5347
      %v5366 = vadd.f32 %v5290, %v5350
      %v5367 = vlaneseq
      %v5368 = vshrl.u32 %v5367, 7
      %v5369 = vsub.s32 6, %v5368
      %v5370 = vrot.slane %v3642, %v5369
      %v5371 = vmul.f32 %v5370, %v3933
      %v5372 = vmul.f32 %v5370, %v3935
      %v5373 = vmul.f32 %v5370, %v3937
      %v5374 = vmul.f32 %v5370, %v3939
      %v5375 = vmul.f32 %v5370, %v3941
      %v5376 = vmul.f32 %v5370, %v3943
      %v5377 = vmul.f32 %v5370, %v3945
      %v5378 = vmul.f32 %v5370, %v3947
      %v5379 = vadd.f32 %v5359, %v5371
      %v5380 = vadd.f32 %v5360, %v5372
      %v5381 = vadd.f32 %v5361, %v5373
      %v5382 = vadd.f32 %v5362, %v5374
      %v5383 = vadd.f32 %v5363, %v5375
      %v5384 = vadd.f32 %v5364, %v5376
      %v5385 = vadd.f32 %v5365, %v5377
      %v5386 = vadd.f32 %v5366, %v5378
      %v5387 = vlaneseq
      %v5388 = vshrl.u32 %v5387, 7
      %v5389 = vsub.s32 7, %v5388
      %v5390 = vrot.slane %v3642, %v5389
      %v5391 = vmul.f32 %v5390, %v3933
      %v5392 = vmul.f32 %v5390, %v3934
      %v5393 = vmul.f32 %v5390, %v3935
      %v5394 = vmul.f32 %v5390, %v3936
      %v5395 = vmul.f32 %v5390, %v3937
      %v5396 = vmul.f32 %v5390, %v3938
      %v5397 = vmul.f32 %v5390, %v3939
      %v5398 = vmul.f32 %v5390, %v3940
      %v5399 = vmul.f32 %v5390, %v3941
      %v5400 = vmul.f32 %v5390, %v3942
      %v5401 = vmul.f32 %v5390, %v3943
      %v5402 = vmul.f32 %v5390, %v3944
      %v5403 = vmul.f32 %v5390, %v3945
      %v5404 = vmul.f32 %v5390, %v3946
      %v5405 = vmul.f32 %v5390, %v3947
      %v5406 = vmul.f32 %v5390, %v3948
      %v5423 = vrot.slane %v5391, 1
      %v5424 = vrot.slane %v5392, 1
      %v5425 = vsel %vm4037, %v5423, %v5424
      %v5426 = vrot.slane %v5393, 1
      %v5427 = vrot.slane %v5394, 1
      %v5428 = vsel %vm4037, %v5426, %v5427
      %v5429 = vrot.slane %v5395, 1
      %v5430 = vrot.slane %v5396, 1
      %v5431 = vsel %vm4037, %v5429, %v5430
      %v5432 = vrot.slane %v5397, 1
      %v5433 = vrot.slane %v5398, 1
      %v5434 = vsel %vm4037, %v5432, %v5433
      %v5435 = vrot.slane %v5399, 1
      %v5436 = vrot.slane %v5400, 1
      %v5437 = vsel %vm4037, %v5435, %v5436
      %v5438 = vrot.slane %v5401, 1
      %v5439 = vrot.slane %v5402, 1
      %v5440 = vsel %vm4037, %v5438, %v5439
      %v5441 = vrot.slane %v5403, 1
      %v5442 = vrot.slane %v5404, 1
      %v5443 = vsel %vm4037, %v5441, %v5442
      %v5444 = vrot.slane %v5405, 1
      %v5445 = vrot.slane %v5406, 1
      %v5446 = vsel %vm4037, %v5444, %v5445
      %v5455 = vadd.f32 %v5379, %v5425
      %v5456 = vadd.f32 %v5380, %v5428
      %v5457 = vadd.f32 %v5381, %v5431
      %v5458 = vadd.f32 %v5382, %v5434
      %v5459 = vadd.f32 %v5383, %v5437
      %v5460 = vadd.f32 %v5384, %v5440
      %v5461 = vadd.f32 %v5385, %v5443
      %v5462 = vadd.f32 %v5386, %v5446
      %v5463 = vlaneseq
      %v5464 = vshrl.u32 %v5463, 7
      %v5465 = vsub.s32 0, %v5464
      %v5466 = vrot.slane %v3643, %v5465
      %v5467 = vmul.f32 %v5466, %v3933
      %v5468 = vmul.f32 %v5466, %v3934
      %v5469 = vmul.f32 %v5466, %v3935
      %v5470 = vmul.f32 %v5466, %v3936
      %v5471 = vmul.f32 %v5466, %v3937
      %v5472 = vmul.f32 %v5466, %v3938
      %v5473 = vmul.f32 %v5466, %v3939
      %v5474 = vmul.f32 %v5466, %v3940
      %v5475 = vmul.f32 %v5466, %v3941
      %v5476 = vmul.f32 %v5466, %v3942
      %v5477 = vmul.f32 %v5466, %v3943
      %v5478 = vmul.f32 %v5466, %v3944
      %v5479 = vmul.f32 %v5466, %v3945
      %v5480 = vmul.f32 %v5466, %v3946
      %v5481 = vmul.f32 %v5466, %v3947
      %v5482 = vmul.f32 %v5466, %v3948
      %v5499 = vrot.slane %v5467, 2
      %v5500 = vrot.slane %v5468, 2
      %v5501 = vsel %vm4114, %v5499, %v5500
      %v5502 = vrot.slane %v5469, 2
      %v5503 = vrot.slane %v5470, 2
      %v5504 = vsel %vm4114, %v5502, %v5503
      %v5505 = vrot.slane %v5471, 2
      %v5506 = vrot.slane %v5472, 2
      %v5507 = vsel %vm4114, %v5505, %v5506
      %v5508 = vrot.slane %v5473, 2
      %v5509 = vrot.slane %v5474, 2
      %v5510 = vsel %vm4114, %v5508, %v5509
      %v5511 = vrot.slane %v5475, 2
      %v5512 = vrot.slane %v5476, 2
      %v5513 = vsel %vm4114, %v5511, %v5512
      %v5514 = vrot.slane %v5477, 2
      %v5515 = vrot.slane %v5478, 2
      %v5516 = vsel %vm4114, %v5514, %v5515
      %v5517 = vrot.slane %v5479, 2
      %v5518 = vrot.slane %v5480, 2
      %v5519 = vsel %vm4114, %v5517, %v5518
      %v5520 = vrot.slane %v5481, 2
      %v5521 = vrot.slane %v5482, 2
      %v5522 = vsel %vm4114, %v5520, %v5521
      %v5531 = vadd.f32 %v5455, %v5501
      %v5532 = vadd.f32 %v5456, %v5504
      %v5533 = vadd.f32 %v5457, %v5507
      %v5534 = vadd.f32 %v5458, %v5510
      %v5535 = vadd.f32 %v5459, %v5513
      %v5536 = vadd.f32 %v5460, %v5516
      %v5537 = vadd.f32 %v5461, %v5519
      %v5538 = vadd.f32 %v5462, %v5522
      %v5539 = vlaneseq
      %v5540 = vshrl.u32 %v5539, 7
      %v5541 = vsub.s32 2, %v5540
      %v5542 = vrot.slane %v3646, %v5541
      %v5543 = vmul.f32 %v5531, %v5542
      %v5544 = vmul.f32 %v5532, %v5542
      %v5545 = vmul.f32 %v5533, %v5542
      %v5546 = vmul.f32 %v5534, %v5542
      %v5547 = vmul.f32 %v5535, %v5542
      %v5548 = vmul.f32 %v5536, %v5542
      %v5549 = vmul.f32 %v5537, %v5542
      %v5550 = vmul.f32 %v5538, %v5542
      %v5551 = vlaneseq
      %v5552 = vshrl.u32 %v5551, 7
      %v5553 = vsub.s32 0, %v5552
      %v5554 = vrot.slane %v3644, %v5553
      %v5555 = vmul.f32 %v5554, %v3969
      %v5556 = vmul.f32 %v5554, %v3971
      %v5557 = vmul.f32 %v5554, %v3973
      %v5558 = vmul.f32 %v5554, %v3975
      %v5559 = vmul.f32 %v5554, %v3977
      %v5560 = vmul.f32 %v5554, %v3979
      %v5561 = vmul.f32 %v5554, %v3981
      %v5562 = vmul.f32 %v5554, %v3983
      %v5563 = vlaneseq
      %v5564 = vshrl.u32 %v5563, 7
      %v5565 = vsub.s32 1, %v5564
      %v5566 = vrot.slane %v3644, %v5565
      %v5567 = vmul.f32 %v5566, %v3969
      %v5568 = vmul.f32 %v5566, %v3970
      %v5569 = vmul.f32 %v5566, %v3971
      %v5570 = vmul.f32 %v5566, %v3972
      %v5571 = vmul.f32 %v5566, %v3973
      %v5572 = vmul.f32 %v5566, %v3974
      %v5573 = vmul.f32 %v5566, %v3975
      %v5574 = vmul.f32 %v5566, %v3976
      %v5575 = vmul.f32 %v5566, %v3977
      %v5576 = vmul.f32 %v5566, %v3978
      %v5577 = vmul.f32 %v5566, %v3979
      %v5578 = vmul.f32 %v5566, %v3980
      %v5579 = vmul.f32 %v5566, %v3981
      %v5580 = vmul.f32 %v5566, %v3982
      %v5581 = vmul.f32 %v5566, %v3983
      %v5582 = vmul.f32 %v5566, %v3984
      %v5599 = vrot.slane %v5567, 1
      %v5600 = vrot.slane %v5568, 1
      %v5601 = vsel %vm4037, %v5599, %v5600
      %v5602 = vrot.slane %v5569, 1
      %v5603 = vrot.slane %v5570, 1
      %v5604 = vsel %vm4037, %v5602, %v5603
      %v5605 = vrot.slane %v5571, 1
      %v5606 = vrot.slane %v5572, 1
      %v5607 = vsel %vm4037, %v5605, %v5606
      %v5608 = vrot.slane %v5573, 1
      %v5609 = vrot.slane %v5574, 1
      %v5610 = vsel %vm4037, %v5608, %v5609
      %v5611 = vrot.slane %v5575, 1
      %v5612 = vrot.slane %v5576, 1
      %v5613 = vsel %vm4037, %v5611, %v5612
      %v5614 = vrot.slane %v5577, 1
      %v5615 = vrot.slane %v5578, 1
      %v5616 = vsel %vm4037, %v5614, %v5615
      %v5617 = vrot.slane %v5579, 1
      %v5618 = vrot.slane %v5580, 1
      %v5619 = vsel %vm4037, %v5617, %v5618
      %v5620 = vrot.slane %v5581, 1
      %v5621 = vrot.slane %v5582, 1
      %v5622 = vsel %vm4037, %v5620, %v5621
      %v5631 = vadd.f32 %v5555, %v5601
      %v5632 = vadd.f32 %v5556, %v5604
      %v5633 = vadd.f32 %v5557, %v5607
      %v5634 = vadd.f32 %v5558, %v5610
      %v5635 = vadd.f32 %v5559, %v5613
      %v5636 = vadd.f32 %v5560, %v5616
      %v5637 = vadd.f32 %v5561, %v5619
      %v5638 = vadd.f32 %v5562, %v5622
      %v5639 = vlaneseq
      %v5640 = vshrl.u32 %v5639, 7
      %v5641 = vsub.s32 2, %v5640
      %v5642 = vrot.slane %v3644, %v5641
      %v5643 = vmul.f32 %v5642, %v3969
      %v5644 = vmul.f32 %v5642, %v3970
      %v5645 = vmul.f32 %v5642, %v3971
      %v5646 = vmul.f32 %v5642, %v3972
      %v5647 = vmul.f32 %v5642, %v3973
      %v5648 = vmul.f32 %v5642, %v3974
      %v5649 = vmul.f32 %v5642, %v3975
      %v5650 = vmul.f32 %v5642, %v3976
      %v5651 = vmul.f32 %v5642, %v3977
      %v5652 = vmul.f32 %v5642, %v3978
      %v5653 = vmul.f32 %v5642, %v3979
      %v5654 = vmul.f32 %v5642, %v3980
      %v5655 = vmul.f32 %v5642, %v3981
      %v5656 = vmul.f32 %v5642, %v3982
      %v5657 = vmul.f32 %v5642, %v3983
      %v5658 = vmul.f32 %v5642, %v3984
      %v5675 = vrot.slane %v5643, 2
      %v5676 = vrot.slane %v5644, 2
      %v5677 = vsel %vm4114, %v5675, %v5676
      %v5678 = vrot.slane %v5645, 2
      %v5679 = vrot.slane %v5646, 2
      %v5680 = vsel %vm4114, %v5678, %v5679
      %v5681 = vrot.slane %v5647, 2
      %v5682 = vrot.slane %v5648, 2
      %v5683 = vsel %vm4114, %v5681, %v5682
      %v5684 = vrot.slane %v5649, 2
      %v5685 = vrot.slane %v5650, 2
      %v5686 = vsel %vm4114, %v5684, %v5685
      %v5687 = vrot.slane %v5651, 2
      %v5688 = vrot.slane %v5652, 2
      %v5689 = vsel %vm4114, %v5687, %v5688
      %v5690 = vrot.slane %v5653, 2
      %v5691 = vrot.slane %v5654, 2
      %v5692 = vsel %vm4114, %v5690, %v5691
      %v5693 = vrot.slane %v5655, 2
      %v5694 = vrot.slane %v5656, 2
      %v5695 = vsel %vm4114, %v5693, %v5694
      %v5696 = vrot.slane %v5657, 2
      %v5697 = vrot.slane %v5658, 2
      %v5698 = vsel %vm4114, %v5696, %v5697
      %v5707 = vadd.f32 %v5631, %v5677
      %v5708 = vadd.f32 %v5632, %v5680
      %v5709 = vadd.f32 %v5633, %v5683
      %v5710 = vadd.f32 %v5634, %v5686
      %v5711 = vadd.f32 %v5635, %v5689
      %v5712 = vadd.f32 %v5636, %v5692
      %v5713 = vadd.f32 %v5637, %v5695
      %v5714 = vadd.f32 %v5638, %v5698
      %v5715 = vlaneseq
      %v5716 = vshrl.u32 %v5715, 7
      %v5717 = vsub.s32 3, %v5716
      %v5718 = vrot.slane %v3644, %v5717
      %v5719 = vmul.f32 %v5718, %v3971
      %v5720 = vmul.f32 %v5718, %v3973
      %v5721 = vmul.f32 %v5718, %v3975
      %v5722 = vmul.f32 %v5718, %v3977
      %v5723 = vmul.f32 %v5718, %v3979
      %v5724 = vmul.f32 %v5718, %v3981
      %v5725 = vmul.f32 %v5718, %v3983
      %v5726 = vmul.f32 %v5718, %v3985
      %v5727 = vadd.f32 %v5707, %v5719
      %v5728 = vadd.f32 %v5708, %v5720
      %v5729 = vadd.f32 %v5709, %v5721
      %v5730 = vadd.f32 %v5710, %v5722
      %v5731 = vadd.f32 %v5711, %v5723
      %v5732 = vadd.f32 %v5712, %v5724
      %v5733 = vadd.f32 %v5713, %v5725
      %v5734 = vadd.f32 %v5714, %v5726
      %v5735 = vlaneseq
      %v5736 = vshrl.u32 %v5735, 7
      %v5737 = vsub.s32 4, %v5736
      %v5738 = vrot.slane %v3644, %v5737
      %v5739 = vmul.f32 %v5738, %v3971
      %v5740 = vmul.f32 %v5738, %v3972
      %v5741 = vmul.f32 %v5738, %v3973
      %v5742 = vmul.f32 %v5738, %v3974
      %v5743 = vmul.f32 %v5738, %v3975
      %v5744 = vmul.f32 %v5738, %v3976
      %v5745 = vmul.f32 %v5738, %v3977
      %v5746 = vmul.f32 %v5738, %v3978
      %v5747 = vmul.f32 %v5738, %v3979
      %v5748 = vmul.f32 %v5738, %v3980
      %v5749 = vmul.f32 %v5738, %v3981
      %v5750 = vmul.f32 %v5738, %v3982
      %v5751 = vmul.f32 %v5738, %v3983
      %v5752 = vmul.f32 %v5738, %v3984
      %v5753 = vmul.f32 %v5738, %v3985
      %v5754 = vmul.f32 %v5738, %v3986
      %v5771 = vrot.slane %v5739, 1
      %v5772 = vrot.slane %v5740, 1
      %v5773 = vsel %vm4037, %v5771, %v5772
      %v5774 = vrot.slane %v5741, 1
      %v5775 = vrot.slane %v5742, 1
      %v5776 = vsel %vm4037, %v5774, %v5775
      %v5777 = vrot.slane %v5743, 1
      %v5778 = vrot.slane %v5744, 1
      %v5779 = vsel %vm4037, %v5777, %v5778
      %v5780 = vrot.slane %v5745, 1
      %v5781 = vrot.slane %v5746, 1
      %v5782 = vsel %vm4037, %v5780, %v5781
      %v5783 = vrot.slane %v5747, 1
      %v5784 = vrot.slane %v5748, 1
      %v5785 = vsel %vm4037, %v5783, %v5784
      %v5786 = vrot.slane %v5749, 1
      %v5787 = vrot.slane %v5750, 1
      %v5788 = vsel %vm4037, %v5786, %v5787
      %v5789 = vrot.slane %v5751, 1
      %v5790 = vrot.slane %v5752, 1
      %v5791 = vsel %vm4037, %v5789, %v5790
      %v5792 = vrot.slane %v5753, 1
      %v5793 = vrot.slane %v5754, 1
      %v5794 = vsel %vm4037, %v5792, %v5793
      %v5803 = vadd.f32 %v5727, %v5773
      %v5804 = vadd.f32 %v5728, %v5776
      %v5805 = vadd.f32 %v5729, %v5779
      %v5806 = vadd.f32 %v5730, %v5782
      %v5807 = vadd.f32 %v5731, %v5785
      %v5808 = vadd.f32 %v5732, %v5788
      %v5809 = vadd.f32 %v5733, %v5791
      %v5810 = vadd.f32 %v5734, %v5794
      %v5811 = vlaneseq
      %v5812 = vshrl.u32 %v5811, 7
      %v5813 = vsub.s32 5, %v5812
      %v5814 = vrot.slane %v3644, %v5813
      %v5815 = vmul.f32 %v5814, %v3971
      %v5816 = vmul.f32 %v5814, %v3972
      %v5817 = vmul.f32 %v5814, %v3973
      %v5818 = vmul.f32 %v5814, %v3974
      %v5819 = vmul.f32 %v5814, %v3975
      %v5820 = vmul.f32 %v5814, %v3976
      %v5821 = vmul.f32 %v5814, %v3977
      %v5822 = vmul.f32 %v5814, %v3978
      %v5823 = vmul.f32 %v5814, %v3979
      %v5824 = vmul.f32 %v5814, %v3980
      %v5825 = vmul.f32 %v5814, %v3981
      %v5826 = vmul.f32 %v5814, %v3982
      %v5827 = vmul.f32 %v5814, %v3983
      %v5828 = vmul.f32 %v5814, %v3984
      %v5829 = vmul.f32 %v5814, %v3985
      %v5830 = vmul.f32 %v5814, %v3986
      %v5847 = vrot.slane %v5815, 2
      %v5848 = vrot.slane %v5816, 2
      %v5849 = vsel %vm4114, %v5847, %v5848
      %v5850 = vrot.slane %v5817, 2
      %v5851 = vrot.slane %v5818, 2
      %v5852 = vsel %vm4114, %v5850, %v5851
      %v5853 = vrot.slane %v5819, 2
      %v5854 = vrot.slane %v5820, 2
      %v5855 = vsel %vm4114, %v5853, %v5854
      %v5856 = vrot.slane %v5821, 2
      %v5857 = vrot.slane %v5822, 2
      %v5858 = vsel %vm4114, %v5856, %v5857
      %v5859 = vrot.slane %v5823, 2
      %v5860 = vrot.slane %v5824, 2
      %v5861 = vsel %vm4114, %v5859, %v5860
      %v5862 = vrot.slane %v5825, 2
      %v5863 = vrot.slane %v5826, 2
      %v5864 = vsel %vm4114, %v5862, %v5863
      %v5865 = vrot.slane %v5827, 2
      %v5866 = vrot.slane %v5828, 2
      %v5867 = vsel %vm4114, %v5865, %v5866
      %v5868 = vrot.slane %v5829, 2
      %v5869 = vrot.slane %v5830, 2
      %v5870 = vsel %vm4114, %v5868, %v5869
      %v5879 = vadd.f32 %v5803, %v5849
      %v5880 = vadd.f32 %v5804, %v5852
      %v5881 = vadd.f32 %v5805, %v5855
      %v5882 = vadd.f32 %v5806, %v5858
      %v5883 = vadd.f32 %v5807, %v5861
      %v5884 = vadd.f32 %v5808, %v5864
      %v5885 = vadd.f32 %v5809, %v5867
      %v5886 = vadd.f32 %v5810, %v5870
      %v5887 = vlaneseq
      %v5888 = vshrl.u32 %v5887, 7
      %v5889 = vsub.s32 6, %v5888
      %v5890 = vrot.slane %v3644, %v5889
      %v5891 = vmul.f32 %v5890, %v3973
      %v5892 = vmul.f32 %v5890, %v3975
      %v5893 = vmul.f32 %v5890, %v3977
      %v5894 = vmul.f32 %v5890, %v3979
      %v5895 = vmul.f32 %v5890, %v3981
      %v5896 = vmul.f32 %v5890, %v3983
      %v5897 = vmul.f32 %v5890, %v3985
      %v5898 = vmul.f32 %v5890, %v3987
      %v5899 = vadd.f32 %v5879, %v5891
      %v5900 = vadd.f32 %v5880, %v5892
      %v5901 = vadd.f32 %v5881, %v5893
      %v5902 = vadd.f32 %v5882, %v5894
      %v5903 = vadd.f32 %v5883, %v5895
      %v5904 = vadd.f32 %v5884, %v5896
      %v5905 = vadd.f32 %v5885, %v5897
      %v5906 = vadd.f32 %v5886, %v5898
      %v5907 = vlaneseq
      %v5908 = vshrl.u32 %v5907, 7
      %v5909 = vsub.s32 7, %v5908
      %v5910 = vrot.slane %v3644, %v5909
      %v5911 = vmul.f32 %v5910, %v3973
      %v5912 = vmul.f32 %v5910, %v3974
      %v5913 = vmul.f32 %v5910, %v3975
      %v5914 = vmul.f32 %v5910, %v3976
      %v5915 = vmul.f32 %v5910, %v3977
      %v5916 = vmul.f32 %v5910, %v3978
      %v5917 = vmul.f32 %v5910, %v3979
      %v5918 = vmul.f32 %v5910, %v3980
      %v5919 = vmul.f32 %v5910, %v3981
      %v5920 = vmul.f32 %v5910, %v3982
      %v5921 = vmul.f32 %v5910, %v3983
      %v5922 = vmul.f32 %v5910, %v3984
      %v5923 = vmul.f32 %v5910, %v3985
      %v5924 = vmul.f32 %v5910, %v3986
      %v5925 = vmul.f32 %v5910, %v3987
      %v5926 = vmul.f32 %v5910, %v3988
      %v5943 = vrot.slane %v5911, 1
      %v5944 = vrot.slane %v5912, 1
      %v5945 = vsel %vm4037, %v5943, %v5944
      %v5946 = vrot.slane %v5913, 1
      %v5947 = vrot.slane %v5914, 1
      %v5948 = vsel %vm4037, %v5946, %v5947
      %v5949 = vrot.slane %v5915, 1
      %v5950 = vrot.slane %v5916, 1
      %v5951 = vsel %vm4037, %v5949, %v5950
      %v5952 = vrot.slane %v5917, 1
      %v5953 = vrot.slane %v5918, 1
      %v5954 = vsel %vm4037, %v5952, %v5953
      %v5955 = vrot.slane %v5919, 1
      %v5956 = vrot.slane %v5920, 1
      %v5957 = vsel %vm4037, %v5955, %v5956
      %v5958 = vrot.slane %v5921, 1
      %v5959 = vrot.slane %v5922, 1
      %v5960 = vsel %vm4037, %v5958, %v5959
      %v5961 = vrot.slane %v5923, 1
      %v5962 = vrot.slane %v5924, 1
      %v5963 = vsel %vm4037, %v5961, %v5962
      %v5964 = vrot.slane %v5925, 1
      %v5965 = vrot.slane %v5926, 1
      %v5966 = vsel %vm4037, %v5964, %v5965
      %v5975 = vadd.f32 %v5899, %v5945
      %v5976 = vadd.f32 %v5900, %v5948
      %v5977 = vadd.f32 %v5901, %v5951
      %v5978 = vadd.f32 %v5902, %v5954
      %v5979 = vadd.f32 %v5903, %v5957
      %v5980 = vadd.f32 %v5904, %v5960
      %v5981 = vadd.f32 %v5905, %v5963
      %v5982 = vadd.f32 %v5906, %v5966
      %v5983 = vlaneseq
      %v5984 = vshrl.u32 %v5983, 7
      %v5985 = vsub.s32 0, %v5984
      %v5986 = vrot.slane %v3645, %v5985
      %v5987 = vmul.f32 %v5986, %v3973
      %v5988 = vmul.f32 %v5986, %v3974
      %v5989 = vmul.f32 %v5986, %v3975
      %v5990 = vmul.f32 %v5986, %v3976
      %v5991 = vmul.f32 %v5986, %v3977
      %v5992 = vmul.f32 %v5986, %v3978
      %v5993 = vmul.f32 %v5986, %v3979
      %v5994 = vmul.f32 %v5986, %v3980
      %v5995 = vmul.f32 %v5986, %v3981
      %v5996 = vmul.f32 %v5986, %v3982
      %v5997 = vmul.f32 %v5986, %v3983
      %v5998 = vmul.f32 %v5986, %v3984
      %v5999 = vmul.f32 %v5986, %v3985
      %v6000 = vmul.f32 %v5986, %v3986
      %v6001 = vmul.f32 %v5986, %v3987
      %v6002 = vmul.f32 %v5986, %v3988
      %v6019 = vrot.slane %v5987, 2
      %v6020 = vrot.slane %v5988, 2
      %v6021 = vsel %vm4114, %v6019, %v6020
      %v6022 = vrot.slane %v5989, 2
      %v6023 = vrot.slane %v5990, 2
      %v6024 = vsel %vm4114, %v6022, %v6023
      %v6025 = vrot.slane %v5991, 2
      %v6026 = vrot.slane %v5992, 2
      %v6027 = vsel %vm4114, %v6025, %v6026
      %v6028 = vrot.slane %v5993, 2
      %v6029 = vrot.slane %v5994, 2
      %v6030 = vsel %vm4114, %v6028, %v6029
      %v6031 = vrot.slane %v5995, 2
      %v6032 = vrot.slane %v5996, 2
      %v6033 = vsel %vm4114, %v6031, %v6032
      %v6034 = vrot.slane %v5997, 2
      %v6035 = vrot.slane %v5998, 2
      %v6036 = vsel %vm4114, %v6034, %v6035
      %v6037 = vrot.slane %v5999, 2
      %v6038 = vrot.slane %v6000, 2
      %v6039 = vsel %vm4114, %v6037, %v6038
      %v6040 = vrot.slane %v6001, 2
      %v6041 = vrot.slane %v6002, 2
      %v6042 = vsel %vm4114, %v6040, %v6041
      %v6051 = vadd.f32 %v5975, %v6021
      %v6052 = vadd.f32 %v5976, %v6024
      %v6053 = vadd.f32 %v5977, %v6027
      %v6054 = vadd.f32 %v5978, %v6030
      %v6055 = vadd.f32 %v5979, %v6033
      %v6056 = vadd.f32 %v5980, %v6036
      %v6057 = vadd.f32 %v5981, %v6039
      %v6058 = vadd.f32 %v5982, %v6042
      %v6059 = vlaneseq
      %v6060 = vshrl.u32 %v6059, 7
      %v6061 = vsub.s32 3, %v6060
      %v6062 = vrot.slane %v3646, %v6061
      %v6063 = vmul.f32 %v6051, %v6062
      %v6064 = vmul.f32 %v6052, %v6062
      %v6065 = vmul.f32 %v6053, %v6062
      %v6066 = vmul.f32 %v6054, %v6062
      %v6067 = vmul.f32 %v6055, %v6062
      %v6068 = vmul.f32 %v6056, %v6062
      %v6069 = vmul.f32 %v6057, %v6062
      %v6070 = vmul.f32 %v6058, %v6062
      %v6071 = vlaneseq
      %v6072 = vshrl.u32 %v6071, 7
      %v6073 = vsub.s32 0, %v6072
      %v6074 = vrot.slane %v3634, %v6073
      %v6075 = vmul.f32 %v6074, %v3614
      %v6076 = vmul.f32 %v6074, %v3616
      %v6077 = vmul.f32 %v6074, %v3618
      %v6078 = vmul.f32 %v6074, %v3620
      %v6079 = vmul.f32 %v6074, %v3622
      %v6080 = vmul.f32 %v6074, %v3624
      %v6081 = vmul.f32 %v6074, %v3626
      %v6082 = vmul.f32 %v6074, %v3628
      %v6083 = vlaneseq
      %v6084 = vshrl.u32 %v6083, 7
      %v6085 = vsub.s32 1, %v6084
      %v6086 = vrot.slane %v3634, %v6085
      %v6087 = vmul.f32 %v6086, %v3593
      %v6088 = vmul.f32 %v6086, %v3594
      %v6089 = vmul.f32 %v6086, %v3595
      %v6090 = vmul.f32 %v6086, %v3596
      %v6091 = vmul.f32 %v6086, %v3597
      %v6092 = vmul.f32 %v6086, %v3598
      %v6093 = vmul.f32 %v6086, %v3599
      %v6094 = vmul.f32 %v6086, %v3600
      %v6095 = vmul.f32 %v6086, %v3601
      %v6096 = vmul.f32 %v6086, %v3602
      %v6097 = vmul.f32 %v6086, %v3603
      %v6098 = vmul.f32 %v6086, %v3604
      %v6099 = vmul.f32 %v6086, %v3605
      %v6100 = vmul.f32 %v6086, %v3606
      %v6101 = vmul.f32 %v6086, %v3607
      %v6102 = vmul.f32 %v6086, %v3608
      %v6119 = vrot.slane %v6087, 1
      %v6120 = vrot.slane %v6088, 1
      %v6121 = vsel %vm4037, %v6119, %v6120
      %v6122 = vrot.slane %v6089, 1
      %v6123 = vrot.slane %v6090, 1
      %v6124 = vsel %vm4037, %v6122, %v6123
      %v6125 = vrot.slane %v6091, 1
      %v6126 = vrot.slane %v6092, 1
      %v6127 = vsel %vm4037, %v6125, %v6126
      %v6128 = vrot.slane %v6093, 1
      %v6129 = vrot.slane %v6094, 1
      %v6130 = vsel %vm4037, %v6128, %v6129
      %v6131 = vrot.slane %v6095, 1
      %v6132 = vrot.slane %v6096, 1
      %v6133 = vsel %vm4037, %v6131, %v6132
      %v6134 = vrot.slane %v6097, 1
      %v6135 = vrot.slane %v6098, 1
      %v6136 = vsel %vm4037, %v6134, %v6135
      %v6137 = vrot.slane %v6099, 1
      %v6138 = vrot.slane %v6100, 1
      %v6139 = vsel %vm4037, %v6137, %v6138
      %v6140 = vrot.slane %v6101, 1
      %v6141 = vrot.slane %v6102, 1
      %v6142 = vsel %vm4037, %v6140, %v6141
      %v6151 = vadd.f32 %v6075, %v6121
      %v6152 = vadd.f32 %v6076, %v6124
      %v6153 = vadd.f32 %v6077, %v6127
      %v6154 = vadd.f32 %v6078, %v6130
      %v6155 = vadd.f32 %v6079, %v6133
      %v6156 = vadd.f32 %v6080, %v6136
      %v6157 = vadd.f32 %v6081, %v6139
      %v6158 = vadd.f32 %v6082, %v6142
      %v6159 = vlaneseq
      %v6160 = vshrl.u32 %v6159, 7
      %v6161 = vsub.s32 2, %v6160
      %v6162 = vrot.slane %v3634, %v6161
      %v6163 = vmul.f32 %v6162, %v3614
      %v6164 = vmul.f32 %v6162, %v3615
      %v6165 = vmul.f32 %v6162, %v3616
      %v6166 = vmul.f32 %v6162, %v3617
      %v6167 = vmul.f32 %v6162, %v3618
      %v6168 = vmul.f32 %v6162, %v3619
      %v6169 = vmul.f32 %v6162, %v3620
      %v6170 = vmul.f32 %v6162, %v3621
      %v6171 = vmul.f32 %v6162, %v3622
      %v6172 = vmul.f32 %v6162, %v3623
      %v6173 = vmul.f32 %v6162, %v3624
      %v6174 = vmul.f32 %v6162, %v3625
      %v6175 = vmul.f32 %v6162, %v3626
      %v6176 = vmul.f32 %v6162, %v3627
      %v6177 = vmul.f32 %v6162, %v3628
      %v6178 = vmul.f32 %v6162, %v3629
      %v6195 = vrot.slane %v6163, 1
      %v6196 = vrot.slane %v6164, 1
      %v6197 = vsel %vm4037, %v6195, %v6196
      %v6198 = vrot.slane %v6165, 1
      %v6199 = vrot.slane %v6166, 1
      %v6200 = vsel %vm4037, %v6198, %v6199
      %v6201 = vrot.slane %v6167, 1
      %v6202 = vrot.slane %v6168, 1
      %v6203 = vsel %vm4037, %v6201, %v6202
      %v6204 = vrot.slane %v6169, 1
      %v6205 = vrot.slane %v6170, 1
      %v6206 = vsel %vm4037, %v6204, %v6205
      %v6207 = vrot.slane %v6171, 1
      %v6208 = vrot.slane %v6172, 1
      %v6209 = vsel %vm4037, %v6207, %v6208
      %v6210 = vrot.slane %v6173, 1
      %v6211 = vrot.slane %v6174, 1
      %v6212 = vsel %vm4037, %v6210, %v6211
      %v6213 = vrot.slane %v6175, 1
      %v6214 = vrot.slane %v6176, 1
      %v6215 = vsel %vm4037, %v6213, %v6214
      %v6216 = vrot.slane %v6177, 1
      %v6217 = vrot.slane %v6178, 1
      %v6218 = vsel %vm4037, %v6216, %v6217
      %v6227 = vadd.f32 %v6151, %v6197
      %v6228 = vadd.f32 %v6152, %v6200
      %v6229 = vadd.f32 %v6153, %v6203
      %v6230 = vadd.f32 %v6154, %v6206
      %v6231 = vadd.f32 %v6155, %v6209
      %v6232 = vadd.f32 %v6156, %v6212
      %v6233 = vadd.f32 %v6157, %v6215
      %v6234 = vadd.f32 %v6158, %v6218
      %v6235 = vlaneseq
      %v6236 = vshrl.u32 %v6235, 7
      %v6237 = vsub.s32 3, %v6236
      %v6238 = vrot.slane %v3634, %v6237
      %v6239 = vmul.f32 %v6238, %v3574
      %v6240 = vmul.f32 %v6238, %v3576
      %v6241 = vmul.f32 %v6238, %v3578
      %v6242 = vmul.f32 %v6238, %v3580
      %v6243 = vmul.f32 %v6238, %v3582
      %v6244 = vmul.f32 %v6238, %v3584
      %v6245 = vmul.f32 %v6238, %v3586
      %v6246 = vmul.f32 %v6238, %v3588
      %v6247 = vadd.f32 %v6227, %v6239
      %v6248 = vadd.f32 %v6228, %v6240
      %v6249 = vadd.f32 %v6229, %v6241
      %v6250 = vadd.f32 %v6230, %v6242
      %v6251 = vadd.f32 %v6231, %v6243
      %v6252 = vadd.f32 %v6232, %v6244
      %v6253 = vadd.f32 %v6233, %v6245
      %v6254 = vadd.f32 %v6234, %v6246
      %v6255 = vlaneseq
      %v6256 = vshrl.u32 %v6255, 7
      %v6257 = vsub.s32 4, %v6256
      %v6258 = vrot.slane %v3634, %v6257
      %v6259 = vmul.f32 %v6258, %v3553
      %v6260 = vmul.f32 %v6258, %v3554
      %v6261 = vmul.f32 %v6258, %v3555
      %v6262 = vmul.f32 %v6258, %v3556
      %v6263 = vmul.f32 %v6258, %v3557
      %v6264 = vmul.f32 %v6258, %v3558
      %v6265 = vmul.f32 %v6258, %v3559
      %v6266 = vmul.f32 %v6258, %v3560
      %v6267 = vmul.f32 %v6258, %v3561
      %v6268 = vmul.f32 %v6258, %v3562
      %v6269 = vmul.f32 %v6258, %v3563
      %v6270 = vmul.f32 %v6258, %v3564
      %v6271 = vmul.f32 %v6258, %v3565
      %v6272 = vmul.f32 %v6258, %v3566
      %v6273 = vmul.f32 %v6258, %v3567
      %v6274 = vmul.f32 %v6258, %v3568
      %v6291 = vrot.slane %v6259, 1
      %v6292 = vrot.slane %v6260, 1
      %v6293 = vsel %vm4037, %v6291, %v6292
      %v6294 = vrot.slane %v6261, 1
      %v6295 = vrot.slane %v6262, 1
      %v6296 = vsel %vm4037, %v6294, %v6295
      %v6297 = vrot.slane %v6263, 1
      %v6298 = vrot.slane %v6264, 1
      %v6299 = vsel %vm4037, %v6297, %v6298
      %v6300 = vrot.slane %v6265, 1
      %v6301 = vrot.slane %v6266, 1
      %v6302 = vsel %vm4037, %v6300, %v6301
      %v6303 = vrot.slane %v6267, 1
      %v6304 = vrot.slane %v6268, 1
      %v6305 = vsel %vm4037, %v6303, %v6304
      %v6306 = vrot.slane %v6269, 1
      %v6307 = vrot.slane %v6270, 1
      %v6308 = vsel %vm4037, %v6306, %v6307
      %v6309 = vrot.slane %v6271, 1
      %v6310 = vrot.slane %v6272, 1
      %v6311 = vsel %vm4037, %v6309, %v6310
      %v6312 = vrot.slane %v6273, 1
      %v6313 = vrot.slane %v6274, 1
      %v6314 = vsel %vm4037, %v6312, %v6313
      %v6323 = vadd.f32 %v6247, %v6293
      %v6324 = vadd.f32 %v6248, %v6296
      %v6325 = vadd.f32 %v6249, %v6299
      %v6326 = vadd.f32 %v6250, %v6302
      %v6327 = vadd.f32 %v6251, %v6305
      %v6328 = vadd.f32 %v6252, %v6308
      %v6329 = vadd.f32 %v6253, %v6311
      %v6330 = vadd.f32 %v6254, %v6314
      %v6331 = vlaneseq
      %v6332 = vshrl.u32 %v6331, 7
      %v6333 = vsub.s32 5, %v6332
      %v6334 = vrot.slane %v3634, %v6333
      %v6335 = vmul.f32 %v6334, %v3574
      %v6336 = vmul.f32 %v6334, %v3575
      %v6337 = vmul.f32 %v6334, %v3576
      %v6338 = vmul.f32 %v6334, %v3577
      %v6339 = vmul.f32 %v6334, %v3578
      %v6340 = vmul.f32 %v6334, %v3579
      %v6341 = vmul.f32 %v6334, %v3580
      %v6342 = vmul.f32 %v6334, %v3581
      %v6343 = vmul.f32 %v6334, %v3582
      %v6344 = vmul.f32 %v6334, %v3583
      %v6345 = vmul.f32 %v6334, %v3584
      %v6346 = vmul.f32 %v6334, %v3585
      %v6347 = vmul.f32 %v6334, %v3586
      %v6348 = vmul.f32 %v6334, %v3587
      %v6349 = vmul.f32 %v6334, %v3588
      %v6350 = vmul.f32 %v6334, %v3589
      %v6367 = vrot.slane %v6335, 1
      %v6368 = vrot.slane %v6336, 1
      %v6369 = vsel %vm4037, %v6367, %v6368
      %v6370 = vrot.slane %v6337, 1
      %v6371 = vrot.slane %v6338, 1
      %v6372 = vsel %vm4037, %v6370, %v6371
      %v6373 = vrot.slane %v6339, 1
      %v6374 = vrot.slane %v6340, 1
      %v6375 = vsel %vm4037, %v6373, %v6374
      %v6376 = vrot.slane %v6341, 1
      %v6377 = vrot.slane %v6342, 1
      %v6378 = vsel %vm4037, %v6376, %v6377
      %v6379 = vrot.slane %v6343, 1
      %v6380 = vrot.slane %v6344, 1
      %v6381 = vsel %vm4037, %v6379, %v6380
      %v6382 = vrot.slane %v6345, 1
      %v6383 = vrot.slane %v6346, 1
      %v6384 = vsel %vm4037, %v6382, %v6383
      %v6385 = vrot.slane %v6347, 1
      %v6386 = vrot.slane %v6348, 1
      %v6387 = vsel %vm4037, %v6385, %v6386
      %v6388 = vrot.slane %v6349, 1
      %v6389 = vrot.slane %v6350, 1
      %v6390 = vsel %vm4037, %v6388, %v6389
      %v6399 = vadd.f32 %v6323, %v6369
      %v6400 = vadd.f32 %v6324, %v6372
      %v6401 = vadd.f32 %v6325, %v6375
      %v6402 = vadd.f32 %v6326, %v6378
      %v6403 = vadd.f32 %v6327, %v6381
      %v6404 = vadd.f32 %v6328, %v6384
      %v6405 = vadd.f32 %v6329, %v6387
      %v6406 = vadd.f32 %v6330, %v6390
      %v6407 = vlaneseq
      %v6408 = vshrl.u32 %v6407, 7
      %v6409 = vsub.s32 6, %v6408
      %v6410 = vrot.slane %v3634, %v6409
      %v6411 = vmul.f32 %v6410, %v3616
      %v6412 = vmul.f32 %v6410, %v3618
      %v6413 = vmul.f32 %v6410, %v3620
      %v6414 = vmul.f32 %v6410, %v3622
      %v6415 = vmul.f32 %v6410, %v3624
      %v6416 = vmul.f32 %v6410, %v3626
      %v6417 = vmul.f32 %v6410, %v3628
      %v6418 = vmul.f32 %v6410, %v3630
      %v6419 = vadd.f32 %v6399, %v6411
      %v6420 = vadd.f32 %v6400, %v6412
      %v6421 = vadd.f32 %v6401, %v6413
      %v6422 = vadd.f32 %v6402, %v6414
      %v6423 = vadd.f32 %v6403, %v6415
      %v6424 = vadd.f32 %v6404, %v6416
      %v6425 = vadd.f32 %v6405, %v6417
      %v6426 = vadd.f32 %v6406, %v6418
      %v6427 = vlaneseq
      %v6428 = vshrl.u32 %v6427, 7
      %v6429 = vsub.s32 7, %v6428
      %v6430 = vrot.slane %v3634, %v6429
      %v6431 = vmul.f32 %v6430, %v3595
      %v6432 = vmul.f32 %v6430, %v3596
      %v6433 = vmul.f32 %v6430, %v3597
      %v6434 = vmul.f32 %v6430, %v3598
      %v6435 = vmul.f32 %v6430, %v3599
      %v6436 = vmul.f32 %v6430, %v3600
      %v6437 = vmul.f32 %v6430, %v3601
      %v6438 = vmul.f32 %v6430, %v3602
      %v6439 = vmul.f32 %v6430, %v3603
      %v6440 = vmul.f32 %v6430, %v3604
      %v6441 = vmul.f32 %v6430, %v3605
      %v6442 = vmul.f32 %v6430, %v3606
      %v6443 = vmul.f32 %v6430, %v3607
      %v6444 = vmul.f32 %v6430, %v3608
      %v6445 = vmul.f32 %v6430, %v3609
      %v6446 = vmul.f32 %v6430, %v3610
      %v6463 = vrot.slane %v6431, 1
      %v6464 = vrot.slane %v6432, 1
      %v6465 = vsel %vm4037, %v6463, %v6464
      %v6466 = vrot.slane %v6433, 1
      %v6467 = vrot.slane %v6434, 1
      %v6468 = vsel %vm4037, %v6466, %v6467
      %v6469 = vrot.slane %v6435, 1
      %v6470 = vrot.slane %v6436, 1
      %v6471 = vsel %vm4037, %v6469, %v6470
      %v6472 = vrot.slane %v6437, 1
      %v6473 = vrot.slane %v6438, 1
      %v6474 = vsel %vm4037, %v6472, %v6473
      %v6475 = vrot.slane %v6439, 1
      %v6476 = vrot.slane %v6440, 1
      %v6477 = vsel %vm4037, %v6475, %v6476
      %v6478 = vrot.slane %v6441, 1
      %v6479 = vrot.slane %v6442, 1
      %v6480 = vsel %vm4037, %v6478, %v6479
      %v6481 = vrot.slane %v6443, 1
      %v6482 = vrot.slane %v6444, 1
      %v6483 = vsel %vm4037, %v6481, %v6482
      %v6484 = vrot.slane %v6445, 1
      %v6485 = vrot.slane %v6446, 1
      %v6486 = vsel %vm4037, %v6484, %v6485
      %v6495 = vadd.f32 %v6419, %v6465
      %v6496 = vadd.f32 %v6420, %v6468
      %v6497 = vadd.f32 %v6421, %v6471
      %v6498 = vadd.f32 %v6422, %v6474
      %v6499 = vadd.f32 %v6423, %v6477
      %v6500 = vadd.f32 %v6424, %v6480
      %v6501 = vadd.f32 %v6425, %v6483
      %v6502 = vadd.f32 %v6426, %v6486
      %v6503 = vlaneseq
      %v6504 = vshrl.u32 %v6503, 7
      %v6505 = vsub.s32 0, %v6504
      %v6506 = vrot.slane %v3635, %v6505
      %v6507 = vmul.f32 %v6506, %v3616
      %v6508 = vmul.f32 %v6506, %v3617
      %v6509 = vmul.f32 %v6506, %v3618
      %v6510 = vmul.f32 %v6506, %v3619
      %v6511 = vmul.f32 %v6506, %v3620
      %v6512 = vmul.f32 %v6506, %v3621
      %v6513 = vmul.f32 %v6506, %v3622
      %v6514 = vmul.f32 %v6506, %v3623
      %v6515 = vmul.f32 %v6506, %v3624
      %v6516 = vmul.f32 %v6506, %v3625
      %v6517 = vmul.f32 %v6506, %v3626
      %v6518 = vmul.f32 %v6506, %v3627
      %v6519 = vmul.f32 %v6506, %v3628
      %v6520 = vmul.f32 %v6506, %v3629
      %v6521 = vmul.f32 %v6506, %v3630
      %v6522 = vmul.f32 %v6506, %v3631
      %v6539 = vrot.slane %v6507, 1
      %v6540 = vrot.slane %v6508, 1
      %v6541 = vsel %vm4037, %v6539, %v6540
      %v6542 = vrot.slane %v6509, 1
      %v6543 = vrot.slane %v6510, 1
      %v6544 = vsel %vm4037, %v6542, %v6543
      %v6545 = vrot.slane %v6511, 1
      %v6546 = vrot.slane %v6512, 1
      %v6547 = vsel %vm4037, %v6545, %v6546
      %v6548 = vrot.slane %v6513, 1
      %v6549 = vrot.slane %v6514, 1
      %v6550 = vsel %vm4037, %v6548, %v6549
      %v6551 = vrot.slane %v6515, 1
      %v6552 = vrot.slane %v6516, 1
      %v6553 = vsel %vm4037, %v6551, %v6552
      %v6554 = vrot.slane %v6517, 1
      %v6555 = vrot.slane %v6518, 1
      %v6556 = vsel %vm4037, %v6554, %v6555
      %v6557 = vrot.slane %v6519, 1
      %v6558 = vrot.slane %v6520, 1
      %v6559 = vsel %vm4037, %v6557, %v6558
      %v6560 = vrot.slane %v6521, 1
      %v6561 = vrot.slane %v6522, 1
      %v6562 = vsel %vm4037, %v6560, %v6561
      %v6571 = vadd.f32 %v6495, %v6541
      %v6572 = vadd.f32 %v6496, %v6544
      %v6573 = vadd.f32 %v6497, %v6547
      %v6574 = vadd.f32 %v6498, %v6550
      %v6575 = vadd.f32 %v6499, %v6553
      %v6576 = vadd.f32 %v6500, %v6556
      %v6577 = vadd.f32 %v6501, %v6559
      %v6578 = vadd.f32 %v6502, %v6562
      %v6580 = vlaneseq
      %v6581 = vshrl.u32 %v6580, 7
      %v6582 = vsub.s32 0, %v6581
      %v6583 = vrot.slane %v3636, %v6582
      %v6585 = vadd.f32 %v6571, %v6583
      %v6586 = vadd.f32 %v6572, %v6583
      %v6587 = vadd.f32 %v6573, %v6583
      %v6588 = vadd.f32 %v6574, %v6583
      %v6589 = vadd.f32 %v6575, %v6583
      %v6590 = vadd.f32 %v6576, %v6583
      %v6591 = vadd.f32 %v6577, %v6583
      %v6592 = vadd.f32 %v6578, %v6583
      %v6594 = vlaneseq
      %v6595 = vshrl.u32 %v6594, 7
      %v6596 = vsub.s32 0, %v6595
      %v6597 = vrot.slane %v3637, %v6596
      %v6599 = vmul.f32 %v6585, %v6597
      %v6600 = vmul.f32 %v6586, %v6597
      %v6601 = vmul.f32 %v6587, %v6597
      %v6602 = vmul.f32 %v6588, %v6597
      %v6603 = vmul.f32 %v6589, %v6597
      %v6604 = vmul.f32 %v6590, %v6597
      %v6605 = vmul.f32 %v6591, %v6597
      %v6606 = vmul.f32 %v6592, %v6597
      %v6607 = vmul.f32 %v4503, 0.49999997
      %v6608 = vmul.f32 %v4504, 0.49999997
      %v6609 = vmul.f32 %v4505, 0.49999997
      %v6610 = vmul.f32 %v4506, 0.49999997
      %v6611 = vmul.f32 %v4507, 0.49999997
      %v6612 = vmul.f32 %v4508, 0.49999997
      %v6613 = vmul.f32 %v4509, 0.49999997
      %v6614 = vmul.f32 %v4510, 0.49999997
      %v6615 = vmul.f32 %v5023, 0.49999997
      %v6616 = vmul.f32 %v5024, 0.49999997
      %v6617 = vmul.f32 %v5025, 0.49999997
      %v6618 = vmul.f32 %v5026, 0.49999997
      %v6619 = vmul.f32 %v5027, 0.49999997
      %v6620 = vmul.f32 %v5028, 0.49999997
      %v6621 = vmul.f32 %v5029, 0.49999997
      %v6622 = vmul.f32 %v5030, 0.49999997
      %v6623 = vadd.f32 %v6607, %v6615
      %v6624 = vadd.f32 %v6608, %v6616
      %v6625 = vadd.f32 %v6609, %v6617
      %v6626 = vadd.f32 %v6610, %v6618
      %v6627 = vadd.f32 %v6611, %v6619
      %v6628 = vadd.f32 %v6612, %v6620
      %v6629 = vadd.f32 %v6613, %v6621
      %v6630 = vadd.f32 %v6614, %v6622
      %v6631 = vmul.f32 %v5543, 0.49999997
      %v6632 = vmul.f32 %v5544, 0.49999997
      %v6633 = vmul.f32 %v5545, 0.49999997
      %v6634 = vmul.f32 %v5546, 0.49999997
      %v6635 = vmul.f32 %v5547, 0.49999997
      %v6636 = vmul.f32 %v5548, 0.49999997
      %v6637 = vmul.f32 %v5549, 0.49999997
      %v6638 = vmul.f32 %v5550, 0.49999997
      %v6639 = vadd.f32 %v6623, %v6631
      %v6640 = vadd.f32 %v6624, %v6632
      %v6641 = vadd.f32 %v6625, %v6633
      %v6642 = vadd.f32 %v6626, %v6634
      %v6643 = vadd.f32 %v6627, %v6635
      %v6644 = vadd.f32 %v6628, %v6636
      %v6645 = vadd.f32 %v6629, %v6637
      %v6646 = vadd.f32 %v6630, %v6638
      %v6647 = vmul.f32 %v6063, 0.49999997
      %v6648 = vmul.f32 %v6064, 0.49999997
      %v6649 = vmul.f32 %v6065, 0.49999997
      %v6650 = vmul.f32 %v6066, 0.49999997
      %v6651 = vmul.f32 %v6067, 0.49999997
      %v6652 = vmul.f32 %v6068, 0.49999997
      %v6653 = vmul.f32 %v6069, 0.49999997
      %v6654 = vmul.f32 %v6070, 0.49999997
      %v6655 = vadd.f32 %v6639, %v6647
      %v6656 = vadd.f32 %v6640, %v6648
      %v6657 = vadd.f32 %v6641, %v6649
      %v6658 = vadd.f32 %v6642, %v6650
      %v6659 = vadd.f32 %v6643, %v6651
      %v6660 = vadd.f32 %v6644, %v6652
      %v6661 = vadd.f32 %v6645, %v6653
      %v6662 = vadd.f32 %v6646, %v6654
      %v6663 = vadd.f32 %v6599, %v6655
      %v6664 = vadd.f32 %v6600, %v6656
      %v6665 = vadd.f32 %v6601, %v6657
      %v6666 = vadd.f32 %v6602, %v6658
      %v6667 = vadd.f32 %v6603, %v6659
      %v6668 = vadd.f32 %v6604, %v6660
      %v6669 = vadd.f32 %v6605, %v6661
      %v6670 = vadd.f32 %v6606, %v6662
      %v6672 = vlaneseq
      %v6673 = vshrl.u32 %v6672, 7
      %v6674 = vsub.s32 0, %v6673
      %v6675 = vrot.slane %v3647, %v6674
      %v6677 = vmul.f32 %v6663, %v6675
      %v6678 = vmul.f32 %v6664, %v6675
      %v6679 = vmul.f32 %v6665, %v6675
      %v6680 = vmul.f32 %v6666, %v6675
      %v6681 = vmul.f32 %v6667, %v6675
      %v6682 = vmul.f32 %v6668, %v6675
      %v6683 = vmul.f32 %v6669, %v6675
      %v6684 = vmul.f32 %v6670, %v6675
      %v6686 = vlaneseq
      %v6687 = vshrl.u32 %v6686, 7
      %v6688 = vsub.s32 0, %v6687
      %v6689 = vrot.slane %v3648, %v6688
      %v6691 = vadd.f32 %v6677, %v6689
      %v6692 = vadd.f32 %v6678, %v6689
      %v6693 = vadd.f32 %v6679, %v6689
      %v6694 = vadd.f32 %v6680, %v6689
      %v6695 = vadd.f32 %v6681, %v6689
      %v6696 = vadd.f32 %v6682, %v6689
      %v6697 = vadd.f32 %v6683, %v6689
      %v6698 = vadd.f32 %v6684, %v6689
      %v6699 = vadd.f32 %v6691, %v515
      %v6700 = vadd.f32 %v6692, %v516
      %v6701 = vadd.f32 %v6693, %v517
      %v6702 = vadd.f32 %v6694, %v518
      %v6703 = vadd.f32 %v6695, %v519
      %v6704 = vadd.f32 %v6696, %v520
      %v6705 = vadd.f32 %v6697, %v521
      %v6706 = vadd.f32 %v6698, %v522
      %v6707 = vmax.f32 %v6699, 0.0
      %v6708 = vmax.f32 %v6700, 0.0
      %v6709 = vmax.f32 %v6701, 0.0
      %v6710 = vmax.f32 %v6702, 0.0
      %v6711 = vmax.f32 %v6703, 0.0
      %v6712 = vmax.f32 %v6704, 0.0
      %v6713 = vmax.f32 %v6705, 0.0
      %v6714 = vmax.f32 %v6706, 0.0
      %6715 = vst.msk [vmem:[%s366] sm:$0xff] %vm369, %v6707
      %6716 = vst.msk [vmem:[%s366 + $0x8] sm:$0xff] %vm369, %v6708
      %6717 = vst.msk [vmem:[%s366 + $0x10] sm:$0xff] %vm369, %v6709
      %6718 = vst.msk [vmem:[%s366 + $0x18] sm:$0xff] %vm369, %v6710
      %6719 = vst.msk [vmem:[%s366 + $0x20] sm:$0xff] %vm369, %v6711
      %6720 = vst.msk [vmem:[%s366 + $0x28] sm:$0xff] %vm369, %v6712
      %6721 = vst.msk [vmem:[%s366 + $0x30] sm:$0xff] %vm369, %v6713
      %6722 = vst.msk [vmem:[%s366 + $0x38] sm:$0xff] %vm369, %v6714
      %v6723 = vmul.f32 %v6074, %v3593
      %v6724 = vmul.f32 %v6074, %v3594
      %v6725 = vmul.f32 %v6074, %v3595
      %v6726 = vmul.f32 %v6074, %v3596
      %v6727 = vmul.f32 %v6074, %v3597
      %v6728 = vmul.f32 %v6074, %v3598
      %v6729 = vmul.f32 %v6074, %v3599
      %v6730 = vmul.f32 %v6074, %v3600
      %v6731 = vmul.f32 %v6074, %v3601
      %v6732 = vmul.f32 %v6074, %v3602
      %v6733 = vmul.f32 %v6074, %v3603
      %v6734 = vmul.f32 %v6074, %v3604
      %v6735 = vmul.f32 %v6074, %v3605
      %v6736 = vmul.f32 %v6074, %v3606
      %v6737 = vmul.f32 %v6074, %v3607
      %v6738 = vmul.f32 %v6074, %v3608
      %v6739 = vmul.f32 %v6086, %v3614
      %v6740 = vmul.f32 %v6086, %v3615
      %v6741 = vmul.f32 %v6086, %v3616
      %v6742 = vmul.f32 %v6086, %v3617
      %v6743 = vmul.f32 %v6086, %v3618
      %v6744 = vmul.f32 %v6086, %v3619
      %v6745 = vmul.f32 %v6086, %v3620
      %v6746 = vmul.f32 %v6086, %v3621
      %v6747 = vmul.f32 %v6086, %v3622
      %v6748 = vmul.f32 %v6086, %v3623
      %v6749 = vmul.f32 %v6086, %v3624
      %v6750 = vmul.f32 %v6086, %v3625
      %v6751 = vmul.f32 %v6086, %v3626
      %v6752 = vmul.f32 %v6086, %v3627
      %v6753 = vmul.f32 %v6086, %v3628
      %v6754 = vmul.f32 %v6086, %v3629
      %v6755 = vadd.f32 %v6723, %v6739
      %v6756 = vadd.f32 %v6724, %v6740
      %v6757 = vadd.f32 %v6725, %v6741
      %v6758 = vadd.f32 %v6726, %v6742
      %v6759 = vadd.f32 %v6727, %v6743
      %v6760 = vadd.f32 %v6728, %v6744
      %v6761 = vadd.f32 %v6729, %v6745
      %v6762 = vadd.f32 %v6730, %v6746
      %v6763 = vadd.f32 %v6731, %v6747
      %v6764 = vadd.f32 %v6732, %v6748
      %v6765 = vadd.f32 %v6733, %v6749
      %v6766 = vadd.f32 %v6734, %v6750
      %v6767 = vadd.f32 %v6735, %v6751
      %v6768 = vadd.f32 %v6736, %v6752
      %v6769 = vadd.f32 %v6737, %v6753
      %v6770 = vadd.f32 %v6738, %v6754
      %v6771 = vmul.f32 %v6162, %v3593
      %v6772 = vmul.f32 %v6162, %v3594
      %v6773 = vmul.f32 %v6162, %v3595
      %v6774 = vmul.f32 %v6162, %v3596
      %v6775 = vmul.f32 %v6162, %v3597
      %v6776 = vmul.f32 %v6162, %v3598
      %v6777 = vmul.f32 %v6162, %v3599
      %v6778 = vmul.f32 %v6162, %v3600
      %v6779 = vmul.f32 %v6162, %v3601
      %v6780 = vmul.f32 %v6162, %v3602
      %v6781 = vmul.f32 %v6162, %v3603
      %v6782 = vmul.f32 %v6162, %v3604
      %v6783 = vmul.f32 %v6162, %v3605
      %v6784 = vmul.f32 %v6162, %v3606
      %v6785 = vmul.f32 %v6162, %v3607
      %v6786 = vmul.f32 %v6162, %v3608
      %v6803 = vrot.slane %v6771, 1
      %v6804 = vrot.slane %v6772, 1
      %v6805 = vsel %vm4037, %v6803, %v6804
      %v6806 = vrot.slane %v6773, 1
      %v6807 = vrot.slane %v6774, 1
      %v6808 = vsel %vm4037, %v6806, %v6807
      %v6809 = vrot.slane %v6775, 1
      %v6810 = vrot.slane %v6776, 1
      %v6811 = vsel %vm4037, %v6809, %v6810
      %v6812 = vrot.slane %v6777, 1
      %v6813 = vrot.slane %v6778, 1
      %v6814 = vsel %vm4037, %v6812, %v6813
      %v6815 = vrot.slane %v6779, 1
      %v6816 = vrot.slane %v6780, 1
      %v6817 = vsel %vm4037, %v6815, %v6816
      %v6818 = vrot.slane %v6781, 1
      %v6819 = vrot.slane %v6782, 1
      %v6820 = vsel %vm4037, %v6818, %v6819
      %v6821 = vrot.slane %v6783, 1
      %v6822 = vrot.slane %v6784, 1
      %v6823 = vsel %vm4037, %v6821, %v6822
      %v6824 = vrot.slane %v6785, 1
      %v6825 = vrot.slane %v6786, 1
      %v6826 = vsel %vm4037, %v6824, %v6825
      %v6843 = vadd.f32 %v6755, %v6805
      %v6844 = vadd.f32 %v6756, %v6804
      %v6845 = vadd.f32 %v6757, %v6808
      %v6846 = vadd.f32 %v6758, %v6807
      %v6847 = vadd.f32 %v6759, %v6811
      %v6848 = vadd.f32 %v6760, %v6810
      %v6849 = vadd.f32 %v6761, %v6814
      %v6850 = vadd.f32 %v6762, %v6813
      %v6851 = vadd.f32 %v6763, %v6817
      %v6852 = vadd.f32 %v6764, %v6816
      %v6853 = vadd.f32 %v6765, %v6820
      %v6854 = vadd.f32 %v6766, %v6819
      %v6855 = vadd.f32 %v6767, %v6823
      %v6856 = vadd.f32 %v6768, %v6822
      %v6857 = vadd.f32 %v6769, %v6826
      %v6858 = vadd.f32 %v6770, %v6825
      %v6859 = vmul.f32 %v6238, %v3553
      %v6860 = vmul.f32 %v6238, %v3554
      %v6861 = vmul.f32 %v6238, %v3555
      %v6862 = vmul.f32 %v6238, %v3556
      %v6863 = vmul.f32 %v6238, %v3557
      %v6864 = vmul.f32 %v6238, %v3558
      %v6865 = vmul.f32 %v6238, %v3559
      %v6866 = vmul.f32 %v6238, %v3560
      %v6867 = vmul.f32 %v6238, %v3561
      %v6868 = vmul.f32 %v6238, %v3562
      %v6869 = vmul.f32 %v6238, %v3563
      %v6870 = vmul.f32 %v6238, %v3564
      %v6871 = vmul.f32 %v6238, %v3565
      %v6872 = vmul.f32 %v6238, %v3566
      %v6873 = vmul.f32 %v6238, %v3567
      %v6874 = vmul.f32 %v6238, %v3568
      %v6875 = vadd.f32 %v6843, %v6859
      %v6876 = vadd.f32 %v6844, %v6860
      %v6877 = vadd.f32 %v6845, %v6861
      %v6878 = vadd.f32 %v6846, %v6862
      %v6879 = vadd.f32 %v6847, %v6863
      %v6880 = vadd.f32 %v6848, %v6864
      %v6881 = vadd.f32 %v6849, %v6865
      %v6882 = vadd.f32 %v6850, %v6866
      %v6883 = vadd.f32 %v6851, %v6867
      %v6884 = vadd.f32 %v6852, %v6868
      %v6885 = vadd.f32 %v6853, %v6869
      %v6886 = vadd.f32 %v6854, %v6870
      %v6887 = vadd.f32 %v6855, %v6871
      %v6888 = vadd.f32 %v6856, %v6872
      %v6889 = vadd.f32 %v6857, %v6873
      %v6890 = vadd.f32 %v6858, %v6874
      %v6891 = vmul.f32 %v6258, %v3574
      %v6892 = vmul.f32 %v6258, %v3575
      %v6893 = vmul.f32 %v6258, %v3576
      %v6894 = vmul.f32 %v6258, %v3577
      %v6895 = vmul.f32 %v6258, %v3578
      %v6896 = vmul.f32 %v6258, %v3579
      %v6897 = vmul.f32 %v6258, %v3580
      %v6898 = vmul.f32 %v6258, %v3581
      %v6899 = vmul.f32 %v6258, %v3582
      %v6900 = vmul.f32 %v6258, %v3583
      %v6901 = vmul.f32 %v6258, %v3584
      %v6902 = vmul.f32 %v6258, %v3585
      %v6903 = vmul.f32 %v6258, %v3586
      %v6904 = vmul.f32 %v6258, %v3587
      %v6905 = vmul.f32 %v6258, %v3588
      %v6906 = vmul.f32 %v6258, %v3589
      %v6907 = vadd.f32 %v6875, %v6891
      %v6908 = vadd.f32 %v6876, %v6892
      %v6909 = vadd.f32 %v6877, %v6893
      %v6910 = vadd.f32 %v6878, %v6894
      %v6911 = vadd.f32 %v6879, %v6895
      %v6912 = vadd.f32 %v6880, %v6896
      %v6913 = vadd.f32 %v6881, %v6897
      %v6914 = vadd.f32 %v6882, %v6898
      %v6915 = vadd.f32 %v6883, %v6899
      %v6916 = vadd.f32 %v6884, %v6900
      %v6917 = vadd.f32 %v6885, %v6901
      %v6918 = vadd.f32 %v6886, %v6902
      %v6919 = vadd.f32 %v6887, %v6903
      %v6920 = vadd.f32 %v6888, %v6904
      %v6921 = vadd.f32 %v6889, %v6905
      %v6922 = vadd.f32 %v6890, %v6906
      %v6923 = vmul.f32 %v6334, %v3553
      %v6924 = vmul.f32 %v6334, %v3554
      %v6925 = vmul.f32 %v6334, %v3555
      %v6926 = vmul.f32 %v6334, %v3556
      %v6927 = vmul.f32 %v6334, %v3557
      %v6928 = vmul.f32 %v6334, %v3558
      %v6929 = vmul.f32 %v6334, %v3559
      %v6930 = vmul.f32 %v6334, %v3560
      %v6931 = vmul.f32 %v6334, %v3561
      %v6932 = vmul.f32 %v6334, %v3562
      %v6933 = vmul.f32 %v6334, %v3563
      %v6934 = vmul.f32 %v6334, %v3564
      %v6935 = vmul.f32 %v6334, %v3565
      %v6936 = vmul.f32 %v6334, %v3566
      %v6937 = vmul.f32 %v6334, %v3567
      %v6938 = vmul.f32 %v6334, %v3568
      %v6955 = vrot.slane %v6923, 1
      %v6956 = vrot.slane %v6924, 1
      %v6957 = vsel %vm4037, %v6955, %v6956
      %v6958 = vrot.slane %v6925, 1
      %v6959 = vrot.slane %v6926, 1
      %v6960 = vsel %vm4037, %v6958, %v6959
      %v6961 = vrot.slane %v6927, 1
      %v6962 = vrot.slane %v6928, 1
      %v6963 = vsel %vm4037, %v6961, %v6962
      %v6964 = vrot.slane %v6929, 1
      %v6965 = vrot.slane %v6930, 1
      %v6966 = vsel %vm4037, %v6964, %v6965
      %v6967 = vrot.slane %v6931, 1
      %v6968 = vrot.slane %v6932, 1
      %v6969 = vsel %vm4037, %v6967, %v6968
      %v6970 = vrot.slane %v6933, 1
      %v6971 = vrot.slane %v6934, 1
      %v6972 = vsel %vm4037, %v6970, %v6971
      %v6973 = vrot.slane %v6935, 1
      %v6974 = vrot.slane %v6936, 1
      %v6975 = vsel %vm4037, %v6973, %v6974
      %v6976 = vrot.slane %v6937, 1
      %v6977 = vrot.slane %v6938, 1
      %v6978 = vsel %vm4037, %v6976, %v6977
      %v6995 = vadd.f32 %v6907, %v6957
      %v6996 = vadd.f32 %v6908, %v6956
      %v6997 = vadd.f32 %v6909, %v6960
      %v6998 = vadd.f32 %v6910, %v6959
      %v6999 = vadd.f32 %v6911, %v6963
      %v7000 = vadd.f32 %v6912, %v6962
      %v7001 = vadd.f32 %v6913, %v6966
      %v7002 = vadd.f32 %v6914, %v6965
      %v7003 = vadd.f32 %v6915, %v6969
      %v7004 = vadd.f32 %v6916, %v6968
      %v7005 = vadd.f32 %v6917, %v6972
      %v7006 = vadd.f32 %v6918, %v6971
      %v7007 = vadd.f32 %v6919, %v6975
      %v7008 = vadd.f32 %v6920, %v6974
      %v7009 = vadd.f32 %v6921, %v6978
      %v7010 = vadd.f32 %v6922, %v6977
      %v7011 = vmul.f32 %v6410, %v3595
      %v7012 = vmul.f32 %v6410, %v3596
      %v7013 = vmul.f32 %v6410, %v3597
      %v7014 = vmul.f32 %v6410, %v3598
      %v7015 = vmul.f32 %v6410, %v3599
      %v7016 = vmul.f32 %v6410, %v3600
      %v7017 = vmul.f32 %v6410, %v3601
      %v7018 = vmul.f32 %v6410, %v3602
      %v7019 = vmul.f32 %v6410, %v3603
      %v7020 = vmul.f32 %v6410, %v3604
      %v7021 = vmul.f32 %v6410, %v3605
      %v7022 = vmul.f32 %v6410, %v3606
      %v7023 = vmul.f32 %v6410, %v3607
      %v7024 = vmul.f32 %v6410, %v3608
      %v7025 = vmul.f32 %v6410, %v3609
      %v7026 = vmul.f32 %v6410, %v3610
      %v7027 = vadd.f32 %v6995, %v7011
      %v7028 = vadd.f32 %v6996, %v7012
      %v7029 = vadd.f32 %v6997, %v7013
      %v7030 = vadd.f32 %v6998, %v7014
      %v7031 = vadd.f32 %v6999, %v7015
      %v7032 = vadd.f32 %v7000, %v7016
      %v7033 = vadd.f32 %v7001, %v7017
      %v7034 = vadd.f32 %v7002, %v7018
      %v7035 = vadd.f32 %v7003, %v7019
      %v7036 = vadd.f32 %v7004, %v7020
      %v7037 = vadd.f32 %v7005, %v7021
      %v7038 = vadd.f32 %v7006, %v7022
      %v7039 = vadd.f32 %v7007, %v7023
      %v7040 = vadd.f32 %v7008, %v7024
      %v7041 = vadd.f32 %v7009, %v7025
      %v7042 = vadd.f32 %v7010, %v7026
      %v7043 = vmul.f32 %v6430, %v3616
      %v7044 = vmul.f32 %v6430, %v3617
      %v7045 = vmul.f32 %v6430, %v3618
      %v7046 = vmul.f32 %v6430, %v3619
      %v7047 = vmul.f32 %v6430, %v3620
      %v7048 = vmul.f32 %v6430, %v3621
      %v7049 = vmul.f32 %v6430, %v3622
      %v7050 = vmul.f32 %v6430, %v3623
      %v7051 = vmul.f32 %v6430, %v3624
      %v7052 = vmul.f32 %v6430, %v3625
      %v7053 = vmul.f32 %v6430, %v3626
      %v7054 = vmul.f32 %v6430, %v3627
      %v7055 = vmul.f32 %v6430, %v3628
      %v7056 = vmul.f32 %v6430, %v3629
      %v7057 = vmul.f32 %v6430, %v3630
      %v7058 = vmul.f32 %v6430, %v3631
      %v7059 = vadd.f32 %v7027, %v7043
      %v7060 = vadd.f32 %v7028, %v7044
      %v7061 = vadd.f32 %v7029, %v7045
      %v7062 = vadd.f32 %v7030, %v7046
      %v7063 = vadd.f32 %v7031, %v7047
      %v7064 = vadd.f32 %v7032, %v7048
      %v7065 = vadd.f32 %v7033, %v7049
      %v7066 = vadd.f32 %v7034, %v7050
      %v7067 = vadd.f32 %v7035, %v7051
      %v7068 = vadd.f32 %v7036, %v7052
      %v7069 = vadd.f32 %v7037, %v7053
      %v7070 = vadd.f32 %v7038, %v7054
      %v7071 = vadd.f32 %v7039, %v7055
      %v7072 = vadd.f32 %v7040, %v7056
      %v7073 = vadd.f32 %v7041, %v7057
      %v7074 = vadd.f32 %v7042, %v7058
      %v7075 = vmul.f32 %v6506, %v3595
      %v7076 = vmul.f32 %v6506, %v3596
      %v7077 = vmul.f32 %v6506, %v3597
      %v7078 = vmul.f32 %v6506, %v3598
      %v7079 = vmul.f32 %v6506, %v3599
      %v7080 = vmul.f32 %v6506, %v3600
      %v7081 = vmul.f32 %v6506, %v3601
      %v7082 = vmul.f32 %v6506, %v3602
      %v7083 = vmul.f32 %v6506, %v3603
      %v7084 = vmul.f32 %v6506, %v3604
      %v7085 = vmul.f32 %v6506, %v3605
      %v7086 = vmul.f32 %v6506, %v3606
      %v7087 = vmul.f32 %v6506, %v3607
      %v7088 = vmul.f32 %v6506, %v3608
      %v7089 = vmul.f32 %v6506, %v3609
      %v7090 = vmul.f32 %v6506, %v3610
      %v7107 = vrot.slane %v7075, 1
      %v7108 = vrot.slane %v7076, 1
      %v7109 = vsel %vm4037, %v7107, %v7108
      %v7110 = vrot.slane %v7077, 1
      %v7111 = vrot.slane %v7078, 1
      %v7112 = vsel %vm4037, %v7110, %v7111
      %v7113 = vrot.slane %v7079, 1
      %v7114 = vrot.slane %v7080, 1
      %v7115 = vsel %vm4037, %v7113, %v7114
      %v7116 = vrot.slane %v7081, 1
      %v7117 = vrot.slane %v7082, 1
      %v7118 = vsel %vm4037, %v7116, %v7117
      %v7119 = vrot.slane %v7083, 1
      %v7120 = vrot.slane %v7084, 1
      %v7121 = vsel %vm4037, %v7119, %v7120
      %v7122 = vrot.slane %v7085, 1
      %v7123 = vrot.slane %v7086, 1
      %v7124 = vsel %vm4037, %v7122, %v7123
      %v7125 = vrot.slane %v7087, 1
      %v7126 = vrot.slane %v7088, 1
      %v7127 = vsel %vm4037, %v7125, %v7126
      %v7128 = vrot.slane %v7089, 1
      %v7129 = vrot.slane %v7090, 1
      %v7130 = vsel %vm4037, %v7128, %v7129
      %v7147 = vadd.f32 %v7059, %v7109
      %v7148 = vadd.f32 %v7060, %v7108
      %v7149 = vadd.f32 %v7061, %v7112
      %v7150 = vadd.f32 %v7062, %v7111
      %v7151 = vadd.f32 %v7063, %v7115
      %v7152 = vadd.f32 %v7064, %v7114
      %v7153 = vadd.f32 %v7065, %v7118
      %v7154 = vadd.f32 %v7066, %v7117
      %v7155 = vadd.f32 %v7067, %v7121
      %v7156 = vadd.f32 %v7068, %v7120
      %v7157 = vadd.f32 %v7069, %v7124
      %v7158 = vadd.f32 %v7070, %v7123
      %v7159 = vadd.f32 %v7071, %v7127
      %v7160 = vadd.f32 %v7072, %v7126
      %v7161 = vadd.f32 %v7073, %v7130
      %v7162 = vadd.f32 %v7074, %v7129
      %v7163 = vadd.f32 %v7147, %v6583
      %v7164 = vadd.f32 %v7148, %v6583
      %v7165 = vadd.f32 %v7149, %v6583
      %v7166 = vadd.f32 %v7150, %v6583
      %v7167 = vadd.f32 %v7151, %v6583
      %v7168 = vadd.f32 %v7152, %v6583
      %v7169 = vadd.f32 %v7153, %v6583
      %v7170 = vadd.f32 %v7154, %v6583
      %v7171 = vadd.f32 %v7155, %v6583
      %v7172 = vadd.f32 %v7156, %v6583
      %v7173 = vadd.f32 %v7157, %v6583
      %v7174 = vadd.f32 %v7158, %v6583
      %v7175 = vadd.f32 %v7159, %v6583
      %v7176 = vadd.f32 %v7160, %v6583
      %v7177 = vadd.f32 %v7161, %v6583
      %v7178 = vadd.f32 %v7162, %v6583
      %v7179 = vmul.f32 %v7163, %v6597
      %v7180 = vmul.f32 %v7164, %v6597
      %v7181 = vmul.f32 %v7165, %v6597
      %v7182 = vmul.f32 %v7166, %v6597
      %v7183 = vmul.f32 %v7167, %v6597
      %v7184 = vmul.f32 %v7168, %v6597
      %v7185 = vmul.f32 %v7169, %v6597
      %v7186 = vmul.f32 %v7170, %v6597
      %v7187 = vmul.f32 %v7171, %v6597
      %v7188 = vmul.f32 %v7172, %v6597
      %v7189 = vmul.f32 %v7173, %v6597
      %v7190 = vmul.f32 %v7174, %v6597
      %v7191 = vmul.f32 %v7175, %v6597
      %v7192 = vmul.f32 %v7176, %v6597
      %v7193 = vmul.f32 %v7177, %v6597
      %v7194 = vmul.f32 %v7178, %v6597
      %v7195 = vmul.f32 %v5543, -0.49999997
      %v7196 = vmul.f32 %v5544, -0.49999997
      %v7197 = vmul.f32 %v5545, -0.49999997
      %v7198 = vmul.f32 %v5546, -0.49999997
      %v7199 = vmul.f32 %v5547, -0.49999997
      %v7200 = vmul.f32 %v5548, -0.49999997
      %v7201 = vmul.f32 %v5549, -0.49999997
      %v7202 = vmul.f32 %v5550, -0.49999997
      %v7203 = vadd.f32 %v6623, %v7195
      %v7204 = vadd.f32 %v6624, %v7196
      %v7205 = vadd.f32 %v6625, %v7197
      %v7206 = vadd.f32 %v6626, %v7198
      %v7207 = vadd.f32 %v6627, %v7199
      %v7208 = vadd.f32 %v6628, %v7200
      %v7209 = vadd.f32 %v6629, %v7201
      %v7210 = vadd.f32 %v6630, %v7202
      %v7211 = vmul.f32 %v6063, -0.49999997
      %v7212 = vmul.f32 %v6064, -0.49999997
      %v7213 = vmul.f32 %v6065, -0.49999997
      %v7214 = vmul.f32 %v6066, -0.49999997
      %v7215 = vmul.f32 %v6067, -0.49999997
      %v7216 = vmul.f32 %v6068, -0.49999997
      %v7217 = vmul.f32 %v6069, -0.49999997
      %v7218 = vmul.f32 %v6070, -0.49999997
      %v7219 = vadd.f32 %v7203, %v7211
      %v7220 = vadd.f32 %v7204, %v7212
      %v7221 = vadd.f32 %v7205, %v7213
      %v7222 = vadd.f32 %v7206, %v7214
      %v7223 = vadd.f32 %v7207, %v7215
      %v7224 = vadd.f32 %v7208, %v7216
      %v7225 = vadd.f32 %v7209, %v7217
      %v7226 = vadd.f32 %v7210, %v7218
      %v7235 = vrot.slane %v7219, 7
      %v7236 = vrot.slane %v7220, 7
      %v7237 = vrot.slane %v7221, 7
      %v7238 = vrot.slane %v7222, 7
      %v7239 = vrot.slane %v7223, 7
      %v7240 = vrot.slane %v7224, 7
      %v7241 = vrot.slane %v7225, 7
      %v7242 = vrot.slane %v7226, 7
      %v7251 = vadd.f32 %v7179, %v7235
      %v7252 = vadd.f32 %v7180, %v7235
      %v7253 = vadd.f32 %v7181, %v7236
      %v7254 = vadd.f32 %v7182, %v7236
      %v7255 = vadd.f32 %v7183, %v7237
      %v7256 = vadd.f32 %v7184, %v7237
      %v7257 = vadd.f32 %v7185, %v7238
      %v7258 = vadd.f32 %v7186, %v7238
      %v7259 = vadd.f32 %v7187, %v7239
      %v7260 = vadd.f32 %v7188, %v7239
      %v7261 = vadd.f32 %v7189, %v7240
      %v7262 = vadd.f32 %v7190, %v7240
      %v7263 = vadd.f32 %v7191, %v7241
      %v7264 = vadd.f32 %v7192, %v7241
      %v7265 = vadd.f32 %v7193, %v7242
      %v7266 = vadd.f32 %v7194, %v7242
      %v7267 = vmul.f32 %v7251, %v6675
      %v7268 = vmul.f32 %v7252, %v6675
      %v7269 = vmul.f32 %v7253, %v6675
      %v7270 = vmul.f32 %v7254, %v6675
      %v7271 = vmul.f32 %v7255, %v6675
      %v7272 = vmul.f32 %v7256, %v6675
      %v7273 = vmul.f32 %v7257, %v6675
      %v7274 = vmul.f32 %v7258, %v6675
      %v7275 = vmul.f32 %v7259, %v6675
      %v7276 = vmul.f32 %v7260, %v6675
      %v7277 = vmul.f32 %v7261, %v6675
      %v7278 = vmul.f32 %v7262, %v6675
      %v7279 = vmul.f32 %v7263, %v6675
      %v7280 = vmul.f32 %v7264, %v6675
      %v7281 = vmul.f32 %v7265, %v6675
      %v7282 = vmul.f32 %v7266, %v6675
      %v7283 = vadd.f32 %v7267, %v6689
      %v7284 = vadd.f32 %v7268, %v6689
      %v7285 = vadd.f32 %v7269, %v6689
      %v7286 = vadd.f32 %v7270, %v6689
      %v7287 = vadd.f32 %v7271, %v6689
      %v7288 = vadd.f32 %v7272, %v6689
      %v7289 = vadd.f32 %v7273, %v6689
      %v7290 = vadd.f32 %v7274, %v6689
      %v7291 = vadd.f32 %v7275, %v6689
      %v7292 = vadd.f32 %v7276, %v6689
      %v7293 = vadd.f32 %v7277, %v6689
      %v7294 = vadd.f32 %v7278, %v6689
      %v7295 = vadd.f32 %v7279, %v6689
      %v7296 = vadd.f32 %v7280, %v6689
      %v7297 = vadd.f32 %v7281, %v6689
      %v7298 = vadd.f32 %v7282, %v6689
      %v7307 = vrot.slane %v527, 7
      %v7308 = vrot.slane %v528, 7
      %v7309 = vrot.slane %v529, 7
      %v7310 = vrot.slane %v530, 7
      %v7311 = vrot.slane %v531, 7
      %v7312 = vrot.slane %v532, 7
      %v7313 = vrot.slane %v533, 7
      %v7314 = vrot.slane %v534, 7
      %v7323 = vadd.f32 %v7283, %v7307
      %v7324 = vadd.f32 %v7284, %v7307
      %v7325 = vadd.f32 %v7285, %v7308
      %v7326 = vadd.f32 %v7286, %v7308
      %v7327 = vadd.f32 %v7287, %v7309
      %v7328 = vadd.f32 %v7288, %v7309
      %v7329 = vadd.f32 %v7289, %v7310
      %v7330 = vadd.f32 %v7290, %v7310
      %v7331 = vadd.f32 %v7291, %v7311
      %v7332 = vadd.f32 %v7292, %v7311
      %v7333 = vadd.f32 %v7293, %v7312
      %v7334 = vadd.f32 %v7294, %v7312
      %v7335 = vadd.f32 %v7295, %v7313
      %v7336 = vadd.f32 %v7296, %v7313
      %v7337 = vadd.f32 %v7297, %v7314
      %v7338 = vadd.f32 %v7298, %v7314
      %v7339 = vmax.f32 %v7323, 0.0
      %v7340 = vmax.f32 %v7324, 0.0
      %v7341 = vmax.f32 %v7325, 0.0
      %v7342 = vmax.f32 %v7326, 0.0
      %v7343 = vmax.f32 %v7327, 0.0
      %v7344 = vmax.f32 %v7328, 0.0
      %v7345 = vmax.f32 %v7329, 0.0
      %v7346 = vmax.f32 %v7330, 0.0
      %v7347 = vmax.f32 %v7331, 0.0
      %v7348 = vmax.f32 %v7332, 0.0
      %v7349 = vmax.f32 %v7333, 0.0
      %v7350 = vmax.f32 %v7334, 0.0
      %v7351 = vmax.f32 %v7335, 0.0
      %v7352 = vmax.f32 %v7336, 0.0
      %v7353 = vmax.f32 %v7337, 0.0
      %v7354 = vmax.f32 %v7338, 0.0
      %s7355 = scalar_lea.vmem %s366, 64
      %vm7356 = vcmask 31745
      %7357 = vst.msk [vmem:[%s7355 - $0x1] sm:$0xfe] %vm7356, %v7339
      %vm7358 = vcmask 24576
      %7359 = vst.msk [vmem:[%s7355 + $0x7] sm:$0x1] %vm7358, %v7340
      %7360 = vst.msk [vmem:[%s7355 + $0x7] sm:$0xfe] %vm7356, %v7341
      %7361 = vst.msk [vmem:[%s7355 + $0xf] sm:$0x1] %vm7358, %v7342
      %7362 = vst.msk [vmem:[%s7355 + $0xf] sm:$0xfe] %vm7356, %v7343
      %7363 = vst.msk [vmem:[%s7355 + $0x17] sm:$0x1] %vm7358, %v7344
      %7364 = vst.msk [vmem:[%s7355 + $0x17] sm:$0xfe] %vm7356, %v7345
      %7365 = vst.msk [vmem:[%s7355 + $0x1f] sm:$0x1] %vm7358, %v7346
      %7366 = vst.msk [vmem:[%s7355 + $0x1f] sm:$0xfe] %vm7356, %v7347
      %7367 = vst.msk [vmem:[%s7355 + $0x27] sm:$0x1] %vm7358, %v7348
      %7368 = vst.msk [vmem:[%s7355 + $0x27] sm:$0xfe] %vm7356, %v7349
      %7369 = vst.msk [vmem:[%s7355 + $0x2f] sm:$0x1] %vm7358, %v7350
      %7370 = vst.msk [vmem:[%s7355 + $0x2f] sm:$0xfe] %vm7356, %v7351
      %7371 = vst.msk [vmem:[%s7355 + $0x37] sm:$0x1] %vm7358, %v7352
      %7372 = vst.msk [vmem:[%s7355 + $0x37] sm:$0xfe] %vm7356, %v7353
      %7373 = vst.msk [vmem:[%s7355 + $0x3f] sm:$0x1] %vm7358, %v7354
      %v7374 = vmul.f32 %v6074, %v3574
      %v7375 = vmul.f32 %v6074, %v3576
      %v7376 = vmul.f32 %v6074, %v3578
      %v7377 = vmul.f32 %v6074, %v3580
      %v7378 = vmul.f32 %v6074, %v3582
      %v7379 = vmul.f32 %v6074, %v3584
      %v7380 = vmul.f32 %v6074, %v3586
      %v7381 = vmul.f32 %v6074, %v3588
      %v7382 = vmul.f32 %v6086, %v3553
      %v7383 = vmul.f32 %v6086, %v3554
      %v7384 = vmul.f32 %v6086, %v3555
      %v7385 = vmul.f32 %v6086, %v3556
      %v7386 = vmul.f32 %v6086, %v3557
      %v7387 = vmul.f32 %v6086, %v3558
      %v7388 = vmul.f32 %v6086, %v3559
      %v7389 = vmul.f32 %v6086, %v3560
      %v7390 = vmul.f32 %v6086, %v3561
      %v7391 = vmul.f32 %v6086, %v3562
      %v7392 = vmul.f32 %v6086, %v3563
      %v7393 = vmul.f32 %v6086, %v3564
      %v7394 = vmul.f32 %v6086, %v3565
      %v7395 = vmul.f32 %v6086, %v3566
      %v7396 = vmul.f32 %v6086, %v3567
      %v7397 = vmul.f32 %v6086, %v3568
      %v7414 = vrot.slane %v7382, 1
      %v7415 = vrot.slane %v7383, 1
      %v7416 = vsel %vm4037, %v7414, %v7415
      %v7417 = vrot.slane %v7384, 1
      %v7418 = vrot.slane %v7385, 1
      %v7419 = vsel %vm4037, %v7417, %v7418
      %v7420 = vrot.slane %v7386, 1
      %v7421 = vrot.slane %v7387, 1
      %v7422 = vsel %vm4037, %v7420, %v7421
      %v7423 = vrot.slane %v7388, 1
      %v7424 = vrot.slane %v7389, 1
      %v7425 = vsel %vm4037, %v7423, %v7424
      %v7426 = vrot.slane %v7390, 1
      %v7427 = vrot.slane %v7391, 1
      %v7428 = vsel %vm4037, %v7426, %v7427
      %v7429 = vrot.slane %v7392, 1
      %v7430 = vrot.slane %v7393, 1
      %v7431 = vsel %vm4037, %v7429, %v7430
      %v7432 = vrot.slane %v7394, 1
      %v7433 = vrot.slane %v7395, 1
      %v7434 = vsel %vm4037, %v7432, %v7433
      %v7435 = vrot.slane %v7396, 1
      %v7436 = vrot.slane %v7397, 1
      %v7437 = vsel %vm4037, %v7435, %v7436
      %v7446 = vadd.f32 %v7374, %v7416
      %v7447 = vadd.f32 %v7375, %v7419
      %v7448 = vadd.f32 %v7376, %v7422
      %v7449 = vadd.f32 %v7377, %v7425
      %v7450 = vadd.f32 %v7378, %v7428
      %v7451 = vadd.f32 %v7379, %v7431
      %v7452 = vadd.f32 %v7380, %v7434
      %v7453 = vadd.f32 %v7381, %v7437
      %v7454 = vmul.f32 %v6162, %v3574
      %v7455 = vmul.f32 %v6162, %v3575
      %v7456 = vmul.f32 %v6162, %v3576
      %v7457 = vmul.f32 %v6162, %v3577
      %v7458 = vmul.f32 %v6162, %v3578
      %v7459 = vmul.f32 %v6162, %v3579
      %v7460 = vmul.f32 %v6162, %v3580
      %v7461 = vmul.f32 %v6162, %v3581
      %v7462 = vmul.f32 %v6162, %v3582
      %v7463 = vmul.f32 %v6162, %v3583
      %v7464 = vmul.f32 %v6162, %v3584
      %v7465 = vmul.f32 %v6162, %v3585
      %v7466 = vmul.f32 %v6162, %v3586
      %v7467 = vmul.f32 %v6162, %v3587
      %v7468 = vmul.f32 %v6162, %v3588
      %v7469 = vmul.f32 %v6162, %v3589
      %v7486 = vrot.slane %v7454, 1
      %v7487 = vrot.slane %v7455, 1
      %v7488 = vsel %vm4037, %v7486, %v7487
      %v7489 = vrot.slane %v7456, 1
      %v7490 = vrot.slane %v7457, 1
      %v7491 = vsel %vm4037, %v7489, %v7490
      %v7492 = vrot.slane %v7458, 1
      %v7493 = vrot.slane %v7459, 1
      %v7494 = vsel %vm4037, %v7492, %v7493
      %v7495 = vrot.slane %v7460, 1
      %v7496 = vrot.slane %v7461, 1
      %v7497 = vsel %vm4037, %v7495, %v7496
      %v7498 = vrot.slane %v7462, 1
      %v7499 = vrot.slane %v7463, 1
      %v7500 = vsel %vm4037, %v7498, %v7499
      %v7501 = vrot.slane %v7464, 1
      %v7502 = vrot.slane %v7465, 1
      %v7503 = vsel %vm4037, %v7501, %v7502
      %v7504 = vrot.slane %v7466, 1
      %v7505 = vrot.slane %v7467, 1
      %v7506 = vsel %vm4037, %v7504, %v7505
      %v7507 = vrot.slane %v7468, 1
      %v7508 = vrot.slane %v7469, 1
      %v7509 = vsel %vm4037, %v7507, %v7508
      %v7518 = vadd.f32 %v7446, %v7488
      %v7519 = vadd.f32 %v7447, %v7491
      %v7520 = vadd.f32 %v7448, %v7494
      %v7521 = vadd.f32 %v7449, %v7497
      %v7522 = vadd.f32 %v7450, %v7500
      %v7523 = vadd.f32 %v7451, %v7503
      %v7524 = vadd.f32 %v7452, %v7506
      %v7525 = vadd.f32 %v7453, %v7509
      %v7526 = vmul.f32 %v6238, %v3616
      %v7527 = vmul.f32 %v6238, %v3618
      %v7528 = vmul.f32 %v6238, %v3620
      %v7529 = vmul.f32 %v6238, %v3622
      %v7530 = vmul.f32 %v6238, %v3624
      %v7531 = vmul.f32 %v6238, %v3626
      %v7532 = vmul.f32 %v6238, %v3628
      %v7533 = vmul.f32 %v6238, %v3630
      %v7534 = vadd.f32 %v7518, %v7526
      %v7535 = vadd.f32 %v7519, %v7527
      %v7536 = vadd.f32 %v7520, %v7528
      %v7537 = vadd.f32 %v7521, %v7529
      %v7538 = vadd.f32 %v7522, %v7530
      %v7539 = vadd.f32 %v7523, %v7531
      %v7540 = vadd.f32 %v7524, %v7532
      %v7541 = vadd.f32 %v7525, %v7533
      %v7542 = vmul.f32 %v6258, %v3595
      %v7543 = vmul.f32 %v6258, %v3596
      %v7544 = vmul.f32 %v6258, %v3597
      %v7545 = vmul.f32 %v6258, %v3598
      %v7546 = vmul.f32 %v6258, %v3599
      %v7547 = vmul.f32 %v6258, %v3600
      %v7548 = vmul.f32 %v6258, %v3601
      %v7549 = vmul.f32 %v6258, %v3602
      %v7550 = vmul.f32 %v6258, %v3603
      %v7551 = vmul.f32 %v6258, %v3604
      %v7552 = vmul.f32 %v6258, %v3605
      %v7553 = vmul.f32 %v6258, %v3606
      %v7554 = vmul.f32 %v6258, %v3607
      %v7555 = vmul.f32 %v6258, %v3608
      %v7556 = vmul.f32 %v6258, %v3609
      %v7557 = vmul.f32 %v6258, %v3610
      %v7574 = vrot.slane %v7542, 1
      %v7575 = vrot.slane %v7543, 1
      %v7576 = vsel %vm4037, %v7574, %v7575
      %v7577 = vrot.slane %v7544, 1
      %v7578 = vrot.slane %v7545, 1
      %v7579 = vsel %vm4037, %v7577, %v7578
      %v7580 = vrot.slane %v7546, 1
      %v7581 = vrot.slane %v7547, 1
      %v7582 = vsel %vm4037, %v7580, %v7581
      %v7583 = vrot.slane %v7548, 1
      %v7584 = vrot.slane %v7549, 1
      %v7585 = vsel %vm4037, %v7583, %v7584
      %v7586 = vrot.slane %v7550, 1
      %v7587 = vrot.slane %v7551, 1
      %v7588 = vsel %vm4037, %v7586, %v7587
      %v7589 = vrot.slane %v7552, 1
      %v7590 = vrot.slane %v7553, 1
      %v7591 = vsel %vm4037, %v7589, %v7590
      %v7592 = vrot.slane %v7554, 1
      %v7593 = vrot.slane %v7555, 1
      %v7594 = vsel %vm4037, %v7592, %v7593
      %v7595 = vrot.slane %v7556, 1
      %v7596 = vrot.slane %v7557, 1
      %v7597 = vsel %vm4037, %v7595, %v7596
      %v7606 = vadd.f32 %v7534, %v7576
      %v7607 = vadd.f32 %v7535, %v7579
      %v7608 = vadd.f32 %v7536, %v7582
      %v7609 = vadd.f32 %v7537, %v7585
      %v7610 = vadd.f32 %v7538, %v7588
      %v7611 = vadd.f32 %v7539, %v7591
      %v7612 = vadd.f32 %v7540, %v7594
      %v7613 = vadd.f32 %v7541, %v7597
      %v7614 = vmul.f32 %v6334, %v3616
      %v7615 = vmul.f32 %v6334, %v3617
      %v7616 = vmul.f32 %v6334, %v3618
      %v7617 = vmul.f32 %v6334, %v3619
      %v7618 = vmul.f32 %v6334, %v3620
      %v7619 = vmul.f32 %v6334, %v3621
      %v7620 = vmul.f32 %v6334, %v3622
      %v7621 = vmul.f32 %v6334, %v3623
      %v7622 = vmul.f32 %v6334, %v3624
      %v7623 = vmul.f32 %v6334, %v3625
      %v7624 = vmul.f32 %v6334, %v3626
      %v7625 = vmul.f32 %v6334, %v3627
      %v7626 = vmul.f32 %v6334, %v3628
      %v7627 = vmul.f32 %v6334, %v3629
      %v7628 = vmul.f32 %v6334, %v3630
      %v7629 = vmul.f32 %v6334, %v3631
      %v7646 = vrot.slane %v7614, 1
      %v7647 = vrot.slane %v7615, 1
      %v7648 = vsel %vm4037, %v7646, %v7647
      %v7649 = vrot.slane %v7616, 1
      %v7650 = vrot.slane %v7617, 1
      %v7651 = vsel %vm4037, %v7649, %v7650
      %v7652 = vrot.slane %v7618, 1
      %v7653 = vrot.slane %v7619, 1
      %v7654 = vsel %vm4037, %v7652, %v7653
      %v7655 = vrot.slane %v7620, 1
      %v7656 = vrot.slane %v7621, 1
      %v7657 = vsel %vm4037, %v7655, %v7656
      %v7658 = vrot.slane %v7622, 1
      %v7659 = vrot.slane %v7623, 1
      %v7660 = vsel %vm4037, %v7658, %v7659
      %v7661 = vrot.slane %v7624, 1
      %v7662 = vrot.slane %v7625, 1
      %v7663 = vsel %vm4037, %v7661, %v7662
      %v7664 = vrot.slane %v7626, 1
      %v7665 = vrot.slane %v7627, 1
      %v7666 = vsel %vm4037, %v7664, %v7665
      %v7667 = vrot.slane %v7628, 1
      %v7668 = vrot.slane %v7629, 1
      %v7669 = vsel %vm4037, %v7667, %v7668
      %v7678 = vadd.f32 %v7606, %v7648
      %v7679 = vadd.f32 %v7607, %v7651
      %v7680 = vadd.f32 %v7608, %v7654
      %v7681 = vadd.f32 %v7609, %v7657
      %v7682 = vadd.f32 %v7610, %v7660
      %v7683 = vadd.f32 %v7611, %v7663
      %v7684 = vadd.f32 %v7612, %v7666
      %v7685 = vadd.f32 %v7613, %v7669
      %v7686 = vmul.f32 %v6410, %v3576
      %v7687 = vmul.f32 %v6410, %v3578
      %v7688 = vmul.f32 %v6410, %v3580
      %v7689 = vmul.f32 %v6410, %v3582
      %v7690 = vmul.f32 %v6410, %v3584
      %v7691 = vmul.f32 %v6410, %v3586
      %v7692 = vmul.f32 %v6410, %v3588
      %v7693 = vmul.f32 %v6410, %v3590
      %v7694 = vadd.f32 %v7678, %v7686
      %v7695 = vadd.f32 %v7679, %v7687
      %v7696 = vadd.f32 %v7680, %v7688
      %v7697 = vadd.f32 %v7681, %v7689
      %v7698 = vadd.f32 %v7682, %v7690
      %v7699 = vadd.f32 %v7683, %v7691
      %v7700 = vadd.f32 %v7684, %v7692
      %v7701 = vadd.f32 %v7685, %v7693
      %v7702 = vmul.f32 %v6430, %v3555
      %v7703 = vmul.f32 %v6430, %v3556
      %v7704 = vmul.f32 %v6430, %v3557
      %v7705 = vmul.f32 %v6430, %v3558
      %v7706 = vmul.f32 %v6430, %v3559
      %v7707 = vmul.f32 %v6430, %v3560
      %v7708 = vmul.f32 %v6430, %v3561
      %v7709 = vmul.f32 %v6430, %v3562
      %v7710 = vmul.f32 %v6430, %v3563
      %v7711 = vmul.f32 %v6430, %v3564
      %v7712 = vmul.f32 %v6430, %v3565
      %v7713 = vmul.f32 %v6430, %v3566
      %v7714 = vmul.f32 %v6430, %v3567
      %v7715 = vmul.f32 %v6430, %v3568
      %v7716 = vmul.f32 %v6430, %v3569
      %v7717 = vmul.f32 %v6430, %v3570
      %v7734 = vrot.slane %v7702, 1
      %v7735 = vrot.slane %v7703, 1
      %v7736 = vsel %vm4037, %v7734, %v7735
      %v7737 = vrot.slane %v7704, 1
      %v7738 = vrot.slane %v7705, 1
      %v7739 = vsel %vm4037, %v7737, %v7738
      %v7740 = vrot.slane %v7706, 1
      %v7741 = vrot.slane %v7707, 1
      %v7742 = vsel %vm4037, %v7740, %v7741
      %v7743 = vrot.slane %v7708, 1
      %v7744 = vrot.slane %v7709, 1
      %v7745 = vsel %vm4037, %v7743, %v7744
      %v7746 = vrot.slane %v7710, 1
      %v7747 = vrot.slane %v7711, 1
      %v7748 = vsel %vm4037, %v7746, %v7747
      %v7749 = vrot.slane %v7712, 1
      %v7750 = vrot.slane %v7713, 1
      %v7751 = vsel %vm4037, %v7749, %v7750
      %v7752 = vrot.slane %v7714, 1
      %v7753 = vrot.slane %v7715, 1
      %v7754 = vsel %vm4037, %v7752, %v7753
      %v7755 = vrot.slane %v7716, 1
      %v7756 = vrot.slane %v7717, 1
      %v7757 = vsel %vm4037, %v7755, %v7756
      %v7766 = vadd.f32 %v7694, %v7736
      %v7767 = vadd.f32 %v7695, %v7739
      %v7768 = vadd.f32 %v7696, %v7742
      %v7769 = vadd.f32 %v7697, %v7745
      %v7770 = vadd.f32 %v7698, %v7748
      %v7771 = vadd.f32 %v7699, %v7751
      %v7772 = vadd.f32 %v7700, %v7754
      %v7773 = vadd.f32 %v7701, %v7757
      %v7774 = vmul.f32 %v6506, %v3576
      %v7775 = vmul.f32 %v6506, %v3577
      %v7776 = vmul.f32 %v6506, %v3578
      %v7777 = vmul.f32 %v6506, %v3579
      %v7778 = vmul.f32 %v6506, %v3580
      %v7779 = vmul.f32 %v6506, %v3581
      %v7780 = vmul.f32 %v6506, %v3582
      %v7781 = vmul.f32 %v6506, %v3583
      %v7782 = vmul.f32 %v6506, %v3584
      %v7783 = vmul.f32 %v6506, %v3585
      %v7784 = vmul.f32 %v6506, %v3586
      %v7785 = vmul.f32 %v6506, %v3587
      %v7786 = vmul.f32 %v6506, %v3588
      %v7787 = vmul.f32 %v6506, %v3589
      %v7788 = vmul.f32 %v6506, %v3590
      %v7789 = vmul.f32 %v6506, %v3591
      %v7806 = vrot.slane %v7774, 1
      %v7807 = vrot.slane %v7775, 1
      %v7808 = vsel %vm4037, %v7806, %v7807
      %v7809 = vrot.slane %v7776, 1
      %v7810 = vrot.slane %v7777, 1
      %v7811 = vsel %vm4037, %v7809, %v7810
      %v7812 = vrot.slane %v7778, 1
      %v7813 = vrot.slane %v7779, 1
      %v7814 = vsel %vm4037, %v7812, %v7813
      %v7815 = vrot.slane %v7780, 1
      %v7816 = vrot.slane %v7781, 1
      %v7817 = vsel %vm4037, %v7815, %v7816
      %v7818 = vrot.slane %v7782, 1
      %v7819 = vrot.slane %v7783, 1
      %v7820 = vsel %vm4037, %v7818, %v7819
      %v7821 = vrot.slane %v7784, 1
      %v7822 = vrot.slane %v7785, 1
      %v7823 = vsel %vm4037, %v7821, %v7822
      %v7824 = vrot.slane %v7786, 1
      %v7825 = vrot.slane %v7787, 1
      %v7826 = vsel %vm4037, %v7824, %v7825
      %v7827 = vrot.slane %v7788, 1
      %v7828 = vrot.slane %v7789, 1
      %v7829 = vsel %vm4037, %v7827, %v7828
      %v7838 = vadd.f32 %v7766, %v7808
      %v7839 = vadd.f32 %v7767, %v7811
      %v7840 = vadd.f32 %v7768, %v7814
      %v7841 = vadd.f32 %v7769, %v7817
      %v7842 = vadd.f32 %v7770, %v7820
      %v7843 = vadd.f32 %v7771, %v7823
      %v7844 = vadd.f32 %v7772, %v7826
      %v7845 = vadd.f32 %v7773, %v7829
      %v7846 = vadd.f32 %v7838, %v6583
      %v7847 = vadd.f32 %v7839, %v6583
      %v7848 = vadd.f32 %v7840, %v6583
      %v7849 = vadd.f32 %v7841, %v6583
      %v7850 = vadd.f32 %v7842, %v6583
      %v7851 = vadd.f32 %v7843, %v6583
      %v7852 = vadd.f32 %v7844, %v6583
      %v7853 = vadd.f32 %v7845, %v6583
      %v7854 = vmul.f32 %v7846, %v6597
      %v7855 = vmul.f32 %v7847, %v6597
      %v7856 = vmul.f32 %v7848, %v6597
      %v7857 = vmul.f32 %v7849, %v6597
      %v7858 = vmul.f32 %v7850, %v6597
      %v7859 = vmul.f32 %v7851, %v6597
      %v7860 = vmul.f32 %v7852, %v6597
      %v7861 = vmul.f32 %v7853, %v6597
      %v7862 = vmul.f32 %v5023, -0.49999997
      %v7863 = vmul.f32 %v5024, -0.49999997
      %v7864 = vmul.f32 %v5025, -0.49999997
      %v7865 = vmul.f32 %v5026, -0.49999997
      %v7866 = vmul.f32 %v5027, -0.49999997
      %v7867 = vmul.f32 %v5028, -0.49999997
      %v7868 = vmul.f32 %v5029, -0.49999997
      %v7869 = vmul.f32 %v5030, -0.49999997
      %v7870 = vadd.f32 %v6607, %v7862
      %v7871 = vadd.f32 %v6608, %v7863
      %v7872 = vadd.f32 %v6609, %v7864
      %v7873 = vadd.f32 %v6610, %v7865
      %v7874 = vadd.f32 %v6611, %v7866
      %v7875 = vadd.f32 %v6612, %v7867
      %v7876 = vadd.f32 %v6613, %v7868
      %v7877 = vadd.f32 %v6614, %v7869
      %v7878 = vadd.f32 %v7870, %v6631
      %v7879 = vadd.f32 %v7871, %v6632
      %v7880 = vadd.f32 %v7872, %v6633
      %v7881 = vadd.f32 %v7873, %v6634
      %v7882 = vadd.f32 %v7874, %v6635
      %v7883 = vadd.f32 %v7875, %v6636
      %v7884 = vadd.f32 %v7876, %v6637
      %v7885 = vadd.f32 %v7877, %v6638
      %v7886 = vadd.f32 %v7878, %v7211
      %v7887 = vadd.f32 %v7879, %v7212
      %v7888 = vadd.f32 %v7880, %v7213
      %v7889 = vadd.f32 %v7881, %v7214
      %v7890 = vadd.f32 %v7882, %v7215
      %v7891 = vadd.f32 %v7883, %v7216
      %v7892 = vadd.f32 %v7884, %v7217
      %v7893 = vadd.f32 %v7885, %v7218
      %v7894 = vadd.f32 %v7854, %v7886
      %v7895 = vadd.f32 %v7855, %v7887
      %v7896 = vadd.f32 %v7856, %v7888
      %v7897 = vadd.f32 %v7857, %v7889
      %v7898 = vadd.f32 %v7858, %v7890
      %v7899 = vadd.f32 %v7859, %v7891
      %v7900 = vadd.f32 %v7860, %v7892
      %v7901 = vadd.f32 %v7861, %v7893
      %v7902 = vmul.f32 %v7894, %v6675
      %v7903 = vmul.f32 %v7895, %v6675
      %v7904 = vmul.f32 %v7896, %v6675
      %v7905 = vmul.f32 %v7897, %v6675
      %v7906 = vmul.f32 %v7898, %v6675
      %v7907 = vmul.f32 %v7899, %v6675
      %v7908 = vmul.f32 %v7900, %v6675
      %v7909 = vmul.f32 %v7901, %v6675
      %v7910 = vadd.f32 %v7902, %v6689
      %v7911 = vadd.f32 %v7903, %v6689
      %v7912 = vadd.f32 %v7904, %v6689
      %v7913 = vadd.f32 %v7905, %v6689
      %v7914 = vadd.f32 %v7906, %v6689
      %v7915 = vadd.f32 %v7907, %v6689
      %v7916 = vadd.f32 %v7908, %v6689
      %v7917 = vadd.f32 %v7909, %v6689
      %v7918 = vadd.f32 %v7910, %v565
      %v7919 = vadd.f32 %v7911, %v566
      %v7920 = vadd.f32 %v7912, %v567
      %v7921 = vadd.f32 %v7913, %v568
      %v7922 = vadd.f32 %v7914, %v569
      %v7923 = vadd.f32 %v7915, %v570
      %v7924 = vadd.f32 %v7916, %v571
      %v7925 = vadd.f32 %v7917, %v572
      %v7926 = vmax.f32 %v7918, 0.0
      %v7927 = vmax.f32 %v7919, 0.0
      %v7928 = vmax.f32 %v7920, 0.0
      %v7929 = vmax.f32 %v7921, 0.0
      %v7930 = vmax.f32 %v7922, 0.0
      %v7931 = vmax.f32 %v7923, 0.0
      %v7932 = vmax.f32 %v7924, 0.0
      %v7933 = vmax.f32 %v7925, 0.0
      %s7934 = scalar_lea.vmem %s366, 128
      %7935 = vst.msk [vmem:[%s7934] sm:$0xff] %vm369, %v7926
      %7936 = vst.msk [vmem:[%s7934 + $0x8] sm:$0xff] %vm369, %v7927
      %7937 = vst.msk [vmem:[%s7934 + $0x10] sm:$0xff] %vm369, %v7928
      %7938 = vst.msk [vmem:[%s7934 + $0x18] sm:$0xff] %vm369, %v7929
      %7939 = vst.msk [vmem:[%s7934 + $0x20] sm:$0xff] %vm369, %v7930
      %7940 = vst.msk [vmem:[%s7934 + $0x28] sm:$0xff] %vm369, %v7931
      %7941 = vst.msk [vmem:[%s7934 + $0x30] sm:$0xff] %vm369, %v7932
      %7942 = vst.msk [vmem:[%s7934 + $0x38] sm:$0xff] %vm369, %v7933
      %v7943 = vmul.f32 %v6074, %v3553
      %v7944 = vmul.f32 %v6074, %v3554
      %v7945 = vmul.f32 %v6074, %v3555
      %v7946 = vmul.f32 %v6074, %v3556
      %v7947 = vmul.f32 %v6074, %v3557
      %v7948 = vmul.f32 %v6074, %v3558
      %v7949 = vmul.f32 %v6074, %v3559
      %v7950 = vmul.f32 %v6074, %v3560
      %v7951 = vmul.f32 %v6074, %v3561
      %v7952 = vmul.f32 %v6074, %v3562
      %v7953 = vmul.f32 %v6074, %v3563
      %v7954 = vmul.f32 %v6074, %v3564
      %v7955 = vmul.f32 %v6074, %v3565
      %v7956 = vmul.f32 %v6074, %v3566
      %v7957 = vmul.f32 %v6074, %v3567
      %v7958 = vmul.f32 %v6074, %v3568
      %v7959 = vmul.f32 %v6086, %v3574
      %v7960 = vmul.f32 %v6086, %v3575
      %v7961 = vmul.f32 %v6086, %v3576
      %v7962 = vmul.f32 %v6086, %v3577
      %v7963 = vmul.f32 %v6086, %v3578
      %v7964 = vmul.f32 %v6086, %v3579
      %v7965 = vmul.f32 %v6086, %v3580
      %v7966 = vmul.f32 %v6086, %v3581
      %v7967 = vmul.f32 %v6086, %v3582
      %v7968 = vmul.f32 %v6086, %v3583
      %v7969 = vmul.f32 %v6086, %v3584
      %v7970 = vmul.f32 %v6086, %v3585
      %v7971 = vmul.f32 %v6086, %v3586
      %v7972 = vmul.f32 %v6086, %v3587
      %v7973 = vmul.f32 %v6086, %v3588
      %v7974 = vmul.f32 %v6086, %v3589
      %v7975 = vadd.f32 %v7943, %v7959
      %v7976 = vadd.f32 %v7944, %v7960
      %v7977 = vadd.f32 %v7945, %v7961
      %v7978 = vadd.f32 %v7946, %v7962
      %v7979 = vadd.f32 %v7947, %v7963
      %v7980 = vadd.f32 %v7948, %v7964
      %v7981 = vadd.f32 %v7949, %v7965
      %v7982 = vadd.f32 %v7950, %v7966
      %v7983 = vadd.f32 %v7951, %v7967
      %v7984 = vadd.f32 %v7952, %v7968
      %v7985 = vadd.f32 %v7953, %v7969
      %v7986 = vadd.f32 %v7954, %v7970
      %v7987 = vadd.f32 %v7955, %v7971
      %v7988 = vadd.f32 %v7956, %v7972
      %v7989 = vadd.f32 %v7957, %v7973
      %v7990 = vadd.f32 %v7958, %v7974
      %v7991 = vmul.f32 %v6162, %v3553
      %v7992 = vmul.f32 %v6162, %v3554
      %v7993 = vmul.f32 %v6162, %v3555
      %v7994 = vmul.f32 %v6162, %v3556
      %v7995 = vmul.f32 %v6162, %v3557
      %v7996 = vmul.f32 %v6162, %v3558
      %v7997 = vmul.f32 %v6162, %v3559
      %v7998 = vmul.f32 %v6162, %v3560
      %v7999 = vmul.f32 %v6162, %v3561
      %v8000 = vmul.f32 %v6162, %v3562
      %v8001 = vmul.f32 %v6162, %v3563
      %v8002 = vmul.f32 %v6162, %v3564
      %v8003 = vmul.f32 %v6162, %v3565
      %v8004 = vmul.f32 %v6162, %v3566
      %v8005 = vmul.f32 %v6162, %v3567
      %v8006 = vmul.f32 %v6162, %v3568
      %v8023 = vrot.slane %v7991, 1
      %v8024 = vrot.slane %v7992, 1
      %v8025 = vsel %vm4037, %v8023, %v8024
      %v8026 = vrot.slane %v7993, 1
      %v8027 = vrot.slane %v7994, 1
      %v8028 = vsel %vm4037, %v8026, %v8027
      %v8029 = vrot.slane %v7995, 1
      %v8030 = vrot.slane %v7996, 1
      %v8031 = vsel %vm4037, %v8029, %v8030
      %v8032 = vrot.slane %v7997, 1
      %v8033 = vrot.slane %v7998, 1
      %v8034 = vsel %vm4037, %v8032, %v8033
      %v8035 = vrot.slane %v7999, 1
      %v8036 = vrot.slane %v8000, 1
      %v8037 = vsel %vm4037, %v8035, %v8036
      %v8038 = vrot.slane %v8001, 1
      %v8039 = vrot.slane %v8002, 1
      %v8040 = vsel %vm4037, %v8038, %v8039
      %v8041 = vrot.slane %v8003, 1
      %v8042 = vrot.slane %v8004, 1
      %v8043 = vsel %vm4037, %v8041, %v8042
      %v8044 = vrot.slane %v8005, 1
      %v8045 = vrot.slane %v8006, 1
      %v8046 = vsel %vm4037, %v8044, %v8045
      %v8063 = vadd.f32 %v7975, %v8025
      %v8064 = vadd.f32 %v7976, %v8024
      %v8065 = vadd.f32 %v7977, %v8028
      %v8066 = vadd.f32 %v7978, %v8027
      %v8067 = vadd.f32 %v7979, %v8031
      %v8068 = vadd.f32 %v7980, %v8030
      %v8069 = vadd.f32 %v7981, %v8034
      %v8070 = vadd.f32 %v7982, %v8033
      %v8071 = vadd.f32 %v7983, %v8037
      %v8072 = vadd.f32 %v7984, %v8036
      %v8073 = vadd.f32 %v7985, %v8040
      %v8074 = vadd.f32 %v7986, %v8039
      %v8075 = vadd.f32 %v7987, %v8043
      %v8076 = vadd.f32 %v7988, %v8042
      %v8077 = vadd.f32 %v7989, %v8046
      %v8078 = vadd.f32 %v7990, %v8045
      %v8079 = vmul.f32 %v6238, %v3595
      %v8080 = vmul.f32 %v6238, %v3596
      %v8081 = vmul.f32 %v6238, %v3597
      %v8082 = vmul.f32 %v6238, %v3598
      %v8083 = vmul.f32 %v6238, %v3599
      %v8084 = vmul.f32 %v6238, %v3600
      %v8085 = vmul.f32 %v6238, %v3601
      %v8086 = vmul.f32 %v6238, %v3602
      %v8087 = vmul.f32 %v6238, %v3603
      %v8088 = vmul.f32 %v6238, %v3604
      %v8089 = vmul.f32 %v6238, %v3605
      %v8090 = vmul.f32 %v6238, %v3606
      %v8091 = vmul.f32 %v6238, %v3607
      %v8092 = vmul.f32 %v6238, %v3608
      %v8093 = vmul.f32 %v6238, %v3609
      %v8094 = vmul.f32 %v6238, %v3610
      %v8095 = vadd.f32 %v8063, %v8079
      %v8096 = vadd.f32 %v8064, %v8080
      %v8097 = vadd.f32 %v8065, %v8081
      %v8098 = vadd.f32 %v8066, %v8082
      %v8099 = vadd.f32 %v8067, %v8083
      %v8100 = vadd.f32 %v8068, %v8084
      %v8101 = vadd.f32 %v8069, %v8085
      %v8102 = vadd.f32 %v8070, %v8086
      %v8103 = vadd.f32 %v8071, %v8087
      %v8104 = vadd.f32 %v8072, %v8088
      %v8105 = vadd.f32 %v8073, %v8089
      %v8106 = vadd.f32 %v8074, %v8090
      %v8107 = vadd.f32 %v8075, %v8091
      %v8108 = vadd.f32 %v8076, %v8092
      %v8109 = vadd.f32 %v8077, %v8093
      %v8110 = vadd.f32 %v8078, %v8094
      %v8111 = vmul.f32 %v6258, %v3616
      %v8112 = vmul.f32 %v6258, %v3617
      %v8113 = vmul.f32 %v6258, %v3618
      %v8114 = vmul.f32 %v6258, %v3619
      %v8115 = vmul.f32 %v6258, %v3620
      %v8116 = vmul.f32 %v6258, %v3621
      %v8117 = vmul.f32 %v6258, %v3622
      %v8118 = vmul.f32 %v6258, %v3623
      %v8119 = vmul.f32 %v6258, %v3624
      %v8120 = vmul.f32 %v6258, %v3625
      %v8121 = vmul.f32 %v6258, %v3626
      %v8122 = vmul.f32 %v6258, %v3627
      %v8123 = vmul.f32 %v6258, %v3628
      %v8124 = vmul.f32 %v6258, %v3629
      %v8125 = vmul.f32 %v6258, %v3630
      %v8126 = vmul.f32 %v6258, %v3631
      %v8127 = vadd.f32 %v8095, %v8111
      %v8128 = vadd.f32 %v8096, %v8112
      %v8129 = vadd.f32 %v8097, %v8113
      %v8130 = vadd.f32 %v8098, %v8114
      %v8131 = vadd.f32 %v8099, %v8115
      %v8132 = vadd.f32 %v8100, %v8116
      %v8133 = vadd.f32 %v8101, %v8117
      %v8134 = vadd.f32 %v8102, %v8118
      %v8135 = vadd.f32 %v8103, %v8119
      %v8136 = vadd.f32 %v8104, %v8120
      %v8137 = vadd.f32 %v8105, %v8121
      %v8138 = vadd.f32 %v8106, %v8122
      %v8139 = vadd.f32 %v8107, %v8123
      %v8140 = vadd.f32 %v8108, %v8124
      %v8141 = vadd.f32 %v8109, %v8125
      %v8142 = vadd.f32 %v8110, %v8126
      %v8143 = vmul.f32 %v6334, %v3595
      %v8144 = vmul.f32 %v6334, %v3596
      %v8145 = vmul.f32 %v6334, %v3597
      %v8146 = vmul.f32 %v6334, %v3598
      %v8147 = vmul.f32 %v6334, %v3599
      %v8148 = vmul.f32 %v6334, %v3600
      %v8149 = vmul.f32 %v6334, %v3601
      %v8150 = vmul.f32 %v6334, %v3602
      %v8151 = vmul.f32 %v6334, %v3603
      %v8152 = vmul.f32 %v6334, %v3604
      %v8153 = vmul.f32 %v6334, %v3605
      %v8154 = vmul.f32 %v6334, %v3606
      %v8155 = vmul.f32 %v6334, %v3607
      %v8156 = vmul.f32 %v6334, %v3608
      %v8157 = vmul.f32 %v6334, %v3609
      %v8158 = vmul.f32 %v6334, %v3610
      %v8175 = vrot.slane %v8143, 1
      %v8176 = vrot.slane %v8144, 1
      %v8177 = vsel %vm4037, %v8175, %v8176
      %v8178 = vrot.slane %v8145, 1
      %v8179 = vrot.slane %v8146, 1
      %v8180 = vsel %vm4037, %v8178, %v8179
      %v8181 = vrot.slane %v8147, 1
      %v8182 = vrot.slane %v8148, 1
      %v8183 = vsel %vm4037, %v8181, %v8182
      %v8184 = vrot.slane %v8149, 1
      %v8185 = vrot.slane %v8150, 1
      %v8186 = vsel %vm4037, %v8184, %v8185
      %v8187 = vrot.slane %v8151, 1
      %v8188 = vrot.slane %v8152, 1
      %v8189 = vsel %vm4037, %v8187, %v8188
      %v8190 = vrot.slane %v8153, 1
      %v8191 = vrot.slane %v8154, 1
      %v8192 = vsel %vm4037, %v8190, %v8191
      %v8193 = vrot.slane %v8155, 1
      %v8194 = vrot.slane %v8156, 1
      %v8195 = vsel %vm4037, %v8193, %v8194
      %v8196 = vrot.slane %v8157, 1
      %v8197 = vrot.slane %v8158, 1
      %v8198 = vsel %vm4037, %v8196, %v8197
      %v8215 = vadd.f32 %v8127, %v8177
      %v8216 = vadd.f32 %v8128, %v8176
      %v8217 = vadd.f32 %v8129, %v8180
      %v8218 = vadd.f32 %v8130, %v8179
      %v8219 = vadd.f32 %v8131, %v8183
      %v8220 = vadd.f32 %v8132, %v8182
      %v8221 = vadd.f32 %v8133, %v8186
      %v8222 = vadd.f32 %v8134, %v8185
      %v8223 = vadd.f32 %v8135, %v8189
      %v8224 = vadd.f32 %v8136, %v8188
      %v8225 = vadd.f32 %v8137, %v8192
      %v8226 = vadd.f32 %v8138, %v8191
      %v8227 = vadd.f32 %v8139, %v8195
      %v8228 = vadd.f32 %v8140, %v8194
      %v8229 = vadd.f32 %v8141, %v8198
      %v8230 = vadd.f32 %v8142, %v8197
      %v8231 = vmul.f32 %v6410, %v3555
      %v8232 = vmul.f32 %v6410, %v3556
      %v8233 = vmul.f32 %v6410, %v3557
      %v8234 = vmul.f32 %v6410, %v3558
      %v8235 = vmul.f32 %v6410, %v3559
      %v8236 = vmul.f32 %v6410, %v3560
      %v8237 = vmul.f32 %v6410, %v3561
      %v8238 = vmul.f32 %v6410, %v3562
      %v8239 = vmul.f32 %v6410, %v3563
      %v8240 = vmul.f32 %v6410, %v3564
      %v8241 = vmul.f32 %v6410, %v3565
      %v8242 = vmul.f32 %v6410, %v3566
      %v8243 = vmul.f32 %v6410, %v3567
      %v8244 = vmul.f32 %v6410, %v3568
      %v8245 = vmul.f32 %v6410, %v3569
      %v8246 = vmul.f32 %v6410, %v3570
      %v8247 = vadd.f32 %v8215, %v8231
      %v8248 = vadd.f32 %v8216, %v8232
      %v8249 = vadd.f32 %v8217, %v8233
      %v8250 = vadd.f32 %v8218, %v8234
      %v8251 = vadd.f32 %v8219, %v8235
      %v8252 = vadd.f32 %v8220, %v8236
      %v8253 = vadd.f32 %v8221, %v8237
      %v8254 = vadd.f32 %v8222, %v8238
      %v8255 = vadd.f32 %v8223, %v8239
      %v8256 = vadd.f32 %v8224, %v8240
      %v8257 = vadd.f32 %v8225, %v8241
      %v8258 = vadd.f32 %v8226, %v8242
      %v8259 = vadd.f32 %v8227, %v8243
      %v8260 = vadd.f32 %v8228, %v8244
      %v8261 = vadd.f32 %v8229, %v8245
      %v8262 = vadd.f32 %v8230, %v8246
      %v8263 = vmul.f32 %v6430, %v3576
      %v8264 = vmul.f32 %v6430, %v3577
      %v8265 = vmul.f32 %v6430, %v3578
      %v8266 = vmul.f32 %v6430, %v3579
      %v8267 = vmul.f32 %v6430, %v3580
      %v8268 = vmul.f32 %v6430, %v3581
      %v8269 = vmul.f32 %v6430, %v3582
      %v8270 = vmul.f32 %v6430, %v3583
      %v8271 = vmul.f32 %v6430, %v3584
      %v8272 = vmul.f32 %v6430, %v3585
      %v8273 = vmul.f32 %v6430, %v3586
      %v8274 = vmul.f32 %v6430, %v3587
      %v8275 = vmul.f32 %v6430, %v3588
      %v8276 = vmul.f32 %v6430, %v3589
      %v8277 = vmul.f32 %v6430, %v3590
      %v8278 = vmul.f32 %v6430, %v3591
      %v8279 = vadd.f32 %v8247, %v8263
      %v8280 = vadd.f32 %v8248, %v8264
      %v8281 = vadd.f32 %v8249, %v8265
      %v8282 = vadd.f32 %v8250, %v8266
      %v8283 = vadd.f32 %v8251, %v8267
      %v8284 = vadd.f32 %v8252, %v8268
      %v8285 = vadd.f32 %v8253, %v8269
      %v8286 = vadd.f32 %v8254, %v8270
      %v8287 = vadd.f32 %v8255, %v8271
      %v8288 = vadd.f32 %v8256, %v8272
      %v8289 = vadd.f32 %v8257, %v8273
      %v8290 = vadd.f32 %v8258, %v8274
      %v8291 = vadd.f32 %v8259, %v8275
      %v8292 = vadd.f32 %v8260, %v8276
      %v8293 = vadd.f32 %v8261, %v8277
      %v8294 = vadd.f32 %v8262, %v8278
      %v8295 = vmul.f32 %v6506, %v3555
      %v8296 = vmul.f32 %v6506, %v3556
      %v8297 = vmul.f32 %v6506, %v3557
      %v8298 = vmul.f32 %v6506, %v3558
      %v8299 = vmul.f32 %v6506, %v3559
      %v8300 = vmul.f32 %v6506, %v3560
      %v8301 = vmul.f32 %v6506, %v3561
      %v8302 = vmul.f32 %v6506, %v3562
      %v8303 = vmul.f32 %v6506, %v3563
      %v8304 = vmul.f32 %v6506, %v3564
      %v8305 = vmul.f32 %v6506, %v3565
      %v8306 = vmul.f32 %v6506, %v3566
      %v8307 = vmul.f32 %v6506, %v3567
      %v8308 = vmul.f32 %v6506, %v3568
      %v8309 = vmul.f32 %v6506, %v3569
      %v8310 = vmul.f32 %v6506, %v3570
      %v8327 = vrot.slane %v8295, 1
      %v8328 = vrot.slane %v8296, 1
      %v8329 = vsel %vm4037, %v8327, %v8328
      %v8330 = vrot.slane %v8297, 1
      %v8331 = vrot.slane %v8298, 1
      %v8332 = vsel %vm4037, %v8330, %v8331
      %v8333 = vrot.slane %v8299, 1
      %v8334 = vrot.slane %v8300, 1
      %v8335 = vsel %vm4037, %v8333, %v8334
      %v8336 = vrot.slane %v8301, 1
      %v8337 = vrot.slane %v8302, 1
      %v8338 = vsel %vm4037, %v8336, %v8337
      %v8339 = vrot.slane %v8303, 1
      %v8340 = vrot.slane %v8304, 1
      %v8341 = vsel %vm4037, %v8339, %v8340
      %v8342 = vrot.slane %v8305, 1
      %v8343 = vrot.slane %v8306, 1
      %v8344 = vsel %vm4037, %v8342, %v8343
      %v8345 = vrot.slane %v8307, 1
      %v8346 = vrot.slane %v8308, 1
      %v8347 = vsel %vm4037, %v8345, %v8346
      %v8348 = vrot.slane %v8309, 1
      %v8349 = vrot.slane %v8310, 1
      %v8350 = vsel %vm4037, %v8348, %v8349
      %v8367 = vadd.f32 %v8279, %v8329
      %v8368 = vadd.f32 %v8280, %v8328
      %v8369 = vadd.f32 %v8281, %v8332
      %v8370 = vadd.f32 %v8282, %v8331
      %v8371 = vadd.f32 %v8283, %v8335
      %v8372 = vadd.f32 %v8284, %v8334
      %v8373 = vadd.f32 %v8285, %v8338
      %v8374 = vadd.f32 %v8286, %v8337
      %v8375 = vadd.f32 %v8287, %v8341
      %v8376 = vadd.f32 %v8288, %v8340
      %v8377 = vadd.f32 %v8289, %v8344
      %v8378 = vadd.f32 %v8290, %v8343
      %v8379 = vadd.f32 %v8291, %v8347
      %v8380 = vadd.f32 %v8292, %v8346
      %v8381 = vadd.f32 %v8293, %v8350
      %v8382 = vadd.f32 %v8294, %v8349
      %v8383 = vadd.f32 %v8367, %v6583
      %v8384 = vadd.f32 %v8368, %v6583
      %v8385 = vadd.f32 %v8369, %v6583
      %v8386 = vadd.f32 %v8370, %v6583
      %v8387 = vadd.f32 %v8371, %v6583
      %v8388 = vadd.f32 %v8372, %v6583
      %v8389 = vadd.f32 %v8373, %v6583
      %v8390 = vadd.f32 %v8374, %v6583
      %v8391 = vadd.f32 %v8375, %v6583
      %v8392 = vadd.f32 %v8376, %v6583
      %v8393 = vadd.f32 %v8377, %v6583
      %v8394 = vadd.f32 %v8378, %v6583
      %v8395 = vadd.f32 %v8379, %v6583
      %v8396 = vadd.f32 %v8380, %v6583
      %v8397 = vadd.f32 %v8381, %v6583
      %v8398 = vadd.f32 %v8382, %v6583
      %v8399 = vmul.f32 %v8383, %v6597
      %v8400 = vmul.f32 %v8384, %v6597
      %v8401 = vmul.f32 %v8385, %v6597
      %v8402 = vmul.f32 %v8386, %v6597
      %v8403 = vmul.f32 %v8387, %v6597
      %v8404 = vmul.f32 %v8388, %v6597
      %v8405 = vmul.f32 %v8389, %v6597
      %v8406 = vmul.f32 %v8390, %v6597
      %v8407 = vmul.f32 %v8391, %v6597
      %v8408 = vmul.f32 %v8392, %v6597
      %v8409 = vmul.f32 %v8393, %v6597
      %v8410 = vmul.f32 %v8394, %v6597
      %v8411 = vmul.f32 %v8395, %v6597
      %v8412 = vmul.f32 %v8396, %v6597
      %v8413 = vmul.f32 %v8397, %v6597
      %v8414 = vmul.f32 %v8398, %v6597
      %v8415 = vadd.f32 %v7870, %v7195
      %v8416 = vadd.f32 %v7871, %v7196
      %v8417 = vadd.f32 %v7872, %v7197
      %v8418 = vadd.f32 %v7873, %v7198
      %v8419 = vadd.f32 %v7874, %v7199
      %v8420 = vadd.f32 %v7875, %v7200
      %v8421 = vadd.f32 %v7876, %v7201
      %v8422 = vadd.f32 %v7877, %v7202
      %v8423 = vadd.f32 %v8415, %v6647
      %v8424 = vadd.f32 %v8416, %v6648
      %v8425 = vadd.f32 %v8417, %v6649
      %v8426 = vadd.f32 %v8418, %v6650
      %v8427 = vadd.f32 %v8419, %v6651
      %v8428 = vadd.f32 %v8420, %v6652
      %v8429 = vadd.f32 %v8421, %v6653
      %v8430 = vadd.f32 %v8422, %v6654
      %v8439 = vrot.slane %v8423, 7
      %v8440 = vrot.slane %v8424, 7
      %v8441 = vrot.slane %v8425, 7
      %v8442 = vrot.slane %v8426, 7
      %v8443 = vrot.slane %v8427, 7
      %v8444 = vrot.slane %v8428, 7
      %v8445 = vrot.slane %v8429, 7
      %v8446 = vrot.slane %v8430, 7
      %v8455 = vadd.f32 %v8399, %v8439
      %v8456 = vadd.f32 %v8400, %v8439
      %v8457 = vadd.f32 %v8401, %v8440
      %v8458 = vadd.f32 %v8402, %v8440
      %v8459 = vadd.f32 %v8403, %v8441
      %v8460 = vadd.f32 %v8404, %v8441
      %v8461 = vadd.f32 %v8405, %v8442
      %v8462 = vadd.f32 %v8406, %v8442
      %v8463 = vadd.f32 %v8407, %v8443
      %v8464 = vadd.f32 %v8408, %v8443
      %v8465 = vadd.f32 %v8409, %v8444
      %v8466 = vadd.f32 %v8410, %v8444
      %v8467 = vadd.f32 %v8411, %v8445
      %v8468 = vadd.f32 %v8412, %v8445
      %v8469 = vadd.f32 %v8413, %v8446
      %v8470 = vadd.f32 %v8414, %v8446
      %v8471 = vmul.f32 %v8455, %v6675
      %v8472 = vmul.f32 %v8456, %v6675
      %v8473 = vmul.f32 %v8457, %v6675
      %v8474 = vmul.f32 %v8458, %v6675
      %v8475 = vmul.f32 %v8459, %v6675
      %v8476 = vmul.f32 %v8460, %v6675
      %v8477 = vmul.f32 %v8461, %v6675
      %v8478 = vmul.f32 %v8462, %v6675
      %v8479 = vmul.f32 %v8463, %v6675
      %v8480 = vmul.f32 %v8464, %v6675
      %v8481 = vmul.f32 %v8465, %v6675
      %v8482 = vmul.f32 %v8466, %v6675
      %v8483 = vmul.f32 %v8467, %v6675
      %v8484 = vmul.f32 %v8468, %v6675
      %v8485 = vmul.f32 %v8469, %v6675
      %v8486 = vmul.f32 %v8470, %v6675
      %v8487 = vadd.f32 %v8471, %v6689
      %v8488 = vadd.f32 %v8472, %v6689
      %v8489 = vadd.f32 %v8473, %v6689
      %v8490 = vadd.f32 %v8474, %v6689
      %v8491 = vadd.f32 %v8475, %v6689
      %v8492 = vadd.f32 %v8476, %v6689
      %v8493 = vadd.f32 %v8477, %v6689
      %v8494 = vadd.f32 %v8478, %v6689
      %v8495 = vadd.f32 %v8479, %v6689
      %v8496 = vadd.f32 %v8480, %v6689
      %v8497 = vadd.f32 %v8481, %v6689
      %v8498 = vadd.f32 %v8482, %v6689
      %v8499 = vadd.f32 %v8483, %v6689
      %v8500 = vadd.f32 %v8484, %v6689
      %v8501 = vadd.f32 %v8485, %v6689
      %v8502 = vadd.f32 %v8486, %v6689
      %v8511 = vrot.slane %v577, 7
      %v8512 = vrot.slane %v578, 7
      %v8513 = vrot.slane %v579, 7
      %v8514 = vrot.slane %v580, 7
      %v8515 = vrot.slane %v581, 7
      %v8516 = vrot.slane %v582, 7
      %v8517 = vrot.slane %v583, 7
      %v8518 = vrot.slane %v584, 7
      %v8527 = vadd.f32 %v8487, %v8511
      %v8528 = vadd.f32 %v8488, %v8511
      %v8529 = vadd.f32 %v8489, %v8512
      %v8530 = vadd.f32 %v8490, %v8512
      %v8531 = vadd.f32 %v8491, %v8513
      %v8532 = vadd.f32 %v8492, %v8513
      %v8533 = vadd.f32 %v8493, %v8514
      %v8534 = vadd.f32 %v8494, %v8514
      %v8535 = vadd.f32 %v8495, %v8515
      %v8536 = vadd.f32 %v8496, %v8515
      %v8537 = vadd.f32 %v8497, %v8516
      %v8538 = vadd.f32 %v8498, %v8516
      %v8539 = vadd.f32 %v8499, %v8517
      %v8540 = vadd.f32 %v8500, %v8517
      %v8541 = vadd.f32 %v8501, %v8518
      %v8542 = vadd.f32 %v8502, %v8518
      %v8543 = vmax.f32 %v8527, 0.0
      %v8544 = vmax.f32 %v8528, 0.0
      %v8545 = vmax.f32 %v8529, 0.0
      %v8546 = vmax.f32 %v8530, 0.0
      %v8547 = vmax.f32 %v8531, 0.0
      %v8548 = vmax.f32 %v8532, 0.0
      %v8549 = vmax.f32 %v8533, 0.0
      %v8550 = vmax.f32 %v8534, 0.0
      %v8551 = vmax.f32 %v8535, 0.0
      %v8552 = vmax.f32 %v8536, 0.0
      %v8553 = vmax.f32 %v8537, 0.0
      %v8554 = vmax.f32 %v8538, 0.0
      %v8555 = vmax.f32 %v8539, 0.0
      %v8556 = vmax.f32 %v8540, 0.0
      %v8557 = vmax.f32 %v8541, 0.0
      %v8558 = vmax.f32 %v8542, 0.0
      %s8559 = scalar_lea.vmem %s366, 192
      %8560 = vst.msk [vmem:[%s8559 - $0x1] sm:$0xfe] %vm7356, %v8543
      %8561 = vst.msk [vmem:[%s8559 + $0x7] sm:$0x1] %vm7358, %v8544
      %8562 = vst.msk [vmem:[%s8559 + $0x7] sm:$0xfe] %vm7356, %v8545
      %8563 = vst.msk [vmem:[%s8559 + $0xf] sm:$0x1] %vm7358, %v8546
      %8564 = vst.msk [vmem:[%s8559 + $0xf] sm:$0xfe] %vm7356, %v8547
      %8565 = vst.msk [vmem:[%s8559 + $0x17] sm:$0x1] %vm7358, %v8548
      %8566 = vst.msk [vmem:[%s8559 + $0x17] sm:$0xfe] %vm7356, %v8549
      %8567 = vst.msk [vmem:[%s8559 + $0x1f] sm:$0x1] %vm7358, %v8550
      %8568 = vst.msk [vmem:[%s8559 + $0x1f] sm:$0xfe] %vm7356, %v8551
      %8569 = vst.msk [vmem:[%s8559 + $0x27] sm:$0x1] %vm7358, %v8552
      %8570 = vst.msk [vmem:[%s8559 + $0x27] sm:$0xfe] %vm7356, %v8553
      %8571 = vst.msk [vmem:[%s8559 + $0x2f] sm:$0x1] %vm7358, %v8554
      %8572 = vst.msk [vmem:[%s8559 + $0x2f] sm:$0xfe] %vm7356, %v8555
      %8573 = vst.msk [vmem:[%s8559 + $0x37] sm:$0x1] %vm7358, %v8556
      %8574 = vst.msk [vmem:[%s8559 + $0x37] sm:$0xfe] %vm7356, %v8557
      %8575 = vst.msk [vmem:[%s8559 + $0x3f] sm:$0x1] %vm7358, %v8558
      %s8576 = smul.u32 4, %s21
      %p8577 = scmp.lt.s32.totalorder %s8576, 7
      %s8578 = scalar_select %p8577, %s8576, 7
      %s8579 = smul.addr %s8578, 8
      %s8580 = smul.addr %s8579, 8
      %s8581 = scalar_lea.vmem %s10, %s8580
      // Predicated region
      $region61: #{_lambda_.1} parent=59 // pred_check
        %p8582 = pneg %p254
      $region62: #{_lambda_.1} parent=59 // pred_check_branch
        %8584 = sbr.rel (%p8582) target = $region64
      $region63: #{_lambda_.1} parent=59 // pred_region
        %s8585 = smul.u32 4, %s21
      $region64: #{_lambda_.1} parent=59 // pred_fallthru
        _
    $region60: #{_lambda_.1} parent=5 // pred_fallthru
      _
    %p8586 = scmp.le.s32.totalorder 2, %s16
    // Predicated region
    $region65: #{_lambda_.1} parent=5 // pred_check
      %p8587 = pneg %p8586
    $region66: #{_lambda_.1} parent=5 // pred_check_branch
      %8589 = sbr.rel (%p8587) target = $region68
    $region67: #{_lambda_.1} parent=5 // pred_region
      %s8590 = ssub.s32 %s16, 2
      // Predicated region
      $region69: #{_lambda_.1} parent=67 // pred_check
        %p8591 = pneg %p260
      $region70: #{_lambda_.1} parent=67 // pred_check_branch
        %8593 = sbr.rel (%p8591) target = $region72
      $region71: #{_lambda_.1} parent=67 // pred_region
        %s8594 = smul.u32 4, %s22
        %p8595 = scmp.lt.s32.totalorder %s8594, 7
        %s8596 = scalar_select %p8595, %s8594, 7
        %s8597 = smul.addr %s8596, 8
        %s8598 = smul.addr %s8597, 8
        %s8599 = scalar_lea.vmem %s10, %s8598
      $region72: #{_lambda_.1} parent=67 // pred_fallthru
        _
    $region68: #{_lambda_.1} parent=5 // pred_fallthru
      _
  $region6: #{_lambda_.1} parent=0 // loop_footer
    %s20 = sadd.s32 1, %s16
  $region7: #{_lambda_.1} parent=0 // loop_footer_branch
    %15 = sbr.rel target = $region3
  $region8: #{_lambda_.1} parent=0 // loop_exit
    _

</llo_original>
